<compile_context>
chip_gen: v7x
topology: tpu7x:2x2x1
jax: 0.10.0
libtpu: 0.0.40
codegen_flags: <defaults>
</compile_context>

<pallas_src>
import functools

import jax
import jax.numpy as jnp
from jax import lax
from jax.experimental import pallas as pl
from jax.experimental.pallas import tpu as pltpu

_LANE = 128


def _round_up(x, m):
    return ((x + m - 1) // m) * m


# ---------------------------------------------------------------------------
# Fused Pallas kernel: conv3x3 + ReLU + conv3x3 + residual + ReLU (one image/step)
# ---------------------------------------------------------------------------
def _fused_basic_block_kernel(xp_ref, w1_ref, w2_ref, o_ref, y1_ref):
    """One image per grid step.

    xp_ref : (1, H+2, W+2, Cp) f32   spatially padded (+1) & channel-padded input
    w1_ref : (3, 3, Cp, Cp)    bf16  conv1 weights, layout (kh, kw, cin, cout)
    w2_ref : (3, 3, Cp, Cp)    bf16  conv2 weights
    o_ref  : (1, H, W, Cp)     f32   output (NHWC, channel-padded)
    y1_ref : (H+2, W+2, Cp)    bf16  VMEM scratch: relu(conv1) with 1-px zero halo
    """
    h = o_ref.shape[1]
    w = o_ref.shape[2]
    cp = o_ref.shape[3]

    x_f32 = xp_ref[0]                               # (H+2, W+2, Cp) f32 (VMEM)
    x_bf = x_f32.astype(jnp.bfloat16)               # bf16 MXU operand

    # ---- conv1 (3x3, pad=1, stride=1) + ReLU: 9 shifted matmuls on the MXU ----
    acc1 = jnp.zeros((h * w, cp), jnp.float32)
    for kh in range(3):
        for kw in range(3):
            patch = x_bf[kh:kh + h, kw:kw + w, :].reshape(h * w, cp)
            acc1 += jnp.dot(patch, w1_ref[kh, kw],
                            preferred_element_type=jnp.float32)
    y1 = jnp.maximum(acc1, 0.0)                     # f32 epilogue

    # Stash relu(conv1) in VMEM with a zero halo (this is conv2's padding=1).
    y1_ref[...] = jnp.zeros_like(y1_ref)
    y1_ref[1:h + 1, 1:w + 1, :] = y1.reshape(h, w, cp).astype(jnp.bfloat16)

    # ---- conv2 (3x3, pad=1) + residual add + ReLU ----
    y1p = y1_ref[...]                               # (H+2, W+2, Cp) bf16
    acc2 = jnp.zeros((h * w, cp), jnp.float32)
    for kh in range(3):
        for kw in range(3):
            patch = y1p[kh:kh + h, kw:kw + w, :].reshape(h * w, cp)
            acc2 += jnp.dot(patch, w2_ref[kh, kw],
                            preferred_element_type=jnp.float32)

    residual = x_f32[1:h + 1, 1:w + 1, :].reshape(h * w, cp)   # exact f32 identity
    out = jnp.maximum(acc2 + residual, 0.0)
    o_ref[0] = out.reshape(h, w, cp).astype(o_ref.dtype)


# ---------------------------------------------------------------------------
# Wrapper: layout / padding glue + pallas_call
# ---------------------------------------------------------------------------
@jax.jit
def basic_block_forward(x_nchw, w1_oihw, w2_oihw):
    """BasicBlock(inplanes=planes, stride=1, downsample=None) forward. NCHW in/out."""
    n, cin, h, w = x_nchw.shape
    cout = w1_oihw.shape[0]
    assert cin == cout, "identity residual requires inplanes == planes (downsample=None)"
    cp = _round_up(max(cin, cout), _LANE)           # lane-dense channel count

    # NHWC, +1 spatial halo (conv padding=1), channels zero-padded to Cp.
    x_nhwc = jnp.transpose(x_nchw, (0, 2, 3, 1))
    xp = jnp.pad(x_nhwc, ((0, 0), (1, 1), (1, 1), (0, cp - cin)))      # (N,H+2,W+2,Cp) f32

    def _prep_w(w_oihw):
        wt = jnp.transpose(w_oihw, (2, 3, 1, 0))                       # (3,3,Cin,Cout)
        wt = jnp.pad(wt, ((0, 0), (0, 0),
                          (0, cp - wt.shape[2]), (0, cp - wt.shape[3])))
        return wt.astype(jnp.bfloat16)

    w1 = _prep_w(w1_oihw)                                              # (3,3,Cp,Cp) bf16
    w2 = _prep_w(w2_oihw)

    flops = n * 2 * (2 * h * w * (9 * cp) * cp)                        # two 3x3 convs
    bytes_accessed = xp.size * 4 + (w1.size + w2.size) * 2 + n * h * w * cp * 4

    out = pl.pallas_call(
        _fused_basic_block_kernel,
        out_shape=jax.ShapeDtypeStruct((n, h, w, cp), jnp.float32),
        grid_spec=pltpu.PrefetchScalarGridSpec(
            num_scalar_prefetch=0,
            grid=(n,),
            in_specs=[
                pl.BlockSpec((1, h + 2, w + 2, cp), lambda i: (i, 0, 0, 0)),
                pl.BlockSpec((3, 3, cp, cp), lambda i: (0, 0, 0, 0)),
                pl.BlockSpec((3, 3, cp, cp), lambda i: (0, 0, 0, 0)),
            ],
            out_specs=pl.BlockSpec((1, h, w, cp), lambda i: (i, 0, 0, 0)),
            scratch_shapes=[pltpu.VMEM((h + 2, w + 2, cp), jnp.bfloat16)],
        ),
        compiler_params=pltpu.CompilerParams(
            dimension_semantics=("parallel",),
        ),
        cost_estimate=pl.CostEstimate(
            flops=flops, transcendentals=0, bytes_accessed=bytes_accessed),
    )(xp, w1, w2)

    out = out[..., :cout]                                              # drop channel padding
    return jnp.transpose(out, (0, 3, 1, 2))                            # back to NCHW


# ---------------------------------------------------------------------------
# References (for verification)
# ---------------------------------------------------------------------------
_DN = ("NCHW", "OIHW", "NCHW")


def _reference_basic_block(x_nchw, w1, w2):
    out = lax.conv_general_dilated(x_nchw, w1, (1, 1), ((1, 1), (1, 1)),
                                   dimension_numbers=_DN)
    out = jnp.maximum(out, 0.0)
    out = lax.conv_general_dilated(out, w2, (1, 1), ((1, 1), (1, 1)),
                                   dimension_numbers=_DN)
    out = out + x_nchw
    return jnp.maximum(out, 0.0)


def _reference_basic_block_bf16_quant(x_nchw, w1, w2):
    # Same bf16 operand quantization as the kernel (f32 accumulation, f32 residual).
    def bf(a):
        return a.astype(jnp.bfloat16).astype(jnp.float32)
    y1 = lax.conv_general_dilated(bf(x_nchw), bf(w1), (1, 1), ((1, 1), (1, 1)),
                                  dimension_numbers=_DN)
    y1 = jnp.maximum(y1, 0.0)
    y2 = lax.conv_general_dilated(bf(y1), bf(w2), (1, 1), ((1, 1), (1, 1)),
                                  dimension_numbers=_DN)
    return jnp.maximum(y2 + x_nchw, 0.0)


if __name__ == "__main__":
    # Small shapes consistent with the module: batch=2, inplanes=planes=4, spatial=16.
    N, C, H, W = 2, 4, 16, 16
    planes = C  # downsample=None requires inplanes == planes * expansion

    key = jax.random.PRNGKey(0)
    kx, k1, k2 = jax.random.split(key, 3)

    x = jax.random.normal(kx, (N, C, H, W), dtype=jnp.float32)
    # Deterministic Kaiming-style init (matches nn.Conv2d weight shapes, bias=False).
    std1 = (2.0 / (C * 9)) ** 0.5
    std2 = (2.0 / (planes * 9)) ** 0.5
    w1 = jax.random.normal(k1, (planes, C, 3, 3), dtype=jnp.float32) * std1
    w2 = jax.random.normal(k2, (planes, planes, 3, 3), dtype=jnp.float32) * std2

    out = jax.block_until_ready(basic_block_forward(x, w1, w2))
    assert out.shape == (N, planes, H, W)

    # Tight check vs a reference using the same bf16 operand quantization.
    ref_q = jax.block_until_ready(_reference_basic_block_bf16_quant(x, w1, w2))
    assert jnp.allclose(out, ref_q, atol=2e-2, rtol=2e-2), \
        "Pallas BasicBlock mismatch vs bf16-quantized reference"

    # Loose sanity check vs the exact f32 module semantics (bf16 MXU operands).
    ref = jax.block_until_ready(_reference_basic_block(x, w1, w2))
    assert jnp.allclose(out, ref, atol=1e-1, rtol=1e-1), \
        "Pallas BasicBlock mismatch vs f32 reference"

    print("KERNEL_OK")
</pallas_src>

<mosaic_0001>
module attributes {stable_mosaic.version = 11 : i64} {
  func.func @_fused_basic_block_kernel(%arg0: i32, %arg1: memref<1x18x18x128xf32, #tpu.memory_space<vmem>>, %arg2: memref<3x3x128x128xbf16, #tpu.memory_space<vmem>>, %arg3: memref<3x3x128x128xbf16, #tpu.memory_space<vmem>>, %arg4: memref<1x16x16x128xf32, #tpu.memory_space<vmem>>, %arg5: memref<18x18x128xbf16, #tpu.memory_space<vmem>>) attributes {dimension_semantics = [#tpu.dimension_semantics<parallel>], iteration_bounds = array<i64: 2>, scalar_prefetch = 0 : i64, scratch_operands = 1 : i64, tpu.core_type = #tpu.core_type<tc>, window_params = [{transform_indices = @transform_0, window_bounds = array<i64: 1, 18, 18, 128>}, {pipeline_mode = #tpu.pipeline_mode<synchronous>, transform_indices = @transform_1, window_bounds = array<i64: 3, 3, 128, 128>}, {pipeline_mode = #tpu.pipeline_mode<synchronous>, transform_indices = @transform_2, window_bounds = array<i64: 3, 3, 128, 128>}, {transform_indices = @transform_3, window_bounds = array<i64: 1, 16, 16, 128>}]} {
    %c0 = arith.constant 0 : index
    %c0_0 = arith.constant 0 : index
    %c0_1 = arith.constant 0 : index
    %c0_2 = arith.constant 0 : index
    %0 = vector.load %arg1[%c0, %c0_0, %c0_1, %c0_2] : memref<1x18x18x128xf32, #tpu.memory_space<vmem>>, vector<1x18x18x128xf32>
    %1 = vector.shape_cast %0 : vector<1x18x18x128xf32> to vector<18x18x128xf32>
    %2 = arith.truncf %1 : vector<18x18x128xf32> to vector<18x18x128xbf16>
    %cst = arith.constant 0.000000e+00 : f32
    %3 = vector.broadcast %cst : f32 to vector<256x128xf32>
    %4 = vector.extract_strided_slice %2 {offsets = [0, 0, 0], sizes = [16, 16, 128], strides = [1, 1, 1]} : vector<18x18x128xbf16> to vector<16x16x128xbf16>
    %5 = vector.shape_cast %4 : vector<16x16x128xbf16> to vector<256x128xbf16>
    %c0_3 = arith.constant 0 : index
    %c0_4 = arith.constant 0 : index
    %c0_5 = arith.constant 0 : index
    %c0_6 = arith.constant 0 : index
    %6 = vector.load %arg2[%c0_3, %c0_4, %c0_5, %c0_6] : memref<3x3x128x128xbf16, #tpu.memory_space<vmem>>, vector<1x1x128x128xbf16>
    %7 = vector.shape_cast %6 : vector<1x1x128x128xbf16> to vector<128x128xbf16>
    %cst_7 = arith.constant dense<0.000000e+00> : vector<256x128xf32>
    %8 = tpu.matmul %5, %7, %cst_7 {dimension_numbers = #tpu.dot_dimension_numbers<[1], [0], [0], [1], [0, 0, 1, 1], [], []>} : vector<256x128xbf16>, vector<128x128xbf16>, vector<256x128xf32> -> vector<256x128xf32>
    %9 = arith.addf %3, %8 : vector<256x128xf32>
    %10 = vector.extract_strided_slice %2 {offsets = [0, 1, 0], sizes = [16, 16, 128], strides = [1, 1, 1]} : vector<18x18x128xbf16> to vector<16x16x128xbf16>
    %11 = vector.shape_cast %10 : vector<16x16x128xbf16> to vector<256x128xbf16>
    %c0_8 = arith.constant 0 : index
    %c1 = arith.constant 1 : index
    %c0_9 = arith.constant 0 : index
    %c0_10 = arith.constant 0 : index
    %12 = vector.load %arg2[%c0_8, %c1, %c0_9, %c0_10] : memref<3x3x128x128xbf16, #tpu.memory_space<vmem>>, vector<1x1x128x128xbf16>
    %13 = vector.shape_cast %12 : vector<1x1x128x128xbf16> to vector<128x128xbf16>
    %cst_11 = arith.constant dense<0.000000e+00> : vector<256x128xf32>
    %14 = tpu.matmul %11, %13, %cst_11 {dimension_numbers = #tpu.dot_dimension_numbers<[1], [0], [0], [1], [0, 0, 1, 1], [], []>} : vector<256x128xbf16>, vector<128x128xbf16>, vector<256x128xf32> -> vector<256x128xf32>
    %15 = arith.addf %9, %14 : vector<256x128xf32>
    %16 = vector.extract_strided_slice %2 {offsets = [0, 2, 0], sizes = [16, 16, 128], strides = [1, 1, 1]} : vector<18x18x128xbf16> to vector<16x16x128xbf16>
    %17 = vector.shape_cast %16 : vector<16x16x128xbf16> to vector<256x128xbf16>
    %c0_12 = arith.constant 0 : index
    %c2 = arith.constant 2 : index
    %c0_13 = arith.constant 0 : index
    %c0_14 = arith.constant 0 : index
    %18 = vector.load %arg2[%c0_12, %c2, %c0_13, %c0_14] : memref<3x3x128x128xbf16, #tpu.memory_space<vmem>>, vector<1x1x128x128xbf16>
    %19 = vector.shape_cast %18 : vector<1x1x128x128xbf16> to vector<128x128xbf16>
    %cst_15 = arith.constant dense<0.000000e+00> : vector<256x128xf32>
    %20 = tpu.matmul %17, %19, %cst_15 {dimension_numbers = #tpu.dot_dimension_numbers<[1], [0], [0], [1], [0, 0, 1, 1], [], []>} : vector<256x128xbf16>, vector<128x128xbf16>, vector<256x128xf32> -> vector<256x128xf32>
    %21 = arith.addf %15, %20 : vector<256x128xf32>
    %22 = vector.extract_strided_slice %2 {offsets = [1, 0, 0], sizes = [16, 16, 128], strides = [1, 1, 1]} : vector<18x18x128xbf16> to vector<16x16x128xbf16>
    %23 = vector.shape_cast %22 : vector<16x16x128xbf16> to vector<256x128xbf16>
    %c1_16 = arith.constant 1 : index
    %c0_17 = arith.constant 0 : index
    %c0_18 = arith.constant 0 : index
    %c0_19 = arith.constant 0 : index
    %24 = vector.load %arg2[%c1_16, %c0_17, %c0_18, %c0_19] : memref<3x3x128x128xbf16, #tpu.memory_space<vmem>>, vector<1x1x128x128xbf16>
    %25 = vector.shape_cast %24 : vector<1x1x128x128xbf16> to vector<128x128xbf16>
    %cst_20 = arith.constant dense<0.000000e+00> : vector<256x128xf32>
    %26 = tpu.matmul %23, %25, %cst_20 {dimension_numbers = #tpu.dot_dimension_numbers<[1], [0], [0], [1], [0, 0, 1, 1], [], []>} : vector<256x128xbf16>, vector<128x128xbf16>, vector<256x128xf32> -> vector<256x128xf32>
    %27 = arith.addf %21, %26 : vector<256x128xf32>
    %28 = vector.extract_strided_slice %2 {offsets = [1, 1, 0], sizes = [16, 16, 128], strides = [1, 1, 1]} : vector<18x18x128xbf16> to vector<16x16x128xbf16>
    %29 = vector.shape_cast %28 : vector<16x16x128xbf16> to vector<256x128xbf16>
    %c1_21 = arith.constant 1 : index
    %c1_22 = arith.constant 1 : index
    %c0_23 = arith.constant 0 : index
    %c0_24 = arith.constant 0 : index
    %30 = vector.load %arg2[%c1_21, %c1_22, %c0_23, %c0_24] : memref<3x3x128x128xbf16, #tpu.memory_space<vmem>>, vector<1x1x128x128xbf16>
    %31 = vector.shape_cast %30 : vector<1x1x128x128xbf16> to vector<128x128xbf16>
    %cst_25 = arith.constant dense<0.000000e+00> : vector<256x128xf32>
    %32 = tpu.matmul %29, %31, %cst_25 {dimension_numbers = #tpu.dot_dimension_numbers<[1], [0], [0], [1], [0, 0, 1, 1], [], []>} : vector<256x128xbf16>, vector<128x128xbf16>, vector<256x128xf32> -> vector<256x128xf32>
    %33 = arith.addf %27, %32 : vector<256x128xf32>
    %34 = vector.extract_strided_slice %2 {offsets = [1, 2, 0], sizes = [16, 16, 128], strides = [1, 1, 1]} : vector<18x18x128xbf16> to vector<16x16x128xbf16>
    %35 = vector.shape_cast %34 : vector<16x16x128xbf16> to vector<256x128xbf16>
    %c1_26 = arith.constant 1 : index
    %c2_27 = arith.constant 2 : index
    %c0_28 = arith.constant 0 : index
    %c0_29 = arith.constant 0 : index
    %36 = vector.load %arg2[%c1_26, %c2_27, %c0_28, %c0_29] : memref<3x3x128x128xbf16, #tpu.memory_space<vmem>>, vector<1x1x128x128xbf16>
    %37 = vector.shape_cast %36 : vector<1x1x128x128xbf16> to vector<128x128xbf16>
    %cst_30 = arith.constant dense<0.000000e+00> : vector<256x128xf32>
    %38 = tpu.matmul %35, %37, %cst_30 {dimension_numbers = #tpu.dot_dimension_numbers<[1], [0], [0], [1], [0, 0, 1, 1], [], []>} : vector<256x128xbf16>, vector<128x128xbf16>, vector<256x128xf32> -> vector<256x128xf32>
    %39 = arith.addf %33, %38 : vector<256x128xf32>
    %40 = vector.extract_strided_slice %2 {offsets = [2, 0, 0], sizes = [16, 16, 128], strides = [1, 1, 1]} : vector<18x18x128xbf16> to vector<16x16x128xbf16>
    %41 = vector.shape_cast %40 : vector<16x16x128xbf16> to vector<256x128xbf16>
    %c2_31 = arith.constant 2 : index
    %c0_32 = arith.constant 0 : index
    %c0_33 = arith.constant 0 : index
    %c0_34 = arith.constant 0 : index
    %42 = vector.load %arg2[%c2_31, %c0_32, %c0_33, %c0_34] : memref<3x3x128x128xbf16, #tpu.memory_space<vmem>>, vector<1x1x128x128xbf16>
    %43 = vector.shape_cast %42 : vector<1x1x128x128xbf16> to vector<128x128xbf16>
    %cst_35 = arith.constant dense<0.000000e+00> : vector<256x128xf32>
    %44 = tpu.matmul %41, %43, %cst_35 {dimension_numbers = #tpu.dot_dimension_numbers<[1], [0], [0], [1], [0, 0, 1, 1], [], []>} : vector<256x128xbf16>, vector<128x128xbf16>, vector<256x128xf32> -> vector<256x128xf32>
    %45 = arith.addf %39, %44 : vector<256x128xf32>
    %46 = vector.extract_strided_slice %2 {offsets = [2, 1, 0], sizes = [16, 16, 128], strides = [1, 1, 1]} : vector<18x18x128xbf16> to vector<16x16x128xbf16>
    %47 = vector.shape_cast %46 : vector<16x16x128xbf16> to vector<256x128xbf16>
    %c2_36 = arith.constant 2 : index
    %c1_37 = arith.constant 1 : index
    %c0_38 = arith.constant 0 : index
    %c0_39 = arith.constant 0 : index
    %48 = vector.load %arg2[%c2_36, %c1_37, %c0_38, %c0_39] : memref<3x3x128x128xbf16, #tpu.memory_space<vmem>>, vector<1x1x128x128xbf16>
    %49 = vector.shape_cast %48 : vector<1x1x128x128xbf16> to vector<128x128xbf16>
    %cst_40 = arith.constant dense<0.000000e+00> : vector<256x128xf32>
    %50 = tpu.matmul %47, %49, %cst_40 {dimension_numbers = #tpu.dot_dimension_numbers<[1], [0], [0], [1], [0, 0, 1, 1], [], []>} : vector<256x128xbf16>, vector<128x128xbf16>, vector<256x128xf32> -> vector<256x128xf32>
    %51 = arith.addf %45, %50 : vector<256x128xf32>
    %52 = vector.extract_strided_slice %2 {offsets = [2, 2, 0], sizes = [16, 16, 128], strides = [1, 1, 1]} : vector<18x18x128xbf16> to vector<16x16x128xbf16>
    %53 = vector.shape_cast %52 : vector<16x16x128xbf16> to vector<256x128xbf16>
    %c2_41 = arith.constant 2 : index
    %c2_42 = arith.constant 2 : index
    %c0_43 = arith.constant 0 : index
    %c0_44 = arith.constant 0 : index
    %54 = vector.load %arg2[%c2_41, %c2_42, %c0_43, %c0_44] : memref<3x3x128x128xbf16, #tpu.memory_space<vmem>>, vector<1x1x128x128xbf16>
    %55 = vector.shape_cast %54 : vector<1x1x128x128xbf16> to vector<128x128xbf16>
    %cst_45 = arith.constant dense<0.000000e+00> : vector<256x128xf32>
    %56 = tpu.matmul %53, %55, %cst_45 {dimension_numbers = #tpu.dot_dimension_numbers<[1], [0], [0], [1], [0, 0, 1, 1], [], []>} : vector<256x128xbf16>, vector<128x128xbf16>, vector<256x128xf32> -> vector<256x128xf32>
    %57 = arith.addf %51, %56 : vector<256x128xf32>
    %cst_46 = arith.constant 0.000000e+00 : f32
    %58 = vector.broadcast %cst_46 : f32 to vector<256x128xf32>
    %59 = arith.maximumf %57, %58 : vector<256x128xf32>
    %cst_47 = arith.constant 0.000000e+00 : bf16
    %60 = vector.broadcast %cst_47 : bf16 to vector<18x18x128xbf16>
    %c0_48 = arith.constant 0 : index
    %c0_49 = arith.constant 0 : index
    %c0_50 = arith.constant 0 : index
    %61 = vector.load %arg5[%c0_48, %c0_49, %c0_50] : memref<18x18x128xbf16, #tpu.memory_space<vmem>>, vector<18x18x128xbf16>
    tpu.vector_store %arg5[%c0_48, %c0_49, %c0_50], %60 {strides = array<i32>} : memref<18x18x128xbf16, #tpu.memory_space<vmem>>, vector<18x18x128xbf16>,
    %62 = vector.shape_cast %59 : vector<256x128xf32> to vector<16x16x128xf32>
    %63 = arith.truncf %62 : vector<16x16x128xf32> to vector<16x16x128xbf16>
    %c1_51 = arith.constant 1 : index
    %c1_52 = arith.constant 1 : index
    %c0_53 = arith.constant 0 : index
    %64 = vector.load %arg5[%c1_51, %c1_52, %c0_53] : memref<18x18x128xbf16, #tpu.memory_space<vmem>>, vector<16x16x128xbf16>
    tpu.vector_store %arg5[%c1_51, %c1_52, %c0_53], %63 {strides = array<i32>} : memref<18x18x128xbf16, #tpu.memory_space<vmem>>, vector<16x16x128xbf16>,
    %c0_54 = arith.constant 0 : index
    %c0_55 = arith.constant 0 : index
    %c0_56 = arith.constant 0 : index
    %65 = vector.load %arg5[%c0_54, %c0_55, %c0_56] : memref<18x18x128xbf16, #tpu.memory_space<vmem>>, vector<18x18x128xbf16>
    %cst_57 = arith.constant 0.000000e+00 : f32
    %66 = vector.broadcast %cst_57 : f32 to vector<256x128xf32>
    %67 = vector.extract_strided_slice %65 {offsets = [0, 0, 0], sizes = [16, 16, 128], strides = [1, 1, 1]} : vector<18x18x128xbf16> to vector<16x16x128xbf16>
    %68 = vector.shape_cast %67 : vector<16x16x128xbf16> to vector<256x128xbf16>
    %c0_58 = arith.constant 0 : index
    %c0_59 = arith.constant 0 : index
    %c0_60 = arith.constant 0 : index
    %c0_61 = arith.constant 0 : index
    %69 = vector.load %arg3[%c0_58, %c0_59, %c0_60, %c0_61] : memref<3x3x128x128xbf16, #tpu.memory_space<vmem>>, vector<1x1x128x128xbf16>
    %70 = vector.shape_cast %69 : vector<1x1x128x128xbf16> to vector<128x128xbf16>
    %cst_62 = arith.constant dense<0.000000e+00> : vector<256x128xf32>
    %71 = tpu.matmul %68, %70, %cst_62 {dimension_numbers = #tpu.dot_dimension_numbers<[1], [0], [0], [1], [0, 0, 1, 1], [], []>} : vector<256x128xbf16>, vector<128x128xbf16>, vector<256x128xf32> -> vector<256x128xf32>
    %72 = arith.addf %66, %71 : vector<256x128xf32>
    %73 = vector.extract_strided_slice %65 {offsets = [0, 1, 0], sizes = [16, 16, 128], strides = [1, 1, 1]} : vector<18x18x128xbf16> to vector<16x16x128xbf16>
    %74 = vector.shape_cast %73 : vector<16x16x128xbf16> to vector<256x128xbf16>
    %c0_63 = arith.constant 0 : index
    %c1_64 = arith.constant 1 : index
    %c0_65 = arith.constant 0 : index
    %c0_66 = arith.constant 0 : index
    %75 = vector.load %arg3[%c0_63, %c1_64, %c0_65, %c0_66] : memref<3x3x128x128xbf16, #tpu.memory_space<vmem>>, vector<1x1x128x128xbf16>
    %76 = vector.shape_cast %75 : vector<1x1x128x128xbf16> to vector<128x128xbf16>
    %cst_67 = arith.constant dense<0.000000e+00> : vector<256x128xf32>
    %77 = tpu.matmul %74, %76, %cst_67 {dimension_numbers = #tpu.dot_dimension_numbers<[1], [0], [0], [1], [0, 0, 1, 1], [], []>} : vector<256x128xbf16>, vector<128x128xbf16>, vector<256x128xf32> -> vector<256x128xf32>
    %78 = arith.addf %72, %77 : vector<256x128xf32>
    %79 = vector.extract_strided_slice %65 {offsets = [0, 2, 0], sizes = [16, 16, 128], strides = [1, 1, 1]} : vector<18x18x128xbf16> to vector<16x16x128xbf16>
    %80 = vector.shape_cast %79 : vector<16x16x128xbf16> to vector<256x128xbf16>
    %c0_68 = arith.constant 0 : index
    %c2_69 = arith.constant 2 : index
    %c0_70 = arith.constant 0 : index
    %c0_71 = arith.constant 0 : index
    %81 = vector.load %arg3[%c0_68, %c2_69, %c0_70, %c0_71] : memref<3x3x128x128xbf16, #tpu.memory_space<vmem>>, vector<1x1x128x128xbf16>
    %82 = vector.shape_cast %81 : vector<1x1x128x128xbf16> to vector<128x128xbf16>
    %cst_72 = arith.constant dense<0.000000e+00> : vector<256x128xf32>
    %83 = tpu.matmul %80, %82, %cst_72 {dimension_numbers = #tpu.dot_dimension_numbers<[1], [0], [0], [1], [0, 0, 1, 1], [], []>} : vector<256x128xbf16>, vector<128x128xbf16>, vector<256x128xf32> -> vector<256x128xf32>
    %84 = arith.addf %78, %83 : vector<256x128xf32>
    %85 = vector.extract_strided_slice %65 {offsets = [1, 0, 0], sizes = [16, 16, 128], strides = [1, 1, 1]} : vector<18x18x128xbf16> to vector<16x16x128xbf16>
    %86 = vector.shape_cast %85 : vector<16x16x128xbf16> to vector<256x128xbf16>
    %c1_73 = arith.constant 1 : index
    %c0_74 = arith.constant 0 : index
    %c0_75 = arith.constant 0 : index
    %c0_76 = arith.constant 0 : index
    %87 = vector.load %arg3[%c1_73, %c0_74, %c0_75, %c0_76] : memref<3x3x128x128xbf16, #tpu.memory_space<vmem>>, vector<1x1x128x128xbf16>
    %88 = vector.shape_cast %87 : vector<1x1x128x128xbf16> to vector<128x128xbf16>
    %cst_77 = arith.constant dense<0.000000e+00> : vector<256x128xf32>
    %89 = tpu.matmul %86, %88, %cst_77 {dimension_numbers = #tpu.dot_dimension_numbers<[1], [0], [0], [1], [0, 0, 1, 1], [], []>} : vector<256x128xbf16>, vector<128x128xbf16>, vector<256x128xf32> -> vector<256x128xf32>
    %90 = arith.addf %84, %89 : vector<256x128xf32>
    %91 = vector.extract_strided_slice %65 {offsets = [1, 1, 0], sizes = [16, 16, 128], strides = [1, 1, 1]} : vector<18x18x128xbf16> to vector<16x16x128xbf16>
    %92 = vector.shape_cast %91 : vector<16x16x128xbf16> to vector<256x128xbf16>
    %c1_78 = arith.constant 1 : index
    %c1_79 = arith.constant 1 : index
    %c0_80 = arith.constant 0 : index
    %c0_81 = arith.constant 0 : index
    %93 = vector.load %arg3[%c1_78, %c1_79, %c0_80, %c0_81] : memref<3x3x128x128xbf16, #tpu.memory_space<vmem>>, vector<1x1x128x128xbf16>
    %94 = vector.shape_cast %93 : vector<1x1x128x128xbf16> to vector<128x128xbf16>
    %cst_82 = arith.constant dense<0.000000e+00> : vector<256x128xf32>
    %95 = tpu.matmul %92, %94, %cst_82 {dimension_numbers = #tpu.dot_dimension_numbers<[1], [0], [0], [1], [0, 0, 1, 1], [], []>} : vector<256x128xbf16>, vector<128x128xbf16>, vector<256x128xf32> -> vector<256x128xf32>
    %96 = arith.addf %90, %95 : vector<256x128xf32>
    %97 = vector.extract_strided_slice %65 {offsets = [1, 2, 0], sizes = [16, 16, 128], strides = [1, 1, 1]} : vector<18x18x128xbf16> to vector<16x16x128xbf16>
    %98 = vector.shape_cast %97 : vector<16x16x128xbf16> to vector<256x128xbf16>
    %c1_83 = arith.constant 1 : index
    %c2_84 = arith.constant 2 : index
    %c0_85 = arith.constant 0 : index
    %c0_86 = arith.constant 0 : index
    %99 = vector.load %arg3[%c1_83, %c2_84, %c0_85, %c0_86] : memref<3x3x128x128xbf16, #tpu.memory_space<vmem>>, vector<1x1x128x128xbf16>
    %100 = vector.shape_cast %99 : vector<1x1x128x128xbf16> to vector<128x128xbf16>
    %cst_87 = arith.constant dense<0.000000e+00> : vector<256x128xf32>
    %101 = tpu.matmul %98, %100, %cst_87 {dimension_numbers = #tpu.dot_dimension_numbers<[1], [0], [0], [1], [0, 0, 1, 1], [], []>} : vector<256x128xbf16>, vector<128x128xbf16>, vector<256x128xf32> -> vector<256x128xf32>
    %102 = arith.addf %96, %101 : vector<256x128xf32>
    %103 = vector.extract_strided_slice %65 {offsets = [2, 0, 0], sizes = [16, 16, 128], strides = [1, 1, 1]} : vector<18x18x128xbf16> to vector<16x16x128xbf16>
    %104 = vector.shape_cast %103 : vector<16x16x128xbf16> to vector<256x128xbf16>
    %c2_88 = arith.constant 2 : index
    %c0_89 = arith.constant 0 : index
    %c0_90 = arith.constant 0 : index
    %c0_91 = arith.constant 0 : index
    %105 = vector.load %arg3[%c2_88, %c0_89, %c0_90, %c0_91] : memref<3x3x128x128xbf16, #tpu.memory_space<vmem>>, vector<1x1x128x128xbf16>
    %106 = vector.shape_cast %105 : vector<1x1x128x128xbf16> to vector<128x128xbf16>
    %cst_92 = arith.constant dense<0.000000e+00> : vector<256x128xf32>
    %107 = tpu.matmul %104, %106, %cst_92 {dimension_numbers = #tpu.dot_dimension_numbers<[1], [0], [0], [1], [0, 0, 1, 1], [], []>} : vector<256x128xbf16>, vector<128x128xbf16>, vector<256x128xf32> -> vector<256x128xf32>
    %108 = arith.addf %102, %107 : vector<256x128xf32>
    %109 = vector.extract_strided_slice %65 {offsets = [2, 1, 0], sizes = [16, 16, 128], strides = [1, 1, 1]} : vector<18x18x128xbf16> to vector<16x16x128xbf16>
    %110 = vector.shape_cast %109 : vector<16x16x128xbf16> to vector<256x128xbf16>
    %c2_93 = arith.constant 2 : index
    %c1_94 = arith.constant 1 : index
    %c0_95 = arith.constant 0 : index
    %c0_96 = arith.constant 0 : index
    %111 = vector.load %arg3[%c2_93, %c1_94, %c0_95, %c0_96] : memref<3x3x128x128xbf16, #tpu.memory_space<vmem>>, vector<1x1x128x128xbf16>
    %112 = vector.shape_cast %111 : vector<1x1x128x128xbf16> to vector<128x128xbf16>
    %cst_97 = arith.constant dense<0.000000e+00> : vector<256x128xf32>
    %113 = tpu.matmul %110, %112, %cst_97 {dimension_numbers = #tpu.dot_dimension_numbers<[1], [0], [0], [1], [0, 0, 1, 1], [], []>} : vector<256x128xbf16>, vector<128x128xbf16>, vector<256x128xf32> -> vector<256x128xf32>
    %114 = arith.addf %108, %113 : vector<256x128xf32>
    %115 = vector.extract_strided_slice %65 {offsets = [2, 2, 0], sizes = [16, 16, 128], strides = [1, 1, 1]} : vector<18x18x128xbf16> to vector<16x16x128xbf16>
    %116 = vector.shape_cast %115 : vector<16x16x128xbf16> to vector<256x128xbf16>
    %c2_98 = arith.constant 2 : index
    %c2_99 = arith.constant 2 : index
    %c0_100 = arith.constant 0 : index
    %c0_101 = arith.constant 0 : index
    %117 = vector.load %arg3[%c2_98, %c2_99, %c0_100, %c0_101] : memref<3x3x128x128xbf16, #tpu.memory_space<vmem>>, vector<1x1x128x128xbf16>
    %118 = vector.shape_cast %117 : vector<1x1x128x128xbf16> to vector<128x128xbf16>
    %cst_102 = arith.constant dense<0.000000e+00> : vector<256x128xf32>
    %119 = tpu.matmul %116, %118, %cst_102 {dimension_numbers = #tpu.dot_dimension_numbers<[1], [0], [0], [1], [0, 0, 1, 1], [], []>} : vector<256x128xbf16>, vector<128x128xbf16>, vector<256x128xf32> -> vector<256x128xf32>
    %120 = arith.addf %114, %119 : vector<256x128xf32>
    %121 = vector.extract_strided_slice %1 {offsets = [1, 1, 0], sizes = [16, 16, 128], strides = [1, 1, 1]} : vector<18x18x128xf32> to vector<16x16x128xf32>
    %122 = vector.shape_cast %121 : vector<16x16x128xf32> to vector<256x128xf32>
    %123 = arith.addf %120, %122 : vector<256x128xf32>
    %cst_103 = arith.constant 0.000000e+00 : f32
    %124 = vector.broadcast %cst_103 : f32 to vector<256x128xf32>
    %125 = arith.maximumf %123, %124 : vector<256x128xf32>
    %126 = vector.shape_cast %125 : vector<256x128xf32> to vector<16x16x128xf32>
    %c0_104 = arith.constant 0 : index
    %c0_105 = arith.constant 0 : index
    %c0_106 = arith.constant 0 : index
    %c0_107 = arith.constant 0 : index
    %127 = vector.load %arg4[%c0_104, %c0_105, %c0_106, %c0_107] : memref<1x16x16x128xf32, #tpu.memory_space<vmem>>, vector<1x16x16x128xf32>
    %128 = vector.shape_cast %127 : vector<1x16x16x128xf32> to vector<16x16x128xf32>
    %129 = vector.shape_cast %126 : vector<16x16x128xf32> to vector<1x16x16x128xf32>
    tpu.vector_store %arg4[%c0_104, %c0_105, %c0_106, %c0_107], %129 {strides = array<i32>} : memref<1x16x16x128xf32, #tpu.memory_space<vmem>>, vector<1x16x16x128xf32>,
    return
  }
  func.func @transform_0(%arg0: i32) -> (i32, i32, i32, i32) {
    %c0_i32 = arith.constant 0 : i32
    %c0_i32_0 = arith.constant 0 : i32
    %c0_i32_1 = arith.constant 0 : i32
    %c0_i32_2 = arith.constant 0 : i32
    return %arg0, %c0_i32, %c0_i32_0, %c0_i32_1 : i32, i32, i32, i32
  }
  func.func @transform_1(%arg0: i32) -> (i32, i32, i32, i32) {
    %c0_i32 = arith.constant 0 : i32
    %c0_i32_0 = arith.constant 0 : i32
    %c0_i32_1 = arith.constant 0 : i32
    %c0_i32_2 = arith.constant 0 : i32
    %c0_i32_3 = arith.constant 0 : i32
    return %c0_i32, %c0_i32_0, %c0_i32_1, %c0_i32_2 : i32, i32, i32, i32
  }
  func.func @transform_2(%arg0: i32) -> (i32, i32, i32, i32) {
    %c0_i32 = arith.constant 0 : i32
    %c0_i32_0 = arith.constant 0 : i32
    %c0_i32_1 = arith.constant 0 : i32
    %c0_i32_2 = arith.constant 0 : i32
    %c0_i32_3 = arith.constant 0 : i32
    return %c0_i32, %c0_i32_0, %c0_i32_1, %c0_i32_2 : i32, i32, i32, i32
  }
  func.func @transform_3(%arg0: i32) -> (i32, i32, i32, i32) {
    %c0_i32 = arith.constant 0 : i32
    %c0_i32_0 = arith.constant 0 : i32
    %c0_i32_1 = arith.constant 0 : i32
    %c0_i32_2 = arith.constant 0 : i32
    return %arg0, %c0_i32, %c0_i32_0, %c0_i32_1 : i32, i32, i32, i32
  }
}

</mosaic_0001>

<llo_original>
// kernel: basic_block_forward.1
$region0: #{basic_block_forward.1}
  #allocation0 [shape = 'u32[]', space=smem, size = 0x4, offset = 0x4, fixed_abs, tag = 'smem constant byte address 0x4 - core index']
  #allocation1 [shape = 'u32[144,128]{1,0:T(1,128)}', space=vmem, size = 0x12000, scoped, tag = 'internal scratch']
  #allocation2 [shape = 'bf16[18,18,128]{2,1,0:T(8,128)(2,1)}', space=vmem, size = 0x1b000, scoped, tag = 'scratch operand']
  %s0 = inlined_call_operand.vmem [shape: f32[2,18,18,128], index: 0, kind: input, shape index: {}]
  %s1 = inlined_call_operand.vmem [shape: bf16[3,3,128,128], index: 1, kind: input, shape index: {}]
  %s2 = inlined_call_operand.vmem [shape: bf16[3,3,128,128], index: 2, kind: input, shape index: {}]
  %s3 = inlined_call_operand.vmem [shape: f32[2,16,16,128], index: 3, kind: output, shape index: {}]
  %s4 = sld [smem:[#allocation0]]
  $region45: #{basic_block_forward.1} parent=0
    _
  %s6 = ssub.s32 1, %s4
  %s7 = scalar_select 0, %s6, %s4
  loop: start=0, step=1, limit=4
  $region2: #{basic_block_forward.1} parent=0 // loop_pre_header
    _
  $region3: #{basic_block_forward.1} parent=0 // loop_header
    %s9 = sphi 0, %s13
    %p10 = scmp.ge.s32.totalorder %s9, 4
    %s19 = sphi 0, %s21
    %s22 = sphi 0, %s19
    %s23 = sphi 0, %s22
    %s39 = sphi 0, %s23
    %s43 = sphi 0, %s43
    %s45 = sphi 0, %s43
    %s46 = sphi 0, %s45
    %s60 = sphi 0, %s46
    %s64 = sphi 0, %s64
    %s66 = sphi 0, %s64
    %s67 = sphi 0, %s66
    %s81 = sphi 0, %s67
    %s87 = sphi 0, %s89
    %s90 = sphi 0, %s87
    %s91 = sphi 0, %s90
    %s107 = sphi 0, %s91
  $region4: #{basic_block_forward.1} parent=0 // loop_header_branch
    %12 = sbr.rel (%p10) target = $region8
  $region5: #{basic_block_forward.1} parent=0 // loop_body
    %s14 = ssub.s32 %s9, 1
    %s15 = ssub.s32 %s9, 2
    %s16 = sadd.s32 %s9, 1
    %s17 = ssub.s32 %s9, %s16
    %p18 = scmp.eq.s32.totalorder %s17, 0
    %s20 = sadd.s32 %s19, 1
    %s21 = scalar_select %p18, %s19, %s20
    %p24 = pneg %p18
    %p25 = scmp.eq.s32.totalorder %s9, 1
    %p26 = por %p24, %p25
    %p27 = scmp.ne.s32.totalorder %s19, %s22
    %p28 = scmp.eq.s32.totalorder %s9, 0
    %p29 = por %p27, %p28
    %p30 = scmp.ne.s32.totalorder %s19, %s22
    %p31 = scmp.eq.s32.totalorder %s14, 1
    %p32 = por %p30, %p31
    %p33 = scmp.ne.s32.totalorder %s22, %s23
    %p34 = scmp.eq.s32.totalorder %s14, 0
    %p35 = por %p33, %p34
    %p36 = scmp.ne.s32.totalorder %s22, %s23
    %p37 = scmp.eq.s32.totalorder %s15, 1
    %p38 = por %p36, %p37
    %p40 = scmp.ne.s32.totalorder %s23, %s39
    %p41 = scmp.eq.s32.totalorder %s15, 0
    %p42 = por %p40, %p41
    %s44 = sadd.s32 %s43, 1
    %p47 = scmp.eq.s32.totalorder %s9, 1
    %p48 = scmp.ne.s32.totalorder %s43, %s45
    %p49 = scmp.eq.s32.totalorder %s9, 0
    %p50 = por %p48, %p49
    %p51 = scmp.ne.s32.totalorder %s43, %s45
    %p52 = scmp.eq.s32.totalorder %s14, 1
    %p53 = por %p51, %p52
    %p54 = scmp.ne.s32.totalorder %s45, %s46
    %p55 = scmp.eq.s32.totalorder %s14, 0
    %p56 = por %p54, %p55
    %p57 = scmp.ne.s32.totalorder %s45, %s46
    %p58 = scmp.eq.s32.totalorder %s15, 1
    %p59 = por %p57, %p58
    %p61 = scmp.ne.s32.totalorder %s46, %s60
    %p62 = scmp.eq.s32.totalorder %s15, 0
    %p63 = por %p61, %p62
    %s65 = sadd.s32 %s64, 1
    %p68 = scmp.eq.s32.totalorder %s9, 1
    %p69 = scmp.ne.s32.totalorder %s64, %s66
    %p70 = scmp.eq.s32.totalorder %s9, 0
    %p71 = por %p69, %p70
    %p72 = scmp.ne.s32.totalorder %s64, %s66
    %p73 = scmp.eq.s32.totalorder %s14, 1
    %p74 = por %p72, %p73
    %p75 = scmp.ne.s32.totalorder %s66, %s67
    %p76 = scmp.eq.s32.totalorder %s14, 0
    %p77 = por %p75, %p76
    %p78 = scmp.ne.s32.totalorder %s66, %s67
    %p79 = scmp.eq.s32.totalorder %s15, 1
    %p80 = por %p78, %p79
    %p82 = scmp.ne.s32.totalorder %s67, %s81
    %p83 = scmp.eq.s32.totalorder %s15, 0
    %p84 = por %p82, %p83
    %s85 = ssub.s32 %s9, %s16
    %p86 = scmp.eq.s32.totalorder %s85, 0
    %s88 = sadd.s32 %s87, 1
    %s89 = scalar_select %p86, %s87, %s88
    %p92 = pneg %p86
    %p93 = scmp.eq.s32.totalorder %s9, 1
    %p94 = por %p92, %p93
    %p95 = scmp.ne.s32.totalorder %s87, %s90
    %p96 = scmp.eq.s32.totalorder %s9, 0
    %p97 = por %p95, %p96
    %p98 = scmp.ne.s32.totalorder %s87, %s90
    %p99 = scmp.eq.s32.totalorder %s14, 1
    %p100 = por %p98, %p99
    %p101 = scmp.ne.s32.totalorder %s90, %s91
    %p102 = scmp.eq.s32.totalorder %s14, 0
    %p103 = por %p101, %p102
    %p104 = scmp.ne.s32.totalorder %s90, %s91
    %p105 = scmp.eq.s32.totalorder %s15, 1
    %p106 = por %p104, %p105
    %p108 = scmp.ne.s32.totalorder %s91, %s107
    %p109 = scmp.eq.s32.totalorder %s15, 0
    %p110 = por %p108, %p109
    %p111 = scmp.le.s32.totalorder 1, %s9
    %p112 = scmp.lt.s32.totalorder %s9, 3
    %p113 = pnand %p111, %p112
    %p114 = pneg %p113
    // Predicated region
    $region9: #{basic_block_forward.1} parent=5 // pred_check
      _
    $region10: #{basic_block_forward.1} parent=5 // pred_check_branch
      %116 = sbr.rel (%p113) target = $region12
    $region11: #{basic_block_forward.1} parent=5 // pred_region
      %s117 = ssub.s32 %s9, 1
      // Predicated region
      $region13: #{basic_block_forward.1} parent=11 // pred_check
        %p118 = pneg %p56
      $region14: #{basic_block_forward.1} parent=11 // pred_check_branch
        %120 = sbr.rel (%p118) target = $region16
      $region15: #{basic_block_forward.1} parent=11 // pred_region
        _
      $region16: #{basic_block_forward.1} parent=11 // pred_fallthru
        _
      // Predicated region
      $region17: #{basic_block_forward.1} parent=11 // pred_check
        %p121 = pneg %p77
      $region18: #{basic_block_forward.1} parent=11 // pred_check_branch
        %123 = sbr.rel (%p121) target = $region20
      $region19: #{basic_block_forward.1} parent=11 // pred_region
        _
      $region20: #{basic_block_forward.1} parent=11 // pred_fallthru
        _
    $region12: #{basic_block_forward.1} parent=5 // pred_fallthru
      _
    %p124 = scmp.lt.s32.totalorder %s9, 2
    // Predicated region
    $region21: #{basic_block_forward.1} parent=5 // pred_check
      %p125 = pneg %p124
    $region22: #{basic_block_forward.1} parent=5 // pred_check_branch
      %127 = sbr.rel (%p125) target = $region24
    $region23: #{basic_block_forward.1} parent=5 // pred_region
      // Predicated region
      $region25: #{basic_block_forward.1} parent=23 // pred_check
        %p128 = pneg %p29
      $region26: #{basic_block_forward.1} parent=23 // pred_check_branch
        %130 = sbr.rel (%p128) target = $region28
      $region27: #{basic_block_forward.1} parent=23 // pred_region
        %p131 = scmp.lt.s32.totalorder %s9, 1
        %s132 = scalar_select %p131, %s9, 1
        %s133 = smul.addr %s132, 54
        %s134 = smul.addr %s133, 8
        %s135 = scalar_lea.vmem %s0, %s134
      $region28: #{basic_block_forward.1} parent=23 // pred_fallthru
        _
    $region24: #{basic_block_forward.1} parent=5 // pred_fallthru
      _
    %p136 = scmp.le.s32.totalorder 1, %s9
    %p137 = scmp.lt.s32.totalorder %s9, 3
    %p138 = pnand %p136, %p137
    %p139 = pneg %p138
    // Predicated region
    $region29: #{basic_block_forward.1} parent=5 // pred_check
      _
    $region30: #{basic_block_forward.1} parent=5 // pred_check_branch
      %141 = sbr.rel (%p138) target = $region32
    $region31: #{basic_block_forward.1} parent=5 // pred_region
      %s142 = ssub.s32 %s9, 1
      %p143 = scmp.lt.s32.totalorder %s14, 1
      %s144 = scalar_select %p143, %s14, 1
      %s145 = smul.addr %s144, 54
      %s146 = smul.addr %s145, 8
      %s147 = scalar_lea.vmem %s0, %s146
      %p148 = pneg %p35
      %p149 = pneg %p32
      %p150 = pneg %p56
      %p151 = pneg %p53
      %p152 = pneg %p77
      %p153 = pneg %p74
      %p154 = pneg %p103
      %p155 = pneg %p100
      %p156 = scmp.lt.s32.totalorder %s14, 1
      %s157 = scalar_select %p156, %s14, 1
      %s158 = smul.addr %s157, 32
      %s159 = smul.addr %s158, 8
      %s160 = scalar_lea.vmem %s3, %s159
      %p161 = scmp.lt.s32.totalorder %s14, 1
      %s162 = scalar_select %p161, %s14, 1
      %s163 = smul.addr %s162, 54
      %s164 = smul.addr %s163, 8
      %s165 = scalar_lea.vmem %s0, %s164
      %p166 = scmp.lt.s32.totalorder %s14, 1
      %s167 = scalar_select %p166, %s14, 1
      %s168 = smul.addr %s167, 32
      %s169 = smul.addr %s168, 8
      %s170 = scalar_lea.vmem %s3, %s169
      %v172 = vld [vmem:[%s165] sm:$0xff]
      %v173 = vld [vmem:[%s165 + $0x8] sm:$0xff]
      %v174 = vld [vmem:[%s165 + $0x10] sm:$0x3]
      %v175 = vld [vmem:[%s165 + $0x18] sm:$0xff]
      %v176 = vld [vmem:[%s165 + $0x20] sm:$0xff]
      %v177 = vld [vmem:[%s165 + $0x28] sm:$0x3]
      %v178 = vld [vmem:[%s165 + $0x30] sm:$0xff]
      %v179 = vld [vmem:[%s165 + $0x38] sm:$0xff]
      %v180 = vld [vmem:[%s165 + $0x40] sm:$0x3]
      %v181 = vld [vmem:[%s165 + $0x48] sm:$0xff]
      %v182 = vld [vmem:[%s165 + $0x50] sm:$0xff]
      %v183 = vld [vmem:[%s165 + $0x58] sm:$0x3]
      %v184 = vld [vmem:[%s165 + $0x60] sm:$0xff]
      %v185 = vld [vmem:[%s165 + $0x68] sm:$0xff]
      %v186 = vld [vmem:[%s165 + $0x70] sm:$0x3]
      %v187 = vld [vmem:[%s165 + $0x78] sm:$0xff]
      %v188 = vld [vmem:[%s165 + $0x80] sm:$0xff]
      %v189 = vld [vmem:[%s165 + $0x88] sm:$0x3]
      %v190 = vld [vmem:[%s165 + $0x90] sm:$0xff]
      %v191 = vld [vmem:[%s165 + $0x98] sm:$0xff]
      %v192 = vld [vmem:[%s165 + $0xa0] sm:$0x3]
      %v193 = vld [vmem:[%s165 + $0xa8] sm:$0xff]
      %v194 = vld [vmem:[%s165 + $0xb0] sm:$0xff]
      %v195 = vld [vmem:[%s165 + $0xb8] sm:$0x3]
      %v196 = vld [vmem:[%s165 + $0xc0] sm:$0xff]
      %v197 = vld [vmem:[%s165 + $0xc8] sm:$0xff]
      %v198 = vld [vmem:[%s165 + $0xd0] sm:$0x3]
      %v199 = vld [vmem:[%s165 + $0xd8] sm:$0xff]
      %v200 = vld [vmem:[%s165 + $0xe0] sm:$0xff]
      %v201 = vld [vmem:[%s165 + $0xe8] sm:$0x3]
      %v202 = vld [vmem:[%s165 + $0xf0] sm:$0xff]
      %v203 = vld [vmem:[%s165 + $0xf8] sm:$0xff]
      %v204 = vld [vmem:[%s165 + $0x100] sm:$0x3]
      %v205 = vld [vmem:[%s165 + $0x108] sm:$0xff]
      %v206 = vld [vmem:[%s165 + $0x110] sm:$0xff]
      %v207 = vld [vmem:[%s165 + $0x118] sm:$0x3]
      %v208 = vld [vmem:[%s165 + $0x120] sm:$0xff]
      %v209 = vld [vmem:[%s165 + $0x128] sm:$0xff]
      %v210 = vld [vmem:[%s165 + $0x130] sm:$0x3]
      %v211 = vld [vmem:[%s165 + $0x138] sm:$0xff]
      %v212 = vld [vmem:[%s165 + $0x140] sm:$0xff]
      %v213 = vld [vmem:[%s165 + $0x148] sm:$0x3]
      %v214 = vld [vmem:[%s165 + $0x150] sm:$0xff]
      %v215 = vld [vmem:[%s165 + $0x158] sm:$0xff]
      %v216 = vld [vmem:[%s165 + $0x160] sm:$0x3]
      %v217 = vld [vmem:[%s165 + $0x168] sm:$0xff]
      %v218 = vld [vmem:[%s165 + $0x170] sm:$0xff]
      %v219 = vld [vmem:[%s165 + $0x178] sm:$0x3]
      %v220 = vld [vmem:[%s165 + $0x180] sm:$0xff]
      %v221 = vld [vmem:[%s165 + $0x188] sm:$0xff]
      %v222 = vld [vmem:[%s165 + $0x190] sm:$0x3]
      %v223 = vld [vmem:[%s165 + $0x198] sm:$0xff]
      %v224 = vld [vmem:[%s165 + $0x1a0] sm:$0xff]
      %v225 = vld [vmem:[%s165 + $0x1a8] sm:$0x3]
      %v226 = vpack.c.bf16 %v173, %v172
      %v227 = vpack.c.bf16 %v174, %v174
      %v228 = vpack.c.bf16 %v176, %v175
      %v229 = vpack.c.bf16 %v177, %v177
      %v230 = vpack.c.bf16 %v179, %v178
      %v231 = vpack.c.bf16 %v180, %v180
      %v232 = vpack.c.bf16 %v182, %v181
      %v233 = vpack.c.bf16 %v183, %v183
      %v234 = vpack.c.bf16 %v185, %v184
      %v235 = vpack.c.bf16 %v186, %v186
      %v236 = vpack.c.bf16 %v188, %v187
      %v237 = vpack.c.bf16 %v189, %v189
      %v238 = vpack.c.bf16 %v191, %v190
      %v239 = vpack.c.bf16 %v192, %v192
      %v240 = vpack.c.bf16 %v194, %v193
      %v241 = vpack.c.bf16 %v195, %v195
      %v242 = vpack.c.bf16 %v197, %v196
      %v243 = vpack.c.bf16 %v198, %v198
      %v244 = vpack.c.bf16 %v200, %v199
      %v245 = vpack.c.bf16 %v201, %v201
      %v246 = vpack.c.bf16 %v203, %v202
      %v247 = vpack.c.bf16 %v204, %v204
      %v248 = vpack.c.bf16 %v206, %v205
      %v249 = vpack.c.bf16 %v207, %v207
      %v250 = vpack.c.bf16 %v209, %v208
      %v251 = vpack.c.bf16 %v210, %v210
      %v252 = vpack.c.bf16 %v212, %v211
      %v253 = vpack.c.bf16 %v213, %v213
      %v254 = vpack.c.bf16 %v215, %v214
      %v255 = vpack.c.bf16 %v216, %v216
      %v256 = vpack.c.bf16 %v218, %v217
      %v257 = vpack.c.bf16 %v219, %v219
      %v258 = vpack.c.bf16 %v221, %v220
      %v259 = vpack.c.bf16 %v222, %v222
      %v260 = vpack.c.bf16 %v224, %v223
      %v261 = vpack.c.bf16 %v225, %v225
      %v262 = vld [vmem:[%s1] sm:$0xf]
      %v263 = vld [vmem:[%s1 + $0x4] sm:$0xf]
      %v264 = vld [vmem:[%s1 + $0x8] sm:$0xf]
      %v265 = vld [vmem:[%s1 + $0xc] sm:$0xf]
      %v266 = vld [vmem:[%s1 + $0x10] sm:$0xf]
      %v267 = vld [vmem:[%s1 + $0x14] sm:$0xf]
      %v268 = vld [vmem:[%s1 + $0x18] sm:$0xf]
      %v269 = vld [vmem:[%s1 + $0x1c] sm:$0xf]
      %v270 = vld [vmem:[%s1 + $0x20] sm:$0xf]
      %v271 = vld [vmem:[%s1 + $0x24] sm:$0xf]
      %v272 = vld [vmem:[%s1 + $0x28] sm:$0xf]
      %v273 = vld [vmem:[%s1 + $0x2c] sm:$0xf]
      %v274 = vld [vmem:[%s1 + $0x30] sm:$0xf]
      %v275 = vld [vmem:[%s1 + $0x34] sm:$0xf]
      %v276 = vld [vmem:[%s1 + $0x38] sm:$0xf]
      %v277 = vld [vmem:[%s1 + $0x3c] sm:$0xf]
      %vm278 = vsmask.f32 7424
      %v280 = vshrl.u32 %v226, 16
      %v282 = vshll.u32 %v226, 16
      %v284 = vrot.slane %v282, 1
      %v285 = vor.u32 %v280, %v284
      %v287 = vshll.u32 %v227, 16
      %v289 = vrot.slane %v287, 1
      %v290 = vsel %vm278, %v285, %v289
      %v292 = vshrl.u32 %v228, 16
      %v294 = vshll.u32 %v228, 16
      %v296 = vrot.slane %v294, 1
      %v297 = vor.u32 %v292, %v296
      %v299 = vshll.u32 %v229, 16
      %v301 = vrot.slane %v299, 1
      %v302 = vsel %vm278, %v297, %v301
      %v304 = vshrl.u32 %v230, 16
      %v306 = vshll.u32 %v230, 16
      %v308 = vrot.slane %v306, 1
      %v309 = vor.u32 %v304, %v308
      %v311 = vshll.u32 %v231, 16
      %v313 = vrot.slane %v311, 1
      %v314 = vsel %vm278, %v309, %v313
      %v316 = vshrl.u32 %v232, 16
      %v318 = vshll.u32 %v232, 16
      %v320 = vrot.slane %v318, 1
      %v321 = vor.u32 %v316, %v320
      %v323 = vshll.u32 %v233, 16
      %v325 = vrot.slane %v323, 1
      %v326 = vsel %vm278, %v321, %v325
      %v328 = vshrl.u32 %v234, 16
      %v330 = vshll.u32 %v234, 16
      %v332 = vrot.slane %v330, 1
      %v333 = vor.u32 %v328, %v332
      %v335 = vshll.u32 %v235, 16
      %v337 = vrot.slane %v335, 1
      %v338 = vsel %vm278, %v333, %v337
      %v340 = vshrl.u32 %v236, 16
      %v342 = vshll.u32 %v236, 16
      %v344 = vrot.slane %v342, 1
      %v345 = vor.u32 %v340, %v344
      %v347 = vshll.u32 %v237, 16
      %v349 = vrot.slane %v347, 1
      %v350 = vsel %vm278, %v345, %v349
      %v352 = vshrl.u32 %v238, 16
      %v354 = vshll.u32 %v238, 16
      %v356 = vrot.slane %v354, 1
      %v357 = vor.u32 %v352, %v356
      %v359 = vshll.u32 %v239, 16
      %v361 = vrot.slane %v359, 1
      %v362 = vsel %vm278, %v357, %v361
      %v364 = vshrl.u32 %v240, 16
      %v366 = vshll.u32 %v240, 16
      %v368 = vrot.slane %v366, 1
      %v369 = vor.u32 %v364, %v368
      %v371 = vshll.u32 %v241, 16
      %v373 = vrot.slane %v371, 1
      %v374 = vsel %vm278, %v369, %v373
      %v376 = vshrl.u32 %v242, 16
      %v378 = vshll.u32 %v242, 16
      %v380 = vrot.slane %v378, 1
      %v381 = vor.u32 %v376, %v380
      %v383 = vshll.u32 %v243, 16
      %v385 = vrot.slane %v383, 1
      %v386 = vsel %vm278, %v381, %v385
      %v388 = vshrl.u32 %v244, 16
      %v390 = vshll.u32 %v244, 16
      %v392 = vrot.slane %v390, 1
      %v393 = vor.u32 %v388, %v392
      %v395 = vshll.u32 %v245, 16
      %v397 = vrot.slane %v395, 1
      %v398 = vsel %vm278, %v393, %v397
      %v400 = vshrl.u32 %v246, 16
      %v402 = vshll.u32 %v246, 16
      %v404 = vrot.slane %v402, 1
      %v405 = vor.u32 %v400, %v404
      %v407 = vshll.u32 %v247, 16
      %v409 = vrot.slane %v407, 1
      %v410 = vsel %vm278, %v405, %v409
      %v412 = vshrl.u32 %v248, 16
      %v414 = vshll.u32 %v248, 16
      %v416 = vrot.slane %v414, 1
      %v417 = vor.u32 %v412, %v416
      %v419 = vshll.u32 %v249, 16
      %v421 = vrot.slane %v419, 1
      %v422 = vsel %vm278, %v417, %v421
      %v424 = vshrl.u32 %v250, 16
      %v426 = vshll.u32 %v250, 16
      %v428 = vrot.slane %v426, 1
      %v429 = vor.u32 %v424, %v428
      %v431 = vshll.u32 %v251, 16
      %v433 = vrot.slane %v431, 1
      %v434 = vsel %vm278, %v429, %v433
      %v436 = vshrl.u32 %v252, 16
      %v438 = vshll.u32 %v252, 16
      %v440 = vrot.slane %v438, 1
      %v441 = vor.u32 %v436, %v440
      %v443 = vshll.u32 %v253, 16
      %v445 = vrot.slane %v443, 1
      %v446 = vsel %vm278, %v441, %v445
      %v448 = vshrl.u32 %v254, 16
      %v450 = vshll.u32 %v254, 16
      %v452 = vrot.slane %v450, 1
      %v453 = vor.u32 %v448, %v452
      %v455 = vshll.u32 %v255, 16
      %v457 = vrot.slane %v455, 1
      %v458 = vsel %vm278, %v453, %v457
      %v460 = vshrl.u32 %v256, 16
      %v462 = vshll.u32 %v256, 16
      %v464 = vrot.slane %v462, 1
      %v465 = vor.u32 %v460, %v464
      %v467 = vshll.u32 %v257, 16
      %v469 = vrot.slane %v467, 1
      %v470 = vsel %vm278, %v465, %v469
      %s487 = scalar_lea.vmem %s1, 64
      %v488 = vld [vmem:[%s487] sm:$0xf]
      %v489 = vld [vmem:[%s487 + $0x4] sm:$0xf]
      %v490 = vld [vmem:[%s487 + $0x8] sm:$0xf]
      %v491 = vld [vmem:[%s487 + $0xc] sm:$0xf]
      %v492 = vld [vmem:[%s487 + $0x10] sm:$0xf]
      %v493 = vld [vmem:[%s487 + $0x14] sm:$0xf]
      %v494 = vld [vmem:[%s487 + $0x18] sm:$0xf]
      %v495 = vld [vmem:[%s487 + $0x1c] sm:$0xf]
      %v496 = vld [vmem:[%s487 + $0x20] sm:$0xf]
      %v497 = vld [vmem:[%s487 + $0x24] sm:$0xf]
      %v498 = vld [vmem:[%s487 + $0x28] sm:$0xf]
      %v499 = vld [vmem:[%s487 + $0x2c] sm:$0xf]
      %v500 = vld [vmem:[%s487 + $0x30] sm:$0xf]
      %v501 = vld [vmem:[%s487 + $0x34] sm:$0xf]
      %v502 = vld [vmem:[%s487 + $0x38] sm:$0xf]
      %v503 = vld [vmem:[%s487 + $0x3c] sm:$0xf]
      %v520 = vunpack.c.l.b16 %v488
      %v521 = vunpack.c.l.b16 %v489
      %v522 = vunpack.c.l.b16 %v490
      %v523 = vunpack.c.l.b16 %v491
      %v524 = vunpack.c.l.b16 %v492
      %v525 = vunpack.c.l.b16 %v493
      %v526 = vunpack.c.l.b16 %v494
      %v527 = vunpack.c.l.b16 %v495
      %v528 = vunpack.c.l.b16 %v496
      %v529 = vunpack.c.l.b16 %v497
      %v530 = vunpack.c.l.b16 %v498
      %v531 = vunpack.c.l.b16 %v499
      %v532 = vunpack.c.l.b16 %v500
      %v533 = vunpack.c.l.b16 %v501
      %v534 = vunpack.c.l.b16 %v502
      %v535 = vunpack.c.l.b16 %v503
      %v536 = vpack.c.b16 %v521, %v520
      %v537 = vpack.c.b16 %v523, %v522
      %v538 = vpack.c.b16 %v525, %v524
      %v539 = vpack.c.b16 %v527, %v526
      %v540 = vpack.c.b16 %v529, %v528
      %v541 = vpack.c.b16 %v531, %v530
      %v542 = vpack.c.b16 %v533, %v532
      %v543 = vpack.c.b16 %v535, %v534
      %552 = vmatprep.subr.bf16.mxu0 0
      %553 = vmatpush1.bf16.msra.mxu0 %v536
      %554 = vmatprep.subr.bf16.mxu0 0
      %555 = vmatpush1.bf16.msra.mxu0 %v537
      %556 = vmatprep.subr.bf16.mxu0 0
      %557 = vmatpush1.bf16.msra.mxu0 %v538
      %558 = vmatprep.subr.bf16.mxu0 0
      %559 = vmatpush1.bf16.msra.mxu0 %v539
      %560 = vmatprep.subr.bf16.mxu0 0
      %561 = vmatpush1.bf16.msra.mxu0 %v540
      %562 = vmatprep.subr.bf16.mxu0 0
      %563 = vmatpush1.bf16.msra.mxu0 %v541
      %564 = vmatprep.subr.bf16.mxu0 0
      %565 = vmatpush1.bf16.msra.mxu0 %v542
      %566 = vmatprep.subr.bf16.mxu0 0
      %567 = vmatpush1.bf16.msra.mxu0 %v543
      %568 = vmatprep.subr.bf16.mxu0 0
      %569 = vmatpush1.bf16.msra.mxu0 0
      %570 = vmatprep.subr.bf16.mxu0 0
      %571 = vmatpush1.bf16.msra.mxu0 0
      %572 = vmatprep.subr.bf16.mxu0 0
      %573 = vmatpush1.bf16.msra.mxu0 0
      %574 = vmatprep.subr.bf16.mxu0 0
      %575 = vmatpush1.bf16.msra.mxu0 0
      %576 = vmatprep.subr.bf16.mxu0 0
      %577 = vmatpush1.bf16.msra.mxu0 0
      %578 = vmatprep.subr.bf16.mxu0 0
      %579 = vmatpush1.bf16.msra.mxu0 0
      %580 = vmatprep.subr.bf16.mxu0 0
      %581 = vmatpush1.bf16.msra.mxu0 0
      %582 = vmatprep.subr.bf16.mxu0 0
      %583 = vmatpush1.bf16.msra.mxu0 0
      %584 = vmatprep.mubr.bf16.mxu0 0
      %585 = vmatmul.mubr.bf16.gmra.mrb[0].mxu0 %v290
      %v586 = vpop.f32.mrb[0].mxu0
      %v587 = vadd.f32 0.0, %v586
      %v588 = vpop.f32.mrb[0].mxu0
      %v589 = vpop.f32.mrb[0].mxu0
      %v590 = vadd.f32 0.0, %v589
      %v591 = vpop.f32.mrb[0].mxu0
      %592 = vmatprep.mubr.bf16.mxu0 0
      %593 = vmatmul.mubr.bf16.gmra.mrb[0].mxu0 %v302
      %v594 = vpop.f32.mrb[0].mxu0
      %v595 = vadd.f32 0.0, %v594
      %v596 = vpop.f32.mrb[0].mxu0
      %v597 = vpop.f32.mrb[0].mxu0
      %v598 = vadd.f32 0.0, %v597
      %v599 = vpop.f32.mrb[0].mxu0
      %600 = vmatprep.mubr.bf16.mxu0 0
      %601 = vmatmul.mubr.bf16.gmra.mrb[0].mxu0 %v314
      %v602 = vpop.f32.mrb[0].mxu0
      %v603 = vadd.f32 0.0, %v602
      %v604 = vpop.f32.mrb[0].mxu0
      %v605 = vpop.f32.mrb[0].mxu0
      %v606 = vadd.f32 0.0, %v605
      %v607 = vpop.f32.mrb[0].mxu0
      %608 = vmatprep.mubr.bf16.mxu0 0
      %609 = vmatmul.mubr.bf16.gmra.mrb[0].mxu0 %v326
      %v610 = vpop.f32.mrb[0].mxu0
      %v611 = vadd.f32 0.0, %v610
      %v612 = vpop.f32.mrb[0].mxu0
      %v613 = vpop.f32.mrb[0].mxu0
      %v614 = vadd.f32 0.0, %v613
      %v615 = vpop.f32.mrb[0].mxu0
      %616 = vmatprep.mubr.bf16.mxu0 0
      %617 = vmatmul.mubr.bf16.gmra.mrb[0].mxu0 %v338
      %v618 = vpop.f32.mrb[0].mxu0
      %v619 = vadd.f32 0.0, %v618
      %v620 = vpop.f32.mrb[0].mxu0
      %v621 = vpop.f32.mrb[0].mxu0
      %v622 = vadd.f32 0.0, %v621
      %v623 = vpop.f32.mrb[0].mxu0
      %624 = vmatprep.mubr.bf16.mxu0 0
      %625 = vmatmul.mubr.bf16.gmra.mrb[0].mxu0 %v350
      %v626 = vpop.f32.mrb[0].mxu0
      %v627 = vadd.f32 0.0, %v626
      %v628 = vpop.f32.mrb[0].mxu0
      %v629 = vpop.f32.mrb[0].mxu0
      %v630 = vadd.f32 0.0, %v629
      %v631 = vpop.f32.mrb[0].mxu0
      %632 = vmatprep.mubr.bf16.mxu0 0
      %633 = vmatmul.mubr.bf16.gmra.mrb[0].mxu0 %v362
      %v634 = vpop.f32.mrb[0].mxu0
      %v635 = vadd.f32 0.0, %v634
      %v636 = vpop.f32.mrb[0].mxu0
      %v637 = vpop.f32.mrb[0].mxu0
      %v638 = vadd.f32 0.0, %v637
      %v639 = vpop.f32.mrb[0].mxu0
      %640 = vmatprep.mubr.bf16.mxu0 0
      %641 = vmatmul.mubr.bf16.gmra.mrb[0].mxu0 %v374
      %v642 = vpop.f32.mrb[0].mxu0
      %v643 = vadd.f32 0.0, %v642
      %v644 = vpop.f32.mrb[0].mxu0
      %v645 = vpop.f32.mrb[0].mxu0
      %v646 = vadd.f32 0.0, %v645
      %v647 = vpop.f32.mrb[0].mxu0
      %648 = vmatprep.mubr.bf16.mxu0 0
      %649 = vmatmul.mubr.bf16.gmra.mrb[0].mxu0 %v386
      %v650 = vpop.f32.mrb[0].mxu0
      %v651 = vadd.f32 0.0, %v650
      %v652 = vpop.f32.mrb[0].mxu0
      %v653 = vpop.f32.mrb[0].mxu0
      %v654 = vadd.f32 0.0, %v653
      %v655 = vpop.f32.mrb[0].mxu0
      %656 = vmatprep.mubr.bf16.mxu0 0
      %657 = vmatmul.mubr.bf16.gmra.mrb[0].mxu0 %v398
      %v658 = vpop.f32.mrb[0].mxu0
      %v659 = vadd.f32 0.0, %v658
      %v660 = vpop.f32.mrb[0].mxu0
      %v661 = vpop.f32.mrb[0].mxu0
      %v662 = vadd.f32 0.0, %v661
      %v663 = vpop.f32.mrb[0].mxu0
      %664 = vmatprep.mubr.bf16.mxu0 0
      %665 = vmatmul.mubr.bf16.gmra.mrb[0].mxu0 %v410
      %v666 = vpop.f32.mrb[0].mxu0
      %v667 = vadd.f32 0.0, %v666
      %v668 = vpop.f32.mrb[0].mxu0
      %v669 = vpop.f32.mrb[0].mxu0
      %v670 = vadd.f32 0.0, %v669
      %v671 = vpop.f32.mrb[0].mxu0
      %672 = vmatprep.mubr.bf16.mxu0 0
      %673 = vmatmul.mubr.bf16.gmra.mrb[0].mxu0 %v422
      %v674 = vpop.f32.mrb[0].mxu0
      %v675 = vadd.f32 0.0, %v674
      %v676 = vpop.f32.mrb[0].mxu0
      %v677 = vpop.f32.mrb[0].mxu0
      %v678 = vadd.f32 0.0, %v677
      %v679 = vpop.f32.mrb[0].mxu0
      %680 = vmatprep.mubr.bf16.mxu0 0
      %681 = vmatmul.mubr.bf16.gmra.mrb[0].mxu0 %v434
      %v682 = vpop.f32.mrb[0].mxu0
      %v683 = vadd.f32 0.0, %v682
      %v684 = vpop.f32.mrb[0].mxu0
      %v685 = vpop.f32.mrb[0].mxu0
      %v686 = vadd.f32 0.0, %v685
      %v687 = vpop.f32.mrb[0].mxu0
      %688 = vmatprep.mubr.bf16.mxu0 0
      %689 = vmatmul.mubr.bf16.gmra.mrb[0].mxu0 %v446
      %v690 = vpop.f32.mrb[0].mxu0
      %v691 = vadd.f32 0.0, %v690
      %v692 = vpop.f32.mrb[0].mxu0
      %v693 = vpop.f32.mrb[0].mxu0
      %v694 = vadd.f32 0.0, %v693
      %v695 = vpop.f32.mrb[0].mxu0
      %696 = vmatprep.mubr.bf16.mxu0 0
      %697 = vmatmul.mubr.bf16.gmra.mrb[0].mxu0 %v458
      %v698 = vpop.f32.mrb[0].mxu0
      %v699 = vadd.f32 0.0, %v698
      %v700 = vpop.f32.mrb[0].mxu0
      %v701 = vpop.f32.mrb[0].mxu0
      %v702 = vadd.f32 0.0, %v701
      %v703 = vpop.f32.mrb[0].mxu0
      %704 = vmatprep.mubr.bf16.mxu0 0
      %705 = vmatmul.mubr.bf16.gmra.mrb[0].mxu0 %v470
      %v706 = vpop.f32.mrb[0].mxu0
      %v707 = vadd.f32 0.0, %v706
      %v708 = vpop.f32.mrb[0].mxu0
      %v709 = vpop.f32.mrb[0].mxu0
      %v710 = vadd.f32 0.0, %v709
      %v711 = vpop.f32.mrb[0].mxu0
      %712 = vdwg.mxu0
      %v729 = vunpack.c.l.b16 %v262
      %v730 = vunpack.c.l.b16 %v263
      %v731 = vunpack.c.l.b16 %v264
      %v732 = vunpack.c.l.b16 %v265
      %v733 = vunpack.c.l.b16 %v266
      %v734 = vunpack.c.l.b16 %v267
      %v735 = vunpack.c.l.b16 %v268
      %v736 = vunpack.c.l.b16 %v269
      %v737 = vunpack.c.l.b16 %v270
      %v738 = vunpack.c.l.b16 %v271
      %v739 = vunpack.c.l.b16 %v272
      %v740 = vunpack.c.l.b16 %v273
      %v741 = vunpack.c.l.b16 %v274
      %v742 = vunpack.c.l.b16 %v275
      %v743 = vunpack.c.l.b16 %v276
      %v744 = vunpack.c.l.b16 %v277
      %v745 = vpack.c.b16 %v730, %v729
      %v746 = vpack.c.b16 %v732, %v731
      %v747 = vpack.c.b16 %v734, %v733
      %v748 = vpack.c.b16 %v736, %v735
      %v749 = vpack.c.b16 %v738, %v737
      %v750 = vpack.c.b16 %v740, %v739
      %v751 = vpack.c.b16 %v742, %v741
      %v752 = vpack.c.b16 %v744, %v743
      %761 = vmatprep.subr.bf16.mxu0 0
      %762 = vmatpush1.bf16.msra.mxu0 %v745
      %763 = vmatprep.subr.bf16.mxu0 0
      %764 = vmatpush1.bf16.msra.mxu0 %v746
      %765 = vmatprep.subr.bf16.mxu0 0
      %766 = vmatpush1.bf16.msra.mxu0 %v747
      %767 = vmatprep.subr.bf16.mxu0 0
      %768 = vmatpush1.bf16.msra.mxu0 %v748
      %769 = vmatprep.subr.bf16.mxu0 0
      %770 = vmatpush1.bf16.msra.mxu0 %v749
      %771 = vmatprep.subr.bf16.mxu0 0
      %772 = vmatpush1.bf16.msra.mxu0 %v750
      %773 = vmatprep.subr.bf16.mxu0 0
      %774 = vmatpush1.bf16.msra.mxu0 %v751
      %775 = vmatprep.subr.bf16.mxu0 0
      %776 = vmatpush1.bf16.msra.mxu0 %v752
      %777 = vmatprep.subr.bf16.mxu0 0
      %778 = vmatpush1.bf16.msra.mxu0 0
      %779 = vmatprep.subr.bf16.mxu0 0
      %780 = vmatpush1.bf16.msra.mxu0 0
      %781 = vmatprep.subr.bf16.mxu0 0
      %782 = vmatpush1.bf16.msra.mxu0 0
      %783 = vmatprep.subr.bf16.mxu0 0
      %784 = vmatpush1.bf16.msra.mxu0 0
      %785 = vmatprep.subr.bf16.mxu0 0
      %786 = vmatpush1.bf16.msra.mxu0 0
      %787 = vmatprep.subr.bf16.mxu0 0
      %788 = vmatpush1.bf16.msra.mxu0 0
      %789 = vmatprep.subr.bf16.mxu0 0
      %790 = vmatpush1.bf16.msra.mxu0 0
      %791 = vmatprep.subr.bf16.mxu0 0
      %792 = vmatpush1.bf16.msra.mxu0 0
      %793 = vmatprep.mubr.bf16.mxu0 0
      %794 = vmatmul.mubr.bf16.gmra.mrb[0].mxu0 %v226
      %v795 = vpop.f32.mrb[0].mxu0
      %v796 = vadd.f32 %v587, %v795
      %v797 = vpop.f32.mrb[0].mxu0
      %v798 = vpop.f32.mrb[0].mxu0
      %v799 = vadd.f32 %v590, %v798
      %v800 = vpop.f32.mrb[0].mxu0
      %801 = vmatprep.mubr.bf16.mxu0 0
      %802 = vmatmul.mubr.bf16.gmra.mrb[0].mxu0 %v228
      %v803 = vpop.f32.mrb[0].mxu0
      %v804 = vadd.f32 %v595, %v803
      %v805 = vpop.f32.mrb[0].mxu0
      %v806 = vpop.f32.mrb[0].mxu0
      %v807 = vadd.f32 %v598, %v806
      %v808 = vpop.f32.mrb[0].mxu0
      %809 = vmatprep.mubr.bf16.mxu0 0
      %810 = vmatmul.mubr.bf16.gmra.mrb[0].mxu0 %v230
      %v811 = vpop.f32.mrb[0].mxu0
      %v812 = vadd.f32 %v603, %v811
      %v813 = vpop.f32.mrb[0].mxu0
      %v814 = vpop.f32.mrb[0].mxu0
      %v815 = vadd.f32 %v606, %v814
      %v816 = vpop.f32.mrb[0].mxu0
      %817 = vmatprep.mubr.bf16.mxu0 0
      %818 = vmatmul.mubr.bf16.gmra.mrb[0].mxu0 %v232
      %v819 = vpop.f32.mrb[0].mxu0
      %v820 = vadd.f32 %v611, %v819
      %v821 = vpop.f32.mrb[0].mxu0
      %v822 = vpop.f32.mrb[0].mxu0
      %v823 = vadd.f32 %v614, %v822
      %v824 = vpop.f32.mrb[0].mxu0
      %825 = vmatprep.mubr.bf16.mxu0 0
      %826 = vmatmul.mubr.bf16.gmra.mrb[0].mxu0 %v234
      %v827 = vpop.f32.mrb[0].mxu0
      %v828 = vadd.f32 %v619, %v827
      %v829 = vpop.f32.mrb[0].mxu0
      %v830 = vpop.f32.mrb[0].mxu0
      %v831 = vadd.f32 %v622, %v830
      %v832 = vpop.f32.mrb[0].mxu0
      %833 = vmatprep.mubr.bf16.mxu0 0
      %834 = vmatmul.mubr.bf16.gmra.mrb[0].mxu0 %v236
      %v835 = vpop.f32.mrb[0].mxu0
      %v836 = vadd.f32 %v627, %v835
      %v837 = vpop.f32.mrb[0].mxu0
      %v838 = vpop.f32.mrb[0].mxu0
      %v839 = vadd.f32 %v630, %v838
      %v840 = vpop.f32.mrb[0].mxu0
      %841 = vmatprep.mubr.bf16.mxu0 0
      %842 = vmatmul.mubr.bf16.gmra.mrb[0].mxu0 %v238
      %v843 = vpop.f32.mrb[0].mxu0
      %v844 = vadd.f32 %v635, %v843
      %v845 = vpop.f32.mrb[0].mxu0
      %v846 = vpop.f32.mrb[0].mxu0
      %v847 = vadd.f32 %v638, %v846
      %v848 = vpop.f32.mrb[0].mxu0
      %849 = vmatprep.mubr.bf16.mxu0 0
      %850 = vmatmul.mubr.bf16.gmra.mrb[0].mxu0 %v240
      %v851 = vpop.f32.mrb[0].mxu0
      %v852 = vadd.f32 %v643, %v851
      %v853 = vpop.f32.mrb[0].mxu0
      %v854 = vpop.f32.mrb[0].mxu0
      %v855 = vadd.f32 %v646, %v854
      %v856 = vpop.f32.mrb[0].mxu0
      %857 = vmatprep.mubr.bf16.mxu0 0
      %858 = vmatmul.mubr.bf16.gmra.mrb[0].mxu0 %v242
      %v859 = vpop.f32.mrb[0].mxu0
      %v860 = vadd.f32 %v651, %v859
      %v861 = vpop.f32.mrb[0].mxu0
      %v862 = vpop.f32.mrb[0].mxu0
      %v863 = vadd.f32 %v654, %v862
      %v864 = vpop.f32.mrb[0].mxu0
      %865 = vmatprep.mubr.bf16.mxu0 0
      %866 = vmatmul.mubr.bf16.gmra.mrb[0].mxu0 %v244
      %v867 = vpop.f32.mrb[0].mxu0
      %v868 = vadd.f32 %v659, %v867
      %v869 = vpop.f32.mrb[0].mxu0
      %v870 = vpop.f32.mrb[0].mxu0
      %v871 = vadd.f32 %v662, %v870
      %v872 = vpop.f32.mrb[0].mxu0
      %873 = vmatprep.mubr.bf16.mxu0 0
      %874 = vmatmul.mubr.bf16.gmra.mrb[0].mxu0 %v246
      %v875 = vpop.f32.mrb[0].mxu0
      %v876 = vadd.f32 %v667, %v875
      %v877 = vpop.f32.mrb[0].mxu0
      %v878 = vpop.f32.mrb[0].mxu0
      %v879 = vadd.f32 %v670, %v878
      %v880 = vpop.f32.mrb[0].mxu0
      %881 = vmatprep.mubr.bf16.mxu0 0
      %882 = vmatmul.mubr.bf16.gmra.mrb[0].mxu0 %v248
      %v883 = vpop.f32.mrb[0].mxu0
      %v884 = vadd.f32 %v675, %v883
      %v885 = vpop.f32.mrb[0].mxu0
      %v886 = vpop.f32.mrb[0].mxu0
      %v887 = vadd.f32 %v678, %v886
      %v888 = vpop.f32.mrb[0].mxu0
      %889 = vmatprep.mubr.bf16.mxu0 0
      %890 = vmatmul.mubr.bf16.gmra.mrb[0].mxu0 %v250
      %v891 = vpop.f32.mrb[0].mxu0
      %v892 = vadd.f32 %v683, %v891
      %v893 = vpop.f32.mrb[0].mxu0
      %v894 = vpop.f32.mrb[0].mxu0
      %v895 = vadd.f32 %v686, %v894
      %v896 = vpop.f32.mrb[0].mxu0
      %897 = vmatprep.mubr.bf16.mxu0 0
      %898 = vmatmul.mubr.bf16.gmra.mrb[0].mxu0 %v252
      %v899 = vpop.f32.mrb[0].mxu0
      %v900 = vadd.f32 %v691, %v899
      %v901 = vpop.f32.mrb[0].mxu0
      %v902 = vpop.f32.mrb[0].mxu0
      %v903 = vadd.f32 %v694, %v902
      %v904 = vpop.f32.mrb[0].mxu0
      %905 = vmatprep.mubr.bf16.mxu0 0
      %906 = vmatmul.mubr.bf16.gmra.mrb[0].mxu0 %v254
      %v907 = vpop.f32.mrb[0].mxu0
      %v908 = vadd.f32 %v699, %v907
      %v909 = vpop.f32.mrb[0].mxu0
      %v910 = vpop.f32.mrb[0].mxu0
      %v911 = vadd.f32 %v702, %v910
      %v912 = vpop.f32.mrb[0].mxu0
      %913 = vmatprep.mubr.bf16.mxu0 0
      %914 = vmatmul.mubr.bf16.gmra.mrb[0].mxu0 %v256
      %v915 = vpop.f32.mrb[0].mxu0
      %v916 = vadd.f32 %v707, %v915
      %v917 = vpop.f32.mrb[0].mxu0
      %v918 = vpop.f32.mrb[0].mxu0
      %v919 = vadd.f32 %v710, %v918
      %v920 = vpop.f32.mrb[0].mxu0
      %921 = vdwg.mxu0
      %vm954 = vcmask 1046528
      %v955 = vrot.slane %v226, 1
      %v956 = vrot.slane %v227, 1
      %v957 = vsel %vm954, %v955, %v956
      %v958 = vrot.slane %v228, 1
      %v959 = vrot.slane %v229, 1
      %v960 = vsel %vm954, %v958, %v959
      %v961 = vrot.slane %v230, 1
      %v962 = vrot.slane %v231, 1
      %v963 = vsel %vm954, %v961, %v962
      %v964 = vrot.slane %v232, 1
      %v965 = vrot.slane %v233, 1
      %v966 = vsel %vm954, %v964, %v965
      %v967 = vrot.slane %v234, 1
      %v968 = vrot.slane %v235, 1
      %v969 = vsel %vm954, %v967, %v968
      %v970 = vrot.slane %v236, 1
      %v971 = vrot.slane %v237, 1
      %v972 = vsel %vm954, %v970, %v971
      %v973 = vrot.slane %v238, 1
      %v974 = vrot.slane %v239, 1
      %v975 = vsel %vm954, %v973, %v974
      %v976 = vrot.slane %v240, 1
      %v977 = vrot.slane %v241, 1
      %v978 = vsel %vm954, %v976, %v977
      %v979 = vrot.slane %v242, 1
      %v980 = vrot.slane %v243, 1
      %v981 = vsel %vm954, %v979, %v980
      %v982 = vrot.slane %v244, 1
      %v983 = vrot.slane %v245, 1
      %v984 = vsel %vm954, %v982, %v983
      %v985 = vrot.slane %v246, 1
      %v986 = vrot.slane %v247, 1
      %v987 = vsel %vm954, %v985, %v986
      %v988 = vrot.slane %v248, 1
      %v989 = vrot.slane %v249, 1
      %v990 = vsel %vm954, %v988, %v989
      %v991 = vrot.slane %v250, 1
      %v992 = vrot.slane %v251, 1
      %v993 = vsel %vm954, %v991, %v992
      %v994 = vrot.slane %v252, 1
      %v995 = vrot.slane %v253, 1
      %v996 = vsel %vm954, %v994, %v995
      %v997 = vrot.slane %v254, 1
      %v998 = vrot.slane %v255, 1
      %v999 = vsel %vm954, %v997, %v998
      %v1000 = vrot.slane %v256, 1
      %v1001 = vrot.slane %v257, 1
      %v1002 = vsel %vm954, %v1000, %v1001
      %s1019 = scalar_lea.vmem %s1, 128
      %v1020 = vld [vmem:[%s1019] sm:$0xf]
      %v1021 = vld [vmem:[%s1019 + $0x4] sm:$0xf]
      %v1022 = vld [vmem:[%s1019 + $0x8] sm:$0xf]
      %v1023 = vld [vmem:[%s1019 + $0xc] sm:$0xf]
      %v1024 = vld [vmem:[%s1019 + $0x10] sm:$0xf]
      %v1025 = vld [vmem:[%s1019 + $0x14] sm:$0xf]
      %v1026 = vld [vmem:[%s1019 + $0x18] sm:$0xf]
      %v1027 = vld [vmem:[%s1019 + $0x1c] sm:$0xf]
      %v1028 = vld [vmem:[%s1019 + $0x20] sm:$0xf]
      %v1029 = vld [vmem:[%s1019 + $0x24] sm:$0xf]
      %v1030 = vld [vmem:[%s1019 + $0x28] sm:$0xf]
      %v1031 = vld [vmem:[%s1019 + $0x2c] sm:$0xf]
      %v1032 = vld [vmem:[%s1019 + $0x30] sm:$0xf]
      %v1033 = vld [vmem:[%s1019 + $0x34] sm:$0xf]
      %v1034 = vld [vmem:[%s1019 + $0x38] sm:$0xf]
      %v1035 = vld [vmem:[%s1019 + $0x3c] sm:$0xf]
      %v1052 = vunpack.c.l.b16 %v1020
      %v1053 = vunpack.c.l.b16 %v1021
      %v1054 = vunpack.c.l.b16 %v1022
      %v1055 = vunpack.c.l.b16 %v1023
      %v1056 = vunpack.c.l.b16 %v1024
      %v1057 = vunpack.c.l.b16 %v1025
      %v1058 = vunpack.c.l.b16 %v1026
      %v1059 = vunpack.c.l.b16 %v1027
      %v1060 = vunpack.c.l.b16 %v1028
      %v1061 = vunpack.c.l.b16 %v1029
      %v1062 = vunpack.c.l.b16 %v1030
      %v1063 = vunpack.c.l.b16 %v1031
      %v1064 = vunpack.c.l.b16 %v1032
      %v1065 = vunpack.c.l.b16 %v1033
      %v1066 = vunpack.c.l.b16 %v1034
      %v1067 = vunpack.c.l.b16 %v1035
      %v1068 = vpack.c.b16 %v1053, %v1052
      %v1069 = vpack.c.b16 %v1055, %v1054
      %v1070 = vpack.c.b16 %v1057, %v1056
      %v1071 = vpack.c.b16 %v1059, %v1058
      %v1072 = vpack.c.b16 %v1061, %v1060
      %v1073 = vpack.c.b16 %v1063, %v1062
      %v1074 = vpack.c.b16 %v1065, %v1064
      %v1075 = vpack.c.b16 %v1067, %v1066
      %1084 = vmatprep.subr.bf16.mxu0 0
      %1085 = vmatpush1.bf16.msra.mxu0 %v1068
      %1086 = vmatprep.subr.bf16.mxu0 0
      %1087 = vmatpush1.bf16.msra.mxu0 %v1069
      %1088 = vmatprep.subr.bf16.mxu0 0
      %1089 = vmatpush1.bf16.msra.mxu0 %v1070
      %1090 = vmatprep.subr.bf16.mxu0 0
      %1091 = vmatpush1.bf16.msra.mxu0 %v1071
      %1092 = vmatprep.subr.bf16.mxu0 0
      %1093 = vmatpush1.bf16.msra.mxu0 %v1072
      %1094 = vmatprep.subr.bf16.mxu0 0
      %1095 = vmatpush1.bf16.msra.mxu0 %v1073
      %1096 = vmatprep.subr.bf16.mxu0 0
      %1097 = vmatpush1.bf16.msra.mxu0 %v1074
      %1098 = vmatprep.subr.bf16.mxu0 0
      %1099 = vmatpush1.bf16.msra.mxu0 %v1075
      %1100 = vmatprep.subr.bf16.mxu0 0
      %1101 = vmatpush1.bf16.msra.mxu0 0
      %1102 = vmatprep.subr.bf16.mxu0 0
      %1103 = vmatpush1.bf16.msra.mxu0 0
      %1104 = vmatprep.subr.bf16.mxu0 0
      %1105 = vmatpush1.bf16.msra.mxu0 0
      %1106 = vmatprep.subr.bf16.mxu0 0
      %1107 = vmatpush1.bf16.msra.mxu0 0
      %1108 = vmatprep.subr.bf16.mxu0 0
      %1109 = vmatpush1.bf16.msra.mxu0 0
      %1110 = vmatprep.subr.bf16.mxu0 0
      %1111 = vmatpush1.bf16.msra.mxu0 0
      %1112 = vmatprep.subr.bf16.mxu0 0
      %1113 = vmatpush1.bf16.msra.mxu0 0
      %1114 = vmatprep.subr.bf16.mxu0 0
      %1115 = vmatpush1.bf16.msra.mxu0 0
      %1116 = vmatprep.mubr.bf16.mxu0 0
      %1117 = vmatmul.mubr.bf16.gmra.mrb[0].mxu0 %v957
      %v1118 = vpop.f32.mrb[0].mxu0
      %v1119 = vadd.f32 0.0, %v1118
      %v1120 = vpop.f32.mrb[0].mxu0
      %v1121 = vpop.f32.mrb[0].mxu0
      %v1122 = vadd.f32 0.0, %v1121
      %v1123 = vpop.f32.mrb[0].mxu0
      %1124 = vmatprep.mubr.bf16.mxu0 0
      %1125 = vmatmul.mubr.bf16.gmra.mrb[0].mxu0 %v960
      %v1126 = vpop.f32.mrb[0].mxu0
      %v1127 = vadd.f32 0.0, %v1126
      %v1128 = vpop.f32.mrb[0].mxu0
      %v1129 = vpop.f32.mrb[0].mxu0
      %v1130 = vadd.f32 0.0, %v1129
      %v1131 = vpop.f32.mrb[0].mxu0
      %1132 = vmatprep.mubr.bf16.mxu0 0
      %1133 = vmatmul.mubr.bf16.gmra.mrb[0].mxu0 %v963
      %v1134 = vpop.f32.mrb[0].mxu0
      %v1135 = vadd.f32 0.0, %v1134
      %v1136 = vpop.f32.mrb[0].mxu0
      %v1137 = vpop.f32.mrb[0].mxu0
      %v1138 = vadd.f32 0.0, %v1137
      %v1139 = vpop.f32.mrb[0].mxu0
      %1140 = vmatprep.mubr.bf16.mxu0 0
      %1141 = vmatmul.mubr.bf16.gmra.mrb[0].mxu0 %v966
      %v1142 = vpop.f32.mrb[0].mxu0
      %v1143 = vadd.f32 0.0, %v1142
      %v1144 = vpop.f32.mrb[0].mxu0
      %v1145 = vpop.f32.mrb[0].mxu0
      %v1146 = vadd.f32 0.0, %v1145
      %v1147 = vpop.f32.mrb[0].mxu0
      %1148 = vmatprep.mubr.bf16.mxu0 0
      %1149 = vmatmul.mubr.bf16.gmra.mrb[0].mxu0 %v969
      %v1150 = vpop.f32.mrb[0].mxu0
      %v1151 = vadd.f32 0.0, %v1150
      %v1152 = vpop.f32.mrb[0].mxu0
      %v1153 = vpop.f32.mrb[0].mxu0
      %v1154 = vadd.f32 0.0, %v1153
      %v1155 = vpop.f32.mrb[0].mxu0
      %1156 = vmatprep.mubr.bf16.mxu0 0
      %1157 = vmatmul.mubr.bf16.gmra.mrb[0].mxu0 %v972
      %v1158 = vpop.f32.mrb[0].mxu0
      %v1159 = vadd.f32 0.0, %v1158
      %v1160 = vpop.f32.mrb[0].mxu0
      %v1161 = vpop.f32.mrb[0].mxu0
      %v1162 = vadd.f32 0.0, %v1161
      %v1163 = vpop.f32.mrb[0].mxu0
      %1164 = vmatprep.mubr.bf16.mxu0 0
      %1165 = vmatmul.mubr.bf16.gmra.mrb[0].mxu0 %v975
      %v1166 = vpop.f32.mrb[0].mxu0
      %v1167 = vadd.f32 0.0, %v1166
      %v1168 = vpop.f32.mrb[0].mxu0
      %v1169 = vpop.f32.mrb[0].mxu0
      %v1170 = vadd.f32 0.0, %v1169
      %v1171 = vpop.f32.mrb[0].mxu0
      %1172 = vmatprep.mubr.bf16.mxu0 0
      %1173 = vmatmul.mubr.bf16.gmra.mrb[0].mxu0 %v978
      %v1174 = vpop.f32.mrb[0].mxu0
      %v1175 = vadd.f32 0.0, %v1174
      %v1176 = vpop.f32.mrb[0].mxu0
      %v1177 = vpop.f32.mrb[0].mxu0
      %v1178 = vadd.f32 0.0, %v1177
      %v1179 = vpop.f32.mrb[0].mxu0
      %1180 = vmatprep.mubr.bf16.mxu0 0
      %1181 = vmatmul.mubr.bf16.gmra.mrb[0].mxu0 %v981
      %v1182 = vpop.f32.mrb[0].mxu0
      %v1183 = vadd.f32 0.0, %v1182
      %v1184 = vpop.f32.mrb[0].mxu0
      %v1185 = vpop.f32.mrb[0].mxu0
      %v1186 = vadd.f32 0.0, %v1185
      %v1187 = vpop.f32.mrb[0].mxu0
      %1188 = vmatprep.mubr.bf16.mxu0 0
      %1189 = vmatmul.mubr.bf16.gmra.mrb[0].mxu0 %v984
      %v1190 = vpop.f32.mrb[0].mxu0
      %v1191 = vadd.f32 0.0, %v1190
      %v1192 = vpop.f32.mrb[0].mxu0
      %v1193 = vpop.f32.mrb[0].mxu0
      %v1194 = vadd.f32 0.0, %v1193
      %v1195 = vpop.f32.mrb[0].mxu0
      %1196 = vmatprep.mubr.bf16.mxu0 0
      %1197 = vmatmul.mubr.bf16.gmra.mrb[0].mxu0 %v987
      %v1198 = vpop.f32.mrb[0].mxu0
      %v1199 = vadd.f32 0.0, %v1198
      %v1200 = vpop.f32.mrb[0].mxu0
      %v1201 = vpop.f32.mrb[0].mxu0
      %v1202 = vadd.f32 0.0, %v1201
      %v1203 = vpop.f32.mrb[0].mxu0
      %1204 = vmatprep.mubr.bf16.mxu0 0
      %1205 = vmatmul.mubr.bf16.gmra.mrb[0].mxu0 %v990
      %v1206 = vpop.f32.mrb[0].mxu0
      %v1207 = vadd.f32 0.0, %v1206
      %v1208 = vpop.f32.mrb[0].mxu0
      %v1209 = vpop.f32.mrb[0].mxu0
      %v1210 = vadd.f32 0.0, %v1209
      %v1211 = vpop.f32.mrb[0].mxu0
      %1212 = vmatprep.mubr.bf16.mxu0 0
      %1213 = vmatmul.mubr.bf16.gmra.mrb[0].mxu0 %v993
      %v1214 = vpop.f32.mrb[0].mxu0
      %v1215 = vadd.f32 0.0, %v1214
      %v1216 = vpop.f32.mrb[0].mxu0
      %v1217 = vpop.f32.mrb[0].mxu0
      %v1218 = vadd.f32 0.0, %v1217
      %v1219 = vpop.f32.mrb[0].mxu0
      %1220 = vmatprep.mubr.bf16.mxu0 0
      %1221 = vmatmul.mubr.bf16.gmra.mrb[0].mxu0 %v996
      %v1222 = vpop.f32.mrb[0].mxu0
      %v1223 = vadd.f32 0.0, %v1222
      %v1224 = vpop.f32.mrb[0].mxu0
      %v1225 = vpop.f32.mrb[0].mxu0
      %v1226 = vadd.f32 0.0, %v1225
      %v1227 = vpop.f32.mrb[0].mxu0
      %1228 = vmatprep.mubr.bf16.mxu0 0
      %1229 = vmatmul.mubr.bf16.gmra.mrb[0].mxu0 %v999
      %v1230 = vpop.f32.mrb[0].mxu0
      %v1231 = vadd.f32 0.0, %v1230
      %v1232 = vpop.f32.mrb[0].mxu0
      %v1233 = vpop.f32.mrb[0].mxu0
      %v1234 = vadd.f32 0.0, %v1233
      %v1235 = vpop.f32.mrb[0].mxu0
      %1236 = vmatprep.mubr.bf16.mxu0 0
      %1237 = vmatmul.mubr.bf16.gmra.mrb[0].mxu0 %v1002
      %v1238 = vpop.f32.mrb[0].mxu0
      %v1239 = vadd.f32 0.0, %v1238
      %v1240 = vpop.f32.mrb[0].mxu0
      %v1241 = vpop.f32.mrb[0].mxu0
      %v1242 = vadd.f32 0.0, %v1241
      %v1243 = vpop.f32.mrb[0].mxu0
      %1244 = vdwg.mxu0
      %v1245 = vadd.f32 %v796, %v1119
      %v1246 = vadd.f32 %v799, %v1122
      %v1247 = vadd.f32 %v804, %v1127
      %v1248 = vadd.f32 %v807, %v1130
      %v1249 = vadd.f32 %v812, %v1135
      %v1250 = vadd.f32 %v815, %v1138
      %v1251 = vadd.f32 %v820, %v1143
      %v1252 = vadd.f32 %v823, %v1146
      %v1253 = vadd.f32 %v828, %v1151
      %v1254 = vadd.f32 %v831, %v1154
      %v1255 = vadd.f32 %v836, %v1159
      %v1256 = vadd.f32 %v839, %v1162
      %v1257 = vadd.f32 %v844, %v1167
      %v1258 = vadd.f32 %v847, %v1170
      %v1259 = vadd.f32 %v852, %v1175
      %v1260 = vadd.f32 %v855, %v1178
      %v1261 = vadd.f32 %v860, %v1183
      %v1262 = vadd.f32 %v863, %v1186
      %v1263 = vadd.f32 %v868, %v1191
      %v1264 = vadd.f32 %v871, %v1194
      %v1265 = vadd.f32 %v876, %v1199
      %v1266 = vadd.f32 %v879, %v1202
      %v1267 = vadd.f32 %v884, %v1207
      %v1268 = vadd.f32 %v887, %v1210
      %v1269 = vadd.f32 %v892, %v1215
      %v1270 = vadd.f32 %v895, %v1218
      %v1271 = vadd.f32 %v900, %v1223
      %v1272 = vadd.f32 %v903, %v1226
      %v1273 = vadd.f32 %v908, %v1231
      %v1274 = vadd.f32 %v911, %v1234
      %v1275 = vadd.f32 %v916, %v1239
      %v1276 = vadd.f32 %v919, %v1242
      %s1277 = scalar_lea.vmem %s1, 192
      %v1278 = vld [vmem:[%s1277] sm:$0xf]
      %v1279 = vld [vmem:[%s1277 + $0x4] sm:$0xf]
      %v1280 = vld [vmem:[%s1277 + $0x8] sm:$0xf]
      %v1281 = vld [vmem:[%s1277 + $0xc] sm:$0xf]
      %v1282 = vld [vmem:[%s1277 + $0x10] sm:$0xf]
      %v1283 = vld [vmem:[%s1277 + $0x14] sm:$0xf]
      %v1284 = vld [vmem:[%s1277 + $0x18] sm:$0xf]
      %v1285 = vld [vmem:[%s1277 + $0x1c] sm:$0xf]
      %v1286 = vld [vmem:[%s1277 + $0x20] sm:$0xf]
      %v1287 = vld [vmem:[%s1277 + $0x24] sm:$0xf]
      %v1288 = vld [vmem:[%s1277 + $0x28] sm:$0xf]
      %v1289 = vld [vmem:[%s1277 + $0x2c] sm:$0xf]
      %v1290 = vld [vmem:[%s1277 + $0x30] sm:$0xf]
      %v1291 = vld [vmem:[%s1277 + $0x34] sm:$0xf]
      %v1292 = vld [vmem:[%s1277 + $0x38] sm:$0xf]
      %v1293 = vld [vmem:[%s1277 + $0x3c] sm:$0xf]
      %v1310 = vunpack.c.l.b16 %v1278
      %v1311 = vunpack.c.l.b16 %v1279
      %v1312 = vunpack.c.l.b16 %v1280
      %v1313 = vunpack.c.l.b16 %v1281
      %v1314 = vunpack.c.l.b16 %v1282
      %v1315 = vunpack.c.l.b16 %v1283
      %v1316 = vunpack.c.l.b16 %v1284
      %v1317 = vunpack.c.l.b16 %v1285
      %v1318 = vunpack.c.l.b16 %v1286
      %v1319 = vunpack.c.l.b16 %v1287
      %v1320 = vunpack.c.l.b16 %v1288
      %v1321 = vunpack.c.l.b16 %v1289
      %v1322 = vunpack.c.l.b16 %v1290
      %v1323 = vunpack.c.l.b16 %v1291
      %v1324 = vunpack.c.l.b16 %v1292
      %v1325 = vunpack.c.l.b16 %v1293
      %v1326 = vpack.c.b16 %v1311, %v1310
      %v1327 = vpack.c.b16 %v1313, %v1312
      %v1328 = vpack.c.b16 %v1315, %v1314
      %v1329 = vpack.c.b16 %v1317, %v1316
      %v1330 = vpack.c.b16 %v1319, %v1318
      %v1331 = vpack.c.b16 %v1321, %v1320
      %v1332 = vpack.c.b16 %v1323, %v1322
      %v1333 = vpack.c.b16 %v1325, %v1324
      %1342 = vmatprep.subr.bf16.mxu0 0
      %1343 = vmatpush1.bf16.msra.mxu0 %v1326
      %1344 = vmatprep.subr.bf16.mxu0 0
      %1345 = vmatpush1.bf16.msra.mxu0 %v1327
      %1346 = vmatprep.subr.bf16.mxu0 0
      %1347 = vmatpush1.bf16.msra.mxu0 %v1328
      %1348 = vmatprep.subr.bf16.mxu0 0
      %1349 = vmatpush1.bf16.msra.mxu0 %v1329
      %1350 = vmatprep.subr.bf16.mxu0 0
      %1351 = vmatpush1.bf16.msra.mxu0 %v1330
      %1352 = vmatprep.subr.bf16.mxu0 0
      %1353 = vmatpush1.bf16.msra.mxu0 %v1331
      %1354 = vmatprep.subr.bf16.mxu0 0
      %1355 = vmatpush1.bf16.msra.mxu0 %v1332
      %1356 = vmatprep.subr.bf16.mxu0 0
      %1357 = vmatpush1.bf16.msra.mxu0 %v1333
      %1358 = vmatprep.subr.bf16.mxu0 0
      %1359 = vmatpush1.bf16.msra.mxu0 0
      %1360 = vmatprep.subr.bf16.mxu0 0
      %1361 = vmatpush1.bf16.msra.mxu0 0
      %1362 = vmatprep.subr.bf16.mxu0 0
      %1363 = vmatpush1.bf16.msra.mxu0 0
      %1364 = vmatprep.subr.bf16.mxu0 0
      %1365 = vmatpush1.bf16.msra.mxu0 0
      %1366 = vmatprep.subr.bf16.mxu0 0
      %1367 = vmatpush1.bf16.msra.mxu0 0
      %1368 = vmatprep.subr.bf16.mxu0 0
      %1369 = vmatpush1.bf16.msra.mxu0 0
      %1370 = vmatprep.subr.bf16.mxu0 0
      %1371 = vmatpush1.bf16.msra.mxu0 0
      %1372 = vmatprep.subr.bf16.mxu0 0
      %1373 = vmatpush1.bf16.msra.mxu0 0
      %1374 = vmatprep.mubr.bf16.mxu0 0
      %1375 = vmatmul.mubr.bf16.gmra.mrb[0].mxu0 %v228
      %v1376 = vpop.f32.mrb[0].mxu0
      %v1377 = vadd.f32 0.0, %v1376
      %v1378 = vpop.f32.mrb[0].mxu0
      %v1379 = vpop.f32.mrb[0].mxu0
      %v1380 = vadd.f32 0.0, %v1379
      %v1381 = vpop.f32.mrb[0].mxu0
      %1382 = vmatprep.mubr.bf16.mxu0 0
      %1383 = vmatmul.mubr.bf16.gmra.mrb[0].mxu0 %v230
      %v1384 = vpop.f32.mrb[0].mxu0
      %v1385 = vadd.f32 0.0, %v1384
      %v1386 = vpop.f32.mrb[0].mxu0
      %v1387 = vpop.f32.mrb[0].mxu0
      %v1388 = vadd.f32 0.0, %v1387
      %v1389 = vpop.f32.mrb[0].mxu0
      %1390 = vmatprep.mubr.bf16.mxu0 0
      %1391 = vmatmul.mubr.bf16.gmra.mrb[0].mxu0 %v232
      %v1392 = vpop.f32.mrb[0].mxu0
      %v1393 = vadd.f32 0.0, %v1392
      %v1394 = vpop.f32.mrb[0].mxu0
      %v1395 = vpop.f32.mrb[0].mxu0
      %v1396 = vadd.f32 0.0, %v1395
      %v1397 = vpop.f32.mrb[0].mxu0
      %1398 = vmatprep.mubr.bf16.mxu0 0
      %1399 = vmatmul.mubr.bf16.gmra.mrb[0].mxu0 %v234
      %v1400 = vpop.f32.mrb[0].mxu0
      %v1401 = vadd.f32 0.0, %v1400
      %v1402 = vpop.f32.mrb[0].mxu0
      %v1403 = vpop.f32.mrb[0].mxu0
      %v1404 = vadd.f32 0.0, %v1403
      %v1405 = vpop.f32.mrb[0].mxu0
      %1406 = vmatprep.mubr.bf16.mxu0 0
      %1407 = vmatmul.mubr.bf16.gmra.mrb[0].mxu0 %v236
      %v1408 = vpop.f32.mrb[0].mxu0
      %v1409 = vadd.f32 0.0, %v1408
      %v1410 = vpop.f32.mrb[0].mxu0
      %v1411 = vpop.f32.mrb[0].mxu0
      %v1412 = vadd.f32 0.0, %v1411
      %v1413 = vpop.f32.mrb[0].mxu0
      %1414 = vmatprep.mubr.bf16.mxu0 0
      %1415 = vmatmul.mubr.bf16.gmra.mrb[0].mxu0 %v238
      %v1416 = vpop.f32.mrb[0].mxu0
      %v1417 = vadd.f32 0.0, %v1416
      %v1418 = vpop.f32.mrb[0].mxu0
      %v1419 = vpop.f32.mrb[0].mxu0
      %v1420 = vadd.f32 0.0, %v1419
      %v1421 = vpop.f32.mrb[0].mxu0
      %1422 = vmatprep.mubr.bf16.mxu0 0
      %1423 = vmatmul.mubr.bf16.gmra.mrb[0].mxu0 %v240
      %v1424 = vpop.f32.mrb[0].mxu0
      %v1425 = vadd.f32 0.0, %v1424
      %v1426 = vpop.f32.mrb[0].mxu0
      %v1427 = vpop.f32.mrb[0].mxu0
      %v1428 = vadd.f32 0.0, %v1427
      %v1429 = vpop.f32.mrb[0].mxu0
      %1430 = vmatprep.mubr.bf16.mxu0 0
      %1431 = vmatmul.mubr.bf16.gmra.mrb[0].mxu0 %v242
      %v1432 = vpop.f32.mrb[0].mxu0
      %v1433 = vadd.f32 0.0, %v1432
      %v1434 = vpop.f32.mrb[0].mxu0
      %v1435 = vpop.f32.mrb[0].mxu0
      %v1436 = vadd.f32 0.0, %v1435
      %v1437 = vpop.f32.mrb[0].mxu0
      %1438 = vmatprep.mubr.bf16.mxu0 0
      %1439 = vmatmul.mubr.bf16.gmra.mrb[0].mxu0 %v244
      %v1440 = vpop.f32.mrb[0].mxu0
      %v1441 = vadd.f32 0.0, %v1440
      %v1442 = vpop.f32.mrb[0].mxu0
      %v1443 = vpop.f32.mrb[0].mxu0
      %v1444 = vadd.f32 0.0, %v1443
      %v1445 = vpop.f32.mrb[0].mxu0
      %1446 = vmatprep.mubr.bf16.mxu0 0
      %1447 = vmatmul.mubr.bf16.gmra.mrb[0].mxu0 %v246
      %v1448 = vpop.f32.mrb[0].mxu0
      %v1449 = vadd.f32 0.0, %v1448
      %v1450 = vpop.f32.mrb[0].mxu0
      %v1451 = vpop.f32.mrb[0].mxu0
      %v1452 = vadd.f32 0.0, %v1451
      %v1453 = vpop.f32.mrb[0].mxu0
      %1454 = vmatprep.mubr.bf16.mxu0 0
      %1455 = vmatmul.mubr.bf16.gmra.mrb[0].mxu0 %v248
      %v1456 = vpop.f32.mrb[0].mxu0
      %v1457 = vadd.f32 0.0, %v1456
      %v1458 = vpop.f32.mrb[0].mxu0
      %v1459 = vpop.f32.mrb[0].mxu0
      %v1460 = vadd.f32 0.0, %v1459
      %v1461 = vpop.f32.mrb[0].mxu0
      %1462 = vmatprep.mubr.bf16.mxu0 0
      %1463 = vmatmul.mubr.bf16.gmra.mrb[0].mxu0 %v250
      %v1464 = vpop.f32.mrb[0].mxu0
      %v1465 = vadd.f32 0.0, %v1464
      %v1466 = vpop.f32.mrb[0].mxu0
      %v1467 = vpop.f32.mrb[0].mxu0
      %v1468 = vadd.f32 0.0, %v1467
      %v1469 = vpop.f32.mrb[0].mxu0
      %1470 = vmatprep.mubr.bf16.mxu0 0
      %1471 = vmatmul.mubr.bf16.gmra.mrb[0].mxu0 %v252
      %v1472 = vpop.f32.mrb[0].mxu0
      %v1473 = vadd.f32 0.0, %v1472
      %v1474 = vpop.f32.mrb[0].mxu0
      %v1475 = vpop.f32.mrb[0].mxu0
      %v1476 = vadd.f32 0.0, %v1475
      %v1477 = vpop.f32.mrb[0].mxu0
      %1478 = vmatprep.mubr.bf16.mxu0 0
      %1479 = vmatmul.mubr.bf16.gmra.mrb[0].mxu0 %v254
      %v1480 = vpop.f32.mrb[0].mxu0
      %v1481 = vadd.f32 0.0, %v1480
      %v1482 = vpop.f32.mrb[0].mxu0
      %v1483 = vpop.f32.mrb[0].mxu0
      %v1484 = vadd.f32 0.0, %v1483
      %v1485 = vpop.f32.mrb[0].mxu0
      %1486 = vmatprep.mubr.bf16.mxu0 0
      %1487 = vmatmul.mubr.bf16.gmra.mrb[0].mxu0 %v256
      %v1488 = vpop.f32.mrb[0].mxu0
      %v1489 = vadd.f32 0.0, %v1488
      %v1490 = vpop.f32.mrb[0].mxu0
      %v1491 = vpop.f32.mrb[0].mxu0
      %v1492 = vadd.f32 0.0, %v1491
      %v1493 = vpop.f32.mrb[0].mxu0
      %1494 = vmatprep.mubr.bf16.mxu0 0
      %1495 = vmatmul.mubr.bf16.gmra.mrb[0].mxu0 %v258
      %v1496 = vpop.f32.mrb[0].mxu0
      %v1497 = vadd.f32 0.0, %v1496
      %v1498 = vpop.f32.mrb[0].mxu0
      %v1499 = vpop.f32.mrb[0].mxu0
      %v1500 = vadd.f32 0.0, %v1499
      %v1501 = vpop.f32.mrb[0].mxu0
      %1502 = vdwg.mxu0
      %v1503 = vadd.f32 %v1245, %v1377
      %v1504 = vadd.f32 %v1246, %v1380
      %v1505 = vadd.f32 %v1247, %v1385
      %v1506 = vadd.f32 %v1248, %v1388
      %v1507 = vadd.f32 %v1249, %v1393
      %v1508 = vadd.f32 %v1250, %v1396
      %v1509 = vadd.f32 %v1251, %v1401
      %v1510 = vadd.f32 %v1252, %v1404
      %v1511 = vadd.f32 %v1253, %v1409
      %v1512 = vadd.f32 %v1254, %v1412
      %v1513 = vadd.f32 %v1255, %v1417
      %v1514 = vadd.f32 %v1256, %v1420
      %v1515 = vadd.f32 %v1257, %v1425
      %v1516 = vadd.f32 %v1258, %v1428
      %v1517 = vadd.f32 %v1259, %v1433
      %v1518 = vadd.f32 %v1260, %v1436
      %v1519 = vadd.f32 %v1261, %v1441
      %v1520 = vadd.f32 %v1262, %v1444
      %v1521 = vadd.f32 %v1263, %v1449
      %v1522 = vadd.f32 %v1264, %v1452
      %v1523 = vadd.f32 %v1265, %v1457
      %v1524 = vadd.f32 %v1266, %v1460
      %v1525 = vadd.f32 %v1267, %v1465
      %v1526 = vadd.f32 %v1268, %v1468
      %v1527 = vadd.f32 %v1269, %v1473
      %v1528 = vadd.f32 %v1270, %v1476
      %v1529 = vadd.f32 %v1271, %v1481
      %v1530 = vadd.f32 %v1272, %v1484
      %v1531 = vadd.f32 %v1273, %v1489
      %v1532 = vadd.f32 %v1274, %v1492
      %v1533 = vadd.f32 %v1275, %v1497
      %v1534 = vadd.f32 %v1276, %v1500
      %v1536 = vshrl.u32 %v258, 16
      %v1538 = vshll.u32 %v258, 16
      %v1540 = vrot.slane %v1538, 1
      %v1541 = vor.u32 %v1536, %v1540
      %v1543 = vshll.u32 %v259, 16
      %v1545 = vrot.slane %v1543, 1
      %v1546 = vsel %vm278, %v1541, %v1545
      %s1548 = scalar_lea.vmem %s1, 256
      %v1549 = vld [vmem:[%s1548] sm:$0xf]
      %v1550 = vld [vmem:[%s1548 + $0x4] sm:$0xf]
      %v1551 = vld [vmem:[%s1548 + $0x8] sm:$0xf]
      %v1552 = vld [vmem:[%s1548 + $0xc] sm:$0xf]
      %v1553 = vld [vmem:[%s1548 + $0x10] sm:$0xf]
      %v1554 = vld [vmem:[%s1548 + $0x14] sm:$0xf]
      %v1555 = vld [vmem:[%s1548 + $0x18] sm:$0xf]
      %v1556 = vld [vmem:[%s1548 + $0x1c] sm:$0xf]
      %v1557 = vld [vmem:[%s1548 + $0x20] sm:$0xf]
      %v1558 = vld [vmem:[%s1548 + $0x24] sm:$0xf]
      %v1559 = vld [vmem:[%s1548 + $0x28] sm:$0xf]
      %v1560 = vld [vmem:[%s1548 + $0x2c] sm:$0xf]
      %v1561 = vld [vmem:[%s1548 + $0x30] sm:$0xf]
      %v1562 = vld [vmem:[%s1548 + $0x34] sm:$0xf]
      %v1563 = vld [vmem:[%s1548 + $0x38] sm:$0xf]
      %v1564 = vld [vmem:[%s1548 + $0x3c] sm:$0xf]
      %v1581 = vunpack.c.l.b16 %v1549
      %v1582 = vunpack.c.l.b16 %v1550
      %v1583 = vunpack.c.l.b16 %v1551
      %v1584 = vunpack.c.l.b16 %v1552
      %v1585 = vunpack.c.l.b16 %v1553
      %v1586 = vunpack.c.l.b16 %v1554
      %v1587 = vunpack.c.l.b16 %v1555
      %v1588 = vunpack.c.l.b16 %v1556
      %v1589 = vunpack.c.l.b16 %v1557
      %v1590 = vunpack.c.l.b16 %v1558
      %v1591 = vunpack.c.l.b16 %v1559
      %v1592 = vunpack.c.l.b16 %v1560
      %v1593 = vunpack.c.l.b16 %v1561
      %v1594 = vunpack.c.l.b16 %v1562
      %v1595 = vunpack.c.l.b16 %v1563
      %v1596 = vunpack.c.l.b16 %v1564
      %v1597 = vpack.c.b16 %v1582, %v1581
      %v1598 = vpack.c.b16 %v1584, %v1583
      %v1599 = vpack.c.b16 %v1586, %v1585
      %v1600 = vpack.c.b16 %v1588, %v1587
      %v1601 = vpack.c.b16 %v1590, %v1589
      %v1602 = vpack.c.b16 %v1592, %v1591
      %v1603 = vpack.c.b16 %v1594, %v1593
      %v1604 = vpack.c.b16 %v1596, %v1595
      %1613 = vmatprep.subr.bf16.mxu0 0
      %1614 = vmatpush1.bf16.msra.mxu0 %v1597
      %1615 = vmatprep.subr.bf16.mxu0 0
      %1616 = vmatpush1.bf16.msra.mxu0 %v1598
      %1617 = vmatprep.subr.bf16.mxu0 0
      %1618 = vmatpush1.bf16.msra.mxu0 %v1599
      %1619 = vmatprep.subr.bf16.mxu0 0
      %1620 = vmatpush1.bf16.msra.mxu0 %v1600
      %1621 = vmatprep.subr.bf16.mxu0 0
      %1622 = vmatpush1.bf16.msra.mxu0 %v1601
      %1623 = vmatprep.subr.bf16.mxu0 0
      %1624 = vmatpush1.bf16.msra.mxu0 %v1602
      %1625 = vmatprep.subr.bf16.mxu0 0
      %1626 = vmatpush1.bf16.msra.mxu0 %v1603
      %1627 = vmatprep.subr.bf16.mxu0 0
      %1628 = vmatpush1.bf16.msra.mxu0 %v1604
      %1629 = vmatprep.subr.bf16.mxu0 0
      %1630 = vmatpush1.bf16.msra.mxu0 0
      %1631 = vmatprep.subr.bf16.mxu0 0
      %1632 = vmatpush1.bf16.msra.mxu0 0
      %1633 = vmatprep.subr.bf16.mxu0 0
      %1634 = vmatpush1.bf16.msra.mxu0 0
      %1635 = vmatprep.subr.bf16.mxu0 0
      %1636 = vmatpush1.bf16.msra.mxu0 0
      %1637 = vmatprep.subr.bf16.mxu0 0
      %1638 = vmatpush1.bf16.msra.mxu0 0
      %1639 = vmatprep.subr.bf16.mxu0 0
      %1640 = vmatpush1.bf16.msra.mxu0 0
      %1641 = vmatprep.subr.bf16.mxu0 0
      %1642 = vmatpush1.bf16.msra.mxu0 0
      %1643 = vmatprep.subr.bf16.mxu0 0
      %1644 = vmatpush1.bf16.msra.mxu0 0
      %1645 = vmatprep.mubr.bf16.mxu0 0
      %1646 = vmatmul.mubr.bf16.gmra.mrb[0].mxu0 %v302
      %v1647 = vpop.f32.mrb[0].mxu0
      %v1648 = vadd.f32 0.0, %v1647
      %v1649 = vpop.f32.mrb[0].mxu0
      %v1650 = vpop.f32.mrb[0].mxu0
      %v1651 = vadd.f32 0.0, %v1650
      %v1652 = vpop.f32.mrb[0].mxu0
      %1653 = vmatprep.mubr.bf16.mxu0 0
      %1654 = vmatmul.mubr.bf16.gmra.mrb[0].mxu0 %v314
      %v1655 = vpop.f32.mrb[0].mxu0
      %v1656 = vadd.f32 0.0, %v1655
      %v1657 = vpop.f32.mrb[0].mxu0
      %v1658 = vpop.f32.mrb[0].mxu0
      %v1659 = vadd.f32 0.0, %v1658
      %v1660 = vpop.f32.mrb[0].mxu0
      %1661 = vmatprep.mubr.bf16.mxu0 0
      %1662 = vmatmul.mubr.bf16.gmra.mrb[0].mxu0 %v326
      %v1663 = vpop.f32.mrb[0].mxu0
      %v1664 = vadd.f32 0.0, %v1663
      %v1665 = vpop.f32.mrb[0].mxu0
      %v1666 = vpop.f32.mrb[0].mxu0
      %v1667 = vadd.f32 0.0, %v1666
      %v1668 = vpop.f32.mrb[0].mxu0
      %1669 = vmatprep.mubr.bf16.mxu0 0
      %1670 = vmatmul.mubr.bf16.gmra.mrb[0].mxu0 %v338
      %v1671 = vpop.f32.mrb[0].mxu0
      %v1672 = vadd.f32 0.0, %v1671
      %v1673 = vpop.f32.mrb[0].mxu0
      %v1674 = vpop.f32.mrb[0].mxu0
      %v1675 = vadd.f32 0.0, %v1674
      %v1676 = vpop.f32.mrb[0].mxu0
      %1677 = vmatprep.mubr.bf16.mxu0 0
      %1678 = vmatmul.mubr.bf16.gmra.mrb[0].mxu0 %v350
      %v1679 = vpop.f32.mrb[0].mxu0
      %v1680 = vadd.f32 0.0, %v1679
      %v1681 = vpop.f32.mrb[0].mxu0
      %v1682 = vpop.f32.mrb[0].mxu0
      %v1683 = vadd.f32 0.0, %v1682
      %v1684 = vpop.f32.mrb[0].mxu0
      %1685 = vmatprep.mubr.bf16.mxu0 0
      %1686 = vmatmul.mubr.bf16.gmra.mrb[0].mxu0 %v362
      %v1687 = vpop.f32.mrb[0].mxu0
      %v1688 = vadd.f32 0.0, %v1687
      %v1689 = vpop.f32.mrb[0].mxu0
      %v1690 = vpop.f32.mrb[0].mxu0
      %v1691 = vadd.f32 0.0, %v1690
      %v1692 = vpop.f32.mrb[0].mxu0
      %1693 = vmatprep.mubr.bf16.mxu0 0
      %1694 = vmatmul.mubr.bf16.gmra.mrb[0].mxu0 %v374
      %v1695 = vpop.f32.mrb[0].mxu0
      %v1696 = vadd.f32 0.0, %v1695
      %v1697 = vpop.f32.mrb[0].mxu0
      %v1698 = vpop.f32.mrb[0].mxu0
      %v1699 = vadd.f32 0.0, %v1698
      %v1700 = vpop.f32.mrb[0].mxu0
      %1701 = vmatprep.mubr.bf16.mxu0 0
      %1702 = vmatmul.mubr.bf16.gmra.mrb[0].mxu0 %v386
      %v1703 = vpop.f32.mrb[0].mxu0
      %v1704 = vadd.f32 0.0, %v1703
      %v1705 = vpop.f32.mrb[0].mxu0
      %v1706 = vpop.f32.mrb[0].mxu0
      %v1707 = vadd.f32 0.0, %v1706
      %v1708 = vpop.f32.mrb[0].mxu0
      %1709 = vmatprep.mubr.bf16.mxu0 0
      %1710 = vmatmul.mubr.bf16.gmra.mrb[0].mxu0 %v398
      %v1711 = vpop.f32.mrb[0].mxu0
      %v1712 = vadd.f32 0.0, %v1711
      %v1713 = vpop.f32.mrb[0].mxu0
      %v1714 = vpop.f32.mrb[0].mxu0
      %v1715 = vadd.f32 0.0, %v1714
      %v1716 = vpop.f32.mrb[0].mxu0
      %1717 = vmatprep.mubr.bf16.mxu0 0
      %1718 = vmatmul.mubr.bf16.gmra.mrb[0].mxu0 %v410
      %v1719 = vpop.f32.mrb[0].mxu0
      %v1720 = vadd.f32 0.0, %v1719
      %v1721 = vpop.f32.mrb[0].mxu0
      %v1722 = vpop.f32.mrb[0].mxu0
      %v1723 = vadd.f32 0.0, %v1722
      %v1724 = vpop.f32.mrb[0].mxu0
      %1725 = vmatprep.mubr.bf16.mxu0 0
      %1726 = vmatmul.mubr.bf16.gmra.mrb[0].mxu0 %v422
      %v1727 = vpop.f32.mrb[0].mxu0
      %v1728 = vadd.f32 0.0, %v1727
      %v1729 = vpop.f32.mrb[0].mxu0
      %v1730 = vpop.f32.mrb[0].mxu0
      %v1731 = vadd.f32 0.0, %v1730
      %v1732 = vpop.f32.mrb[0].mxu0
      %1733 = vmatprep.mubr.bf16.mxu0 0
      %1734 = vmatmul.mubr.bf16.gmra.mrb[0].mxu0 %v434
      %v1735 = vpop.f32.mrb[0].mxu0
      %v1736 = vadd.f32 0.0, %v1735
      %v1737 = vpop.f32.mrb[0].mxu0
      %v1738 = vpop.f32.mrb[0].mxu0
      %v1739 = vadd.f32 0.0, %v1738
      %v1740 = vpop.f32.mrb[0].mxu0
      %1741 = vmatprep.mubr.bf16.mxu0 0
      %1742 = vmatmul.mubr.bf16.gmra.mrb[0].mxu0 %v446
      %v1743 = vpop.f32.mrb[0].mxu0
      %v1744 = vadd.f32 0.0, %v1743
      %v1745 = vpop.f32.mrb[0].mxu0
      %v1746 = vpop.f32.mrb[0].mxu0
      %v1747 = vadd.f32 0.0, %v1746
      %v1748 = vpop.f32.mrb[0].mxu0
      %1749 = vmatprep.mubr.bf16.mxu0 0
      %1750 = vmatmul.mubr.bf16.gmra.mrb[0].mxu0 %v458
      %v1751 = vpop.f32.mrb[0].mxu0
      %v1752 = vadd.f32 0.0, %v1751
      %v1753 = vpop.f32.mrb[0].mxu0
      %v1754 = vpop.f32.mrb[0].mxu0
      %v1755 = vadd.f32 0.0, %v1754
      %v1756 = vpop.f32.mrb[0].mxu0
      %1757 = vmatprep.mubr.bf16.mxu0 0
      %1758 = vmatmul.mubr.bf16.gmra.mrb[0].mxu0 %v470
      %v1759 = vpop.f32.mrb[0].mxu0
      %v1760 = vadd.f32 0.0, %v1759
      %v1761 = vpop.f32.mrb[0].mxu0
      %v1762 = vpop.f32.mrb[0].mxu0
      %v1763 = vadd.f32 0.0, %v1762
      %v1764 = vpop.f32.mrb[0].mxu0
      %1765 = vmatprep.mubr.bf16.mxu0 0
      %1766 = vmatmul.mubr.bf16.gmra.mrb[0].mxu0 %v1546
      %v1767 = vpop.f32.mrb[0].mxu0
      %v1768 = vadd.f32 0.0, %v1767
      %v1769 = vpop.f32.mrb[0].mxu0
      %v1770 = vpop.f32.mrb[0].mxu0
      %v1771 = vadd.f32 0.0, %v1770
      %v1772 = vpop.f32.mrb[0].mxu0
      %1773 = vdwg.mxu0
      %v1774 = vadd.f32 %v1503, %v1648
      %v1775 = vadd.f32 %v1504, %v1651
      %v1776 = vadd.f32 %v1505, %v1656
      %v1777 = vadd.f32 %v1506, %v1659
      %v1778 = vadd.f32 %v1507, %v1664
      %v1779 = vadd.f32 %v1508, %v1667
      %v1780 = vadd.f32 %v1509, %v1672
      %v1781 = vadd.f32 %v1510, %v1675
      %v1782 = vadd.f32 %v1511, %v1680
      %v1783 = vadd.f32 %v1512, %v1683
      %v1784 = vadd.f32 %v1513, %v1688
      %v1785 = vadd.f32 %v1514, %v1691
      %v1786 = vadd.f32 %v1515, %v1696
      %v1787 = vadd.f32 %v1516, %v1699
      %v1788 = vadd.f32 %v1517, %v1704
      %v1789 = vadd.f32 %v1518, %v1707
      %v1790 = vadd.f32 %v1519, %v1712
      %v1791 = vadd.f32 %v1520, %v1715
      %v1792 = vadd.f32 %v1521, %v1720
      %v1793 = vadd.f32 %v1522, %v1723
      %v1794 = vadd.f32 %v1523, %v1728
      %v1795 = vadd.f32 %v1524, %v1731
      %v1796 = vadd.f32 %v1525, %v1736
      %v1797 = vadd.f32 %v1526, %v1739
      %v1798 = vadd.f32 %v1527, %v1744
      %v1799 = vadd.f32 %v1528, %v1747
      %v1800 = vadd.f32 %v1529, %v1752
      %v1801 = vadd.f32 %v1530, %v1755
      %v1802 = vadd.f32 %v1531, %v1760
      %v1803 = vadd.f32 %v1532, %v1763
      %v1804 = vadd.f32 %v1533, %v1768
      %v1805 = vadd.f32 %v1534, %v1771
      %v1808 = vrot.slane %v258, 1
      %v1809 = vrot.slane %v259, 1
      %v1810 = vsel %vm954, %v1808, %v1809
      %s1812 = scalar_lea.vmem %s1, 320
      %v1813 = vld [vmem:[%s1812] sm:$0xf]
      %v1814 = vld [vmem:[%s1812 + $0x4] sm:$0xf]
      %v1815 = vld [vmem:[%s1812 + $0x8] sm:$0xf]
      %v1816 = vld [vmem:[%s1812 + $0xc] sm:$0xf]
      %v1817 = vld [vmem:[%s1812 + $0x10] sm:$0xf]
      %v1818 = vld [vmem:[%s1812 + $0x14] sm:$0xf]
      %v1819 = vld [vmem:[%s1812 + $0x18] sm:$0xf]
      %v1820 = vld [vmem:[%s1812 + $0x1c] sm:$0xf]
      %v1821 = vld [vmem:[%s1812 + $0x20] sm:$0xf]
      %v1822 = vld [vmem:[%s1812 + $0x24] sm:$0xf]
      %v1823 = vld [vmem:[%s1812 + $0x28] sm:$0xf]
      %v1824 = vld [vmem:[%s1812 + $0x2c] sm:$0xf]
      %v1825 = vld [vmem:[%s1812 + $0x30] sm:$0xf]
      %v1826 = vld [vmem:[%s1812 + $0x34] sm:$0xf]
      %v1827 = vld [vmem:[%s1812 + $0x38] sm:$0xf]
      %v1828 = vld [vmem:[%s1812 + $0x3c] sm:$0xf]
      %v1845 = vunpack.c.l.b16 %v1813
      %v1846 = vunpack.c.l.b16 %v1814
      %v1847 = vunpack.c.l.b16 %v1815
      %v1848 = vunpack.c.l.b16 %v1816
      %v1849 = vunpack.c.l.b16 %v1817
      %v1850 = vunpack.c.l.b16 %v1818
      %v1851 = vunpack.c.l.b16 %v1819
      %v1852 = vunpack.c.l.b16 %v1820
      %v1853 = vunpack.c.l.b16 %v1821
      %v1854 = vunpack.c.l.b16 %v1822
      %v1855 = vunpack.c.l.b16 %v1823
      %v1856 = vunpack.c.l.b16 %v1824
      %v1857 = vunpack.c.l.b16 %v1825
      %v1858 = vunpack.c.l.b16 %v1826
      %v1859 = vunpack.c.l.b16 %v1827
      %v1860 = vunpack.c.l.b16 %v1828
      %v1861 = vpack.c.b16 %v1846, %v1845
      %v1862 = vpack.c.b16 %v1848, %v1847
      %v1863 = vpack.c.b16 %v1850, %v1849
      %v1864 = vpack.c.b16 %v1852, %v1851
      %v1865 = vpack.c.b16 %v1854, %v1853
      %v1866 = vpack.c.b16 %v1856, %v1855
      %v1867 = vpack.c.b16 %v1858, %v1857
      %v1868 = vpack.c.b16 %v1860, %v1859
      %1877 = vmatprep.subr.bf16.mxu0 0
      %1878 = vmatpush1.bf16.msra.mxu0 %v1861
      %1879 = vmatprep.subr.bf16.mxu0 0
      %1880 = vmatpush1.bf16.msra.mxu0 %v1862
      %1881 = vmatprep.subr.bf16.mxu0 0
      %1882 = vmatpush1.bf16.msra.mxu0 %v1863
      %1883 = vmatprep.subr.bf16.mxu0 0
      %1884 = vmatpush1.bf16.msra.mxu0 %v1864
      %1885 = vmatprep.subr.bf16.mxu0 0
      %1886 = vmatpush1.bf16.msra.mxu0 %v1865
      %1887 = vmatprep.subr.bf16.mxu0 0
      %1888 = vmatpush1.bf16.msra.mxu0 %v1866
      %1889 = vmatprep.subr.bf16.mxu0 0
      %1890 = vmatpush1.bf16.msra.mxu0 %v1867
      %1891 = vmatprep.subr.bf16.mxu0 0
      %1892 = vmatpush1.bf16.msra.mxu0 %v1868
      %1893 = vmatprep.subr.bf16.mxu0 0
      %1894 = vmatpush1.bf16.msra.mxu0 0
      %1895 = vmatprep.subr.bf16.mxu0 0
      %1896 = vmatpush1.bf16.msra.mxu0 0
      %1897 = vmatprep.subr.bf16.mxu0 0
      %1898 = vmatpush1.bf16.msra.mxu0 0
      %1899 = vmatprep.subr.bf16.mxu0 0
      %1900 = vmatpush1.bf16.msra.mxu0 0
      %1901 = vmatprep.subr.bf16.mxu0 0
      %1902 = vmatpush1.bf16.msra.mxu0 0
      %1903 = vmatprep.subr.bf16.mxu0 0
      %1904 = vmatpush1.bf16.msra.mxu0 0
      %1905 = vmatprep.subr.bf16.mxu0 0
      %1906 = vmatpush1.bf16.msra.mxu0 0
      %1907 = vmatprep.subr.bf16.mxu0 0
      %1908 = vmatpush1.bf16.msra.mxu0 0
      %1909 = vmatprep.mubr.bf16.mxu0 0
      %1910 = vmatmul.mubr.bf16.gmra.mrb[0].mxu0 %v960
      %v1911 = vpop.f32.mrb[0].mxu0
      %v1912 = vadd.f32 0.0, %v1911
      %v1913 = vpop.f32.mrb[0].mxu0
      %v1914 = vpop.f32.mrb[0].mxu0
      %v1915 = vadd.f32 0.0, %v1914
      %v1916 = vpop.f32.mrb[0].mxu0
      %1917 = vmatprep.mubr.bf16.mxu0 0
      %1918 = vmatmul.mubr.bf16.gmra.mrb[0].mxu0 %v963
      %v1919 = vpop.f32.mrb[0].mxu0
      %v1920 = vadd.f32 0.0, %v1919
      %v1921 = vpop.f32.mrb[0].mxu0
      %v1922 = vpop.f32.mrb[0].mxu0
      %v1923 = vadd.f32 0.0, %v1922
      %v1924 = vpop.f32.mrb[0].mxu0
      %1925 = vmatprep.mubr.bf16.mxu0 0
      %1926 = vmatmul.mubr.bf16.gmra.mrb[0].mxu0 %v966
      %v1927 = vpop.f32.mrb[0].mxu0
      %v1928 = vadd.f32 0.0, %v1927
      %v1929 = vpop.f32.mrb[0].mxu0
      %v1930 = vpop.f32.mrb[0].mxu0
      %v1931 = vadd.f32 0.0, %v1930
      %v1932 = vpop.f32.mrb[0].mxu0
      %1933 = vmatprep.mubr.bf16.mxu0 0
      %1934 = vmatmul.mubr.bf16.gmra.mrb[0].mxu0 %v969
      %v1935 = vpop.f32.mrb[0].mxu0
      %v1936 = vadd.f32 0.0, %v1935
      %v1937 = vpop.f32.mrb[0].mxu0
      %v1938 = vpop.f32.mrb[0].mxu0
      %v1939 = vadd.f32 0.0, %v1938
      %v1940 = vpop.f32.mrb[0].mxu0
      %1941 = vmatprep.mubr.bf16.mxu0 0
      %1942 = vmatmul.mubr.bf16.gmra.mrb[0].mxu0 %v972
      %v1943 = vpop.f32.mrb[0].mxu0
      %v1944 = vadd.f32 0.0, %v1943
      %v1945 = vpop.f32.mrb[0].mxu0
      %v1946 = vpop.f32.mrb[0].mxu0
      %v1947 = vadd.f32 0.0, %v1946
      %v1948 = vpop.f32.mrb[0].mxu0
      %1949 = vmatprep.mubr.bf16.mxu0 0
      %1950 = vmatmul.mubr.bf16.gmra.mrb[0].mxu0 %v975
      %v1951 = vpop.f32.mrb[0].mxu0
      %v1952 = vadd.f32 0.0, %v1951
      %v1953 = vpop.f32.mrb[0].mxu0
      %v1954 = vpop.f32.mrb[0].mxu0
      %v1955 = vadd.f32 0.0, %v1954
      %v1956 = vpop.f32.mrb[0].mxu0
      %1957 = vmatprep.mubr.bf16.mxu0 0
      %1958 = vmatmul.mubr.bf16.gmra.mrb[0].mxu0 %v978
      %v1959 = vpop.f32.mrb[0].mxu0
      %v1960 = vadd.f32 0.0, %v1959
      %v1961 = vpop.f32.mrb[0].mxu0
      %v1962 = vpop.f32.mrb[0].mxu0
      %v1963 = vadd.f32 0.0, %v1962
      %v1964 = vpop.f32.mrb[0].mxu0
      %1965 = vmatprep.mubr.bf16.mxu0 0
      %1966 = vmatmul.mubr.bf16.gmra.mrb[0].mxu0 %v981
      %v1967 = vpop.f32.mrb[0].mxu0
      %v1968 = vadd.f32 0.0, %v1967
      %v1969 = vpop.f32.mrb[0].mxu0
      %v1970 = vpop.f32.mrb[0].mxu0
      %v1971 = vadd.f32 0.0, %v1970
      %v1972 = vpop.f32.mrb[0].mxu0
      %1973 = vmatprep.mubr.bf16.mxu0 0
      %1974 = vmatmul.mubr.bf16.gmra.mrb[0].mxu0 %v984
      %v1975 = vpop.f32.mrb[0].mxu0
      %v1976 = vadd.f32 0.0, %v1975
      %v1977 = vpop.f32.mrb[0].mxu0
      %v1978 = vpop.f32.mrb[0].mxu0
      %v1979 = vadd.f32 0.0, %v1978
      %v1980 = vpop.f32.mrb[0].mxu0
      %1981 = vmatprep.mubr.bf16.mxu0 0
      %1982 = vmatmul.mubr.bf16.gmra.mrb[0].mxu0 %v987
      %v1983 = vpop.f32.mrb[0].mxu0
      %v1984 = vadd.f32 0.0, %v1983
      %v1985 = vpop.f32.mrb[0].mxu0
      %v1986 = vpop.f32.mrb[0].mxu0
      %v1987 = vadd.f32 0.0, %v1986
      %v1988 = vpop.f32.mrb[0].mxu0
      %1989 = vmatprep.mubr.bf16.mxu0 0
      %1990 = vmatmul.mubr.bf16.gmra.mrb[0].mxu0 %v990
      %v1991 = vpop.f32.mrb[0].mxu0
      %v1992 = vadd.f32 0.0, %v1991
      %v1993 = vpop.f32.mrb[0].mxu0
      %v1994 = vpop.f32.mrb[0].mxu0
      %v1995 = vadd.f32 0.0, %v1994
      %v1996 = vpop.f32.mrb[0].mxu0
      %1997 = vmatprep.mubr.bf16.mxu0 0
      %1998 = vmatmul.mubr.bf16.gmra.mrb[0].mxu0 %v993
      %v1999 = vpop.f32.mrb[0].mxu0
      %v2000 = vadd.f32 0.0, %v1999
      %v2001 = vpop.f32.mrb[0].mxu0
      %v2002 = vpop.f32.mrb[0].mxu0
      %v2003 = vadd.f32 0.0, %v2002
      %v2004 = vpop.f32.mrb[0].mxu0
      %2005 = vmatprep.mubr.bf16.mxu0 0
      %2006 = vmatmul.mubr.bf16.gmra.mrb[0].mxu0 %v996
      %v2007 = vpop.f32.mrb[0].mxu0
      %v2008 = vadd.f32 0.0, %v2007
      %v2009 = vpop.f32.mrb[0].mxu0
      %v2010 = vpop.f32.mrb[0].mxu0
      %v2011 = vadd.f32 0.0, %v2010
      %v2012 = vpop.f32.mrb[0].mxu0
      %2013 = vmatprep.mubr.bf16.mxu0 0
      %2014 = vmatmul.mubr.bf16.gmra.mrb[0].mxu0 %v999
      %v2015 = vpop.f32.mrb[0].mxu0
      %v2016 = vadd.f32 0.0, %v2015
      %v2017 = vpop.f32.mrb[0].mxu0
      %v2018 = vpop.f32.mrb[0].mxu0
      %v2019 = vadd.f32 0.0, %v2018
      %v2020 = vpop.f32.mrb[0].mxu0
      %2021 = vmatprep.mubr.bf16.mxu0 0
      %2022 = vmatmul.mubr.bf16.gmra.mrb[0].mxu0 %v1002
      %v2023 = vpop.f32.mrb[0].mxu0
      %v2024 = vadd.f32 0.0, %v2023
      %v2025 = vpop.f32.mrb[0].mxu0
      %v2026 = vpop.f32.mrb[0].mxu0
      %v2027 = vadd.f32 0.0, %v2026
      %v2028 = vpop.f32.mrb[0].mxu0
      %2029 = vmatprep.mubr.bf16.mxu0 0
      %2030 = vmatmul.mubr.bf16.gmra.mrb[0].mxu0 %v1810
      %v2031 = vpop.f32.mrb[0].mxu0
      %v2032 = vadd.f32 0.0, %v2031
      %v2033 = vpop.f32.mrb[0].mxu0
      %v2034 = vpop.f32.mrb[0].mxu0
      %v2035 = vadd.f32 0.0, %v2034
      %v2036 = vpop.f32.mrb[0].mxu0
      %2037 = vdwg.mxu0
      %v2038 = vadd.f32 %v1774, %v1912
      %v2039 = vadd.f32 %v1775, %v1915
      %v2040 = vadd.f32 %v1776, %v1920
      %v2041 = vadd.f32 %v1777, %v1923
      %v2042 = vadd.f32 %v1778, %v1928
      %v2043 = vadd.f32 %v1779, %v1931
      %v2044 = vadd.f32 %v1780, %v1936
      %v2045 = vadd.f32 %v1781, %v1939
      %v2046 = vadd.f32 %v1782, %v1944
      %v2047 = vadd.f32 %v1783, %v1947
      %v2048 = vadd.f32 %v1784, %v1952
      %v2049 = vadd.f32 %v1785, %v1955
      %v2050 = vadd.f32 %v1786, %v1960
      %v2051 = vadd.f32 %v1787, %v1963
      %v2052 = vadd.f32 %v1788, %v1968
      %v2053 = vadd.f32 %v1789, %v1971
      %v2054 = vadd.f32 %v1790, %v1976
      %v2055 = vadd.f32 %v1791, %v1979
      %v2056 = vadd.f32 %v1792, %v1984
      %v2057 = vadd.f32 %v1793, %v1987
      %v2058 = vadd.f32 %v1794, %v1992
      %v2059 = vadd.f32 %v1795, %v1995
      %v2060 = vadd.f32 %v1796, %v2000
      %v2061 = vadd.f32 %v1797, %v2003
      %v2062 = vadd.f32 %v1798, %v2008
      %v2063 = vadd.f32 %v1799, %v2011
      %v2064 = vadd.f32 %v1800, %v2016
      %v2065 = vadd.f32 %v1801, %v2019
      %v2066 = vadd.f32 %v1802, %v2024
      %v2067 = vadd.f32 %v1803, %v2027
      %v2068 = vadd.f32 %v1804, %v2032
      %v2069 = vadd.f32 %v1805, %v2035
      %s2070 = scalar_lea.vmem %s1, 384
      %v2071 = vld [vmem:[%s2070] sm:$0xf]
      %v2072 = vld [vmem:[%s2070 + $0x4] sm:$0xf]
      %v2073 = vld [vmem:[%s2070 + $0x8] sm:$0xf]
      %v2074 = vld [vmem:[%s2070 + $0xc] sm:$0xf]
      %v2075 = vld [vmem:[%s2070 + $0x10] sm:$0xf]
      %v2076 = vld [vmem:[%s2070 + $0x14] sm:$0xf]
      %v2077 = vld [vmem:[%s2070 + $0x18] sm:$0xf]
      %v2078 = vld [vmem:[%s2070 + $0x1c] sm:$0xf]
      %v2079 = vld [vmem:[%s2070 + $0x20] sm:$0xf]
      %v2080 = vld [vmem:[%s2070 + $0x24] sm:$0xf]
      %v2081 = vld [vmem:[%s2070 + $0x28] sm:$0xf]
      %v2082 = vld [vmem:[%s2070 + $0x2c] sm:$0xf]
      %v2083 = vld [vmem:[%s2070 + $0x30] sm:$0xf]
      %v2084 = vld [vmem:[%s2070 + $0x34] sm:$0xf]
      %v2085 = vld [vmem:[%s2070 + $0x38] sm:$0xf]
      %v2086 = vld [vmem:[%s2070 + $0x3c] sm:$0xf]
      %v2103 = vunpack.c.l.b16 %v2071
      %v2104 = vunpack.c.l.b16 %v2072
      %v2105 = vunpack.c.l.b16 %v2073
      %v2106 = vunpack.c.l.b16 %v2074
      %v2107 = vunpack.c.l.b16 %v2075
      %v2108 = vunpack.c.l.b16 %v2076
      %v2109 = vunpack.c.l.b16 %v2077
      %v2110 = vunpack.c.l.b16 %v2078
      %v2111 = vunpack.c.l.b16 %v2079
      %v2112 = vunpack.c.l.b16 %v2080
      %v2113 = vunpack.c.l.b16 %v2081
      %v2114 = vunpack.c.l.b16 %v2082
      %v2115 = vunpack.c.l.b16 %v2083
      %v2116 = vunpack.c.l.b16 %v2084
      %v2117 = vunpack.c.l.b16 %v2085
      %v2118 = vunpack.c.l.b16 %v2086
      %v2119 = vpack.c.b16 %v2104, %v2103
      %v2120 = vpack.c.b16 %v2106, %v2105
      %v2121 = vpack.c.b16 %v2108, %v2107
      %v2122 = vpack.c.b16 %v2110, %v2109
      %v2123 = vpack.c.b16 %v2112, %v2111
      %v2124 = vpack.c.b16 %v2114, %v2113
      %v2125 = vpack.c.b16 %v2116, %v2115
      %v2126 = vpack.c.b16 %v2118, %v2117
      %2135 = vmatprep.subr.bf16.mxu0 0
      %2136 = vmatpush1.bf16.msra.mxu0 %v2119
      %2137 = vmatprep.subr.bf16.mxu0 0
      %2138 = vmatpush1.bf16.msra.mxu0 %v2120
      %2139 = vmatprep.subr.bf16.mxu0 0
      %2140 = vmatpush1.bf16.msra.mxu0 %v2121
      %2141 = vmatprep.subr.bf16.mxu0 0
      %2142 = vmatpush1.bf16.msra.mxu0 %v2122
      %2143 = vmatprep.subr.bf16.mxu0 0
      %2144 = vmatpush1.bf16.msra.mxu0 %v2123
      %2145 = vmatprep.subr.bf16.mxu0 0
      %2146 = vmatpush1.bf16.msra.mxu0 %v2124
      %2147 = vmatprep.subr.bf16.mxu0 0
      %2148 = vmatpush1.bf16.msra.mxu0 %v2125
      %2149 = vmatprep.subr.bf16.mxu0 0
      %2150 = vmatpush1.bf16.msra.mxu0 %v2126
      %2151 = vmatprep.subr.bf16.mxu0 0
      %2152 = vmatpush1.bf16.msra.mxu0 0
      %2153 = vmatprep.subr.bf16.mxu0 0
      %2154 = vmatpush1.bf16.msra.mxu0 0
      %2155 = vmatprep.subr.bf16.mxu0 0
      %2156 = vmatpush1.bf16.msra.mxu0 0
      %2157 = vmatprep.subr.bf16.mxu0 0
      %2158 = vmatpush1.bf16.msra.mxu0 0
      %2159 = vmatprep.subr.bf16.mxu0 0
      %2160 = vmatpush1.bf16.msra.mxu0 0
      %2161 = vmatprep.subr.bf16.mxu0 0
      %2162 = vmatpush1.bf16.msra.mxu0 0
      %2163 = vmatprep.subr.bf16.mxu0 0
      %2164 = vmatpush1.bf16.msra.mxu0 0
      %2165 = vmatprep.subr.bf16.mxu0 0
      %2166 = vmatpush1.bf16.msra.mxu0 0
      %2167 = vmatprep.mubr.bf16.mxu0 0
      %2168 = vmatmul.mubr.bf16.gmra.mrb[0].mxu0 %v230
      %v2169 = vpop.f32.mrb[0].mxu0
      %v2170 = vadd.f32 0.0, %v2169
      %v2171 = vpop.f32.mrb[0].mxu0
      %v2172 = vpop.f32.mrb[0].mxu0
      %v2173 = vadd.f32 0.0, %v2172
      %v2174 = vpop.f32.mrb[0].mxu0
      %2175 = vmatprep.mubr.bf16.mxu0 0
      %2176 = vmatmul.mubr.bf16.gmra.mrb[0].mxu0 %v232
      %v2177 = vpop.f32.mrb[0].mxu0
      %v2178 = vadd.f32 0.0, %v2177
      %v2179 = vpop.f32.mrb[0].mxu0
      %v2180 = vpop.f32.mrb[0].mxu0
      %v2181 = vadd.f32 0.0, %v2180
      %v2182 = vpop.f32.mrb[0].mxu0
      %2183 = vmatprep.mubr.bf16.mxu0 0
      %2184 = vmatmul.mubr.bf16.gmra.mrb[0].mxu0 %v234
      %v2185 = vpop.f32.mrb[0].mxu0
      %v2186 = vadd.f32 0.0, %v2185
      %v2187 = vpop.f32.mrb[0].mxu0
      %v2188 = vpop.f32.mrb[0].mxu0
      %v2189 = vadd.f32 0.0, %v2188
      %v2190 = vpop.f32.mrb[0].mxu0
      %2191 = vmatprep.mubr.bf16.mxu0 0
      %2192 = vmatmul.mubr.bf16.gmra.mrb[0].mxu0 %v236
      %v2193 = vpop.f32.mrb[0].mxu0
      %v2194 = vadd.f32 0.0, %v2193
      %v2195 = vpop.f32.mrb[0].mxu0
      %v2196 = vpop.f32.mrb[0].mxu0
      %v2197 = vadd.f32 0.0, %v2196
      %v2198 = vpop.f32.mrb[0].mxu0
      %2199 = vmatprep.mubr.bf16.mxu0 0
      %2200 = vmatmul.mubr.bf16.gmra.mrb[0].mxu0 %v238
      %v2201 = vpop.f32.mrb[0].mxu0
      %v2202 = vadd.f32 0.0, %v2201
      %v2203 = vpop.f32.mrb[0].mxu0
      %v2204 = vpop.f32.mrb[0].mxu0
      %v2205 = vadd.f32 0.0, %v2204
      %v2206 = vpop.f32.mrb[0].mxu0
      %2207 = vmatprep.mubr.bf16.mxu0 0
      %2208 = vmatmul.mubr.bf16.gmra.mrb[0].mxu0 %v240
      %v2209 = vpop.f32.mrb[0].mxu0
      %v2210 = vadd.f32 0.0, %v2209
      %v2211 = vpop.f32.mrb[0].mxu0
      %v2212 = vpop.f32.mrb[0].mxu0
      %v2213 = vadd.f32 0.0, %v2212
      %v2214 = vpop.f32.mrb[0].mxu0
      %2215 = vmatprep.mubr.bf16.mxu0 0
      %2216 = vmatmul.mubr.bf16.gmra.mrb[0].mxu0 %v242
      %v2217 = vpop.f32.mrb[0].mxu0
      %v2218 = vadd.f32 0.0, %v2217
      %v2219 = vpop.f32.mrb[0].mxu0
      %v2220 = vpop.f32.mrb[0].mxu0
      %v2221 = vadd.f32 0.0, %v2220
      %v2222 = vpop.f32.mrb[0].mxu0
      %2223 = vmatprep.mubr.bf16.mxu0 0
      %2224 = vmatmul.mubr.bf16.gmra.mrb[0].mxu0 %v244
      %v2225 = vpop.f32.mrb[0].mxu0
      %v2226 = vadd.f32 0.0, %v2225
      %v2227 = vpop.f32.mrb[0].mxu0
      %v2228 = vpop.f32.mrb[0].mxu0
      %v2229 = vadd.f32 0.0, %v2228
      %v2230 = vpop.f32.mrb[0].mxu0
      %2231 = vmatprep.mubr.bf16.mxu0 0
      %2232 = vmatmul.mubr.bf16.gmra.mrb[0].mxu0 %v246
      %v2233 = vpop.f32.mrb[0].mxu0
      %v2234 = vadd.f32 0.0, %v2233
      %v2235 = vpop.f32.mrb[0].mxu0
      %v2236 = vpop.f32.mrb[0].mxu0
      %v2237 = vadd.f32 0.0, %v2236
      %v2238 = vpop.f32.mrb[0].mxu0
      %2239 = vmatprep.mubr.bf16.mxu0 0
      %2240 = vmatmul.mubr.bf16.gmra.mrb[0].mxu0 %v248
      %v2241 = vpop.f32.mrb[0].mxu0
      %v2242 = vadd.f32 0.0, %v2241
      %v2243 = vpop.f32.mrb[0].mxu0
      %v2244 = vpop.f32.mrb[0].mxu0
      %v2245 = vadd.f32 0.0, %v2244
      %v2246 = vpop.f32.mrb[0].mxu0
      %2247 = vmatprep.mubr.bf16.mxu0 0
      %2248 = vmatmul.mubr.bf16.gmra.mrb[0].mxu0 %v250
      %v2249 = vpop.f32.mrb[0].mxu0
      %v2250 = vadd.f32 0.0, %v2249
      %v2251 = vpop.f32.mrb[0].mxu0
      %v2252 = vpop.f32.mrb[0].mxu0
      %v2253 = vadd.f32 0.0, %v2252
      %v2254 = vpop.f32.mrb[0].mxu0
      %2255 = vmatprep.mubr.bf16.mxu0 0
      %2256 = vmatmul.mubr.bf16.gmra.mrb[0].mxu0 %v252
      %v2257 = vpop.f32.mrb[0].mxu0
      %v2258 = vadd.f32 0.0, %v2257
      %v2259 = vpop.f32.mrb[0].mxu0
      %v2260 = vpop.f32.mrb[0].mxu0
      %v2261 = vadd.f32 0.0, %v2260
      %v2262 = vpop.f32.mrb[0].mxu0
      %2263 = vmatprep.mubr.bf16.mxu0 0
      %2264 = vmatmul.mubr.bf16.gmra.mrb[0].mxu0 %v254
      %v2265 = vpop.f32.mrb[0].mxu0
      %v2266 = vadd.f32 0.0, %v2265
      %v2267 = vpop.f32.mrb[0].mxu0
      %v2268 = vpop.f32.mrb[0].mxu0
      %v2269 = vadd.f32 0.0, %v2268
      %v2270 = vpop.f32.mrb[0].mxu0
      %2271 = vmatprep.mubr.bf16.mxu0 0
      %2272 = vmatmul.mubr.bf16.gmra.mrb[0].mxu0 %v256
      %v2273 = vpop.f32.mrb[0].mxu0
      %v2274 = vadd.f32 0.0, %v2273
      %v2275 = vpop.f32.mrb[0].mxu0
      %v2276 = vpop.f32.mrb[0].mxu0
      %v2277 = vadd.f32 0.0, %v2276
      %v2278 = vpop.f32.mrb[0].mxu0
      %2279 = vmatprep.mubr.bf16.mxu0 0
      %2280 = vmatmul.mubr.bf16.gmra.mrb[0].mxu0 %v258
      %v2281 = vpop.f32.mrb[0].mxu0
      %v2282 = vadd.f32 0.0, %v2281
      %v2283 = vpop.f32.mrb[0].mxu0
      %v2284 = vpop.f32.mrb[0].mxu0
      %v2285 = vadd.f32 0.0, %v2284
      %v2286 = vpop.f32.mrb[0].mxu0
      %2287 = vmatprep.mubr.bf16.mxu0 0
      %2288 = vmatmul.mubr.bf16.gmra.mrb[0].mxu0 %v260
      %v2289 = vpop.f32.mrb[0].mxu0
      %v2290 = vadd.f32 0.0, %v2289
      %v2291 = vpop.f32.mrb[0].mxu0
      %v2292 = vpop.f32.mrb[0].mxu0
      %v2293 = vadd.f32 0.0, %v2292
      %v2294 = vpop.f32.mrb[0].mxu0
      %2295 = vdwg.mxu0
      %v2296 = vadd.f32 %v2038, %v2170
      %v2297 = vadd.f32 %v2039, %v2173
      %v2298 = vadd.f32 %v2040, %v2178
      %v2299 = vadd.f32 %v2041, %v2181
      %v2300 = vadd.f32 %v2042, %v2186
      %v2301 = vadd.f32 %v2043, %v2189
      %v2302 = vadd.f32 %v2044, %v2194
      %v2303 = vadd.f32 %v2045, %v2197
      %v2304 = vadd.f32 %v2046, %v2202
      %v2305 = vadd.f32 %v2047, %v2205
      %v2306 = vadd.f32 %v2048, %v2210
      %v2307 = vadd.f32 %v2049, %v2213
      %v2308 = vadd.f32 %v2050, %v2218
      %v2309 = vadd.f32 %v2051, %v2221
      %v2310 = vadd.f32 %v2052, %v2226
      %v2311 = vadd.f32 %v2053, %v2229
      %v2312 = vadd.f32 %v2054, %v2234
      %v2313 = vadd.f32 %v2055, %v2237
      %v2314 = vadd.f32 %v2056, %v2242
      %v2315 = vadd.f32 %v2057, %v2245
      %v2316 = vadd.f32 %v2058, %v2250
      %v2317 = vadd.f32 %v2059, %v2253
      %v2318 = vadd.f32 %v2060, %v2258
      %v2319 = vadd.f32 %v2061, %v2261
      %v2320 = vadd.f32 %v2062, %v2266
      %v2321 = vadd.f32 %v2063, %v2269
      %v2322 = vadd.f32 %v2064, %v2274
      %v2323 = vadd.f32 %v2065, %v2277
      %v2324 = vadd.f32 %v2066, %v2282
      %v2325 = vadd.f32 %v2067, %v2285
      %v2326 = vadd.f32 %v2068, %v2290
      %v2327 = vadd.f32 %v2069, %v2293
      %v2329 = vshrl.u32 %v260, 16
      %v2331 = vshll.u32 %v260, 16
      %v2333 = vrot.slane %v2331, 1
      %v2334 = vor.u32 %v2329, %v2333
      %v2336 = vshll.u32 %v261, 16
      %v2338 = vrot.slane %v2336, 1
      %v2339 = vsel %vm278, %v2334, %v2338
      %s2341 = scalar_lea.vmem %s1, 448
      %v2342 = vld [vmem:[%s2341] sm:$0xf]
      %v2343 = vld [vmem:[%s2341 + $0x4] sm:$0xf]
      %v2344 = vld [vmem:[%s2341 + $0x8] sm:$0xf]
      %v2345 = vld [vmem:[%s2341 + $0xc] sm:$0xf]
      %v2346 = vld [vmem:[%s2341 + $0x10] sm:$0xf]
      %v2347 = vld [vmem:[%s2341 + $0x14] sm:$0xf]
      %v2348 = vld [vmem:[%s2341 + $0x18] sm:$0xf]
      %v2349 = vld [vmem:[%s2341 + $0x1c] sm:$0xf]
      %v2350 = vld [vmem:[%s2341 + $0x20] sm:$0xf]
      %v2351 = vld [vmem:[%s2341 + $0x24] sm:$0xf]
      %v2352 = vld [vmem:[%s2341 + $0x28] sm:$0xf]
      %v2353 = vld [vmem:[%s2341 + $0x2c] sm:$0xf]
      %v2354 = vld [vmem:[%s2341 + $0x30] sm:$0xf]
      %v2355 = vld [vmem:[%s2341 + $0x34] sm:$0xf]
      %v2356 = vld [vmem:[%s2341 + $0x38] sm:$0xf]
      %v2357 = vld [vmem:[%s2341 + $0x3c] sm:$0xf]
      %v2374 = vunpack.c.l.b16 %v2342
      %v2375 = vunpack.c.l.b16 %v2343
      %v2376 = vunpack.c.l.b16 %v2344
      %v2377 = vunpack.c.l.b16 %v2345
      %v2378 = vunpack.c.l.b16 %v2346
      %v2379 = vunpack.c.l.b16 %v2347
      %v2380 = vunpack.c.l.b16 %v2348
      %v2381 = vunpack.c.l.b16 %v2349
      %v2382 = vunpack.c.l.b16 %v2350
      %v2383 = vunpack.c.l.b16 %v2351
      %v2384 = vunpack.c.l.b16 %v2352
      %v2385 = vunpack.c.l.b16 %v2353
      %v2386 = vunpack.c.l.b16 %v2354
      %v2387 = vunpack.c.l.b16 %v2355
      %v2388 = vunpack.c.l.b16 %v2356
      %v2389 = vunpack.c.l.b16 %v2357
      %v2390 = vpack.c.b16 %v2375, %v2374
      %v2391 = vpack.c.b16 %v2377, %v2376
      %v2392 = vpack.c.b16 %v2379, %v2378
      %v2393 = vpack.c.b16 %v2381, %v2380
      %v2394 = vpack.c.b16 %v2383, %v2382
      %v2395 = vpack.c.b16 %v2385, %v2384
      %v2396 = vpack.c.b16 %v2387, %v2386
      %v2397 = vpack.c.b16 %v2389, %v2388
      %2406 = vmatprep.subr.bf16.mxu0 0
      %2407 = vmatpush1.bf16.msra.mxu0 %v2390
      %2408 = vmatprep.subr.bf16.mxu0 0
      %2409 = vmatpush1.bf16.msra.mxu0 %v2391
      %2410 = vmatprep.subr.bf16.mxu0 0
      %2411 = vmatpush1.bf16.msra.mxu0 %v2392
      %2412 = vmatprep.subr.bf16.mxu0 0
      %2413 = vmatpush1.bf16.msra.mxu0 %v2393
      %2414 = vmatprep.subr.bf16.mxu0 0
      %2415 = vmatpush1.bf16.msra.mxu0 %v2394
      %2416 = vmatprep.subr.bf16.mxu0 0
      %2417 = vmatpush1.bf16.msra.mxu0 %v2395
      %2418 = vmatprep.subr.bf16.mxu0 0
      %2419 = vmatpush1.bf16.msra.mxu0 %v2396
      %2420 = vmatprep.subr.bf16.mxu0 0
      %2421 = vmatpush1.bf16.msra.mxu0 %v2397
      %2422 = vmatprep.subr.bf16.mxu0 0
      %2423 = vmatpush1.bf16.msra.mxu0 0
      %2424 = vmatprep.subr.bf16.mxu0 0
      %2425 = vmatpush1.bf16.msra.mxu0 0
      %2426 = vmatprep.subr.bf16.mxu0 0
      %2427 = vmatpush1.bf16.msra.mxu0 0
      %2428 = vmatprep.subr.bf16.mxu0 0
      %2429 = vmatpush1.bf16.msra.mxu0 0
      %2430 = vmatprep.subr.bf16.mxu0 0
      %2431 = vmatpush1.bf16.msra.mxu0 0
      %2432 = vmatprep.subr.bf16.mxu0 0
      %2433 = vmatpush1.bf16.msra.mxu0 0
      %2434 = vmatprep.subr.bf16.mxu0 0
      %2435 = vmatpush1.bf16.msra.mxu0 0
      %2436 = vmatprep.subr.bf16.mxu0 0
      %2437 = vmatpush1.bf16.msra.mxu0 0
      %2438 = vmatprep.mubr.bf16.mxu0 0
      %2439 = vmatmul.mubr.bf16.gmra.mrb[0].mxu0 %v314
      %v2440 = vpop.f32.mrb[0].mxu0
      %v2441 = vadd.f32 0.0, %v2440
      %v2442 = vpop.f32.mrb[0].mxu0
      %v2443 = vpop.f32.mrb[0].mxu0
      %v2444 = vadd.f32 0.0, %v2443
      %v2445 = vpop.f32.mrb[0].mxu0
      %2446 = vmatprep.mubr.bf16.mxu0 0
      %2447 = vmatmul.mubr.bf16.gmra.mrb[0].mxu0 %v326
      %v2448 = vpop.f32.mrb[0].mxu0
      %v2449 = vadd.f32 0.0, %v2448
      %v2450 = vpop.f32.mrb[0].mxu0
      %v2451 = vpop.f32.mrb[0].mxu0
      %v2452 = vadd.f32 0.0, %v2451
      %v2453 = vpop.f32.mrb[0].mxu0
      %2454 = vmatprep.mubr.bf16.mxu0 0
      %2455 = vmatmul.mubr.bf16.gmra.mrb[0].mxu0 %v338
      %v2456 = vpop.f32.mrb[0].mxu0
      %v2457 = vadd.f32 0.0, %v2456
      %v2458 = vpop.f32.mrb[0].mxu0
      %v2459 = vpop.f32.mrb[0].mxu0
      %v2460 = vadd.f32 0.0, %v2459
      %v2461 = vpop.f32.mrb[0].mxu0
      %2462 = vmatprep.mubr.bf16.mxu0 0
      %2463 = vmatmul.mubr.bf16.gmra.mrb[0].mxu0 %v350
      %v2464 = vpop.f32.mrb[0].mxu0
      %v2465 = vadd.f32 0.0, %v2464
      %v2466 = vpop.f32.mrb[0].mxu0
      %v2467 = vpop.f32.mrb[0].mxu0
      %v2468 = vadd.f32 0.0, %v2467
      %v2469 = vpop.f32.mrb[0].mxu0
      %2470 = vmatprep.mubr.bf16.mxu0 0
      %2471 = vmatmul.mubr.bf16.gmra.mrb[0].mxu0 %v362
      %v2472 = vpop.f32.mrb[0].mxu0
      %v2473 = vadd.f32 0.0, %v2472
      %v2474 = vpop.f32.mrb[0].mxu0
      %v2475 = vpop.f32.mrb[0].mxu0
      %v2476 = vadd.f32 0.0, %v2475
      %v2477 = vpop.f32.mrb[0].mxu0
      %2478 = vmatprep.mubr.bf16.mxu0 0
      %2479 = vmatmul.mubr.bf16.gmra.mrb[0].mxu0 %v374
      %v2480 = vpop.f32.mrb[0].mxu0
      %v2481 = vadd.f32 0.0, %v2480
      %v2482 = vpop.f32.mrb[0].mxu0
      %v2483 = vpop.f32.mrb[0].mxu0
      %v2484 = vadd.f32 0.0, %v2483
      %v2485 = vpop.f32.mrb[0].mxu0
      %2486 = vmatprep.mubr.bf16.mxu0 0
      %2487 = vmatmul.mubr.bf16.gmra.mrb[0].mxu0 %v386
      %v2488 = vpop.f32.mrb[0].mxu0
      %v2489 = vadd.f32 0.0, %v2488
      %v2490 = vpop.f32.mrb[0].mxu0
      %v2491 = vpop.f32.mrb[0].mxu0
      %v2492 = vadd.f32 0.0, %v2491
      %v2493 = vpop.f32.mrb[0].mxu0
      %2494 = vmatprep.mubr.bf16.mxu0 0
      %2495 = vmatmul.mubr.bf16.gmra.mrb[0].mxu0 %v398
      %v2496 = vpop.f32.mrb[0].mxu0
      %v2497 = vadd.f32 0.0, %v2496
      %v2498 = vpop.f32.mrb[0].mxu0
      %v2499 = vpop.f32.mrb[0].mxu0
      %v2500 = vadd.f32 0.0, %v2499
      %v2501 = vpop.f32.mrb[0].mxu0
      %2502 = vmatprep.mubr.bf16.mxu0 0
      %2503 = vmatmul.mubr.bf16.gmra.mrb[0].mxu0 %v410
      %v2504 = vpop.f32.mrb[0].mxu0
      %v2505 = vadd.f32 0.0, %v2504
      %v2506 = vpop.f32.mrb[0].mxu0
      %v2507 = vpop.f32.mrb[0].mxu0
      %v2508 = vadd.f32 0.0, %v2507
      %v2509 = vpop.f32.mrb[0].mxu0
      %2510 = vmatprep.mubr.bf16.mxu0 0
      %2511 = vmatmul.mubr.bf16.gmra.mrb[0].mxu0 %v422
      %v2512 = vpop.f32.mrb[0].mxu0
      %v2513 = vadd.f32 0.0, %v2512
      %v2514 = vpop.f32.mrb[0].mxu0
      %v2515 = vpop.f32.mrb[0].mxu0
      %v2516 = vadd.f32 0.0, %v2515
      %v2517 = vpop.f32.mrb[0].mxu0
      %2518 = vmatprep.mubr.bf16.mxu0 0
      %2519 = vmatmul.mubr.bf16.gmra.mrb[0].mxu0 %v434
      %v2520 = vpop.f32.mrb[0].mxu0
      %v2521 = vadd.f32 0.0, %v2520
      %v2522 = vpop.f32.mrb[0].mxu0
      %v2523 = vpop.f32.mrb[0].mxu0
      %v2524 = vadd.f32 0.0, %v2523
      %v2525 = vpop.f32.mrb[0].mxu0
      %2526 = vmatprep.mubr.bf16.mxu0 0
      %2527 = vmatmul.mubr.bf16.gmra.mrb[0].mxu0 %v446
      %v2528 = vpop.f32.mrb[0].mxu0
      %v2529 = vadd.f32 0.0, %v2528
      %v2530 = vpop.f32.mrb[0].mxu0
      %v2531 = vpop.f32.mrb[0].mxu0
      %v2532 = vadd.f32 0.0, %v2531
      %v2533 = vpop.f32.mrb[0].mxu0
      %2534 = vmatprep.mubr.bf16.mxu0 0
      %2535 = vmatmul.mubr.bf16.gmra.mrb[0].mxu0 %v458
      %v2536 = vpop.f32.mrb[0].mxu0
      %v2537 = vadd.f32 0.0, %v2536
      %v2538 = vpop.f32.mrb[0].mxu0
      %v2539 = vpop.f32.mrb[0].mxu0
      %v2540 = vadd.f32 0.0, %v2539
      %v2541 = vpop.f32.mrb[0].mxu0
      %2542 = vmatprep.mubr.bf16.mxu0 0
      %2543 = vmatmul.mubr.bf16.gmra.mrb[0].mxu0 %v470
      %v2544 = vpop.f32.mrb[0].mxu0
      %v2545 = vadd.f32 0.0, %v2544
      %v2546 = vpop.f32.mrb[0].mxu0
      %v2547 = vpop.f32.mrb[0].mxu0
      %v2548 = vadd.f32 0.0, %v2547
      %v2549 = vpop.f32.mrb[0].mxu0
      %2550 = vmatprep.mubr.bf16.mxu0 0
      %2551 = vmatmul.mubr.bf16.gmra.mrb[0].mxu0 %v1546
      %v2552 = vpop.f32.mrb[0].mxu0
      %v2553 = vadd.f32 0.0, %v2552
      %v2554 = vpop.f32.mrb[0].mxu0
      %v2555 = vpop.f32.mrb[0].mxu0
      %v2556 = vadd.f32 0.0, %v2555
      %v2557 = vpop.f32.mrb[0].mxu0
      %2558 = vmatprep.mubr.bf16.mxu0 0
      %2559 = vmatmul.mubr.bf16.gmra.mrb[0].mxu0 %v2339
      %v2560 = vpop.f32.mrb[0].mxu0
      %v2561 = vadd.f32 0.0, %v2560
      %v2562 = vpop.f32.mrb[0].mxu0
      %v2563 = vpop.f32.mrb[0].mxu0
      %v2564 = vadd.f32 0.0, %v2563
      %v2565 = vpop.f32.mrb[0].mxu0
      %2566 = vdwg.mxu0
      %v2567 = vadd.f32 %v2296, %v2441
      %v2568 = vadd.f32 %v2297, %v2444
      %v2569 = vadd.f32 %v2298, %v2449
      %v2570 = vadd.f32 %v2299, %v2452
      %v2571 = vadd.f32 %v2300, %v2457
      %v2572 = vadd.f32 %v2301, %v2460
      %v2573 = vadd.f32 %v2302, %v2465
      %v2574 = vadd.f32 %v2303, %v2468
      %v2575 = vadd.f32 %v2304, %v2473
      %v2576 = vadd.f32 %v2305, %v2476
      %v2577 = vadd.f32 %v2306, %v2481
      %v2578 = vadd.f32 %v2307, %v2484
      %v2579 = vadd.f32 %v2308, %v2489
      %v2580 = vadd.f32 %v2309, %v2492
      %v2581 = vadd.f32 %v2310, %v2497
      %v2582 = vadd.f32 %v2311, %v2500
      %v2583 = vadd.f32 %v2312, %v2505
      %v2584 = vadd.f32 %v2313, %v2508
      %v2585 = vadd.f32 %v2314, %v2513
      %v2586 = vadd.f32 %v2315, %v2516
      %v2587 = vadd.f32 %v2316, %v2521
      %v2588 = vadd.f32 %v2317, %v2524
      %v2589 = vadd.f32 %v2318, %v2529
      %v2590 = vadd.f32 %v2319, %v2532
      %v2591 = vadd.f32 %v2320, %v2537
      %v2592 = vadd.f32 %v2321, %v2540
      %v2593 = vadd.f32 %v2322, %v2545
      %v2594 = vadd.f32 %v2323, %v2548
      %v2595 = vadd.f32 %v2324, %v2553
      %v2596 = vadd.f32 %v2325, %v2556
      %v2597 = vadd.f32 %v2326, %v2561
      %v2598 = vadd.f32 %v2327, %v2564
      %v2601 = vrot.slane %v260, 1
      %v2602 = vrot.slane %v261, 1
      %v2603 = vsel %vm954, %v2601, %v2602
      %s2605 = scalar_lea.vmem %s1, 512
      %v2606 = vld [vmem:[%s2605] sm:$0xf]
      %v2607 = vld [vmem:[%s2605 + $0x4] sm:$0xf]
      %v2608 = vld [vmem:[%s2605 + $0x8] sm:$0xf]
      %v2609 = vld [vmem:[%s2605 + $0xc] sm:$0xf]
      %v2610 = vld [vmem:[%s2605 + $0x10] sm:$0xf]
      %v2611 = vld [vmem:[%s2605 + $0x14] sm:$0xf]
      %v2612 = vld [vmem:[%s2605 + $0x18] sm:$0xf]
      %v2613 = vld [vmem:[%s2605 + $0x1c] sm:$0xf]
      %v2614 = vld [vmem:[%s2605 + $0x20] sm:$0xf]
      %v2615 = vld [vmem:[%s2605 + $0x24] sm:$0xf]
      %v2616 = vld [vmem:[%s2605 + $0x28] sm:$0xf]
      %v2617 = vld [vmem:[%s2605 + $0x2c] sm:$0xf]
      %v2618 = vld [vmem:[%s2605 + $0x30] sm:$0xf]
      %v2619 = vld [vmem:[%s2605 + $0x34] sm:$0xf]
      %v2620 = vld [vmem:[%s2605 + $0x38] sm:$0xf]
      %v2621 = vld [vmem:[%s2605 + $0x3c] sm:$0xf]
      %v2638 = vunpack.c.l.b16 %v2606
      %v2639 = vunpack.c.l.b16 %v2607
      %v2640 = vunpack.c.l.b16 %v2608
      %v2641 = vunpack.c.l.b16 %v2609
      %v2642 = vunpack.c.l.b16 %v2610
      %v2643 = vunpack.c.l.b16 %v2611
      %v2644 = vunpack.c.l.b16 %v2612
      %v2645 = vunpack.c.l.b16 %v2613
      %v2646 = vunpack.c.l.b16 %v2614
      %v2647 = vunpack.c.l.b16 %v2615
      %v2648 = vunpack.c.l.b16 %v2616
      %v2649 = vunpack.c.l.b16 %v2617
      %v2650 = vunpack.c.l.b16 %v2618
      %v2651 = vunpack.c.l.b16 %v2619
      %v2652 = vunpack.c.l.b16 %v2620
      %v2653 = vunpack.c.l.b16 %v2621
      %v2654 = vpack.c.b16 %v2639, %v2638
      %v2655 = vpack.c.b16 %v2641, %v2640
      %v2656 = vpack.c.b16 %v2643, %v2642
      %v2657 = vpack.c.b16 %v2645, %v2644
      %v2658 = vpack.c.b16 %v2647, %v2646
      %v2659 = vpack.c.b16 %v2649, %v2648
      %v2660 = vpack.c.b16 %v2651, %v2650
      %v2661 = vpack.c.b16 %v2653, %v2652
      %2670 = vmatprep.subr.bf16.mxu0 0
      %2671 = vmatpush1.bf16.msra.mxu0 %v2654
      %2672 = vmatprep.subr.bf16.mxu0 0
      %2673 = vmatpush1.bf16.msra.mxu0 %v2655
      %2674 = vmatprep.subr.bf16.mxu0 0
      %2675 = vmatpush1.bf16.msra.mxu0 %v2656
      %2676 = vmatprep.subr.bf16.mxu0 0
      %2677 = vmatpush1.bf16.msra.mxu0 %v2657
      %2678 = vmatprep.subr.bf16.mxu0 0
      %2679 = vmatpush1.bf16.msra.mxu0 %v2658
      %2680 = vmatprep.subr.bf16.mxu0 0
      %2681 = vmatpush1.bf16.msra.mxu0 %v2659
      %2682 = vmatprep.subr.bf16.mxu0 0
      %2683 = vmatpush1.bf16.msra.mxu0 %v2660
      %2684 = vmatprep.subr.bf16.mxu0 0
      %2685 = vmatpush1.bf16.msra.mxu0 %v2661
      %2686 = vmatprep.subr.bf16.mxu0 0
      %2687 = vmatpush1.bf16.msra.mxu0 0
      %2688 = vmatprep.subr.bf16.mxu0 0
      %2689 = vmatpush1.bf16.msra.mxu0 0
      %2690 = vmatprep.subr.bf16.mxu0 0
      %2691 = vmatpush1.bf16.msra.mxu0 0
      %2692 = vmatprep.subr.bf16.mxu0 0
      %2693 = vmatpush1.bf16.msra.mxu0 0
      %2694 = vmatprep.subr.bf16.mxu0 0
      %2695 = vmatpush1.bf16.msra.mxu0 0
      %2696 = vmatprep.subr.bf16.mxu0 0
      %2697 = vmatpush1.bf16.msra.mxu0 0
      %2698 = vmatprep.subr.bf16.mxu0 0
      %2699 = vmatpush1.bf16.msra.mxu0 0
      %2700 = vmatprep.subr.bf16.mxu0 0
      %2701 = vmatpush1.bf16.msra.mxu0 0
      %2702 = vmatprep.mubr.bf16.mxu0 0
      %2703 = vmatmul.mubr.bf16.gmra.mrb[0].mxu0 %v963
      %v2704 = vpop.f32.mrb[0].mxu0
      %v2705 = vadd.f32 0.0, %v2704
      %v2706 = vpop.f32.mrb[0].mxu0
      %v2707 = vpop.f32.mrb[0].mxu0
      %v2708 = vadd.f32 0.0, %v2707
      %v2709 = vpop.f32.mrb[0].mxu0
      %2710 = vmatprep.mubr.bf16.mxu0 0
      %2711 = vmatmul.mubr.bf16.gmra.mrb[0].mxu0 %v966
      %v2712 = vpop.f32.mrb[0].mxu0
      %v2713 = vadd.f32 0.0, %v2712
      %v2714 = vpop.f32.mrb[0].mxu0
      %v2715 = vpop.f32.mrb[0].mxu0
      %v2716 = vadd.f32 0.0, %v2715
      %v2717 = vpop.f32.mrb[0].mxu0
      %2718 = vmatprep.mubr.bf16.mxu0 0
      %2719 = vmatmul.mubr.bf16.gmra.mrb[0].mxu0 %v969
      %v2720 = vpop.f32.mrb[0].mxu0
      %v2721 = vadd.f32 0.0, %v2720
      %v2722 = vpop.f32.mrb[0].mxu0
      %v2723 = vpop.f32.mrb[0].mxu0
      %v2724 = vadd.f32 0.0, %v2723
      %v2725 = vpop.f32.mrb[0].mxu0
      %2726 = vmatprep.mubr.bf16.mxu0 0
      %2727 = vmatmul.mubr.bf16.gmra.mrb[0].mxu0 %v972
      %v2728 = vpop.f32.mrb[0].mxu0
      %v2729 = vadd.f32 0.0, %v2728
      %v2730 = vpop.f32.mrb[0].mxu0
      %v2731 = vpop.f32.mrb[0].mxu0
      %v2732 = vadd.f32 0.0, %v2731
      %v2733 = vpop.f32.mrb[0].mxu0
      %2734 = vmatprep.mubr.bf16.mxu0 0
      %2735 = vmatmul.mubr.bf16.gmra.mrb[0].mxu0 %v975
      %v2736 = vpop.f32.mrb[0].mxu0
      %v2737 = vadd.f32 0.0, %v2736
      %v2738 = vpop.f32.mrb[0].mxu0
      %v2739 = vpop.f32.mrb[0].mxu0
      %v2740 = vadd.f32 0.0, %v2739
      %v2741 = vpop.f32.mrb[0].mxu0
      %2742 = vmatprep.mubr.bf16.mxu0 0
      %2743 = vmatmul.mubr.bf16.gmra.mrb[0].mxu0 %v978
      %v2744 = vpop.f32.mrb[0].mxu0
      %v2745 = vadd.f32 0.0, %v2744
      %v2746 = vpop.f32.mrb[0].mxu0
      %v2747 = vpop.f32.mrb[0].mxu0
      %v2748 = vadd.f32 0.0, %v2747
      %v2749 = vpop.f32.mrb[0].mxu0
      %2750 = vmatprep.mubr.bf16.mxu0 0
      %2751 = vmatmul.mubr.bf16.gmra.mrb[0].mxu0 %v981
      %v2752 = vpop.f32.mrb[0].mxu0
      %v2753 = vadd.f32 0.0, %v2752
      %v2754 = vpop.f32.mrb[0].mxu0
      %v2755 = vpop.f32.mrb[0].mxu0
      %v2756 = vadd.f32 0.0, %v2755
      %v2757 = vpop.f32.mrb[0].mxu0
      %2758 = vmatprep.mubr.bf16.mxu0 0
      %2759 = vmatmul.mubr.bf16.gmra.mrb[0].mxu0 %v984
      %v2760 = vpop.f32.mrb[0].mxu0
      %v2761 = vadd.f32 0.0, %v2760
      %v2762 = vpop.f32.mrb[0].mxu0
      %v2763 = vpop.f32.mrb[0].mxu0
      %v2764 = vadd.f32 0.0, %v2763
      %v2765 = vpop.f32.mrb[0].mxu0
      %2766 = vmatprep.mubr.bf16.mxu0 0
      %2767 = vmatmul.mubr.bf16.gmra.mrb[0].mxu0 %v987
      %v2768 = vpop.f32.mrb[0].mxu0
      %v2769 = vadd.f32 0.0, %v2768
      %v2770 = vpop.f32.mrb[0].mxu0
      %v2771 = vpop.f32.mrb[0].mxu0
      %v2772 = vadd.f32 0.0, %v2771
      %v2773 = vpop.f32.mrb[0].mxu0
      %2774 = vmatprep.mubr.bf16.mxu0 0
      %2775 = vmatmul.mubr.bf16.gmra.mrb[0].mxu0 %v990
      %v2776 = vpop.f32.mrb[0].mxu0
      %v2777 = vadd.f32 0.0, %v2776
      %v2778 = vpop.f32.mrb[0].mxu0
      %v2779 = vpop.f32.mrb[0].mxu0
      %v2780 = vadd.f32 0.0, %v2779
      %v2781 = vpop.f32.mrb[0].mxu0
      %2782 = vmatprep.mubr.bf16.mxu0 0
      %2783 = vmatmul.mubr.bf16.gmra.mrb[0].mxu0 %v993
      %v2784 = vpop.f32.mrb[0].mxu0
      %v2785 = vadd.f32 0.0, %v2784
      %v2786 = vpop.f32.mrb[0].mxu0
      %v2787 = vpop.f32.mrb[0].mxu0
      %v2788 = vadd.f32 0.0, %v2787
      %v2789 = vpop.f32.mrb[0].mxu0
      %2790 = vmatprep.mubr.bf16.mxu0 0
      %2791 = vmatmul.mubr.bf16.gmra.mrb[0].mxu0 %v996
      %v2792 = vpop.f32.mrb[0].mxu0
      %v2793 = vadd.f32 0.0, %v2792
      %v2794 = vpop.f32.mrb[0].mxu0
      %v2795 = vpop.f32.mrb[0].mxu0
      %v2796 = vadd.f32 0.0, %v2795
      %v2797 = vpop.f32.mrb[0].mxu0
      %2798 = vmatprep.mubr.bf16.mxu0 0
      %2799 = vmatmul.mubr.bf16.gmra.mrb[0].mxu0 %v999
      %v2800 = vpop.f32.mrb[0].mxu0
      %v2801 = vadd.f32 0.0, %v2800
      %v2802 = vpop.f32.mrb[0].mxu0
      %v2803 = vpop.f32.mrb[0].mxu0
      %v2804 = vadd.f32 0.0, %v2803
      %v2805 = vpop.f32.mrb[0].mxu0
      %2806 = vmatprep.mubr.bf16.mxu0 0
      %2807 = vmatmul.mubr.bf16.gmra.mrb[0].mxu0 %v1002
      %v2808 = vpop.f32.mrb[0].mxu0
      %v2809 = vadd.f32 0.0, %v2808
      %v2810 = vpop.f32.mrb[0].mxu0
      %v2811 = vpop.f32.mrb[0].mxu0
      %v2812 = vadd.f32 0.0, %v2811
      %v2813 = vpop.f32.mrb[0].mxu0
      %2814 = vmatprep.mubr.bf16.mxu0 0
      %2815 = vmatmul.mubr.bf16.gmra.mrb[0].mxu0 %v1810
      %v2816 = vpop.f32.mrb[0].mxu0
      %v2817 = vadd.f32 0.0, %v2816
      %v2818 = vpop.f32.mrb[0].mxu0
      %v2819 = vpop.f32.mrb[0].mxu0
      %v2820 = vadd.f32 0.0, %v2819
      %v2821 = vpop.f32.mrb[0].mxu0
      %2822 = vmatprep.mubr.bf16.mxu0 0
      %2823 = vmatmul.mubr.bf16.gmra.mrb[0].mxu0 %v2603
      %v2824 = vpop.f32.mrb[0].mxu0
      %v2825 = vadd.f32 0.0, %v2824
      %v2826 = vpop.f32.mrb[0].mxu0
      %v2827 = vpop.f32.mrb[0].mxu0
      %v2828 = vadd.f32 0.0, %v2827
      %v2829 = vpop.f32.mrb[0].mxu0
      %2830 = vdwg.mxu0
      %v2831 = vadd.f32 %v2567, %v2705
      %v2832 = vadd.f32 %v2568, %v2708
      %v2833 = vadd.f32 %v2569, %v2713
      %v2834 = vadd.f32 %v2570, %v2716
      %v2835 = vadd.f32 %v2571, %v2721
      %v2836 = vadd.f32 %v2572, %v2724
      %v2837 = vadd.f32 %v2573, %v2729
      %v2838 = vadd.f32 %v2574, %v2732
      %v2839 = vadd.f32 %v2575, %v2737
      %v2840 = vadd.f32 %v2576, %v2740
      %v2841 = vadd.f32 %v2577, %v2745
      %v2842 = vadd.f32 %v2578, %v2748
      %v2843 = vadd.f32 %v2579, %v2753
      %v2844 = vadd.f32 %v2580, %v2756
      %v2845 = vadd.f32 %v2581, %v2761
      %v2846 = vadd.f32 %v2582, %v2764
      %v2847 = vadd.f32 %v2583, %v2769
      %v2848 = vadd.f32 %v2584, %v2772
      %v2849 = vadd.f32 %v2585, %v2777
      %v2850 = vadd.f32 %v2586, %v2780
      %v2851 = vadd.f32 %v2587, %v2785
      %v2852 = vadd.f32 %v2588, %v2788
      %v2853 = vadd.f32 %v2589, %v2793
      %v2854 = vadd.f32 %v2590, %v2796
      %v2855 = vadd.f32 %v2591, %v2801
      %v2856 = vadd.f32 %v2592, %v2804
      %v2857 = vadd.f32 %v2593, %v2809
      %v2858 = vadd.f32 %v2594, %v2812
      %v2859 = vadd.f32 %v2595, %v2817
      %v2860 = vadd.f32 %v2596, %v2820
      %v2861 = vadd.f32 %v2597, %v2825
      %v2862 = vadd.f32 %v2598, %v2828
      %v2863 = vmax.f32 %v2831, 0.0
      %v2864 = vmax.f32 %v2832, 0.0
      %v2865 = vmax.f32 %v2833, 0.0
      %v2866 = vmax.f32 %v2834, 0.0
      %v2867 = vmax.f32 %v2835, 0.0
      %v2868 = vmax.f32 %v2836, 0.0
      %v2869 = vmax.f32 %v2837, 0.0
      %v2870 = vmax.f32 %v2838, 0.0
      %v2871 = vmax.f32 %v2839, 0.0
      %v2872 = vmax.f32 %v2840, 0.0
      %v2873 = vmax.f32 %v2841, 0.0
      %v2874 = vmax.f32 %v2842, 0.0
      %v2875 = vmax.f32 %v2843, 0.0
      %v2876 = vmax.f32 %v2844, 0.0
      %v2877 = vmax.f32 %v2845, 0.0
      %v2878 = vmax.f32 %v2846, 0.0
      %v2879 = vmax.f32 %v2847, 0.0
      %v2880 = vmax.f32 %v2848, 0.0
      %v2881 = vmax.f32 %v2849, 0.0
      %v2882 = vmax.f32 %v2850, 0.0
      %v2883 = vmax.f32 %v2851, 0.0
      %v2884 = vmax.f32 %v2852, 0.0
      %v2885 = vmax.f32 %v2853, 0.0
      %v2886 = vmax.f32 %v2854, 0.0
      %v2887 = vmax.f32 %v2855, 0.0
      %v2888 = vmax.f32 %v2856, 0.0
      %v2889 = vmax.f32 %v2857, 0.0
      %v2890 = vmax.f32 %v2858, 0.0
      %v2891 = vmax.f32 %v2859, 0.0
      %v2892 = vmax.f32 %v2860, 0.0
      %v2893 = vmax.f32 %v2861, 0.0
      %v2894 = vmax.f32 %v2862, 0.0
      %2895 = vst [vmem:[#allocation2] sm:$0xf] 0
      %2896 = vst [vmem:[#allocation2 + $0x4] sm:$0xf] 0
      %2897 = vst [vmem:[#allocation2 + $0x8] sm:$0x1] 0
      %2898 = vst [vmem:[#allocation2 + $0xc] sm:$0xf] 0
      %2899 = vst [vmem:[#allocation2 + $0x10] sm:$0xf] 0
      %2900 = vst [vmem:[#allocation2 + $0x14] sm:$0x1] 0
      %2901 = vst [vmem:[#allocation2 + $0x18] sm:$0xf] 0
      %2902 = vst [vmem:[#allocation2 + $0x1c] sm:$0xf] 0
      %2903 = vst [vmem:[#allocation2 + $0x20] sm:$0x1] 0
      %2904 = vst [vmem:[#allocation2 + $0x24] sm:$0xf] 0
      %2905 = vst [vmem:[#allocation2 + $0x28] sm:$0xf] 0
      %2906 = vst [vmem:[#allocation2 + $0x2c] sm:$0x1] 0
      %2907 = vst [vmem:[#allocation2 + $0x30] sm:$0xf] 0
      %2908 = vst [vmem:[#allocation2 + $0x34] sm:$0xf] 0
      %2909 = vst [vmem:[#allocation2 + $0x38] sm:$0x1] 0
      %2910 = vst [vmem:[#allocation2 + $0x3c] sm:$0xf] 0
      %2911 = vst [vmem:[#allocation2 + $0x40] sm:$0xf] 0
      %2912 = vst [vmem:[#allocation2 + $0x44] sm:$0x1] 0
      %2913 = vst [vmem:[#allocation2 + $0x48] sm:$0xf] 0
      %2914 = vst [vmem:[#allocation2 + $0x4c] sm:$0xf] 0
      %2915 = vst [vmem:[#allocation2 + $0x50] sm:$0x1] 0
      %2916 = vst [vmem:[#allocation2 + $0x54] sm:$0xf] 0
      %2917 = vst [vmem:[#allocation2 + $0x58] sm:$0xf] 0
      %2918 = vst [vmem:[#allocation2 + $0x5c] sm:$0x1] 0
      %2919 = vst [vmem:[#allocation2 + $0x60] sm:$0xf] 0
      %2920 = vst [vmem:[#allocation2 + $0x64] sm:$0xf] 0
      %2921 = vst [vmem:[#allocation2 + $0x68] sm:$0x1] 0
      %2922 = vst [vmem:[#allocation2 + $0x6c] sm:$0xf] 0
      %2923 = vst [vmem:[#allocation2 + $0x70] sm:$0xf] 0
      %2924 = vst [vmem:[#allocation2 + $0x74] sm:$0x1] 0
      %2925 = vst [vmem:[#allocation2 + $0x78] sm:$0xf] 0
      %2926 = vst [vmem:[#allocation2 + $0x7c] sm:$0xf] 0
      %2927 = vst [vmem:[#allocation2 + $0x80] sm:$0x1] 0
      %2928 = vst [vmem:[#allocation2 + $0x84] sm:$0xf] 0
      %2929 = vst [vmem:[#allocation2 + $0x88] sm:$0xf] 0
      %2930 = vst [vmem:[#allocation2 + $0x8c] sm:$0x1] 0
      %2931 = vst [vmem:[#allocation2 + $0x90] sm:$0xf] 0
      %2932 = vst [vmem:[#allocation2 + $0x94] sm:$0xf] 0
      %2933 = vst [vmem:[#allocation2 + $0x98] sm:$0x1] 0
      %2934 = vst [vmem:[#allocation2 + $0x9c] sm:$0xf] 0
      %2935 = vst [vmem:[#allocation2 + $0xa0] sm:$0xf] 0
      %2936 = vst [vmem:[#allocation2 + $0xa4] sm:$0x1] 0
      %2937 = vst [vmem:[#allocation2 + $0xa8] sm:$0xf] 0
      %2938 = vst [vmem:[#allocation2 + $0xac] sm:$0xf] 0
      %2939 = vst [vmem:[#allocation2 + $0xb0] sm:$0x1] 0
      %2940 = vst [vmem:[#allocation2 + $0xb4] sm:$0xf] 0
      %2941 = vst [vmem:[#allocation2 + $0xb8] sm:$0xf] 0
      %2942 = vst [vmem:[#allocation2 + $0xbc] sm:$0x1] 0
      %2943 = vst [vmem:[#allocation2 + $0xc0] sm:$0xf] 0
      %2944 = vst [vmem:[#allocation2 + $0xc4] sm:$0xf] 0
      %2945 = vst [vmem:[#allocation2 + $0xc8] sm:$0x1] 0
      %2946 = vst [vmem:[#allocation2 + $0xcc] sm:$0xf] 0
      %2947 = vst [vmem:[#allocation2 + $0xd0] sm:$0xf] 0
      %2948 = vst [vmem:[#allocation2 + $0xd4] sm:$0x1] 0
      %v2949 = vpack.c.bf16 %v2864, %v2863
      %v2950 = vpack.c.bf16 %v2866, %v2865
      %v2951 = vpack.c.bf16 %v2868, %v2867
      %v2952 = vpack.c.bf16 %v2870, %v2869
      %v2953 = vpack.c.bf16 %v2872, %v2871
      %v2954 = vpack.c.bf16 %v2874, %v2873
      %v2955 = vpack.c.bf16 %v2876, %v2875
      %v2956 = vpack.c.bf16 %v2878, %v2877
      %v2957 = vpack.c.bf16 %v2880, %v2879
      %v2958 = vpack.c.bf16 %v2882, %v2881
      %v2959 = vpack.c.bf16 %v2884, %v2883
      %v2960 = vpack.c.bf16 %v2886, %v2885
      %v2961 = vpack.c.bf16 %v2888, %v2887
      %v2962 = vpack.c.bf16 %v2890, %v2889
      %v2963 = vpack.c.bf16 %v2892, %v2891
      %v2964 = vpack.c.bf16 %v2894, %v2893
      %v2981 = vunpack.c.l.b16 %v2949
      %v2982 = vunpack.c.h.b16 %v2949
      %v2983 = vunpack.c.l.b16 %v2950
      %v2984 = vunpack.c.h.b16 %v2950
      %v2985 = vunpack.c.l.b16 %v2951
      %v2986 = vunpack.c.h.b16 %v2951
      %v2987 = vunpack.c.l.b16 %v2952
      %v2988 = vunpack.c.h.b16 %v2952
      %v2989 = vunpack.c.l.b16 %v2953
      %v2990 = vunpack.c.h.b16 %v2953
      %v2991 = vunpack.c.l.b16 %v2954
      %v2992 = vunpack.c.h.b16 %v2954
      %v2993 = vunpack.c.l.b16 %v2955
      %v2994 = vunpack.c.h.b16 %v2955
      %v2995 = vunpack.c.l.b16 %v2956
      %v2996 = vunpack.c.h.b16 %v2956
      %v2997 = vunpack.c.l.b16 %v2957
      %v2998 = vunpack.c.h.b16 %v2957
      %v2999 = vunpack.c.l.b16 %v2958
      %v3000 = vunpack.c.h.b16 %v2958
      %v3001 = vunpack.c.l.b16 %v2959
      %v3002 = vunpack.c.h.b16 %v2959
      %v3003 = vunpack.c.l.b16 %v2960
      %v3004 = vunpack.c.h.b16 %v2960
      %v3005 = vunpack.c.l.b16 %v2961
      %v3006 = vunpack.c.h.b16 %v2961
      %v3007 = vunpack.c.l.b16 %v2962
      %v3008 = vunpack.c.h.b16 %v2962
      %v3009 = vunpack.c.l.b16 %v2963
      %v3010 = vunpack.c.h.b16 %v2963
      %v3011 = vunpack.c.l.b16 %v2964
      %v3012 = vunpack.c.h.b16 %v2964
      %v3013 = vpack.c.b16 %v2981, %v2981
      %v3014 = vpack.c.b16 %v2982, %v2982
      %v3015 = vpack.c.b16 %v2983, %v2983
      %v3016 = vpack.c.b16 %v2984, %v2984
      %v3017 = vpack.c.b16 %v2985, %v2985
      %v3018 = vpack.c.b16 %v2986, %v2986
      %v3019 = vpack.c.b16 %v2987, %v2987
      %v3020 = vpack.c.b16 %v2988, %v2988
      %v3021 = vpack.c.b16 %v2989, %v2989
      %v3022 = vpack.c.b16 %v2990, %v2990
      %v3023 = vpack.c.b16 %v2991, %v2991
      %v3024 = vpack.c.b16 %v2992, %v2992
      %v3025 = vpack.c.b16 %v2993, %v2993
      %v3026 = vpack.c.b16 %v2994, %v2994
      %v3027 = vpack.c.b16 %v2995, %v2995
      %v3028 = vpack.c.b16 %v2996, %v2996
      %v3029 = vpack.c.b16 %v2997, %v2997
      %v3030 = vpack.c.b16 %v2998, %v2998
      %v3031 = vpack.c.b16 %v2999, %v2999
      %v3032 = vpack.c.b16 %v3000, %v3000
      %v3033 = vpack.c.b16 %v3001, %v3001
      %v3034 = vpack.c.b16 %v3002, %v3002
      %v3035 = vpack.c.b16 %v3003, %v3003
      %v3036 = vpack.c.b16 %v3004, %v3004
      %v3037 = vpack.c.b16 %v3005, %v3005
      %v3038 = vpack.c.b16 %v3006, %v3006
      %v3039 = vpack.c.b16 %v3007, %v3007
      %v3040 = vpack.c.b16 %v3008, %v3008
      %v3041 = vpack.c.b16 %v3009, %v3009
      %v3042 = vpack.c.b16 %v3010, %v3010
      %v3043 = vpack.c.b16 %v3011, %v3011
      %v3044 = vpack.c.b16 %v3012, %v3012
      %vm3045 = vsmask.f32 256
      %vm3046 = vsmask.f32 4368
      %vm3047 = vmor %vm3045, %vm3046
      %v3049 = vshrl.u32 %v3013, 16
      %v3051 = vrot.slane %v3049, 7
      %v3052 = vshll.u32 %v3013, 16
      %v3054 = vor.u32 %v3051, %v3052
      %v3055 = vrot.slane %v3051, 4
      %v3057 = vshrl.u32 %v3014, 16
      %v3059 = vrot.slane %v3057, 7
      %v3060 = vshll.u32 %v3014, 16
      %v3062 = vor.u32 %v3059, %v3060
      %v3063 = vsel %vm3047, %v3055, %v3062
      %v3064 = vrot.slane %v3059, 4
      %v3066 = vshrl.u32 %v3015, 16
      %v3068 = vrot.slane %v3066, 7
      %v3069 = vshll.u32 %v3015, 16
      %v3071 = vor.u32 %v3068, %v3069
      %v3072 = vrot.slane %v3068, 4
      %v3074 = vshrl.u32 %v3016, 16
      %v3076 = vrot.slane %v3074, 7
      %v3077 = vshll.u32 %v3016, 16
      %v3079 = vor.u32 %v3076, %v3077
      %v3080 = vsel %vm3047, %v3072, %v3079
      %v3081 = vrot.slane %v3076, 4
      %v3083 = vshrl.u32 %v3017, 16
      %v3085 = vrot.slane %v3083, 7
      %v3086 = vshll.u32 %v3017, 16
      %v3088 = vor.u32 %v3085, %v3086
      %v3089 = vrot.slane %v3085, 4
      %v3091 = vshrl.u32 %v3018, 16
      %v3093 = vrot.slane %v3091, 7
      %v3094 = vshll.u32 %v3018, 16
      %v3096 = vor.u32 %v3093, %v3094
      %v3097 = vsel %vm3047, %v3089, %v3096
      %v3098 = vrot.slane %v3093, 4
      %v3100 = vshrl.u32 %v3019, 16
      %v3102 = vrot.slane %v3100, 7
      %v3103 = vshll.u32 %v3019, 16
      %v3105 = vor.u32 %v3102, %v3103
      %v3106 = vrot.slane %v3102, 4
      %v3108 = vshrl.u32 %v3020, 16
      %v3110 = vrot.slane %v3108, 7
      %v3111 = vshll.u32 %v3020, 16
      %v3113 = vor.u32 %v3110, %v3111
      %v3114 = vsel %vm3047, %v3106, %v3113
      %v3115 = vrot.slane %v3110, 4
      %v3117 = vshrl.u32 %v3021, 16
      %v3119 = vrot.slane %v3117, 7
      %v3120 = vshll.u32 %v3021, 16
      %v3122 = vor.u32 %v3119, %v3120
      %v3123 = vrot.slane %v3119, 4
      %v3125 = vshrl.u32 %v3022, 16
      %v3127 = vrot.slane %v3125, 7
      %v3128 = vshll.u32 %v3022, 16
      %v3130 = vor.u32 %v3127, %v3128
      %v3131 = vsel %vm3047, %v3123, %v3130
      %v3132 = vrot.slane %v3127, 4
      %v3134 = vshrl.u32 %v3023, 16
      %v3136 = vrot.slane %v3134, 7
      %v3137 = vshll.u32 %v3023, 16
      %v3139 = vor.u32 %v3136, %v3137
      %v3140 = vrot.slane %v3136, 4
      %v3142 = vshrl.u32 %v3024, 16
      %v3144 = vrot.slane %v3142, 7
      %v3145 = vshll.u32 %v3024, 16
      %v3147 = vor.u32 %v3144, %v3145
      %v3148 = vsel %vm3047, %v3140, %v3147
      %v3149 = vrot.slane %v3144, 4
      %v3151 = vshrl.u32 %v3025, 16
      %v3153 = vrot.slane %v3151, 7
      %v3154 = vshll.u32 %v3025, 16
      %v3156 = vor.u32 %v3153, %v3154
      %v3157 = vrot.slane %v3153, 4
      %v3159 = vshrl.u32 %v3026, 16
      %v3161 = vrot.slane %v3159, 7
      %v3162 = vshll.u32 %v3026, 16
      %v3164 = vor.u32 %v3161, %v3162
      %v3165 = vsel %vm3047, %v3157, %v3164
      %v3166 = vrot.slane %v3161, 4
      %v3168 = vshrl.u32 %v3027, 16
      %v3170 = vrot.slane %v3168, 7
      %v3171 = vshll.u32 %v3027, 16
      %v3173 = vor.u32 %v3170, %v3171
      %v3174 = vrot.slane %v3170, 4
      %v3176 = vshrl.u32 %v3028, 16
      %v3178 = vrot.slane %v3176, 7
      %v3179 = vshll.u32 %v3028, 16
      %v3181 = vor.u32 %v3178, %v3179
      %v3182 = vsel %vm3047, %v3174, %v3181
      %v3183 = vrot.slane %v3178, 4
      %v3185 = vshrl.u32 %v3029, 16
      %v3187 = vrot.slane %v3185, 7
      %v3188 = vshll.u32 %v3029, 16
      %v3190 = vor.u32 %v3187, %v3188
      %v3191 = vrot.slane %v3187, 4
      %v3193 = vshrl.u32 %v3030, 16
      %v3195 = vrot.slane %v3193, 7
      %v3196 = vshll.u32 %v3030, 16
      %v3198 = vor.u32 %v3195, %v3196
      %v3199 = vsel %vm3047, %v3191, %v3198
      %v3200 = vrot.slane %v3195, 4
      %v3202 = vshrl.u32 %v3031, 16
      %v3204 = vrot.slane %v3202, 7
      %v3205 = vshll.u32 %v3031, 16
      %v3207 = vor.u32 %v3204, %v3205
      %v3208 = vrot.slane %v3204, 4
      %v3210 = vshrl.u32 %v3032, 16
      %v3212 = vrot.slane %v3210, 7
      %v3213 = vshll.u32 %v3032, 16
      %v3215 = vor.u32 %v3212, %v3213
      %v3216 = vsel %vm3047, %v3208, %v3215
      %v3217 = vrot.slane %v3212, 4
      %v3219 = vshrl.u32 %v3033, 16
      %v3221 = vrot.slane %v3219, 7
      %v3222 = vshll.u32 %v3033, 16
      %v3224 = vor.u32 %v3221, %v3222
      %v3225 = vrot.slane %v3221, 4
      %v3227 = vshrl.u32 %v3034, 16
      %v3229 = vrot.slane %v3227, 7
      %v3230 = vshll.u32 %v3034, 16
      %v3232 = vor.u32 %v3229, %v3230
      %v3233 = vsel %vm3047, %v3225, %v3232
      %v3234 = vrot.slane %v3229, 4
      %v3236 = vshrl.u32 %v3035, 16
      %v3238 = vrot.slane %v3236, 7
      %v3239 = vshll.u32 %v3035, 16
      %v3241 = vor.u32 %v3238, %v3239
      %v3242 = vrot.slane %v3238, 4
      %v3244 = vshrl.u32 %v3036, 16
      %v3246 = vrot.slane %v3244, 7
      %v3247 = vshll.u32 %v3036, 16
      %v3249 = vor.u32 %v3246, %v3247
      %v3250 = vsel %vm3047, %v3242, %v3249
      %v3251 = vrot.slane %v3246, 4
      %v3253 = vshrl.u32 %v3037, 16
      %v3255 = vrot.slane %v3253, 7
      %v3256 = vshll.u32 %v3037, 16
      %v3258 = vor.u32 %v3255, %v3256
      %v3259 = vrot.slane %v3255, 4
      %v3261 = vshrl.u32 %v3038, 16
      %v3263 = vrot.slane %v3261, 7
      %v3264 = vshll.u32 %v3038, 16
      %v3266 = vor.u32 %v3263, %v3264
      %v3267 = vsel %vm3047, %v3259, %v3266
      %v3268 = vrot.slane %v3263, 4
      %v3270 = vshrl.u32 %v3039, 16
      %v3272 = vrot.slane %v3270, 7
      %v3273 = vshll.u32 %v3039, 16
      %v3275 = vor.u32 %v3272, %v3273
      %v3276 = vrot.slane %v3272, 4
      %v3278 = vshrl.u32 %v3040, 16
      %v3280 = vrot.slane %v3278, 7
      %v3281 = vshll.u32 %v3040, 16
      %v3283 = vor.u32 %v3280, %v3281
      %v3284 = vsel %vm3047, %v3276, %v3283
      %v3285 = vrot.slane %v3280, 4
      %v3287 = vshrl.u32 %v3041, 16
      %v3289 = vrot.slane %v3287, 7
      %v3290 = vshll.u32 %v3041, 16
      %v3292 = vor.u32 %v3289, %v3290
      %v3293 = vrot.slane %v3289, 4
      %v3295 = vshrl.u32 %v3042, 16
      %v3297 = vrot.slane %v3295, 7
      %v3298 = vshll.u32 %v3042, 16
      %v3300 = vor.u32 %v3297, %v3298
      %v3301 = vsel %vm3047, %v3293, %v3300
      %v3302 = vrot.slane %v3297, 4
      %v3304 = vshrl.u32 %v3043, 16
      %v3306 = vrot.slane %v3304, 7
      %v3307 = vshll.u32 %v3043, 16
      %v3309 = vor.u32 %v3306, %v3307
      %v3310 = vrot.slane %v3306, 4
      %v3312 = vshrl.u32 %v3044, 16
      %v3314 = vrot.slane %v3312, 7
      %v3315 = vshll.u32 %v3044, 16
      %v3317 = vor.u32 %v3314, %v3315
      %v3318 = vsel %vm3047, %v3310, %v3317
      %v3319 = vrot.slane %v3314, 4
      %s3368 = scalar_lea.vmem [#allocation2], 12
      %vm3369 = vcmask 1043456
      %vm3370 = vsmask.f32 7938
      %vm3371 = vmand %vm3369, %vm3370
      %v3372 = vld [vmem:[%s3368] sm:$0xf]
      %v3373 = vsel %vm3371, %v3054, %v3372
      %3374 = vst [vmem:[%s3368] sm:$0xf] %v3373
      %3375 = vst [vmem:[%s3368 + $0x4] sm:$0xf] %v3063
      %vm3376 = vcmask 1040384
      %vm3377 = vmand %vm3376, %vm3045
      %v3378 = vld [vmem:[%s3368 + $0x8] sm:$0x1]
      %v3379 = vsel %vm3377, %v3064, %v3378
      %3380 = vst [vmem:[%s3368 + $0x8] sm:$0x1] %v3379
      %v3381 = vld [vmem:[%s3368 + $0xc] sm:$0xf]
      %v3382 = vsel %vm3371, %v3071, %v3381
      %3383 = vst [vmem:[%s3368 + $0xc] sm:$0xf] %v3382
      %3384 = vst [vmem:[%s3368 + $0x10] sm:$0xf] %v3080
      %v3385 = vld [vmem:[%s3368 + $0x14] sm:$0x1]
      %v3386 = vsel %vm3377, %v3081, %v3385
      %3387 = vst [vmem:[%s3368 + $0x14] sm:$0x1] %v3386
      %v3388 = vld [vmem:[%s3368 + $0x18] sm:$0xf]
      %v3389 = vsel %vm3371, %v3088, %v3388
      %3390 = vst [vmem:[%s3368 + $0x18] sm:$0xf] %v3389
      %3391 = vst [vmem:[%s3368 + $0x1c] sm:$0xf] %v3097
      %v3392 = vld [vmem:[%s3368 + $0x20] sm:$0x1]
      %v3393 = vsel %vm3377, %v3098, %v3392
      %3394 = vst [vmem:[%s3368 + $0x20] sm:$0x1] %v3393
      %v3395 = vld [vmem:[%s3368 + $0x24] sm:$0xf]
      %v3396 = vsel %vm3371, %v3105, %v3395
      %3397 = vst [vmem:[%s3368 + $0x24] sm:$0xf] %v3396
      %3398 = vst [vmem:[%s3368 + $0x28] sm:$0xf] %v3114
      %v3399 = vld [vmem:[%s3368 + $0x2c] sm:$0x1]
      %v3400 = vsel %vm3377, %v3115, %v3399
      %3401 = vst [vmem:[%s3368 + $0x2c] sm:$0x1] %v3400
      %v3402 = vld [vmem:[%s3368 + $0x30] sm:$0xf]
      %v3403 = vsel %vm3371, %v3122, %v3402
      %3404 = vst [vmem:[%s3368 + $0x30] sm:$0xf] %v3403
      %3405 = vst [vmem:[%s3368 + $0x34] sm:$0xf] %v3131
      %v3406 = vld [vmem:[%s3368 + $0x38] sm:$0x1]
      %v3407 = vsel %vm3377, %v3132, %v3406
      %3408 = vst [vmem:[%s3368 + $0x38] sm:$0x1] %v3407
      %v3409 = vld [vmem:[%s3368 + $0x3c] sm:$0xf]
      %v3410 = vsel %vm3371, %v3139, %v3409
      %3411 = vst [vmem:[%s3368 + $0x3c] sm:$0xf] %v3410
      %3412 = vst [vmem:[%s3368 + $0x40] sm:$0xf] %v3148
      %v3413 = vld [vmem:[%s3368 + $0x44] sm:$0x1]
      %v3414 = vsel %vm3377, %v3149, %v3413
      %3415 = vst [vmem:[%s3368 + $0x44] sm:$0x1] %v3414
      %v3416 = vld [vmem:[%s3368 + $0x48] sm:$0xf]
      %v3417 = vsel %vm3371, %v3156, %v3416
      %3418 = vst [vmem:[%s3368 + $0x48] sm:$0xf] %v3417
      %3419 = vst [vmem:[%s3368 + $0x4c] sm:$0xf] %v3165
      %v3420 = vld [vmem:[%s3368 + $0x50] sm:$0x1]
      %v3421 = vsel %vm3377, %v3166, %v3420
      %3422 = vst [vmem:[%s3368 + $0x50] sm:$0x1] %v3421
      %v3423 = vld [vmem:[%s3368 + $0x54] sm:$0xf]
      %v3424 = vsel %vm3371, %v3173, %v3423
      %3425 = vst [vmem:[%s3368 + $0x54] sm:$0xf] %v3424
      %3426 = vst [vmem:[%s3368 + $0x58] sm:$0xf] %v3182
      %v3427 = vld [vmem:[%s3368 + $0x5c] sm:$0x1]
      %v3428 = vsel %vm3377, %v3183, %v3427
      %3429 = vst [vmem:[%s3368 + $0x5c] sm:$0x1] %v3428
      %v3430 = vld [vmem:[%s3368 + $0x60] sm:$0xf]
      %v3431 = vsel %vm3371, %v3190, %v3430
      %3432 = vst [vmem:[%s3368 + $0x60] sm:$0xf] %v3431
      %3433 = vst [vmem:[%s3368 + $0x64] sm:$0xf] %v3199
      %v3434 = vld [vmem:[%s3368 + $0x68] sm:$0x1]
      %v3435 = vsel %vm3377, %v3200, %v3434
      %3436 = vst [vmem:[%s3368 + $0x68] sm:$0x1] %v3435
      %v3437 = vld [vmem:[%s3368 + $0x6c] sm:$0xf]
      %v3438 = vsel %vm3371, %v3207, %v3437
      %3439 = vst [vmem:[%s3368 + $0x6c] sm:$0xf] %v3438
      %3440 = vst [vmem:[%s3368 + $0x70] sm:$0xf] %v3216
      %v3441 = vld [vmem:[%s3368 + $0x74] sm:$0x1]
      %v3442 = vsel %vm3377, %v3217, %v3441
      %3443 = vst [vmem:[%s3368 + $0x74] sm:$0x1] %v3442
      %v3444 = vld [vmem:[%s3368 + $0x78] sm:$0xf]
      %v3445 = vsel %vm3371, %v3224, %v3444
      %3446 = vst [vmem:[%s3368 + $0x78] sm:$0xf] %v3445
      %3447 = vst [vmem:[%s3368 + $0x7c] sm:$0xf] %v3233
      %v3448 = vld [vmem:[%s3368 + $0x80] sm:$0x1]
      %v3449 = vsel %vm3377, %v3234, %v3448
      %3450 = vst [vmem:[%s3368 + $0x80] sm:$0x1] %v3449
      %v3451 = vld [vmem:[%s3368 + $0x84] sm:$0xf]
      %v3452 = vsel %vm3371, %v3241, %v3451
      %3453 = vst [vmem:[%s3368 + $0x84] sm:$0xf] %v3452
      %3454 = vst [vmem:[%s3368 + $0x88] sm:$0xf] %v3250
      %v3455 = vld [vmem:[%s3368 + $0x8c] sm:$0x1]
      %v3456 = vsel %vm3377, %v3251, %v3455
      %3457 = vst [vmem:[%s3368 + $0x8c] sm:$0x1] %v3456
      %v3458 = vld [vmem:[%s3368 + $0x90] sm:$0xf]
      %v3459 = vsel %vm3371, %v3258, %v3458
      %3460 = vst [vmem:[%s3368 + $0x90] sm:$0xf] %v3459
      %3461 = vst [vmem:[%s3368 + $0x94] sm:$0xf] %v3267
      %v3462 = vld [vmem:[%s3368 + $0x98] sm:$0x1]
      %v3463 = vsel %vm3377, %v3268, %v3462
      %3464 = vst [vmem:[%s3368 + $0x98] sm:$0x1] %v3463
      %v3465 = vld [vmem:[%s3368 + $0x9c] sm:$0xf]
      %v3466 = vsel %vm3371, %v3275, %v3465
      %3467 = vst [vmem:[%s3368 + $0x9c] sm:$0xf] %v3466
      %3468 = vst [vmem:[%s3368 + $0xa0] sm:$0xf] %v3284
      %v3469 = vld [vmem:[%s3368 + $0xa4] sm:$0x1]
      %v3470 = vsel %vm3377, %v3285, %v3469
      %3471 = vst [vmem:[%s3368 + $0xa4] sm:$0x1] %v3470
      %v3472 = vld [vmem:[%s3368 + $0xa8] sm:$0xf]
      %v3473 = vsel %vm3371, %v3292, %v3472
      %3474 = vst [vmem:[%s3368 + $0xa8] sm:$0xf] %v3473
      %3475 = vst [vmem:[%s3368 + $0xac] sm:$0xf] %v3301
      %v3476 = vld [vmem:[%s3368 + $0xb0] sm:$0x1]
      %v3477 = vsel %vm3377, %v3302, %v3476
      %3478 = vst [vmem:[%s3368 + $0xb0] sm:$0x1] %v3477
      %v3479 = vld [vmem:[%s3368 + $0xb4] sm:$0xf]
      %v3480 = vsel %vm3371, %v3309, %v3479
      %3481 = vst [vmem:[%s3368 + $0xb4] sm:$0xf] %v3480
      %3482 = vst [vmem:[%s3368 + $0xb8] sm:$0xf] %v3318
      %v3483 = vld [vmem:[%s3368 + $0xbc] sm:$0x1]
      %v3484 = vsel %vm3377, %v3319, %v3483
      %3485 = vst [vmem:[%s3368 + $0xbc] sm:$0x1] %v3484
      %v3486 = vld [vmem:[#allocation2] sm:$0xf]
      %v3487 = vld [vmem:[#allocation2 + $0x4] sm:$0xf]
      %v3488 = vld [vmem:[#allocation2 + $0x8] sm:$0x1]
      %v3489 = vld [vmem:[#allocation2 + $0xc] sm:$0xf]
      %v3490 = vld [vmem:[#allocation2 + $0x10] sm:$0xf]
      %v3491 = vld [vmem:[#allocation2 + $0x14] sm:$0x1]
      %v3492 = vld [vmem:[#allocation2 + $0x18] sm:$0xf]
      %v3493 = vld [vmem:[#allocation2 + $0x1c] sm:$0xf]
      %v3494 = vld [vmem:[#allocation2 + $0x20] sm:$0x1]
      %v3495 = vld [vmem:[#allocation2 + $0x24] sm:$0xf]
      %v3496 = vld [vmem:[#allocation2 + $0x28] sm:$0xf]
      %v3497 = vld [vmem:[#allocation2 + $0x2c] sm:$0x1]
      %v3498 = vld [vmem:[#allocation2 + $0x30] sm:$0xf]
      %v3499 = vld [vmem:[#allocation2 + $0x34] sm:$0xf]
      %v3500 = vld [vmem:[#allocation2 + $0x38] sm:$0x1]
      %v3501 = vld [vmem:[#allocation2 + $0x3c] sm:$0xf]
      %v3502 = vld [vmem:[#allocation2 + $0x40] sm:$0xf]
      %v3503 = vld [vmem:[#allocation2 + $0x44] sm:$0x1]
      %v3504 = vld [vmem:[#allocation2 + $0x48] sm:$0xf]
      %v3505 = vld [vmem:[#allocation2 + $0x4c] sm:$0xf]
      %v3506 = vld [vmem:[#allocation2 + $0x50] sm:$0x1]
      %v3507 = vld [vmem:[#allocation2 + $0x54] sm:$0xf]
      %v3508 = vld [vmem:[#allocation2 + $0x58] sm:$0xf]
      %v3509 = vld [vmem:[#allocation2 + $0x5c] sm:$0x1]
      %v3510 = vld [vmem:[#allocation2 + $0x60] sm:$0xf]
      %v3511 = vld [vmem:[#allocation2 + $0x64] sm:$0xf]
      %v3512 = vld [vmem:[#allocation2 + $0x68] sm:$0x1]
      %v3513 = vld [vmem:[#allocation2 + $0x6c] sm:$0xf]
      %v3514 = vld [vmem:[#allocation2 + $0x70] sm:$0xf]
      %v3515 = vld [vmem:[#allocation2 + $0x74] sm:$0x1]
      %v3516 = vld [vmem:[#allocation2 + $0x78] sm:$0xf]
      %v3517 = vld [vmem:[#allocation2 + $0x7c] sm:$0xf]
      %v3518 = vld [vmem:[#allocation2 + $0x80] sm:$0x1]
      %v3519 = vld [vmem:[#allocation2 + $0x84] sm:$0xf]
      %v3520 = vld [vmem:[#allocation2 + $0x88] sm:$0xf]
      %v3521 = vld [vmem:[#allocation2 + $0x8c] sm:$0x1]
      %v3522 = vld [vmem:[#allocation2 + $0x90] sm:$0xf]
      %v3523 = vld [vmem:[#allocation2 + $0x94] sm:$0xf]
      %v3524 = vld [vmem:[#allocation2 + $0x98] sm:$0x1]
      %v3525 = vld [vmem:[#allocation2 + $0x9c] sm:$0xf]
      %v3526 = vld [vmem:[#allocation2 + $0xa0] sm:$0xf]
      %v3527 = vld [vmem:[#allocation2 + $0xa4] sm:$0x1]
      %v3528 = vld [vmem:[#allocation2 + $0xa8] sm:$0xf]
      %v3529 = vld [vmem:[#allocation2 + $0xac] sm:$0xf]
      %v3530 = vld [vmem:[#allocation2 + $0xb0] sm:$0x1]
      %v3531 = vld [vmem:[#allocation2 + $0xb4] sm:$0xf]
      %v3532 = vld [vmem:[#allocation2 + $0xb8] sm:$0xf]
      %v3533 = vld [vmem:[#allocation2 + $0xbc] sm:$0x1]
      %v3534 = vld [vmem:[#allocation2 + $0xc0] sm:$0xf]
      %v3535 = vld [vmem:[#allocation2 + $0xc4] sm:$0xf]
      %v3536 = vld [vmem:[#allocation2 + $0xc8] sm:$0x1]
      %v3537 = vld [vmem:[#allocation2 + $0xcc] sm:$0xf]
      %v3538 = vld [vmem:[#allocation2 + $0xd0] sm:$0xf]
      %v3539 = vld [vmem:[#allocation2 + $0xd4] sm:$0x1]
      %v3540 = vld [vmem:[%s2] sm:$0xf]
      %v3541 = vld [vmem:[%s2 + $0x4] sm:$0xf]
      %v3542 = vld [vmem:[%s2 + $0x8] sm:$0xf]
      %v3543 = vld [vmem:[%s2 + $0xc] sm:$0xf]
      %v3544 = vld [vmem:[%s2 + $0x10] sm:$0xf]
      %v3545 = vld [vmem:[%s2 + $0x14] sm:$0xf]
      %v3546 = vld [vmem:[%s2 + $0x18] sm:$0xf]
      %v3547 = vld [vmem:[%s2 + $0x1c] sm:$0xf]
      %v3548 = vld [vmem:[%s2 + $0x20] sm:$0xf]
      %v3549 = vld [vmem:[%s2 + $0x24] sm:$0xf]
      %v3550 = vld [vmem:[%s2 + $0x28] sm:$0xf]
      %v3551 = vld [vmem:[%s2 + $0x2c] sm:$0xf]
      %v3552 = vld [vmem:[%s2 + $0x30] sm:$0xf]
      %v3553 = vld [vmem:[%s2 + $0x34] sm:$0xf]
      %v3554 = vld [vmem:[%s2 + $0x38] sm:$0xf]
      %v3555 = vld [vmem:[%s2 + $0x3c] sm:$0xf]
      %vm3556 = vsmask.f32 3328
      %vm3557 = vsmask.f32 7440
      %vm3558 = vmor %vm3556, %vm3557
      %v3560 = vshrl.u32 %v3486, 16
      %v3562 = vrot.slane %v3560, 4
      %v3563 = vshll.u32 %v3486, 16
      %v3565 = vrot.slane %v3563, 5
      %v3566 = vor.u32 %v3562, %v3565
      %v3567 = vrot.slane %v3566, 4
      %v3569 = vshll.u32 %v3487, 16
      %v3571 = vrot.slane %v3569, 5
      %v3572 = vsel %vm3558, %v3567, %v3571
      %v3573 = vshrl.u32 %v3487, 16
      %v3575 = vrot.slane %v3573, 4
      %v3576 = vor.u32 %v3575, %v3571
      %v3577 = vrot.slane %v3576, 4
      %v3579 = vshll.u32 %v3488, 16
      %v3581 = vrot.slane %v3579, 5
      %v3582 = vsel %vm3558, %v3577, %v3581
      %v3584 = vshrl.u32 %v3489, 16
      %v3586 = vrot.slane %v3584, 4
      %v3587 = vshll.u32 %v3489, 16
      %v3589 = vrot.slane %v3587, 5
      %v3590 = vor.u32 %v3586, %v3589
      %v3591 = vrot.slane %v3590, 4
      %v3593 = vshll.u32 %v3490, 16
      %v3595 = vrot.slane %v3593, 5
      %v3596 = vsel %vm3558, %v3591, %v3595
      %v3597 = vshrl.u32 %v3490, 16
      %v3599 = vrot.slane %v3597, 4
      %v3600 = vor.u32 %v3599, %v3595
      %v3601 = vrot.slane %v3600, 4
      %v3603 = vshll.u32 %v3491, 16
      %v3605 = vrot.slane %v3603, 5
      %v3606 = vsel %vm3558, %v3601, %v3605
      %v3608 = vshrl.u32 %v3492, 16
      %v3610 = vrot.slane %v3608, 4
      %v3611 = vshll.u32 %v3492, 16
      %v3613 = vrot.slane %v3611, 5
      %v3614 = vor.u32 %v3610, %v3613
      %v3615 = vrot.slane %v3614, 4
      %v3617 = vshll.u32 %v3493, 16
      %v3619 = vrot.slane %v3617, 5
      %v3620 = vsel %vm3558, %v3615, %v3619
      %v3621 = vshrl.u32 %v3493, 16
      %v3623 = vrot.slane %v3621, 4
      %v3624 = vor.u32 %v3623, %v3619
      %v3625 = vrot.slane %v3624, 4
      %v3627 = vshll.u32 %v3494, 16
      %v3629 = vrot.slane %v3627, 5
      %v3630 = vsel %vm3558, %v3625, %v3629
      %v3632 = vshrl.u32 %v3495, 16
      %v3634 = vrot.slane %v3632, 4
      %v3635 = vshll.u32 %v3495, 16
      %v3637 = vrot.slane %v3635, 5
      %v3638 = vor.u32 %v3634, %v3637
      %v3639 = vrot.slane %v3638, 4
      %v3641 = vshll.u32 %v3496, 16
      %v3643 = vrot.slane %v3641, 5
      %v3644 = vsel %vm3558, %v3639, %v3643
      %v3645 = vshrl.u32 %v3496, 16
      %v3647 = vrot.slane %v3645, 4
      %v3648 = vor.u32 %v3647, %v3643
      %v3649 = vrot.slane %v3648, 4
      %v3651 = vshll.u32 %v3497, 16
      %v3653 = vrot.slane %v3651, 5
      %v3654 = vsel %vm3558, %v3649, %v3653
      %v3656 = vshrl.u32 %v3498, 16
      %v3658 = vrot.slane %v3656, 4
      %v3659 = vshll.u32 %v3498, 16
      %v3661 = vrot.slane %v3659, 5
      %v3662 = vor.u32 %v3658, %v3661
      %v3663 = vrot.slane %v3662, 4
      %v3665 = vshll.u32 %v3499, 16
      %v3667 = vrot.slane %v3665, 5
      %v3668 = vsel %vm3558, %v3663, %v3667
      %v3669 = vshrl.u32 %v3499, 16
      %v3671 = vrot.slane %v3669, 4
      %v3672 = vor.u32 %v3671, %v3667
      %v3673 = vrot.slane %v3672, 4
      %v3675 = vshll.u32 %v3500, 16
      %v3677 = vrot.slane %v3675, 5
      %v3678 = vsel %vm3558, %v3673, %v3677
      %v3680 = vshrl.u32 %v3501, 16
      %v3682 = vrot.slane %v3680, 4
      %v3683 = vshll.u32 %v3501, 16
      %v3685 = vrot.slane %v3683, 5
      %v3686 = vor.u32 %v3682, %v3685
      %v3687 = vrot.slane %v3686, 4
      %v3689 = vshll.u32 %v3502, 16
      %v3691 = vrot.slane %v3689, 5
      %v3692 = vsel %vm3558, %v3687, %v3691
      %v3693 = vshrl.u32 %v3502, 16
      %v3695 = vrot.slane %v3693, 4
      %v3696 = vor.u32 %v3695, %v3691
      %v3697 = vrot.slane %v3696, 4
      %v3699 = vshll.u32 %v3503, 16
      %v3701 = vrot.slane %v3699, 5
      %v3702 = vsel %vm3558, %v3697, %v3701
      %v3704 = vshrl.u32 %v3504, 16
      %v3706 = vrot.slane %v3704, 4
      %v3707 = vshll.u32 %v3504, 16
      %v3709 = vrot.slane %v3707, 5
      %v3710 = vor.u32 %v3706, %v3709
      %v3711 = vrot.slane %v3710, 4
      %v3713 = vshll.u32 %v3505, 16
      %v3715 = vrot.slane %v3713, 5
      %v3716 = vsel %vm3558, %v3711, %v3715
      %v3717 = vshrl.u32 %v3505, 16
      %v3719 = vrot.slane %v3717, 4
      %v3720 = vor.u32 %v3719, %v3715
      %v3721 = vrot.slane %v3720, 4
      %v3723 = vshll.u32 %v3506, 16
      %v3725 = vrot.slane %v3723, 5
      %v3726 = vsel %vm3558, %v3721, %v3725
      %v3728 = vshrl.u32 %v3507, 16
      %v3730 = vrot.slane %v3728, 4
      %v3731 = vshll.u32 %v3507, 16
      %v3733 = vrot.slane %v3731, 5
      %v3734 = vor.u32 %v3730, %v3733
      %v3735 = vrot.slane %v3734, 4
      %v3737 = vshll.u32 %v3508, 16
      %v3739 = vrot.slane %v3737, 5
      %v3740 = vsel %vm3558, %v3735, %v3739
      %v3741 = vshrl.u32 %v3508, 16
      %v3743 = vrot.slane %v3741, 4
      %v3744 = vor.u32 %v3743, %v3739
      %v3745 = vrot.slane %v3744, 4
      %v3747 = vshll.u32 %v3509, 16
      %v3749 = vrot.slane %v3747, 5
      %v3750 = vsel %vm3558, %v3745, %v3749
      %v3752 = vshrl.u32 %v3510, 16
      %v3754 = vrot.slane %v3752, 4
      %v3755 = vshll.u32 %v3510, 16
      %v3757 = vrot.slane %v3755, 5
      %v3758 = vor.u32 %v3754, %v3757
      %v3759 = vrot.slane %v3758, 4
      %v3761 = vshll.u32 %v3511, 16
      %v3763 = vrot.slane %v3761, 5
      %v3764 = vsel %vm3558, %v3759, %v3763
      %v3765 = vshrl.u32 %v3511, 16
      %v3767 = vrot.slane %v3765, 4
      %v3768 = vor.u32 %v3767, %v3763
      %v3769 = vrot.slane %v3768, 4
      %v3771 = vshll.u32 %v3512, 16
      %v3773 = vrot.slane %v3771, 5
      %v3774 = vsel %vm3558, %v3769, %v3773
      %v3776 = vshrl.u32 %v3513, 16
      %v3778 = vrot.slane %v3776, 4
      %v3779 = vshll.u32 %v3513, 16
      %v3781 = vrot.slane %v3779, 5
      %v3782 = vor.u32 %v3778, %v3781
      %v3783 = vrot.slane %v3782, 4
      %v3785 = vshll.u32 %v3514, 16
      %v3787 = vrot.slane %v3785, 5
      %v3788 = vsel %vm3558, %v3783, %v3787
      %v3789 = vshrl.u32 %v3514, 16
      %v3791 = vrot.slane %v3789, 4
      %v3792 = vor.u32 %v3791, %v3787
      %v3793 = vrot.slane %v3792, 4
      %v3795 = vshll.u32 %v3515, 16
      %v3797 = vrot.slane %v3795, 5
      %v3798 = vsel %vm3558, %v3793, %v3797
      %v3800 = vshrl.u32 %v3516, 16
      %v3802 = vrot.slane %v3800, 4
      %v3803 = vshll.u32 %v3516, 16
      %v3805 = vrot.slane %v3803, 5
      %v3806 = vor.u32 %v3802, %v3805
      %v3807 = vrot.slane %v3806, 4
      %v3809 = vshll.u32 %v3517, 16
      %v3811 = vrot.slane %v3809, 5
      %v3812 = vsel %vm3558, %v3807, %v3811
      %v3813 = vshrl.u32 %v3517, 16
      %v3815 = vrot.slane %v3813, 4
      %v3816 = vor.u32 %v3815, %v3811
      %v3817 = vrot.slane %v3816, 4
      %v3819 = vshll.u32 %v3518, 16
      %v3821 = vrot.slane %v3819, 5
      %v3822 = vsel %vm3558, %v3817, %v3821
      %v3824 = vshrl.u32 %v3519, 16
      %v3826 = vrot.slane %v3824, 4
      %v3827 = vshll.u32 %v3519, 16
      %v3829 = vrot.slane %v3827, 5
      %v3830 = vor.u32 %v3826, %v3829
      %v3831 = vrot.slane %v3830, 4
      %v3833 = vshll.u32 %v3520, 16
      %v3835 = vrot.slane %v3833, 5
      %v3836 = vsel %vm3558, %v3831, %v3835
      %v3837 = vshrl.u32 %v3520, 16
      %v3839 = vrot.slane %v3837, 4
      %v3840 = vor.u32 %v3839, %v3835
      %v3841 = vrot.slane %v3840, 4
      %v3843 = vshll.u32 %v3521, 16
      %v3845 = vrot.slane %v3843, 5
      %v3846 = vsel %vm3558, %v3841, %v3845
      %v3848 = vshrl.u32 %v3522, 16
      %v3850 = vrot.slane %v3848, 4
      %v3851 = vshll.u32 %v3522, 16
      %v3853 = vrot.slane %v3851, 5
      %v3854 = vor.u32 %v3850, %v3853
      %v3855 = vrot.slane %v3854, 4
      %v3857 = vshll.u32 %v3523, 16
      %v3859 = vrot.slane %v3857, 5
      %v3860 = vsel %vm3558, %v3855, %v3859
      %v3861 = vshrl.u32 %v3523, 16
      %v3863 = vrot.slane %v3861, 4
      %v3864 = vor.u32 %v3863, %v3859
      %v3865 = vrot.slane %v3864, 4
      %v3867 = vshll.u32 %v3524, 16
      %v3869 = vrot.slane %v3867, 5
      %v3870 = vsel %vm3558, %v3865, %v3869
      %v3872 = vshrl.u32 %v3525, 16
      %v3874 = vrot.slane %v3872, 4
      %v3875 = vshll.u32 %v3525, 16
      %v3877 = vrot.slane %v3875, 5
      %v3878 = vor.u32 %v3874, %v3877
      %v3879 = vrot.slane %v3878, 4
      %v3881 = vshll.u32 %v3526, 16
      %v3883 = vrot.slane %v3881, 5
      %v3884 = vsel %vm3558, %v3879, %v3883
      %v3885 = vshrl.u32 %v3526, 16
      %v3887 = vrot.slane %v3885, 4
      %v3888 = vor.u32 %v3887, %v3883
      %v3889 = vrot.slane %v3888, 4
      %v3891 = vshll.u32 %v3527, 16
      %v3893 = vrot.slane %v3891, 5
      %v3894 = vsel %vm3558, %v3889, %v3893
      %v3896 = vshrl.u32 %v3528, 16
      %v3898 = vrot.slane %v3896, 4
      %v3899 = vshll.u32 %v3528, 16
      %v3901 = vrot.slane %v3899, 5
      %v3902 = vor.u32 %v3898, %v3901
      %v3903 = vrot.slane %v3902, 4
      %v3905 = vshll.u32 %v3529, 16
      %v3907 = vrot.slane %v3905, 5
      %v3908 = vsel %vm3558, %v3903, %v3907
      %v3909 = vshrl.u32 %v3529, 16
      %v3911 = vrot.slane %v3909, 4
      %v3912 = vor.u32 %v3911, %v3907
      %v3913 = vrot.slane %v3912, 4
      %v3915 = vshll.u32 %v3530, 16
      %v3917 = vrot.slane %v3915, 5
      %v3918 = vsel %vm3558, %v3913, %v3917
      %v3920 = vshrl.u32 %v3531, 16
      %v3922 = vrot.slane %v3920, 4
      %v3923 = vshll.u32 %v3531, 16
      %v3925 = vrot.slane %v3923, 5
      %v3926 = vor.u32 %v3922, %v3925
      %v3927 = vrot.slane %v3926, 4
      %v3929 = vshll.u32 %v3532, 16
      %v3931 = vrot.slane %v3929, 5
      %v3932 = vsel %vm3558, %v3927, %v3931
      %v3933 = vshrl.u32 %v3532, 16
      %v3935 = vrot.slane %v3933, 4
      %v3936 = vor.u32 %v3935, %v3931
      %v3937 = vrot.slane %v3936, 4
      %v3939 = vshll.u32 %v3533, 16
      %v3941 = vrot.slane %v3939, 5
      %v3942 = vsel %vm3558, %v3937, %v3941
      %s3943 = scalar_lea.vmem %s2, 64
      %v3944 = vld [vmem:[%s3943] sm:$0xf]
      %v3945 = vld [vmem:[%s3943 + $0x4] sm:$0xf]
      %v3946 = vld [vmem:[%s3943 + $0x8] sm:$0xf]
      %v3947 = vld [vmem:[%s3943 + $0xc] sm:$0xf]
      %v3948 = vld [vmem:[%s3943 + $0x10] sm:$0xf]
      %v3949 = vld [vmem:[%s3943 + $0x14] sm:$0xf]
      %v3950 = vld [vmem:[%s3943 + $0x18] sm:$0xf]
      %v3951 = vld [vmem:[%s3943 + $0x1c] sm:$0xf]
      %v3952 = vld [vmem:[%s3943 + $0x20] sm:$0xf]
      %v3953 = vld [vmem:[%s3943 + $0x24] sm:$0xf]
      %v3954 = vld [vmem:[%s3943 + $0x28] sm:$0xf]
      %v3955 = vld [vmem:[%s3943 + $0x2c] sm:$0xf]
      %v3956 = vld [vmem:[%s3943 + $0x30] sm:$0xf]
      %v3957 = vld [vmem:[%s3943 + $0x34] sm:$0xf]
      %v3958 = vld [vmem:[%s3943 + $0x38] sm:$0xf]
      %v3959 = vld [vmem:[%s3943 + $0x3c] sm:$0xf]
      %v3960 = vunpack.c.l.b16 %v3572
      %v3961 = vunpack.c.l.b16 %v3582
      %v3962 = vunpack.c.l.b16 %v3596
      %v3963 = vunpack.c.l.b16 %v3606
      %v3964 = vunpack.c.l.b16 %v3620
      %v3965 = vunpack.c.l.b16 %v3630
      %v3966 = vunpack.c.l.b16 %v3644
      %v3967 = vunpack.c.l.b16 %v3654
      %v3968 = vunpack.c.l.b16 %v3668
      %v3969 = vunpack.c.l.b16 %v3678
      %v3970 = vunpack.c.l.b16 %v3692
      %v3971 = vunpack.c.l.b16 %v3702
      %v3972 = vunpack.c.l.b16 %v3716
      %v3973 = vunpack.c.l.b16 %v3726
      %v3974 = vunpack.c.l.b16 %v3740
      %v3975 = vunpack.c.l.b16 %v3750
      %v3976 = vunpack.c.l.b16 %v3764
      %v3977 = vunpack.c.l.b16 %v3774
      %v3978 = vunpack.c.l.b16 %v3788
      %v3979 = vunpack.c.l.b16 %v3798
      %v3980 = vunpack.c.l.b16 %v3812
      %v3981 = vunpack.c.l.b16 %v3822
      %v3982 = vunpack.c.l.b16 %v3836
      %v3983 = vunpack.c.l.b16 %v3846
      %v3984 = vunpack.c.l.b16 %v3860
      %v3985 = vunpack.c.l.b16 %v3870
      %v3986 = vunpack.c.l.b16 %v3884
      %v3987 = vunpack.c.l.b16 %v3894
      %v3988 = vunpack.c.l.b16 %v3908
      %v3989 = vunpack.c.l.b16 %v3918
      %v3990 = vunpack.c.l.b16 %v3932
      %v3991 = vunpack.c.l.b16 %v3942
      %v3992 = vpack.c.b16 %v3961, %v3960
      %v3993 = vpack.c.b16 %v3963, %v3962
      %v3994 = vpack.c.b16 %v3965, %v3964
      %v3995 = vpack.c.b16 %v3967, %v3966
      %v3996 = vpack.c.b16 %v3969, %v3968
      %v3997 = vpack.c.b16 %v3971, %v3970
      %v3998 = vpack.c.b16 %v3973, %v3972
      %v3999 = vpack.c.b16 %v3975, %v3974
      %v4000 = vpack.c.b16 %v3977, %v3976
      %v4001 = vpack.c.b16 %v3979, %v3978
      %v4002 = vpack.c.b16 %v3981, %v3980
      %v4003 = vpack.c.b16 %v3983, %v3982
      %v4004 = vpack.c.b16 %v3985, %v3984
      %v4005 = vpack.c.b16 %v3987, %v3986
      %v4006 = vpack.c.b16 %v3989, %v3988
      %v4007 = vpack.c.b16 %v3991, %v3990
      %v4040 = vunpack.c.l.b16 %v3944
      %v4041 = vunpack.c.l.b16 %v3945
      %v4042 = vunpack.c.l.b16 %v3946
      %v4043 = vunpack.c.l.b16 %v3947
      %v4044 = vunpack.c.l.b16 %v3948
      %v4045 = vunpack.c.l.b16 %v3949
      %v4046 = vunpack.c.l.b16 %v3950
      %v4047 = vunpack.c.l.b16 %v3951
      %v4048 = vunpack.c.l.b16 %v3952
      %v4049 = vunpack.c.l.b16 %v3953
      %v4050 = vunpack.c.l.b16 %v3954
      %v4051 = vunpack.c.l.b16 %v3955
      %v4052 = vunpack.c.l.b16 %v3956
      %v4053 = vunpack.c.l.b16 %v3957
      %v4054 = vunpack.c.l.b16 %v3958
      %v4055 = vunpack.c.l.b16 %v3959
      %v4056 = vpack.c.b16 %v4041, %v4040
      %v4057 = vpack.c.b16 %v4043, %v4042
      %v4058 = vpack.c.b16 %v4045, %v4044
      %v4059 = vpack.c.b16 %v4047, %v4046
      %v4060 = vpack.c.b16 %v4049, %v4048
      %v4061 = vpack.c.b16 %v4051, %v4050
      %v4062 = vpack.c.b16 %v4053, %v4052
      %v4063 = vpack.c.b16 %v4055, %v4054
      %4072 = vmatprep.subr.bf16.mxu0 0
      %4073 = vmatpush1.bf16.msra.mxu0 %v4056
      %4074 = vmatprep.subr.bf16.mxu0 0
      %4075 = vmatpush1.bf16.msra.mxu0 %v4057
      %4076 = vmatprep.subr.bf16.mxu0 0
      %4077 = vmatpush1.bf16.msra.mxu0 %v4058
      %4078 = vmatprep.subr.bf16.mxu0 0
      %4079 = vmatpush1.bf16.msra.mxu0 %v4059
      %4080 = vmatprep.subr.bf16.mxu0 0
      %4081 = vmatpush1.bf16.msra.mxu0 %v4060
      %4082 = vmatprep.subr.bf16.mxu0 0
      %4083 = vmatpush1.bf16.msra.mxu0 %v4061
      %4084 = vmatprep.subr.bf16.mxu0 0
      %4085 = vmatpush1.bf16.msra.mxu0 %v4062
      %4086 = vmatprep.subr.bf16.mxu0 0
      %4087 = vmatpush1.bf16.msra.mxu0 %v4063
      %4088 = vmatprep.subr.bf16.mxu0 0
      %4089 = vmatpush1.bf16.msra.mxu0 0
      %4090 = vmatprep.subr.bf16.mxu0 0
      %4091 = vmatpush1.bf16.msra.mxu0 0
      %4092 = vmatprep.subr.bf16.mxu0 0
      %4093 = vmatpush1.bf16.msra.mxu0 0
      %4094 = vmatprep.subr.bf16.mxu0 0
      %4095 = vmatpush1.bf16.msra.mxu0 0
      %4096 = vmatprep.subr.bf16.mxu0 0
      %4097 = vmatpush1.bf16.msra.mxu0 0
      %4098 = vmatprep.subr.bf16.mxu0 0
      %4099 = vmatpush1.bf16.msra.mxu0 0
      %4100 = vmatprep.subr.bf16.mxu0 0
      %4101 = vmatpush1.bf16.msra.mxu0 0
      %4102 = vmatprep.subr.bf16.mxu0 0
      %4103 = vmatpush1.bf16.msra.mxu0 0
      %4104 = vmatprep.mubr.bf16.mxu0 0
      %4105 = vmatmul.mubr.bf16.gmra.mrb[0].mxu0 %v3992
      %v4106 = vpop.f32.mrb[0].mxu0
      %v4107 = vadd.f32 0.0, %v4106
      %v4108 = vpop.f32.mrb[0].mxu0
      %v4109 = vpop.f32.mrb[0].mxu0
      %v4110 = vadd.f32 0.0, %v4109
      %v4111 = vpop.f32.mrb[0].mxu0
      %4112 = vmatprep.mubr.bf16.mxu0 0
      %4113 = vmatmul.mubr.bf16.gmra.mrb[0].mxu0 %v3993
      %v4114 = vpop.f32.mrb[0].mxu0
      %v4115 = vadd.f32 0.0, %v4114
      %v4116 = vpop.f32.mrb[0].mxu0
      %v4117 = vpop.f32.mrb[0].mxu0
      %v4118 = vadd.f32 0.0, %v4117
      %v4119 = vpop.f32.mrb[0].mxu0
      %4120 = vmatprep.mubr.bf16.mxu0 0
      %4121 = vmatmul.mubr.bf16.gmra.mrb[0].mxu0 %v3994
      %v4122 = vpop.f32.mrb[0].mxu0
      %v4123 = vadd.f32 0.0, %v4122
      %v4124 = vpop.f32.mrb[0].mxu0
      %v4125 = vpop.f32.mrb[0].mxu0
      %v4126 = vadd.f32 0.0, %v4125
      %v4127 = vpop.f32.mrb[0].mxu0
      %4128 = vmatprep.mubr.bf16.mxu0 0
      %4129 = vmatmul.mubr.bf16.gmra.mrb[0].mxu0 %v3995
      %v4130 = vpop.f32.mrb[0].mxu0
      %v4131 = vadd.f32 0.0, %v4130
      %v4132 = vpop.f32.mrb[0].mxu0
      %v4133 = vpop.f32.mrb[0].mxu0
      %v4134 = vadd.f32 0.0, %v4133
      %v4135 = vpop.f32.mrb[0].mxu0
      %4136 = vmatprep.mubr.bf16.mxu0 0
      %4137 = vmatmul.mubr.bf16.gmra.mrb[0].mxu0 %v3996
      %v4138 = vpop.f32.mrb[0].mxu0
      %v4139 = vadd.f32 0.0, %v4138
      %v4140 = vpop.f32.mrb[0].mxu0
      %v4141 = vpop.f32.mrb[0].mxu0
      %v4142 = vadd.f32 0.0, %v4141
      %v4143 = vpop.f32.mrb[0].mxu0
      %4144 = vmatprep.mubr.bf16.mxu0 0
      %4145 = vmatmul.mubr.bf16.gmra.mrb[0].mxu0 %v3997
      %v4146 = vpop.f32.mrb[0].mxu0
      %v4147 = vadd.f32 0.0, %v4146
      %v4148 = vpop.f32.mrb[0].mxu0
      %v4149 = vpop.f32.mrb[0].mxu0
      %v4150 = vadd.f32 0.0, %v4149
      %v4151 = vpop.f32.mrb[0].mxu0
      %4152 = vmatprep.mubr.bf16.mxu0 0
      %4153 = vmatmul.mubr.bf16.gmra.mrb[0].mxu0 %v3998
      %v4154 = vpop.f32.mrb[0].mxu0
      %v4155 = vadd.f32 0.0, %v4154
      %v4156 = vpop.f32.mrb[0].mxu0
      %v4157 = vpop.f32.mrb[0].mxu0
      %v4158 = vadd.f32 0.0, %v4157
      %v4159 = vpop.f32.mrb[0].mxu0
      %4160 = vmatprep.mubr.bf16.mxu0 0
      %4161 = vmatmul.mubr.bf16.gmra.mrb[0].mxu0 %v3999
      %v4162 = vpop.f32.mrb[0].mxu0
      %v4163 = vadd.f32 0.0, %v4162
      %v4164 = vpop.f32.mrb[0].mxu0
      %v4165 = vpop.f32.mrb[0].mxu0
      %v4166 = vadd.f32 0.0, %v4165
      %v4167 = vpop.f32.mrb[0].mxu0
      %4168 = vmatprep.mubr.bf16.mxu0 0
      %4169 = vmatmul.mubr.bf16.gmra.mrb[0].mxu0 %v4000
      %v4170 = vpop.f32.mrb[0].mxu0
      %v4171 = vadd.f32 0.0, %v4170
      %v4172 = vpop.f32.mrb[0].mxu0
      %v4173 = vpop.f32.mrb[0].mxu0
      %v4174 = vadd.f32 0.0, %v4173
      %v4175 = vpop.f32.mrb[0].mxu0
      %4176 = vmatprep.mubr.bf16.mxu0 0
      %4177 = vmatmul.mubr.bf16.gmra.mrb[0].mxu0 %v4001
      %v4178 = vpop.f32.mrb[0].mxu0
      %v4179 = vadd.f32 0.0, %v4178
      %v4180 = vpop.f32.mrb[0].mxu0
      %v4181 = vpop.f32.mrb[0].mxu0
      %v4182 = vadd.f32 0.0, %v4181
      %v4183 = vpop.f32.mrb[0].mxu0
      %4184 = vmatprep.mubr.bf16.mxu0 0
      %4185 = vmatmul.mubr.bf16.gmra.mrb[0].mxu0 %v4002
      %v4186 = vpop.f32.mrb[0].mxu0
      %v4187 = vadd.f32 0.0, %v4186
      %v4188 = vpop.f32.mrb[0].mxu0
      %v4189 = vpop.f32.mrb[0].mxu0
      %v4190 = vadd.f32 0.0, %v4189
      %v4191 = vpop.f32.mrb[0].mxu0
      %4192 = vmatprep.mubr.bf16.mxu0 0
      %4193 = vmatmul.mubr.bf16.gmra.mrb[0].mxu0 %v4003
      %v4194 = vpop.f32.mrb[0].mxu0
      %v4195 = vadd.f32 0.0, %v4194
      %v4196 = vpop.f32.mrb[0].mxu0
      %v4197 = vpop.f32.mrb[0].mxu0
      %v4198 = vadd.f32 0.0, %v4197
      %v4199 = vpop.f32.mrb[0].mxu0
      %4200 = vmatprep.mubr.bf16.mxu0 0
      %4201 = vmatmul.mubr.bf16.gmra.mrb[0].mxu0 %v4004
      %v4202 = vpop.f32.mrb[0].mxu0
      %v4203 = vadd.f32 0.0, %v4202
      %v4204 = vpop.f32.mrb[0].mxu0
      %v4205 = vpop.f32.mrb[0].mxu0
      %v4206 = vadd.f32 0.0, %v4205
      %v4207 = vpop.f32.mrb[0].mxu0
      %4208 = vmatprep.mubr.bf16.mxu0 0
      %4209 = vmatmul.mubr.bf16.gmra.mrb[0].mxu0 %v4005
      %v4210 = vpop.f32.mrb[0].mxu0
      %v4211 = vadd.f32 0.0, %v4210
      %v4212 = vpop.f32.mrb[0].mxu0
      %v4213 = vpop.f32.mrb[0].mxu0
      %v4214 = vadd.f32 0.0, %v4213
      %v4215 = vpop.f32.mrb[0].mxu0
      %4216 = vmatprep.mubr.bf16.mxu0 0
      %4217 = vmatmul.mubr.bf16.gmra.mrb[0].mxu0 %v4006
      %v4218 = vpop.f32.mrb[0].mxu0
      %v4219 = vadd.f32 0.0, %v4218
      %v4220 = vpop.f32.mrb[0].mxu0
      %v4221 = vpop.f32.mrb[0].mxu0
      %v4222 = vadd.f32 0.0, %v4221
      %v4223 = vpop.f32.mrb[0].mxu0
      %4224 = vmatprep.mubr.bf16.mxu0 0
      %4225 = vmatmul.mubr.bf16.gmra.mrb[0].mxu0 %v4007
      %v4226 = vpop.f32.mrb[0].mxu0
      %v4227 = vadd.f32 0.0, %v4226
      %v4228 = vpop.f32.mrb[0].mxu0
      %v4229 = vpop.f32.mrb[0].mxu0
      %v4230 = vadd.f32 0.0, %v4229
      %v4231 = vpop.f32.mrb[0].mxu0
      %4232 = vdwg.mxu0
      %v4265 = vunpack.c.l.b16 %v3486
      %v4266 = vunpack.c.l.b16 %v3487
      %v4267 = vunpack.c.l.b16 %v3489
      %v4268 = vunpack.c.l.b16 %v3490
      %v4269 = vunpack.c.l.b16 %v3492
      %v4270 = vunpack.c.l.b16 %v3493
      %v4271 = vunpack.c.l.b16 %v3495
      %v4272 = vunpack.c.l.b16 %v3496
      %v4273 = vunpack.c.l.b16 %v3498
      %v4274 = vunpack.c.l.b16 %v3499
      %v4275 = vunpack.c.l.b16 %v3501
      %v4276 = vunpack.c.l.b16 %v3502
      %v4277 = vunpack.c.l.b16 %v3504
      %v4278 = vunpack.c.l.b16 %v3505
      %v4279 = vunpack.c.l.b16 %v3507
      %v4280 = vunpack.c.l.b16 %v3508
      %v4281 = vunpack.c.l.b16 %v3510
      %v4282 = vunpack.c.l.b16 %v3511
      %v4283 = vunpack.c.l.b16 %v3513
      %v4284 = vunpack.c.l.b16 %v3514
      %v4285 = vunpack.c.l.b16 %v3516
      %v4286 = vunpack.c.l.b16 %v3517
      %v4287 = vunpack.c.l.b16 %v3519
      %v4288 = vunpack.c.l.b16 %v3520
      %v4289 = vunpack.c.l.b16 %v3522
      %v4290 = vunpack.c.l.b16 %v3523
      %v4291 = vunpack.c.l.b16 %v3525
      %v4292 = vunpack.c.l.b16 %v3526
      %v4293 = vunpack.c.l.b16 %v3528
      %v4294 = vunpack.c.l.b16 %v3529
      %v4295 = vunpack.c.l.b16 %v3531
      %v4296 = vunpack.c.l.b16 %v3532
      %v4297 = vpack.c.b16 %v4266, %v4265
      %v4298 = vpack.c.b16 %v4268, %v4267
      %v4299 = vpack.c.b16 %v4270, %v4269
      %v4300 = vpack.c.b16 %v4272, %v4271
      %v4301 = vpack.c.b16 %v4274, %v4273
      %v4302 = vpack.c.b16 %v4276, %v4275
      %v4303 = vpack.c.b16 %v4278, %v4277
      %v4304 = vpack.c.b16 %v4280, %v4279
      %v4305 = vpack.c.b16 %v4282, %v4281
      %v4306 = vpack.c.b16 %v4284, %v4283
      %v4307 = vpack.c.b16 %v4286, %v4285
      %v4308 = vpack.c.b16 %v4288, %v4287
      %v4309 = vpack.c.b16 %v4290, %v4289
      %v4310 = vpack.c.b16 %v4292, %v4291
      %v4311 = vpack.c.b16 %v4294, %v4293
      %v4312 = vpack.c.b16 %v4296, %v4295
      %v4345 = vunpack.c.l.b16 %v3540
      %v4346 = vunpack.c.l.b16 %v3541
      %v4347 = vunpack.c.l.b16 %v3542
      %v4348 = vunpack.c.l.b16 %v3543
      %v4349 = vunpack.c.l.b16 %v3544
      %v4350 = vunpack.c.l.b16 %v3545
      %v4351 = vunpack.c.l.b16 %v3546
      %v4352 = vunpack.c.l.b16 %v3547
      %v4353 = vunpack.c.l.b16 %v3548
      %v4354 = vunpack.c.l.b16 %v3549
      %v4355 = vunpack.c.l.b16 %v3550
      %v4356 = vunpack.c.l.b16 %v3551
      %v4357 = vunpack.c.l.b16 %v3552
      %v4358 = vunpack.c.l.b16 %v3553
      %v4359 = vunpack.c.l.b16 %v3554
      %v4360 = vunpack.c.l.b16 %v3555
      %v4361 = vpack.c.b16 %v4346, %v4345
      %v4362 = vpack.c.b16 %v4348, %v4347
      %v4363 = vpack.c.b16 %v4350, %v4349
      %v4364 = vpack.c.b16 %v4352, %v4351
      %v4365 = vpack.c.b16 %v4354, %v4353
      %v4366 = vpack.c.b16 %v4356, %v4355
      %v4367 = vpack.c.b16 %v4358, %v4357
      %v4368 = vpack.c.b16 %v4360, %v4359
      %4377 = vmatprep.subr.bf16.mxu0 0
      %4378 = vmatpush1.bf16.msra.mxu0 %v4361
      %4379 = vmatprep.subr.bf16.mxu0 0
      %4380 = vmatpush1.bf16.msra.mxu0 %v4362
      %4381 = vmatprep.subr.bf16.mxu0 0
      %4382 = vmatpush1.bf16.msra.mxu0 %v4363
      %4383 = vmatprep.subr.bf16.mxu0 0
      %4384 = vmatpush1.bf16.msra.mxu0 %v4364
      %4385 = vmatprep.subr.bf16.mxu0 0
      %4386 = vmatpush1.bf16.msra.mxu0 %v4365
      %4387 = vmatprep.subr.bf16.mxu0 0
      %4388 = vmatpush1.bf16.msra.mxu0 %v4366
      %4389 = vmatprep.subr.bf16.mxu0 0
      %4390 = vmatpush1.bf16.msra.mxu0 %v4367
      %4391 = vmatprep.subr.bf16.mxu0 0
      %4392 = vmatpush1.bf16.msra.mxu0 %v4368
      %4393 = vmatprep.subr.bf16.mxu0 0
      %4394 = vmatpush1.bf16.msra.mxu0 0
      %4395 = vmatprep.subr.bf16.mxu0 0
      %4396 = vmatpush1.bf16.msra.mxu0 0
      %4397 = vmatprep.subr.bf16.mxu0 0
      %4398 = vmatpush1.bf16.msra.mxu0 0
      %4399 = vmatprep.subr.bf16.mxu0 0
      %4400 = vmatpush1.bf16.msra.mxu0 0
      %4401 = vmatprep.subr.bf16.mxu0 0
      %4402 = vmatpush1.bf16.msra.mxu0 0
      %4403 = vmatprep.subr.bf16.mxu0 0
      %4404 = vmatpush1.bf16.msra.mxu0 0
      %4405 = vmatprep.subr.bf16.mxu0 0
      %4406 = vmatpush1.bf16.msra.mxu0 0
      %4407 = vmatprep.subr.bf16.mxu0 0
      %4408 = vmatpush1.bf16.msra.mxu0 0
      %4409 = vmatprep.mubr.bf16.mxu0 0
      %4410 = vmatmul.mubr.bf16.gmra.mrb[0].mxu0 %v4297
      %v4411 = vpop.f32.mrb[0].mxu0
      %v4412 = vadd.f32 %v4107, %v4411
      %v4413 = vpop.f32.mrb[0].mxu0
      %v4414 = vpop.f32.mrb[0].mxu0
      %v4415 = vadd.f32 %v4110, %v4414
      %v4416 = vpop.f32.mrb[0].mxu0
      %4417 = vmatprep.mubr.bf16.mxu0 0
      %4418 = vmatmul.mubr.bf16.gmra.mrb[0].mxu0 %v4298
      %v4419 = vpop.f32.mrb[0].mxu0
      %v4420 = vadd.f32 %v4115, %v4419
      %v4421 = vpop.f32.mrb[0].mxu0
      %v4422 = vpop.f32.mrb[0].mxu0
      %v4423 = vadd.f32 %v4118, %v4422
      %v4424 = vpop.f32.mrb[0].mxu0
      %4425 = vmatprep.mubr.bf16.mxu0 0
      %4426 = vmatmul.mubr.bf16.gmra.mrb[0].mxu0 %v4299
      %v4427 = vpop.f32.mrb[0].mxu0
      %v4428 = vadd.f32 %v4123, %v4427
      %v4429 = vpop.f32.mrb[0].mxu0
      %v4430 = vpop.f32.mrb[0].mxu0
      %v4431 = vadd.f32 %v4126, %v4430
      %v4432 = vpop.f32.mrb[0].mxu0
      %4433 = vmatprep.mubr.bf16.mxu0 0
      %4434 = vmatmul.mubr.bf16.gmra.mrb[0].mxu0 %v4300
      %v4435 = vpop.f32.mrb[0].mxu0
      %v4436 = vadd.f32 %v4131, %v4435
      %v4437 = vpop.f32.mrb[0].mxu0
      %v4438 = vpop.f32.mrb[0].mxu0
      %v4439 = vadd.f32 %v4134, %v4438
      %v4440 = vpop.f32.mrb[0].mxu0
      %4441 = vmatprep.mubr.bf16.mxu0 0
      %4442 = vmatmul.mubr.bf16.gmra.mrb[0].mxu0 %v4301
      %v4443 = vpop.f32.mrb[0].mxu0
      %v4444 = vadd.f32 %v4139, %v4443
      %v4445 = vpop.f32.mrb[0].mxu0
      %v4446 = vpop.f32.mrb[0].mxu0
      %v4447 = vadd.f32 %v4142, %v4446
      %v4448 = vpop.f32.mrb[0].mxu0
      %4449 = vmatprep.mubr.bf16.mxu0 0
      %4450 = vmatmul.mubr.bf16.gmra.mrb[0].mxu0 %v4302
      %v4451 = vpop.f32.mrb[0].mxu0
      %v4452 = vadd.f32 %v4147, %v4451
      %v4453 = vpop.f32.mrb[0].mxu0
      %v4454 = vpop.f32.mrb[0].mxu0
      %v4455 = vadd.f32 %v4150, %v4454
      %v4456 = vpop.f32.mrb[0].mxu0
      %4457 = vmatprep.mubr.bf16.mxu0 0
      %4458 = vmatmul.mubr.bf16.gmra.mrb[0].mxu0 %v4303
      %v4459 = vpop.f32.mrb[0].mxu0
      %v4460 = vadd.f32 %v4155, %v4459
      %v4461 = vpop.f32.mrb[0].mxu0
      %v4462 = vpop.f32.mrb[0].mxu0
      %v4463 = vadd.f32 %v4158, %v4462
      %v4464 = vpop.f32.mrb[0].mxu0
      %4465 = vmatprep.mubr.bf16.mxu0 0
      %4466 = vmatmul.mubr.bf16.gmra.mrb[0].mxu0 %v4304
      %v4467 = vpop.f32.mrb[0].mxu0
      %v4468 = vadd.f32 %v4163, %v4467
      %v4469 = vpop.f32.mrb[0].mxu0
      %v4470 = vpop.f32.mrb[0].mxu0
      %v4471 = vadd.f32 %v4166, %v4470
      %v4472 = vpop.f32.mrb[0].mxu0
      %4473 = vmatprep.mubr.bf16.mxu0 0
      %4474 = vmatmul.mubr.bf16.gmra.mrb[0].mxu0 %v4305
      %v4475 = vpop.f32.mrb[0].mxu0
      %v4476 = vadd.f32 %v4171, %v4475
      %v4477 = vpop.f32.mrb[0].mxu0
      %v4478 = vpop.f32.mrb[0].mxu0
      %v4479 = vadd.f32 %v4174, %v4478
      %v4480 = vpop.f32.mrb[0].mxu0
      %4481 = vmatprep.mubr.bf16.mxu0 0
      %4482 = vmatmul.mubr.bf16.gmra.mrb[0].mxu0 %v4306
      %v4483 = vpop.f32.mrb[0].mxu0
      %v4484 = vadd.f32 %v4179, %v4483
      %v4485 = vpop.f32.mrb[0].mxu0
      %v4486 = vpop.f32.mrb[0].mxu0
      %v4487 = vadd.f32 %v4182, %v4486
      %v4488 = vpop.f32.mrb[0].mxu0
      %4489 = vmatprep.mubr.bf16.mxu0 0
      %4490 = vmatmul.mubr.bf16.gmra.mrb[0].mxu0 %v4307
      %v4491 = vpop.f32.mrb[0].mxu0
      %v4492 = vadd.f32 %v4187, %v4491
      %v4493 = vpop.f32.mrb[0].mxu0
      %v4494 = vpop.f32.mrb[0].mxu0
      %v4495 = vadd.f32 %v4190, %v4494
      %v4496 = vpop.f32.mrb[0].mxu0
      %4497 = vmatprep.mubr.bf16.mxu0 0
      %4498 = vmatmul.mubr.bf16.gmra.mrb[0].mxu0 %v4308
      %v4499 = vpop.f32.mrb[0].mxu0
      %v4500 = vadd.f32 %v4195, %v4499
      %v4501 = vpop.f32.mrb[0].mxu0
      %v4502 = vpop.f32.mrb[0].mxu0
      %v4503 = vadd.f32 %v4198, %v4502
      %v4504 = vpop.f32.mrb[0].mxu0
      %4505 = vmatprep.mubr.bf16.mxu0 0
      %4506 = vmatmul.mubr.bf16.gmra.mrb[0].mxu0 %v4309
      %v4507 = vpop.f32.mrb[0].mxu0
      %v4508 = vadd.f32 %v4203, %v4507
      %v4509 = vpop.f32.mrb[0].mxu0
      %v4510 = vpop.f32.mrb[0].mxu0
      %v4511 = vadd.f32 %v4206, %v4510
      %v4512 = vpop.f32.mrb[0].mxu0
      %4513 = vmatprep.mubr.bf16.mxu0 0
      %4514 = vmatmul.mubr.bf16.gmra.mrb[0].mxu0 %v4310
      %v4515 = vpop.f32.mrb[0].mxu0
      %v4516 = vadd.f32 %v4211, %v4515
      %v4517 = vpop.f32.mrb[0].mxu0
      %v4518 = vpop.f32.mrb[0].mxu0
      %v4519 = vadd.f32 %v4214, %v4518
      %v4520 = vpop.f32.mrb[0].mxu0
      %4521 = vmatprep.mubr.bf16.mxu0 0
      %4522 = vmatmul.mubr.bf16.gmra.mrb[0].mxu0 %v4311
      %v4523 = vpop.f32.mrb[0].mxu0
      %v4524 = vadd.f32 %v4219, %v4523
      %v4525 = vpop.f32.mrb[0].mxu0
      %v4526 = vpop.f32.mrb[0].mxu0
      %v4527 = vadd.f32 %v4222, %v4526
      %v4528 = vpop.f32.mrb[0].mxu0
      %4529 = vmatprep.mubr.bf16.mxu0 0
      %4530 = vmatmul.mubr.bf16.gmra.mrb[0].mxu0 %v4312
      %v4531 = vpop.f32.mrb[0].mxu0
      %v4532 = vadd.f32 %v4227, %v4531
      %v4533 = vpop.f32.mrb[0].mxu0
      %v4534 = vpop.f32.mrb[0].mxu0
      %v4535 = vadd.f32 %v4230, %v4534
      %v4536 = vpop.f32.mrb[0].mxu0
      %4537 = vdwg.mxu0
      %vm4554 = vcmask 1042432
      %vm4555 = vcmask 1046532
      %vm4556 = vmor %vm4554, %vm4555
      %v4557 = vrot.slane %v3486, 5
      %v4558 = vrot.slane %v4557, 4
      %v4559 = vrot.slane %v3487, 5
      %v4560 = vsel %vm4556, %v4558, %v4559
      %v4561 = vrot.slane %v4559, 4
      %v4562 = vrot.slane %v3488, 5
      %v4563 = vsel %vm4556, %v4561, %v4562
      %v4564 = vrot.slane %v3489, 5
      %v4565 = vrot.slane %v4564, 4
      %v4566 = vrot.slane %v3490, 5
      %v4567 = vsel %vm4556, %v4565, %v4566
      %v4568 = vrot.slane %v4566, 4
      %v4569 = vrot.slane %v3491, 5
      %v4570 = vsel %vm4556, %v4568, %v4569
      %v4571 = vrot.slane %v3492, 5
      %v4572 = vrot.slane %v4571, 4
      %v4573 = vrot.slane %v3493, 5
      %v4574 = vsel %vm4556, %v4572, %v4573
      %v4575 = vrot.slane %v4573, 4
      %v4576 = vrot.slane %v3494, 5
      %v4577 = vsel %vm4556, %v4575, %v4576
      %v4578 = vrot.slane %v3495, 5
      %v4579 = vrot.slane %v4578, 4
      %v4580 = vrot.slane %v3496, 5
      %v4581 = vsel %vm4556, %v4579, %v4580
      %v4582 = vrot.slane %v4580, 4
      %v4583 = vrot.slane %v3497, 5
      %v4584 = vsel %vm4556, %v4582, %v4583
      %v4585 = vrot.slane %v3498, 5
      %v4586 = vrot.slane %v4585, 4
      %v4587 = vrot.slane %v3499, 5
      %v4588 = vsel %vm4556, %v4586, %v4587
      %v4589 = vrot.slane %v4587, 4
      %v4590 = vrot.slane %v3500, 5
      %v4591 = vsel %vm4556, %v4589, %v4590
      %v4592 = vrot.slane %v3501, 5
      %v4593 = vrot.slane %v4592, 4
      %v4594 = vrot.slane %v3502, 5
      %v4595 = vsel %vm4556, %v4593, %v4594
      %v4596 = vrot.slane %v4594, 4
      %v4597 = vrot.slane %v3503, 5
      %v4598 = vsel %vm4556, %v4596, %v4597
      %v4599 = vrot.slane %v3504, 5
      %v4600 = vrot.slane %v4599, 4
      %v4601 = vrot.slane %v3505, 5
      %v4602 = vsel %vm4556, %v4600, %v4601
      %v4603 = vrot.slane %v4601, 4
      %v4604 = vrot.slane %v3506, 5
      %v4605 = vsel %vm4556, %v4603, %v4604
      %v4606 = vrot.slane %v3507, 5
      %v4607 = vrot.slane %v4606, 4
      %v4608 = vrot.slane %v3508, 5
      %v4609 = vsel %vm4556, %v4607, %v4608
      %v4610 = vrot.slane %v4608, 4
      %v4611 = vrot.slane %v3509, 5
      %v4612 = vsel %vm4556, %v4610, %v4611
      %v4613 = vrot.slane %v3510, 5
      %v4614 = vrot.slane %v4613, 4
      %v4615 = vrot.slane %v3511, 5
      %v4616 = vsel %vm4556, %v4614, %v4615
      %v4617 = vrot.slane %v4615, 4
      %v4618 = vrot.slane %v3512, 5
      %v4619 = vsel %vm4556, %v4617, %v4618
      %v4620 = vrot.slane %v3513, 5
      %v4621 = vrot.slane %v4620, 4
      %v4622 = vrot.slane %v3514, 5
      %v4623 = vsel %vm4556, %v4621, %v4622
      %v4624 = vrot.slane %v4622, 4
      %v4625 = vrot.slane %v3515, 5
      %v4626 = vsel %vm4556, %v4624, %v4625
      %v4627 = vrot.slane %v3516, 5
      %v4628 = vrot.slane %v4627, 4
      %v4629 = vrot.slane %v3517, 5
      %v4630 = vsel %vm4556, %v4628, %v4629
      %v4631 = vrot.slane %v4629, 4
      %v4632 = vrot.slane %v3518, 5
      %v4633 = vsel %vm4556, %v4631, %v4632
      %v4634 = vrot.slane %v3519, 5
      %v4635 = vrot.slane %v4634, 4
      %v4636 = vrot.slane %v3520, 5
      %v4637 = vsel %vm4556, %v4635, %v4636
      %v4638 = vrot.slane %v4636, 4
      %v4639 = vrot.slane %v3521, 5
      %v4640 = vsel %vm4556, %v4638, %v4639
      %v4641 = vrot.slane %v3522, 5
      %v4642 = vrot.slane %v4641, 4
      %v4643 = vrot.slane %v3523, 5
      %v4644 = vsel %vm4556, %v4642, %v4643
      %v4645 = vrot.slane %v4643, 4
      %v4646 = vrot.slane %v3524, 5
      %v4647 = vsel %vm4556, %v4645, %v4646
      %v4648 = vrot.slane %v3525, 5
      %v4649 = vrot.slane %v4648, 4
      %v4650 = vrot.slane %v3526, 5
      %v4651 = vsel %vm4556, %v4649, %v4650
      %v4652 = vrot.slane %v4650, 4
      %v4653 = vrot.slane %v3527, 5
      %v4654 = vsel %vm4556, %v4652, %v4653
      %v4655 = vrot.slane %v3528, 5
      %v4656 = vrot.slane %v4655, 4
      %v4657 = vrot.slane %v3529, 5
      %v4658 = vsel %vm4556, %v4656, %v4657
      %v4659 = vrot.slane %v4657, 4
      %v4660 = vrot.slane %v3530, 5
      %v4661 = vsel %vm4556, %v4659, %v4660
      %v4662 = vrot.slane %v3531, 5
      %v4663 = vrot.slane %v4662, 4
      %v4664 = vrot.slane %v3532, 5
      %v4665 = vsel %vm4556, %v4663, %v4664
      %v4666 = vrot.slane %v4664, 4
      %v4667 = vrot.slane %v3533, 5
      %v4668 = vsel %vm4556, %v4666, %v4667
      %s4669 = scalar_lea.vmem %s2, 128
      %v4670 = vld [vmem:[%s4669] sm:$0xf]
      %v4671 = vld [vmem:[%s4669 + $0x4] sm:$0xf]
      %v4672 = vld [vmem:[%s4669 + $0x8] sm:$0xf]
      %v4673 = vld [vmem:[%s4669 + $0xc] sm:$0xf]
      %v4674 = vld [vmem:[%s4669 + $0x10] sm:$0xf]
      %v4675 = vld [vmem:[%s4669 + $0x14] sm:$0xf]
      %v4676 = vld [vmem:[%s4669 + $0x18] sm:$0xf]
      %v4677 = vld [vmem:[%s4669 + $0x1c] sm:$0xf]
      %v4678 = vld [vmem:[%s4669 + $0x20] sm:$0xf]
      %v4679 = vld [vmem:[%s4669 + $0x24] sm:$0xf]
      %v4680 = vld [vmem:[%s4669 + $0x28] sm:$0xf]
      %v4681 = vld [vmem:[%s4669 + $0x2c] sm:$0xf]
      %v4682 = vld [vmem:[%s4669 + $0x30] sm:$0xf]
      %v4683 = vld [vmem:[%s4669 + $0x34] sm:$0xf]
      %v4684 = vld [vmem:[%s4669 + $0x38] sm:$0xf]
      %v4685 = vld [vmem:[%s4669 + $0x3c] sm:$0xf]
      %v4686 = vunpack.c.l.b16 %v4560
      %v4687 = vunpack.c.l.b16 %v4563
      %v4688 = vunpack.c.l.b16 %v4567
      %v4689 = vunpack.c.l.b16 %v4570
      %v4690 = vunpack.c.l.b16 %v4574
      %v4691 = vunpack.c.l.b16 %v4577
      %v4692 = vunpack.c.l.b16 %v4581
      %v4693 = vunpack.c.l.b16 %v4584
      %v4694 = vunpack.c.l.b16 %v4588
      %v4695 = vunpack.c.l.b16 %v4591
      %v4696 = vunpack.c.l.b16 %v4595
      %v4697 = vunpack.c.l.b16 %v4598
      %v4698 = vunpack.c.l.b16 %v4602
      %v4699 = vunpack.c.l.b16 %v4605
      %v4700 = vunpack.c.l.b16 %v4609
      %v4701 = vunpack.c.l.b16 %v4612
      %v4702 = vunpack.c.l.b16 %v4616
      %v4703 = vunpack.c.l.b16 %v4619
      %v4704 = vunpack.c.l.b16 %v4623
      %v4705 = vunpack.c.l.b16 %v4626
      %v4706 = vunpack.c.l.b16 %v4630
      %v4707 = vunpack.c.l.b16 %v4633
      %v4708 = vunpack.c.l.b16 %v4637
      %v4709 = vunpack.c.l.b16 %v4640
      %v4710 = vunpack.c.l.b16 %v4644
      %v4711 = vunpack.c.l.b16 %v4647
      %v4712 = vunpack.c.l.b16 %v4651
      %v4713 = vunpack.c.l.b16 %v4654
      %v4714 = vunpack.c.l.b16 %v4658
      %v4715 = vunpack.c.l.b16 %v4661
      %v4716 = vunpack.c.l.b16 %v4665
      %v4717 = vunpack.c.l.b16 %v4668
      %v4718 = vpack.c.b16 %v4687, %v4686
      %v4719 = vpack.c.b16 %v4689, %v4688
      %v4720 = vpack.c.b16 %v4691, %v4690
      %v4721 = vpack.c.b16 %v4693, %v4692
      %v4722 = vpack.c.b16 %v4695, %v4694
      %v4723 = vpack.c.b16 %v4697, %v4696
      %v4724 = vpack.c.b16 %v4699, %v4698
      %v4725 = vpack.c.b16 %v4701, %v4700
      %v4726 = vpack.c.b16 %v4703, %v4702
      %v4727 = vpack.c.b16 %v4705, %v4704
      %v4728 = vpack.c.b16 %v4707, %v4706
      %v4729 = vpack.c.b16 %v4709, %v4708
      %v4730 = vpack.c.b16 %v4711, %v4710
      %v4731 = vpack.c.b16 %v4713, %v4712
      %v4732 = vpack.c.b16 %v4715, %v4714
      %v4733 = vpack.c.b16 %v4717, %v4716
      %v4766 = vunpack.c.l.b16 %v4670
      %v4767 = vunpack.c.l.b16 %v4671
      %v4768 = vunpack.c.l.b16 %v4672
      %v4769 = vunpack.c.l.b16 %v4673
      %v4770 = vunpack.c.l.b16 %v4674
      %v4771 = vunpack.c.l.b16 %v4675
      %v4772 = vunpack.c.l.b16 %v4676
      %v4773 = vunpack.c.l.b16 %v4677
      %v4774 = vunpack.c.l.b16 %v4678
      %v4775 = vunpack.c.l.b16 %v4679
      %v4776 = vunpack.c.l.b16 %v4680
      %v4777 = vunpack.c.l.b16 %v4681
      %v4778 = vunpack.c.l.b16 %v4682
      %v4779 = vunpack.c.l.b16 %v4683
      %v4780 = vunpack.c.l.b16 %v4684
      %v4781 = vunpack.c.l.b16 %v4685
      %v4782 = vpack.c.b16 %v4767, %v4766
      %v4783 = vpack.c.b16 %v4769, %v4768
      %v4784 = vpack.c.b16 %v4771, %v4770
      %v4785 = vpack.c.b16 %v4773, %v4772
      %v4786 = vpack.c.b16 %v4775, %v4774
      %v4787 = vpack.c.b16 %v4777, %v4776
      %v4788 = vpack.c.b16 %v4779, %v4778
      %v4789 = vpack.c.b16 %v4781, %v4780
      %4798 = vmatprep.subr.bf16.mxu0 0
      %4799 = vmatpush1.bf16.msra.mxu0 %v4782
      %4800 = vmatprep.subr.bf16.mxu0 0
      %4801 = vmatpush1.bf16.msra.mxu0 %v4783
      %4802 = vmatprep.subr.bf16.mxu0 0
      %4803 = vmatpush1.bf16.msra.mxu0 %v4784
      %4804 = vmatprep.subr.bf16.mxu0 0
      %4805 = vmatpush1.bf16.msra.mxu0 %v4785
      %4806 = vmatprep.subr.bf16.mxu0 0
      %4807 = vmatpush1.bf16.msra.mxu0 %v4786
      %4808 = vmatprep.subr.bf16.mxu0 0
      %4809 = vmatpush1.bf16.msra.mxu0 %v4787
      %4810 = vmatprep.subr.bf16.mxu0 0
      %4811 = vmatpush1.bf16.msra.mxu0 %v4788
      %4812 = vmatprep.subr.bf16.mxu0 0
      %4813 = vmatpush1.bf16.msra.mxu0 %v4789
      %4814 = vmatprep.subr.bf16.mxu0 0
      %4815 = vmatpush1.bf16.msra.mxu0 0
      %4816 = vmatprep.subr.bf16.mxu0 0
      %4817 = vmatpush1.bf16.msra.mxu0 0
      %4818 = vmatprep.subr.bf16.mxu0 0
      %4819 = vmatpush1.bf16.msra.mxu0 0
      %4820 = vmatprep.subr.bf16.mxu0 0
      %4821 = vmatpush1.bf16.msra.mxu0 0
      %4822 = vmatprep.subr.bf16.mxu0 0
      %4823 = vmatpush1.bf16.msra.mxu0 0
      %4824 = vmatprep.subr.bf16.mxu0 0
      %4825 = vmatpush1.bf16.msra.mxu0 0
      %4826 = vmatprep.subr.bf16.mxu0 0
      %4827 = vmatpush1.bf16.msra.mxu0 0
      %4828 = vmatprep.subr.bf16.mxu0 0
      %4829 = vmatpush1.bf16.msra.mxu0 0
      %4830 = vmatprep.mubr.bf16.mxu0 0
      %4831 = vmatmul.mubr.bf16.gmra.mrb[0].mxu0 %v4718
      %v4832 = vpop.f32.mrb[0].mxu0
      %v4833 = vadd.f32 0.0, %v4832
      %v4834 = vpop.f32.mrb[0].mxu0
      %v4835 = vpop.f32.mrb[0].mxu0
      %v4836 = vadd.f32 0.0, %v4835
      %v4837 = vpop.f32.mrb[0].mxu0
      %4838 = vmatprep.mubr.bf16.mxu0 0
      %4839 = vmatmul.mubr.bf16.gmra.mrb[0].mxu0 %v4719
      %v4840 = vpop.f32.mrb[0].mxu0
      %v4841 = vadd.f32 0.0, %v4840
      %v4842 = vpop.f32.mrb[0].mxu0
      %v4843 = vpop.f32.mrb[0].mxu0
      %v4844 = vadd.f32 0.0, %v4843
      %v4845 = vpop.f32.mrb[0].mxu0
      %4846 = vmatprep.mubr.bf16.mxu0 0
      %4847 = vmatmul.mubr.bf16.gmra.mrb[0].mxu0 %v4720
      %v4848 = vpop.f32.mrb[0].mxu0
      %v4849 = vadd.f32 0.0, %v4848
      %v4850 = vpop.f32.mrb[0].mxu0
      %v4851 = vpop.f32.mrb[0].mxu0
      %v4852 = vadd.f32 0.0, %v4851
      %v4853 = vpop.f32.mrb[0].mxu0
      %4854 = vmatprep.mubr.bf16.mxu0 0
      %4855 = vmatmul.mubr.bf16.gmra.mrb[0].mxu0 %v4721
      %v4856 = vpop.f32.mrb[0].mxu0
      %v4857 = vadd.f32 0.0, %v4856
      %v4858 = vpop.f32.mrb[0].mxu0
      %v4859 = vpop.f32.mrb[0].mxu0
      %v4860 = vadd.f32 0.0, %v4859
      %v4861 = vpop.f32.mrb[0].mxu0
      %4862 = vmatprep.mubr.bf16.mxu0 0
      %4863 = vmatmul.mubr.bf16.gmra.mrb[0].mxu0 %v4722
      %v4864 = vpop.f32.mrb[0].mxu0
      %v4865 = vadd.f32 0.0, %v4864
      %v4866 = vpop.f32.mrb[0].mxu0
      %v4867 = vpop.f32.mrb[0].mxu0
      %v4868 = vadd.f32 0.0, %v4867
      %v4869 = vpop.f32.mrb[0].mxu0
      %4870 = vmatprep.mubr.bf16.mxu0 0
      %4871 = vmatmul.mubr.bf16.gmra.mrb[0].mxu0 %v4723
      %v4872 = vpop.f32.mrb[0].mxu0
      %v4873 = vadd.f32 0.0, %v4872
      %v4874 = vpop.f32.mrb[0].mxu0
      %v4875 = vpop.f32.mrb[0].mxu0
      %v4876 = vadd.f32 0.0, %v4875
      %v4877 = vpop.f32.mrb[0].mxu0
      %4878 = vmatprep.mubr.bf16.mxu0 0
      %4879 = vmatmul.mubr.bf16.gmra.mrb[0].mxu0 %v4724
      %v4880 = vpop.f32.mrb[0].mxu0
      %v4881 = vadd.f32 0.0, %v4880
      %v4882 = vpop.f32.mrb[0].mxu0
      %v4883 = vpop.f32.mrb[0].mxu0
      %v4884 = vadd.f32 0.0, %v4883
      %v4885 = vpop.f32.mrb[0].mxu0
      %4886 = vmatprep.mubr.bf16.mxu0 0
      %4887 = vmatmul.mubr.bf16.gmra.mrb[0].mxu0 %v4725
      %v4888 = vpop.f32.mrb[0].mxu0
      %v4889 = vadd.f32 0.0, %v4888
      %v4890 = vpop.f32.mrb[0].mxu0
      %v4891 = vpop.f32.mrb[0].mxu0
      %v4892 = vadd.f32 0.0, %v4891
      %v4893 = vpop.f32.mrb[0].mxu0
      %4894 = vmatprep.mubr.bf16.mxu0 0
      %4895 = vmatmul.mubr.bf16.gmra.mrb[0].mxu0 %v4726
      %v4896 = vpop.f32.mrb[0].mxu0
      %v4897 = vadd.f32 0.0, %v4896
      %v4898 = vpop.f32.mrb[0].mxu0
      %v4899 = vpop.f32.mrb[0].mxu0
      %v4900 = vadd.f32 0.0, %v4899
      %v4901 = vpop.f32.mrb[0].mxu0
      %4902 = vmatprep.mubr.bf16.mxu0 0
      %4903 = vmatmul.mubr.bf16.gmra.mrb[0].mxu0 %v4727
      %v4904 = vpop.f32.mrb[0].mxu0
      %v4905 = vadd.f32 0.0, %v4904
      %v4906 = vpop.f32.mrb[0].mxu0
      %v4907 = vpop.f32.mrb[0].mxu0
      %v4908 = vadd.f32 0.0, %v4907
      %v4909 = vpop.f32.mrb[0].mxu0
      %4910 = vmatprep.mubr.bf16.mxu0 0
      %4911 = vmatmul.mubr.bf16.gmra.mrb[0].mxu0 %v4728
      %v4912 = vpop.f32.mrb[0].mxu0
      %v4913 = vadd.f32 0.0, %v4912
      %v4914 = vpop.f32.mrb[0].mxu0
      %v4915 = vpop.f32.mrb[0].mxu0
      %v4916 = vadd.f32 0.0, %v4915
      %v4917 = vpop.f32.mrb[0].mxu0
      %4918 = vmatprep.mubr.bf16.mxu0 0
      %4919 = vmatmul.mubr.bf16.gmra.mrb[0].mxu0 %v4729
      %v4920 = vpop.f32.mrb[0].mxu0
      %v4921 = vadd.f32 0.0, %v4920
      %v4922 = vpop.f32.mrb[0].mxu0
      %v4923 = vpop.f32.mrb[0].mxu0
      %v4924 = vadd.f32 0.0, %v4923
      %v4925 = vpop.f32.mrb[0].mxu0
      %4926 = vmatprep.mubr.bf16.mxu0 0
      %4927 = vmatmul.mubr.bf16.gmra.mrb[0].mxu0 %v4730
      %v4928 = vpop.f32.mrb[0].mxu0
      %v4929 = vadd.f32 0.0, %v4928
      %v4930 = vpop.f32.mrb[0].mxu0
      %v4931 = vpop.f32.mrb[0].mxu0
      %v4932 = vadd.f32 0.0, %v4931
      %v4933 = vpop.f32.mrb[0].mxu0
      %4934 = vmatprep.mubr.bf16.mxu0 0
      %4935 = vmatmul.mubr.bf16.gmra.mrb[0].mxu0 %v4731
      %v4936 = vpop.f32.mrb[0].mxu0
      %v4937 = vadd.f32 0.0, %v4936
      %v4938 = vpop.f32.mrb[0].mxu0
      %v4939 = vpop.f32.mrb[0].mxu0
      %v4940 = vadd.f32 0.0, %v4939
      %v4941 = vpop.f32.mrb[0].mxu0
      %4942 = vmatprep.mubr.bf16.mxu0 0
      %4943 = vmatmul.mubr.bf16.gmra.mrb[0].mxu0 %v4732
      %v4944 = vpop.f32.mrb[0].mxu0
      %v4945 = vadd.f32 0.0, %v4944
      %v4946 = vpop.f32.mrb[0].mxu0
      %v4947 = vpop.f32.mrb[0].mxu0
      %v4948 = vadd.f32 0.0, %v4947
      %v4949 = vpop.f32.mrb[0].mxu0
      %4950 = vmatprep.mubr.bf16.mxu0 0
      %4951 = vmatmul.mubr.bf16.gmra.mrb[0].mxu0 %v4733
      %v4952 = vpop.f32.mrb[0].mxu0
      %v4953 = vadd.f32 0.0, %v4952
      %v4954 = vpop.f32.mrb[0].mxu0
      %v4955 = vpop.f32.mrb[0].mxu0
      %v4956 = vadd.f32 0.0, %v4955
      %v4957 = vpop.f32.mrb[0].mxu0
      %4958 = vdwg.mxu0
      %v4959 = vadd.f32 %v4412, %v4833
      %v4960 = vadd.f32 %v4415, %v4836
      %v4961 = vadd.f32 %v4420, %v4841
      %v4962 = vadd.f32 %v4423, %v4844
      %v4963 = vadd.f32 %v4428, %v4849
      %v4964 = vadd.f32 %v4431, %v4852
      %v4965 = vadd.f32 %v4436, %v4857
      %v4966 = vadd.f32 %v4439, %v4860
      %v4967 = vadd.f32 %v4444, %v4865
      %v4968 = vadd.f32 %v4447, %v4868
      %v4969 = vadd.f32 %v4452, %v4873
      %v4970 = vadd.f32 %v4455, %v4876
      %v4971 = vadd.f32 %v4460, %v4881
      %v4972 = vadd.f32 %v4463, %v4884
      %v4973 = vadd.f32 %v4468, %v4889
      %v4974 = vadd.f32 %v4471, %v4892
      %v4975 = vadd.f32 %v4476, %v4897
      %v4976 = vadd.f32 %v4479, %v4900
      %v4977 = vadd.f32 %v4484, %v4905
      %v4978 = vadd.f32 %v4487, %v4908
      %v4979 = vadd.f32 %v4492, %v4913
      %v4980 = vadd.f32 %v4495, %v4916
      %v4981 = vadd.f32 %v4500, %v4921
      %v4982 = vadd.f32 %v4503, %v4924
      %v4983 = vadd.f32 %v4508, %v4929
      %v4984 = vadd.f32 %v4511, %v4932
      %v4985 = vadd.f32 %v4516, %v4937
      %v4986 = vadd.f32 %v4519, %v4940
      %v4987 = vadd.f32 %v4524, %v4945
      %v4988 = vadd.f32 %v4527, %v4948
      %v4989 = vadd.f32 %v4532, %v4953
      %v4990 = vadd.f32 %v4535, %v4956
      %s4991 = scalar_lea.vmem %s2, 192
      %v4992 = vld [vmem:[%s4991] sm:$0xf]
      %v4993 = vld [vmem:[%s4991 + $0x4] sm:$0xf]
      %v4994 = vld [vmem:[%s4991 + $0x8] sm:$0xf]
      %v4995 = vld [vmem:[%s4991 + $0xc] sm:$0xf]
      %v4996 = vld [vmem:[%s4991 + $0x10] sm:$0xf]
      %v4997 = vld [vmem:[%s4991 + $0x14] sm:$0xf]
      %v4998 = vld [vmem:[%s4991 + $0x18] sm:$0xf]
      %v4999 = vld [vmem:[%s4991 + $0x1c] sm:$0xf]
      %v5000 = vld [vmem:[%s4991 + $0x20] sm:$0xf]
      %v5001 = vld [vmem:[%s4991 + $0x24] sm:$0xf]
      %v5002 = vld [vmem:[%s4991 + $0x28] sm:$0xf]
      %v5003 = vld [vmem:[%s4991 + $0x2c] sm:$0xf]
      %v5004 = vld [vmem:[%s4991 + $0x30] sm:$0xf]
      %v5005 = vld [vmem:[%s4991 + $0x34] sm:$0xf]
      %v5006 = vld [vmem:[%s4991 + $0x38] sm:$0xf]
      %v5007 = vld [vmem:[%s4991 + $0x3c] sm:$0xf]
      %v5010 = vunpack.c.l.b16 %v3534
      %v5011 = vunpack.c.l.b16 %v3535
      %v5012 = vpack.c.b16 %v5011, %v5010
      %v5030 = vunpack.c.l.b16 %v4992
      %v5031 = vunpack.c.l.b16 %v4993
      %v5032 = vunpack.c.l.b16 %v4994
      %v5033 = vunpack.c.l.b16 %v4995
      %v5034 = vunpack.c.l.b16 %v4996
      %v5035 = vunpack.c.l.b16 %v4997
      %v5036 = vunpack.c.l.b16 %v4998
      %v5037 = vunpack.c.l.b16 %v4999
      %v5038 = vunpack.c.l.b16 %v5000
      %v5039 = vunpack.c.l.b16 %v5001
      %v5040 = vunpack.c.l.b16 %v5002
      %v5041 = vunpack.c.l.b16 %v5003
      %v5042 = vunpack.c.l.b16 %v5004
      %v5043 = vunpack.c.l.b16 %v5005
      %v5044 = vunpack.c.l.b16 %v5006
      %v5045 = vunpack.c.l.b16 %v5007
      %v5046 = vpack.c.b16 %v5031, %v5030
      %v5047 = vpack.c.b16 %v5033, %v5032
      %v5048 = vpack.c.b16 %v5035, %v5034
      %v5049 = vpack.c.b16 %v5037, %v5036
      %v5050 = vpack.c.b16 %v5039, %v5038
      %v5051 = vpack.c.b16 %v5041, %v5040
      %v5052 = vpack.c.b16 %v5043, %v5042
      %v5053 = vpack.c.b16 %v5045, %v5044
      %5062 = vmatprep.subr.bf16.mxu0 0
      %5063 = vmatpush1.bf16.msra.mxu0 %v5046
      %5064 = vmatprep.subr.bf16.mxu0 0
      %5065 = vmatpush1.bf16.msra.mxu0 %v5047
      %5066 = vmatprep.subr.bf16.mxu0 0
      %5067 = vmatpush1.bf16.msra.mxu0 %v5048
      %5068 = vmatprep.subr.bf16.mxu0 0
      %5069 = vmatpush1.bf16.msra.mxu0 %v5049
      %5070 = vmatprep.subr.bf16.mxu0 0
      %5071 = vmatpush1.bf16.msra.mxu0 %v5050
      %5072 = vmatprep.subr.bf16.mxu0 0
      %5073 = vmatpush1.bf16.msra.mxu0 %v5051
      %5074 = vmatprep.subr.bf16.mxu0 0
      %5075 = vmatpush1.bf16.msra.mxu0 %v5052
      %5076 = vmatprep.subr.bf16.mxu0 0
      %5077 = vmatpush1.bf16.msra.mxu0 %v5053
      %5078 = vmatprep.subr.bf16.mxu0 0
      %5079 = vmatpush1.bf16.msra.mxu0 0
      %5080 = vmatprep.subr.bf16.mxu0 0
      %5081 = vmatpush1.bf16.msra.mxu0 0
      %5082 = vmatprep.subr.bf16.mxu0 0
      %5083 = vmatpush1.bf16.msra.mxu0 0
      %5084 = vmatprep.subr.bf16.mxu0 0
      %5085 = vmatpush1.bf16.msra.mxu0 0
      %5086 = vmatprep.subr.bf16.mxu0 0
      %5087 = vmatpush1.bf16.msra.mxu0 0
      %5088 = vmatprep.subr.bf16.mxu0 0
      %5089 = vmatpush1.bf16.msra.mxu0 0
      %5090 = vmatprep.subr.bf16.mxu0 0
      %5091 = vmatpush1.bf16.msra.mxu0 0
      %5092 = vmatprep.subr.bf16.mxu0 0
      %5093 = vmatpush1.bf16.msra.mxu0 0
      %5094 = vmatprep.mubr.bf16.mxu0 0
      %5095 = vmatmul.mubr.bf16.gmra.mrb[0].mxu0 %v4298
      %v5096 = vpop.f32.mrb[0].mxu0
      %v5097 = vadd.f32 0.0, %v5096
      %v5098 = vpop.f32.mrb[0].mxu0
      %v5099 = vpop.f32.mrb[0].mxu0
      %v5100 = vadd.f32 0.0, %v5099
      %v5101 = vpop.f32.mrb[0].mxu0
      %5102 = vmatprep.mubr.bf16.mxu0 0
      %5103 = vmatmul.mubr.bf16.gmra.mrb[0].mxu0 %v4299
      %v5104 = vpop.f32.mrb[0].mxu0
      %v5105 = vadd.f32 0.0, %v5104
      %v5106 = vpop.f32.mrb[0].mxu0
      %v5107 = vpop.f32.mrb[0].mxu0
      %v5108 = vadd.f32 0.0, %v5107
      %v5109 = vpop.f32.mrb[0].mxu0
      %5110 = vmatprep.mubr.bf16.mxu0 0
      %5111 = vmatmul.mubr.bf16.gmra.mrb[0].mxu0 %v4300
      %v5112 = vpop.f32.mrb[0].mxu0
      %v5113 = vadd.f32 0.0, %v5112
      %v5114 = vpop.f32.mrb[0].mxu0
      %v5115 = vpop.f32.mrb[0].mxu0
      %v5116 = vadd.f32 0.0, %v5115
      %v5117 = vpop.f32.mrb[0].mxu0
      %5118 = vmatprep.mubr.bf16.mxu0 0
      %5119 = vmatmul.mubr.bf16.gmra.mrb[0].mxu0 %v4301
      %v5120 = vpop.f32.mrb[0].mxu0
      %v5121 = vadd.f32 0.0, %v5120
      %v5122 = vpop.f32.mrb[0].mxu0
      %v5123 = vpop.f32.mrb[0].mxu0
      %v5124 = vadd.f32 0.0, %v5123
      %v5125 = vpop.f32.mrb[0].mxu0
      %5126 = vmatprep.mubr.bf16.mxu0 0
      %5127 = vmatmul.mubr.bf16.gmra.mrb[0].mxu0 %v4302
      %v5128 = vpop.f32.mrb[0].mxu0
      %v5129 = vadd.f32 0.0, %v5128
      %v5130 = vpop.f32.mrb[0].mxu0
      %v5131 = vpop.f32.mrb[0].mxu0
      %v5132 = vadd.f32 0.0, %v5131
      %v5133 = vpop.f32.mrb[0].mxu0
      %5134 = vmatprep.mubr.bf16.mxu0 0
      %5135 = vmatmul.mubr.bf16.gmra.mrb[0].mxu0 %v4303
      %v5136 = vpop.f32.mrb[0].mxu0
      %v5137 = vadd.f32 0.0, %v5136
      %v5138 = vpop.f32.mrb[0].mxu0
      %v5139 = vpop.f32.mrb[0].mxu0
      %v5140 = vadd.f32 0.0, %v5139
      %v5141 = vpop.f32.mrb[0].mxu0
      %5142 = vmatprep.mubr.bf16.mxu0 0
      %5143 = vmatmul.mubr.bf16.gmra.mrb[0].mxu0 %v4304
      %v5144 = vpop.f32.mrb[0].mxu0
      %v5145 = vadd.f32 0.0, %v5144
      %v5146 = vpop.f32.mrb[0].mxu0
      %v5147 = vpop.f32.mrb[0].mxu0
      %v5148 = vadd.f32 0.0, %v5147
      %v5149 = vpop.f32.mrb[0].mxu0
      %5150 = vmatprep.mubr.bf16.mxu0 0
      %5151 = vmatmul.mubr.bf16.gmra.mrb[0].mxu0 %v4305
      %v5152 = vpop.f32.mrb[0].mxu0
      %v5153 = vadd.f32 0.0, %v5152
      %v5154 = vpop.f32.mrb[0].mxu0
      %v5155 = vpop.f32.mrb[0].mxu0
      %v5156 = vadd.f32 0.0, %v5155
      %v5157 = vpop.f32.mrb[0].mxu0
      %5158 = vmatprep.mubr.bf16.mxu0 0
      %5159 = vmatmul.mubr.bf16.gmra.mrb[0].mxu0 %v4306
      %v5160 = vpop.f32.mrb[0].mxu0
      %v5161 = vadd.f32 0.0, %v5160
      %v5162 = vpop.f32.mrb[0].mxu0
      %v5163 = vpop.f32.mrb[0].mxu0
      %v5164 = vadd.f32 0.0, %v5163
      %v5165 = vpop.f32.mrb[0].mxu0
      %5166 = vmatprep.mubr.bf16.mxu0 0
      %5167 = vmatmul.mubr.bf16.gmra.mrb[0].mxu0 %v4307
      %v5168 = vpop.f32.mrb[0].mxu0
      %v5169 = vadd.f32 0.0, %v5168
      %v5170 = vpop.f32.mrb[0].mxu0
      %v5171 = vpop.f32.mrb[0].mxu0
      %v5172 = vadd.f32 0.0, %v5171
      %v5173 = vpop.f32.mrb[0].mxu0
      %5174 = vmatprep.mubr.bf16.mxu0 0
      %5175 = vmatmul.mubr.bf16.gmra.mrb[0].mxu0 %v4308
      %v5176 = vpop.f32.mrb[0].mxu0
      %v5177 = vadd.f32 0.0, %v5176
      %v5178 = vpop.f32.mrb[0].mxu0
      %v5179 = vpop.f32.mrb[0].mxu0
      %v5180 = vadd.f32 0.0, %v5179
      %v5181 = vpop.f32.mrb[0].mxu0
      %5182 = vmatprep.mubr.bf16.mxu0 0
      %5183 = vmatmul.mubr.bf16.gmra.mrb[0].mxu0 %v4309
      %v5184 = vpop.f32.mrb[0].mxu0
      %v5185 = vadd.f32 0.0, %v5184
      %v5186 = vpop.f32.mrb[0].mxu0
      %v5187 = vpop.f32.mrb[0].mxu0
      %v5188 = vadd.f32 0.0, %v5187
      %v5189 = vpop.f32.mrb[0].mxu0
      %5190 = vmatprep.mubr.bf16.mxu0 0
      %5191 = vmatmul.mubr.bf16.gmra.mrb[0].mxu0 %v4310
      %v5192 = vpop.f32.mrb[0].mxu0
      %v5193 = vadd.f32 0.0, %v5192
      %v5194 = vpop.f32.mrb[0].mxu0
      %v5195 = vpop.f32.mrb[0].mxu0
      %v5196 = vadd.f32 0.0, %v5195
      %v5197 = vpop.f32.mrb[0].mxu0
      %5198 = vmatprep.mubr.bf16.mxu0 0
      %5199 = vmatmul.mubr.bf16.gmra.mrb[0].mxu0 %v4311
      %v5200 = vpop.f32.mrb[0].mxu0
      %v5201 = vadd.f32 0.0, %v5200
      %v5202 = vpop.f32.mrb[0].mxu0
      %v5203 = vpop.f32.mrb[0].mxu0
      %v5204 = vadd.f32 0.0, %v5203
      %v5205 = vpop.f32.mrb[0].mxu0
      %5206 = vmatprep.mubr.bf16.mxu0 0
      %5207 = vmatmul.mubr.bf16.gmra.mrb[0].mxu0 %v4312
      %v5208 = vpop.f32.mrb[0].mxu0
      %v5209 = vadd.f32 0.0, %v5208
      %v5210 = vpop.f32.mrb[0].mxu0
      %v5211 = vpop.f32.mrb[0].mxu0
      %v5212 = vadd.f32 0.0, %v5211
      %v5213 = vpop.f32.mrb[0].mxu0
      %5214 = vmatprep.mubr.bf16.mxu0 0
      %5215 = vmatmul.mubr.bf16.gmra.mrb[0].mxu0 %v5012
      %v5216 = vpop.f32.mrb[0].mxu0
      %v5217 = vadd.f32 0.0, %v5216
      %v5218 = vpop.f32.mrb[0].mxu0
      %v5219 = vpop.f32.mrb[0].mxu0
      %v5220 = vadd.f32 0.0, %v5219
      %v5221 = vpop.f32.mrb[0].mxu0
      %5222 = vdwg.mxu0
      %v5223 = vadd.f32 %v4959, %v5097
      %v5224 = vadd.f32 %v4960, %v5100
      %v5225 = vadd.f32 %v4961, %v5105
      %v5226 = vadd.f32 %v4962, %v5108
      %v5227 = vadd.f32 %v4963, %v5113
      %v5228 = vadd.f32 %v4964, %v5116
      %v5229 = vadd.f32 %v4965, %v5121
      %v5230 = vadd.f32 %v4966, %v5124
      %v5231 = vadd.f32 %v4967, %v5129
      %v5232 = vadd.f32 %v4968, %v5132
      %v5233 = vadd.f32 %v4969, %v5137
      %v5234 = vadd.f32 %v4970, %v5140
      %v5235 = vadd.f32 %v4971, %v5145
      %v5236 = vadd.f32 %v4972, %v5148
      %v5237 = vadd.f32 %v4973, %v5153
      %v5238 = vadd.f32 %v4974, %v5156
      %v5239 = vadd.f32 %v4975, %v5161
      %v5240 = vadd.f32 %v4976, %v5164
      %v5241 = vadd.f32 %v4977, %v5169
      %v5242 = vadd.f32 %v4978, %v5172
      %v5243 = vadd.f32 %v4979, %v5177
      %v5244 = vadd.f32 %v4980, %v5180
      %v5245 = vadd.f32 %v4981, %v5185
      %v5246 = vadd.f32 %v4982, %v5188
      %v5247 = vadd.f32 %v4983, %v5193
      %v5248 = vadd.f32 %v4984, %v5196
      %v5249 = vadd.f32 %v4985, %v5201
      %v5250 = vadd.f32 %v4986, %v5204
      %v5251 = vadd.f32 %v4987, %v5209
      %v5252 = vadd.f32 %v4988, %v5212
      %v5253 = vadd.f32 %v4989, %v5217
      %v5254 = vadd.f32 %v4990, %v5220
      %v5256 = vshrl.u32 %v3534, 16
      %v5258 = vrot.slane %v5256, 4
      %v5259 = vshll.u32 %v3534, 16
      %v5261 = vrot.slane %v5259, 5
      %v5262 = vor.u32 %v5258, %v5261
      %v5263 = vrot.slane %v5262, 4
      %v5265 = vshll.u32 %v3535, 16
      %v5267 = vrot.slane %v5265, 5
      %v5268 = vsel %vm3558, %v5263, %v5267
      %v5269 = vshrl.u32 %v3535, 16
      %v5271 = vrot.slane %v5269, 4
      %v5272 = vor.u32 %v5271, %v5267
      %v5273 = vrot.slane %v5272, 4
      %v5275 = vshll.u32 %v3536, 16
      %v5277 = vrot.slane %v5275, 5
      %v5278 = vsel %vm3558, %v5273, %v5277
      %s5279 = scalar_lea.vmem %s2, 256
      %v5280 = vld [vmem:[%s5279] sm:$0xf]
      %v5281 = vld [vmem:[%s5279 + $0x4] sm:$0xf]
      %v5282 = vld [vmem:[%s5279 + $0x8] sm:$0xf]
      %v5283 = vld [vmem:[%s5279 + $0xc] sm:$0xf]
      %v5284 = vld [vmem:[%s5279 + $0x10] sm:$0xf]
      %v5285 = vld [vmem:[%s5279 + $0x14] sm:$0xf]
      %v5286 = vld [vmem:[%s5279 + $0x18] sm:$0xf]
      %v5287 = vld [vmem:[%s5279 + $0x1c] sm:$0xf]
      %v5288 = vld [vmem:[%s5279 + $0x20] sm:$0xf]
      %v5289 = vld [vmem:[%s5279 + $0x24] sm:$0xf]
      %v5290 = vld [vmem:[%s5279 + $0x28] sm:$0xf]
      %v5291 = vld [vmem:[%s5279 + $0x2c] sm:$0xf]
      %v5292 = vld [vmem:[%s5279 + $0x30] sm:$0xf]
      %v5293 = vld [vmem:[%s5279 + $0x34] sm:$0xf]
      %v5294 = vld [vmem:[%s5279 + $0x38] sm:$0xf]
      %v5295 = vld [vmem:[%s5279 + $0x3c] sm:$0xf]
      %v5296 = vunpack.c.l.b16 %v5268
      %v5297 = vunpack.c.l.b16 %v5278
      %v5298 = vpack.c.b16 %v5297, %v5296
      %v5316 = vunpack.c.l.b16 %v5280
      %v5317 = vunpack.c.l.b16 %v5281
      %v5318 = vunpack.c.l.b16 %v5282
      %v5319 = vunpack.c.l.b16 %v5283
      %v5320 = vunpack.c.l.b16 %v5284
      %v5321 = vunpack.c.l.b16 %v5285
      %v5322 = vunpack.c.l.b16 %v5286
      %v5323 = vunpack.c.l.b16 %v5287
      %v5324 = vunpack.c.l.b16 %v5288
      %v5325 = vunpack.c.l.b16 %v5289
      %v5326 = vunpack.c.l.b16 %v5290
      %v5327 = vunpack.c.l.b16 %v5291
      %v5328 = vunpack.c.l.b16 %v5292
      %v5329 = vunpack.c.l.b16 %v5293
      %v5330 = vunpack.c.l.b16 %v5294
      %v5331 = vunpack.c.l.b16 %v5295
      %v5332 = vpack.c.b16 %v5317, %v5316
      %v5333 = vpack.c.b16 %v5319, %v5318
      %v5334 = vpack.c.b16 %v5321, %v5320
      %v5335 = vpack.c.b16 %v5323, %v5322
      %v5336 = vpack.c.b16 %v5325, %v5324
      %v5337 = vpack.c.b16 %v5327, %v5326
      %v5338 = vpack.c.b16 %v5329, %v5328
      %v5339 = vpack.c.b16 %v5331, %v5330
      %5348 = vmatprep.subr.bf16.mxu0 0
      %5349 = vmatpush1.bf16.msra.mxu0 %v5332
      %5350 = vmatprep.subr.bf16.mxu0 0
      %5351 = vmatpush1.bf16.msra.mxu0 %v5333
      %5352 = vmatprep.subr.bf16.mxu0 0
      %5353 = vmatpush1.bf16.msra.mxu0 %v5334
      %5354 = vmatprep.subr.bf16.mxu0 0
      %5355 = vmatpush1.bf16.msra.mxu0 %v5335
      %5356 = vmatprep.subr.bf16.mxu0 0
      %5357 = vmatpush1.bf16.msra.mxu0 %v5336
      %5358 = vmatprep.subr.bf16.mxu0 0
      %5359 = vmatpush1.bf16.msra.mxu0 %v5337
      %5360 = vmatprep.subr.bf16.mxu0 0
      %5361 = vmatpush1.bf16.msra.mxu0 %v5338
      %5362 = vmatprep.subr.bf16.mxu0 0
      %5363 = vmatpush1.bf16.msra.mxu0 %v5339
      %5364 = vmatprep.subr.bf16.mxu0 0
      %5365 = vmatpush1.bf16.msra.mxu0 0
      %5366 = vmatprep.subr.bf16.mxu0 0
      %5367 = vmatpush1.bf16.msra.mxu0 0
      %5368 = vmatprep.subr.bf16.mxu0 0
      %5369 = vmatpush1.bf16.msra.mxu0 0
      %5370 = vmatprep.subr.bf16.mxu0 0
      %5371 = vmatpush1.bf16.msra.mxu0 0
      %5372 = vmatprep.subr.bf16.mxu0 0
      %5373 = vmatpush1.bf16.msra.mxu0 0
      %5374 = vmatprep.subr.bf16.mxu0 0
      %5375 = vmatpush1.bf16.msra.mxu0 0
      %5376 = vmatprep.subr.bf16.mxu0 0
      %5377 = vmatpush1.bf16.msra.mxu0 0
      %5378 = vmatprep.subr.bf16.mxu0 0
      %5379 = vmatpush1.bf16.msra.mxu0 0
      %5380 = vmatprep.mubr.bf16.mxu0 0
      %5381 = vmatmul.mubr.bf16.gmra.mrb[0].mxu0 %v3993
      %v5382 = vpop.f32.mrb[0].mxu0
      %v5383 = vadd.f32 0.0, %v5382
      %v5384 = vpop.f32.mrb[0].mxu0
      %v5385 = vpop.f32.mrb[0].mxu0
      %v5386 = vadd.f32 0.0, %v5385
      %v5387 = vpop.f32.mrb[0].mxu0
      %5388 = vmatprep.mubr.bf16.mxu0 0
      %5389 = vmatmul.mubr.bf16.gmra.mrb[0].mxu0 %v3994
      %v5390 = vpop.f32.mrb[0].mxu0
      %v5391 = vadd.f32 0.0, %v5390
      %v5392 = vpop.f32.mrb[0].mxu0
      %v5393 = vpop.f32.mrb[0].mxu0
      %v5394 = vadd.f32 0.0, %v5393
      %v5395 = vpop.f32.mrb[0].mxu0
      %5396 = vmatprep.mubr.bf16.mxu0 0
      %5397 = vmatmul.mubr.bf16.gmra.mrb[0].mxu0 %v3995
      %v5398 = vpop.f32.mrb[0].mxu0
      %v5399 = vadd.f32 0.0, %v5398
      %v5400 = vpop.f32.mrb[0].mxu0
      %v5401 = vpop.f32.mrb[0].mxu0
      %v5402 = vadd.f32 0.0, %v5401
      %v5403 = vpop.f32.mrb[0].mxu0
      %5404 = vmatprep.mubr.bf16.mxu0 0
      %5405 = vmatmul.mubr.bf16.gmra.mrb[0].mxu0 %v3996
      %v5406 = vpop.f32.mrb[0].mxu0
      %v5407 = vadd.f32 0.0, %v5406
      %v5408 = vpop.f32.mrb[0].mxu0
      %v5409 = vpop.f32.mrb[0].mxu0
      %v5410 = vadd.f32 0.0, %v5409
      %v5411 = vpop.f32.mrb[0].mxu0
      %5412 = vmatprep.mubr.bf16.mxu0 0
      %5413 = vmatmul.mubr.bf16.gmra.mrb[0].mxu0 %v3997
      %v5414 = vpop.f32.mrb[0].mxu0
      %v5415 = vadd.f32 0.0, %v5414
      %v5416 = vpop.f32.mrb[0].mxu0
      %v5417 = vpop.f32.mrb[0].mxu0
      %v5418 = vadd.f32 0.0, %v5417
      %v5419 = vpop.f32.mrb[0].mxu0
      %5420 = vmatprep.mubr.bf16.mxu0 0
      %5421 = vmatmul.mubr.bf16.gmra.mrb[0].mxu0 %v3998
      %v5422 = vpop.f32.mrb[0].mxu0
      %v5423 = vadd.f32 0.0, %v5422
      %v5424 = vpop.f32.mrb[0].mxu0
      %v5425 = vpop.f32.mrb[0].mxu0
      %v5426 = vadd.f32 0.0, %v5425
      %v5427 = vpop.f32.mrb[0].mxu0
      %5428 = vmatprep.mubr.bf16.mxu0 0
      %5429 = vmatmul.mubr.bf16.gmra.mrb[0].mxu0 %v3999
      %v5430 = vpop.f32.mrb[0].mxu0
      %v5431 = vadd.f32 0.0, %v5430
      %v5432 = vpop.f32.mrb[0].mxu0
      %v5433 = vpop.f32.mrb[0].mxu0
      %v5434 = vadd.f32 0.0, %v5433
      %v5435 = vpop.f32.mrb[0].mxu0
      %5436 = vmatprep.mubr.bf16.mxu0 0
      %5437 = vmatmul.mubr.bf16.gmra.mrb[0].mxu0 %v4000
      %v5438 = vpop.f32.mrb[0].mxu0
      %v5439 = vadd.f32 0.0, %v5438
      %v5440 = vpop.f32.mrb[0].mxu0
      %v5441 = vpop.f32.mrb[0].mxu0
      %v5442 = vadd.f32 0.0, %v5441
      %v5443 = vpop.f32.mrb[0].mxu0
      %5444 = vmatprep.mubr.bf16.mxu0 0
      %5445 = vmatmul.mubr.bf16.gmra.mrb[0].mxu0 %v4001
      %v5446 = vpop.f32.mrb[0].mxu0
      %v5447 = vadd.f32 0.0, %v5446
      %v5448 = vpop.f32.mrb[0].mxu0
      %v5449 = vpop.f32.mrb[0].mxu0
      %v5450 = vadd.f32 0.0, %v5449
      %v5451 = vpop.f32.mrb[0].mxu0
      %5452 = vmatprep.mubr.bf16.mxu0 0
      %5453 = vmatmul.mubr.bf16.gmra.mrb[0].mxu0 %v4002
      %v5454 = vpop.f32.mrb[0].mxu0
      %v5455 = vadd.f32 0.0, %v5454
      %v5456 = vpop.f32.mrb[0].mxu0
      %v5457 = vpop.f32.mrb[0].mxu0
      %v5458 = vadd.f32 0.0, %v5457
      %v5459 = vpop.f32.mrb[0].mxu0
      %5460 = vmatprep.mubr.bf16.mxu0 0
      %5461 = vmatmul.mubr.bf16.gmra.mrb[0].mxu0 %v4003
      %v5462 = vpop.f32.mrb[0].mxu0
      %v5463 = vadd.f32 0.0, %v5462
      %v5464 = vpop.f32.mrb[0].mxu0
      %v5465 = vpop.f32.mrb[0].mxu0
      %v5466 = vadd.f32 0.0, %v5465
      %v5467 = vpop.f32.mrb[0].mxu0
      %5468 = vmatprep.mubr.bf16.mxu0 0
      %5469 = vmatmul.mubr.bf16.gmra.mrb[0].mxu0 %v4004
      %v5470 = vpop.f32.mrb[0].mxu0
      %v5471 = vadd.f32 0.0, %v5470
      %v5472 = vpop.f32.mrb[0].mxu0
      %v5473 = vpop.f32.mrb[0].mxu0
      %v5474 = vadd.f32 0.0, %v5473
      %v5475 = vpop.f32.mrb[0].mxu0
      %5476 = vmatprep.mubr.bf16.mxu0 0
      %5477 = vmatmul.mubr.bf16.gmra.mrb[0].mxu0 %v4005
      %v5478 = vpop.f32.mrb[0].mxu0
      %v5479 = vadd.f32 0.0, %v5478
      %v5480 = vpop.f32.mrb[0].mxu0
      %v5481 = vpop.f32.mrb[0].mxu0
      %v5482 = vadd.f32 0.0, %v5481
      %v5483 = vpop.f32.mrb[0].mxu0
      %5484 = vmatprep.mubr.bf16.mxu0 0
      %5485 = vmatmul.mubr.bf16.gmra.mrb[0].mxu0 %v4006
      %v5486 = vpop.f32.mrb[0].mxu0
      %v5487 = vadd.f32 0.0, %v5486
      %v5488 = vpop.f32.mrb[0].mxu0
      %v5489 = vpop.f32.mrb[0].mxu0
      %v5490 = vadd.f32 0.0, %v5489
      %v5491 = vpop.f32.mrb[0].mxu0
      %5492 = vmatprep.mubr.bf16.mxu0 0
      %5493 = vmatmul.mubr.bf16.gmra.mrb[0].mxu0 %v4007
      %v5494 = vpop.f32.mrb[0].mxu0
      %v5495 = vadd.f32 0.0, %v5494
      %v5496 = vpop.f32.mrb[0].mxu0
      %v5497 = vpop.f32.mrb[0].mxu0
      %v5498 = vadd.f32 0.0, %v5497
      %v5499 = vpop.f32.mrb[0].mxu0
      %5500 = vmatprep.mubr.bf16.mxu0 0
      %5501 = vmatmul.mubr.bf16.gmra.mrb[0].mxu0 %v5298
      %v5502 = vpop.f32.mrb[0].mxu0
      %v5503 = vadd.f32 0.0, %v5502
      %v5504 = vpop.f32.mrb[0].mxu0
      %v5505 = vpop.f32.mrb[0].mxu0
      %v5506 = vadd.f32 0.0, %v5505
      %v5507 = vpop.f32.mrb[0].mxu0
      %5508 = vdwg.mxu0
      %v5509 = vadd.f32 %v5223, %v5383
      %v5510 = vadd.f32 %v5224, %v5386
      %v5511 = vadd.f32 %v5225, %v5391
      %v5512 = vadd.f32 %v5226, %v5394
      %v5513 = vadd.f32 %v5227, %v5399
      %v5514 = vadd.f32 %v5228, %v5402
      %v5515 = vadd.f32 %v5229, %v5407
      %v5516 = vadd.f32 %v5230, %v5410
      %v5517 = vadd.f32 %v5231, %v5415
      %v5518 = vadd.f32 %v5232, %v5418
      %v5519 = vadd.f32 %v5233, %v5423
      %v5520 = vadd.f32 %v5234, %v5426
      %v5521 = vadd.f32 %v5235, %v5431
      %v5522 = vadd.f32 %v5236, %v5434
      %v5523 = vadd.f32 %v5237, %v5439
      %v5524 = vadd.f32 %v5238, %v5442
      %v5525 = vadd.f32 %v5239, %v5447
      %v5526 = vadd.f32 %v5240, %v5450
      %v5527 = vadd.f32 %v5241, %v5455
      %v5528 = vadd.f32 %v5242, %v5458
      %v5529 = vadd.f32 %v5243, %v5463
      %v5530 = vadd.f32 %v5244, %v5466
      %v5531 = vadd.f32 %v5245, %v5471
      %v5532 = vadd.f32 %v5246, %v5474
      %v5533 = vadd.f32 %v5247, %v5479
      %v5534 = vadd.f32 %v5248, %v5482
      %v5535 = vadd.f32 %v5249, %v5487
      %v5536 = vadd.f32 %v5250, %v5490
      %v5537 = vadd.f32 %v5251, %v5495
      %v5538 = vadd.f32 %v5252, %v5498
      %v5539 = vadd.f32 %v5253, %v5503
      %v5540 = vadd.f32 %v5254, %v5506
      %v5542 = vrot.slane %v3534, 5
      %v5543 = vrot.slane %v5542, 4
      %v5544 = vrot.slane %v3535, 5
      %v5545 = vsel %vm4556, %v5543, %v5544
      %v5546 = vrot.slane %v5544, 4
      %v5547 = vrot.slane %v3536, 5
      %v5548 = vsel %vm4556, %v5546, %v5547
      %s5549 = scalar_lea.vmem %s2, 320
      %v5550 = vld [vmem:[%s5549] sm:$0xf]
      %v5551 = vld [vmem:[%s5549 + $0x4] sm:$0xf]
      %v5552 = vld [vmem:[%s5549 + $0x8] sm:$0xf]
      %v5553 = vld [vmem:[%s5549 + $0xc] sm:$0xf]
      %v5554 = vld [vmem:[%s5549 + $0x10] sm:$0xf]
      %v5555 = vld [vmem:[%s5549 + $0x14] sm:$0xf]
      %v5556 = vld [vmem:[%s5549 + $0x18] sm:$0xf]
      %v5557 = vld [vmem:[%s5549 + $0x1c] sm:$0xf]
      %v5558 = vld [vmem:[%s5549 + $0x20] sm:$0xf]
      %v5559 = vld [vmem:[%s5549 + $0x24] sm:$0xf]
      %v5560 = vld [vmem:[%s5549 + $0x28] sm:$0xf]
      %v5561 = vld [vmem:[%s5549 + $0x2c] sm:$0xf]
      %v5562 = vld [vmem:[%s5549 + $0x30] sm:$0xf]
      %v5563 = vld [vmem:[%s5549 + $0x34] sm:$0xf]
      %v5564 = vld [vmem:[%s5549 + $0x38] sm:$0xf]
      %v5565 = vld [vmem:[%s5549 + $0x3c] sm:$0xf]
      %v5566 = vunpack.c.l.b16 %v5545
      %v5567 = vunpack.c.l.b16 %v5548
      %v5568 = vpack.c.b16 %v5567, %v5566
      %v5586 = vunpack.c.l.b16 %v5550
      %v5587 = vunpack.c.l.b16 %v5551
      %v5588 = vunpack.c.l.b16 %v5552
      %v5589 = vunpack.c.l.b16 %v5553
      %v5590 = vunpack.c.l.b16 %v5554
      %v5591 = vunpack.c.l.b16 %v5555
      %v5592 = vunpack.c.l.b16 %v5556
      %v5593 = vunpack.c.l.b16 %v5557
      %v5594 = vunpack.c.l.b16 %v5558
      %v5595 = vunpack.c.l.b16 %v5559
      %v5596 = vunpack.c.l.b16 %v5560
      %v5597 = vunpack.c.l.b16 %v5561
      %v5598 = vunpack.c.l.b16 %v5562
      %v5599 = vunpack.c.l.b16 %v5563
      %v5600 = vunpack.c.l.b16 %v5564
      %v5601 = vunpack.c.l.b16 %v5565
      %v5602 = vpack.c.b16 %v5587, %v5586
      %v5603 = vpack.c.b16 %v5589, %v5588
      %v5604 = vpack.c.b16 %v5591, %v5590
      %v5605 = vpack.c.b16 %v5593, %v5592
      %v5606 = vpack.c.b16 %v5595, %v5594
      %v5607 = vpack.c.b16 %v5597, %v5596
      %v5608 = vpack.c.b16 %v5599, %v5598
      %v5609 = vpack.c.b16 %v5601, %v5600
      %5618 = vmatprep.subr.bf16.mxu0 0
      %5619 = vmatpush1.bf16.msra.mxu0 %v5602
      %5620 = vmatprep.subr.bf16.mxu0 0
      %5621 = vmatpush1.bf16.msra.mxu0 %v5603
      %5622 = vmatprep.subr.bf16.mxu0 0
      %5623 = vmatpush1.bf16.msra.mxu0 %v5604
      %5624 = vmatprep.subr.bf16.mxu0 0
      %5625 = vmatpush1.bf16.msra.mxu0 %v5605
      %5626 = vmatprep.subr.bf16.mxu0 0
      %5627 = vmatpush1.bf16.msra.mxu0 %v5606
      %5628 = vmatprep.subr.bf16.mxu0 0
      %5629 = vmatpush1.bf16.msra.mxu0 %v5607
      %5630 = vmatprep.subr.bf16.mxu0 0
      %5631 = vmatpush1.bf16.msra.mxu0 %v5608
      %5632 = vmatprep.subr.bf16.mxu0 0
      %5633 = vmatpush1.bf16.msra.mxu0 %v5609
      %5634 = vmatprep.subr.bf16.mxu0 0
      %5635 = vmatpush1.bf16.msra.mxu0 0
      %5636 = vmatprep.subr.bf16.mxu0 0
      %5637 = vmatpush1.bf16.msra.mxu0 0
      %5638 = vmatprep.subr.bf16.mxu0 0
      %5639 = vmatpush1.bf16.msra.mxu0 0
      %5640 = vmatprep.subr.bf16.mxu0 0
      %5641 = vmatpush1.bf16.msra.mxu0 0
      %5642 = vmatprep.subr.bf16.mxu0 0
      %5643 = vmatpush1.bf16.msra.mxu0 0
      %5644 = vmatprep.subr.bf16.mxu0 0
      %5645 = vmatpush1.bf16.msra.mxu0 0
      %5646 = vmatprep.subr.bf16.mxu0 0
      %5647 = vmatpush1.bf16.msra.mxu0 0
      %5648 = vmatprep.subr.bf16.mxu0 0
      %5649 = vmatpush1.bf16.msra.mxu0 0
      %5650 = vmatprep.mubr.bf16.mxu0 0
      %5651 = vmatmul.mubr.bf16.gmra.mrb[0].mxu0 %v4719
      %v5652 = vpop.f32.mrb[0].mxu0
      %v5653 = vadd.f32 0.0, %v5652
      %v5654 = vpop.f32.mrb[0].mxu0
      %v5655 = vpop.f32.mrb[0].mxu0
      %v5656 = vadd.f32 0.0, %v5655
      %v5657 = vpop.f32.mrb[0].mxu0
      %5658 = vmatprep.mubr.bf16.mxu0 0
      %5659 = vmatmul.mubr.bf16.gmra.mrb[0].mxu0 %v4720
      %v5660 = vpop.f32.mrb[0].mxu0
      %v5661 = vadd.f32 0.0, %v5660
      %v5662 = vpop.f32.mrb[0].mxu0
      %v5663 = vpop.f32.mrb[0].mxu0
      %v5664 = vadd.f32 0.0, %v5663
      %v5665 = vpop.f32.mrb[0].mxu0
      %5666 = vmatprep.mubr.bf16.mxu0 0
      %5667 = vmatmul.mubr.bf16.gmra.mrb[0].mxu0 %v4721
      %v5668 = vpop.f32.mrb[0].mxu0
      %v5669 = vadd.f32 0.0, %v5668
      %v5670 = vpop.f32.mrb[0].mxu0
      %v5671 = vpop.f32.mrb[0].mxu0
      %v5672 = vadd.f32 0.0, %v5671
      %v5673 = vpop.f32.mrb[0].mxu0
      %5674 = vmatprep.mubr.bf16.mxu0 0
      %5675 = vmatmul.mubr.bf16.gmra.mrb[0].mxu0 %v4722
      %v5676 = vpop.f32.mrb[0].mxu0
      %v5677 = vadd.f32 0.0, %v5676
      %v5678 = vpop.f32.mrb[0].mxu0
      %v5679 = vpop.f32.mrb[0].mxu0
      %v5680 = vadd.f32 0.0, %v5679
      %v5681 = vpop.f32.mrb[0].mxu0
      %5682 = vmatprep.mubr.bf16.mxu0 0
      %5683 = vmatmul.mubr.bf16.gmra.mrb[0].mxu0 %v4723
      %v5684 = vpop.f32.mrb[0].mxu0
      %v5685 = vadd.f32 0.0, %v5684
      %v5686 = vpop.f32.mrb[0].mxu0
      %v5687 = vpop.f32.mrb[0].mxu0
      %v5688 = vadd.f32 0.0, %v5687
      %v5689 = vpop.f32.mrb[0].mxu0
      %5690 = vmatprep.mubr.bf16.mxu0 0
      %5691 = vmatmul.mubr.bf16.gmra.mrb[0].mxu0 %v4724
      %v5692 = vpop.f32.mrb[0].mxu0
      %v5693 = vadd.f32 0.0, %v5692
      %v5694 = vpop.f32.mrb[0].mxu0
      %v5695 = vpop.f32.mrb[0].mxu0
      %v5696 = vadd.f32 0.0, %v5695
      %v5697 = vpop.f32.mrb[0].mxu0
      %5698 = vmatprep.mubr.bf16.mxu0 0
      %5699 = vmatmul.mubr.bf16.gmra.mrb[0].mxu0 %v4725
      %v5700 = vpop.f32.mrb[0].mxu0
      %v5701 = vadd.f32 0.0, %v5700
      %v5702 = vpop.f32.mrb[0].mxu0
      %v5703 = vpop.f32.mrb[0].mxu0
      %v5704 = vadd.f32 0.0, %v5703
      %v5705 = vpop.f32.mrb[0].mxu0
      %5706 = vmatprep.mubr.bf16.mxu0 0
      %5707 = vmatmul.mubr.bf16.gmra.mrb[0].mxu0 %v4726
      %v5708 = vpop.f32.mrb[0].mxu0
      %v5709 = vadd.f32 0.0, %v5708
      %v5710 = vpop.f32.mrb[0].mxu0
      %v5711 = vpop.f32.mrb[0].mxu0
      %v5712 = vadd.f32 0.0, %v5711
      %v5713 = vpop.f32.mrb[0].mxu0
      %5714 = vmatprep.mubr.bf16.mxu0 0
      %5715 = vmatmul.mubr.bf16.gmra.mrb[0].mxu0 %v4727
      %v5716 = vpop.f32.mrb[0].mxu0
      %v5717 = vadd.f32 0.0, %v5716
      %v5718 = vpop.f32.mrb[0].mxu0
      %v5719 = vpop.f32.mrb[0].mxu0
      %v5720 = vadd.f32 0.0, %v5719
      %v5721 = vpop.f32.mrb[0].mxu0
      %5722 = vmatprep.mubr.bf16.mxu0 0
      %5723 = vmatmul.mubr.bf16.gmra.mrb[0].mxu0 %v4728
      %v5724 = vpop.f32.mrb[0].mxu0
      %v5725 = vadd.f32 0.0, %v5724
      %v5726 = vpop.f32.mrb[0].mxu0
      %v5727 = vpop.f32.mrb[0].mxu0
      %v5728 = vadd.f32 0.0, %v5727
      %v5729 = vpop.f32.mrb[0].mxu0
      %5730 = vmatprep.mubr.bf16.mxu0 0
      %5731 = vmatmul.mubr.bf16.gmra.mrb[0].mxu0 %v4729
      %v5732 = vpop.f32.mrb[0].mxu0
      %v5733 = vadd.f32 0.0, %v5732
      %v5734 = vpop.f32.mrb[0].mxu0
      %v5735 = vpop.f32.mrb[0].mxu0
      %v5736 = vadd.f32 0.0, %v5735
      %v5737 = vpop.f32.mrb[0].mxu0
      %5738 = vmatprep.mubr.bf16.mxu0 0
      %5739 = vmatmul.mubr.bf16.gmra.mrb[0].mxu0 %v4730
      %v5740 = vpop.f32.mrb[0].mxu0
      %v5741 = vadd.f32 0.0, %v5740
      %v5742 = vpop.f32.mrb[0].mxu0
      %v5743 = vpop.f32.mrb[0].mxu0
      %v5744 = vadd.f32 0.0, %v5743
      %v5745 = vpop.f32.mrb[0].mxu0
      %5746 = vmatprep.mubr.bf16.mxu0 0
      %5747 = vmatmul.mubr.bf16.gmra.mrb[0].mxu0 %v4731
      %v5748 = vpop.f32.mrb[0].mxu0
      %v5749 = vadd.f32 0.0, %v5748
      %v5750 = vpop.f32.mrb[0].mxu0
      %v5751 = vpop.f32.mrb[0].mxu0
      %v5752 = vadd.f32 0.0, %v5751
      %v5753 = vpop.f32.mrb[0].mxu0
      %5754 = vmatprep.mubr.bf16.mxu0 0
      %5755 = vmatmul.mubr.bf16.gmra.mrb[0].mxu0 %v4732
      %v5756 = vpop.f32.mrb[0].mxu0
      %v5757 = vadd.f32 0.0, %v5756
      %v5758 = vpop.f32.mrb[0].mxu0
      %v5759 = vpop.f32.mrb[0].mxu0
      %v5760 = vadd.f32 0.0, %v5759
      %v5761 = vpop.f32.mrb[0].mxu0
      %5762 = vmatprep.mubr.bf16.mxu0 0
      %5763 = vmatmul.mubr.bf16.gmra.mrb[0].mxu0 %v4733
      %v5764 = vpop.f32.mrb[0].mxu0
      %v5765 = vadd.f32 0.0, %v5764
      %v5766 = vpop.f32.mrb[0].mxu0
      %v5767 = vpop.f32.mrb[0].mxu0
      %v5768 = vadd.f32 0.0, %v5767
      %v5769 = vpop.f32.mrb[0].mxu0
      %5770 = vmatprep.mubr.bf16.mxu0 0
      %5771 = vmatmul.mubr.bf16.gmra.mrb[0].mxu0 %v5568
      %v5772 = vpop.f32.mrb[0].mxu0
      %v5773 = vadd.f32 0.0, %v5772
      %v5774 = vpop.f32.mrb[0].mxu0
      %v5775 = vpop.f32.mrb[0].mxu0
      %v5776 = vadd.f32 0.0, %v5775
      %v5777 = vpop.f32.mrb[0].mxu0
      %5778 = vdwg.mxu0
      %v5779 = vadd.f32 %v5509, %v5653
      %v5780 = vadd.f32 %v5510, %v5656
      %v5781 = vadd.f32 %v5511, %v5661
      %v5782 = vadd.f32 %v5512, %v5664
      %v5783 = vadd.f32 %v5513, %v5669
      %v5784 = vadd.f32 %v5514, %v5672
      %v5785 = vadd.f32 %v5515, %v5677
      %v5786 = vadd.f32 %v5516, %v5680
      %v5787 = vadd.f32 %v5517, %v5685
      %v5788 = vadd.f32 %v5518, %v5688
      %v5789 = vadd.f32 %v5519, %v5693
      %v5790 = vadd.f32 %v5520, %v5696
      %v5791 = vadd.f32 %v5521, %v5701
      %v5792 = vadd.f32 %v5522, %v5704
      %v5793 = vadd.f32 %v5523, %v5709
      %v5794 = vadd.f32 %v5524, %v5712
      %v5795 = vadd.f32 %v5525, %v5717
      %v5796 = vadd.f32 %v5526, %v5720
      %v5797 = vadd.f32 %v5527, %v5725
      %v5798 = vadd.f32 %v5528, %v5728
      %v5799 = vadd.f32 %v5529, %v5733
      %v5800 = vadd.f32 %v5530, %v5736
      %v5801 = vadd.f32 %v5531, %v5741
      %v5802 = vadd.f32 %v5532, %v5744
      %v5803 = vadd.f32 %v5533, %v5749
      %v5804 = vadd.f32 %v5534, %v5752
      %v5805 = vadd.f32 %v5535, %v5757
      %v5806 = vadd.f32 %v5536, %v5760
      %v5807 = vadd.f32 %v5537, %v5765
      %v5808 = vadd.f32 %v5538, %v5768
      %v5809 = vadd.f32 %v5539, %v5773
      %v5810 = vadd.f32 %v5540, %v5776
      %s5811 = scalar_lea.vmem %s2, 384
      %v5812 = vld [vmem:[%s5811] sm:$0xf]
      %v5813 = vld [vmem:[%s5811 + $0x4] sm:$0xf]
      %v5814 = vld [vmem:[%s5811 + $0x8] sm:$0xf]
      %v5815 = vld [vmem:[%s5811 + $0xc] sm:$0xf]
      %v5816 = vld [vmem:[%s5811 + $0x10] sm:$0xf]
      %v5817 = vld [vmem:[%s5811 + $0x14] sm:$0xf]
      %v5818 = vld [vmem:[%s5811 + $0x18] sm:$0xf]
      %v5819 = vld [vmem:[%s5811 + $0x1c] sm:$0xf]
      %v5820 = vld [vmem:[%s5811 + $0x20] sm:$0xf]
      %v5821 = vld [vmem:[%s5811 + $0x24] sm:$0xf]
      %v5822 = vld [vmem:[%s5811 + $0x28] sm:$0xf]
      %v5823 = vld [vmem:[%s5811 + $0x2c] sm:$0xf]
      %v5824 = vld [vmem:[%s5811 + $0x30] sm:$0xf]
      %v5825 = vld [vmem:[%s5811 + $0x34] sm:$0xf]
      %v5826 = vld [vmem:[%s5811 + $0x38] sm:$0xf]
      %v5827 = vld [vmem:[%s5811 + $0x3c] sm:$0xf]
      %v5830 = vunpack.c.l.b16 %v3537
      %v5831 = vunpack.c.l.b16 %v3538
      %v5832 = vpack.c.b16 %v5831, %v5830
      %v5850 = vunpack.c.l.b16 %v5812
      %v5851 = vunpack.c.l.b16 %v5813
      %v5852 = vunpack.c.l.b16 %v5814
      %v5853 = vunpack.c.l.b16 %v5815
      %v5854 = vunpack.c.l.b16 %v5816
      %v5855 = vunpack.c.l.b16 %v5817
      %v5856 = vunpack.c.l.b16 %v5818
      %v5857 = vunpack.c.l.b16 %v5819
      %v5858 = vunpack.c.l.b16 %v5820
      %v5859 = vunpack.c.l.b16 %v5821
      %v5860 = vunpack.c.l.b16 %v5822
      %v5861 = vunpack.c.l.b16 %v5823
      %v5862 = vunpack.c.l.b16 %v5824
      %v5863 = vunpack.c.l.b16 %v5825
      %v5864 = vunpack.c.l.b16 %v5826
      %v5865 = vunpack.c.l.b16 %v5827
      %v5866 = vpack.c.b16 %v5851, %v5850
      %v5867 = vpack.c.b16 %v5853, %v5852
      %v5868 = vpack.c.b16 %v5855, %v5854
      %v5869 = vpack.c.b16 %v5857, %v5856
      %v5870 = vpack.c.b16 %v5859, %v5858
      %v5871 = vpack.c.b16 %v5861, %v5860
      %v5872 = vpack.c.b16 %v5863, %v5862
      %v5873 = vpack.c.b16 %v5865, %v5864
      %5882 = vmatprep.subr.bf16.mxu0 0
      %5883 = vmatpush1.bf16.msra.mxu0 %v5866
      %5884 = vmatprep.subr.bf16.mxu0 0
      %5885 = vmatpush1.bf16.msra.mxu0 %v5867
      %5886 = vmatprep.subr.bf16.mxu0 0
      %5887 = vmatpush1.bf16.msra.mxu0 %v5868
      %5888 = vmatprep.subr.bf16.mxu0 0
      %5889 = vmatpush1.bf16.msra.mxu0 %v5869
      %5890 = vmatprep.subr.bf16.mxu0 0
      %5891 = vmatpush1.bf16.msra.mxu0 %v5870
      %5892 = vmatprep.subr.bf16.mxu0 0
      %5893 = vmatpush1.bf16.msra.mxu0 %v5871
      %5894 = vmatprep.subr.bf16.mxu0 0
      %5895 = vmatpush1.bf16.msra.mxu0 %v5872
      %5896 = vmatprep.subr.bf16.mxu0 0
      %5897 = vmatpush1.bf16.msra.mxu0 %v5873
      %5898 = vmatprep.subr.bf16.mxu0 0
      %5899 = vmatpush1.bf16.msra.mxu0 0
      %5900 = vmatprep.subr.bf16.mxu0 0
      %5901 = vmatpush1.bf16.msra.mxu0 0
      %5902 = vmatprep.subr.bf16.mxu0 0
      %5903 = vmatpush1.bf16.msra.mxu0 0
      %5904 = vmatprep.subr.bf16.mxu0 0
      %5905 = vmatpush1.bf16.msra.mxu0 0
      %5906 = vmatprep.subr.bf16.mxu0 0
      %5907 = vmatpush1.bf16.msra.mxu0 0
      %5908 = vmatprep.subr.bf16.mxu0 0
      %5909 = vmatpush1.bf16.msra.mxu0 0
      %5910 = vmatprep.subr.bf16.mxu0 0
      %5911 = vmatpush1.bf16.msra.mxu0 0
      %5912 = vmatprep.subr.bf16.mxu0 0
      %5913 = vmatpush1.bf16.msra.mxu0 0
      %5914 = vmatprep.mubr.bf16.mxu0 0
      %5915 = vmatmul.mubr.bf16.gmra.mrb[0].mxu0 %v4299
      %v5916 = vpop.f32.mrb[0].mxu0
      %v5917 = vadd.f32 0.0, %v5916
      %v5918 = vpop.f32.mrb[0].mxu0
      %v5919 = vpop.f32.mrb[0].mxu0
      %v5920 = vadd.f32 0.0, %v5919
      %v5921 = vpop.f32.mrb[0].mxu0
      %5922 = vmatprep.mubr.bf16.mxu0 0
      %5923 = vmatmul.mubr.bf16.gmra.mrb[0].mxu0 %v4300
      %v5924 = vpop.f32.mrb[0].mxu0
      %v5925 = vadd.f32 0.0, %v5924
      %v5926 = vpop.f32.mrb[0].mxu0
      %v5927 = vpop.f32.mrb[0].mxu0
      %v5928 = vadd.f32 0.0, %v5927
      %v5929 = vpop.f32.mrb[0].mxu0
      %5930 = vmatprep.mubr.bf16.mxu0 0
      %5931 = vmatmul.mubr.bf16.gmra.mrb[0].mxu0 %v4301
      %v5932 = vpop.f32.mrb[0].mxu0
      %v5933 = vadd.f32 0.0, %v5932
      %v5934 = vpop.f32.mrb[0].mxu0
      %v5935 = vpop.f32.mrb[0].mxu0
      %v5936 = vadd.f32 0.0, %v5935
      %v5937 = vpop.f32.mrb[0].mxu0
      %5938 = vmatprep.mubr.bf16.mxu0 0
      %5939 = vmatmul.mubr.bf16.gmra.mrb[0].mxu0 %v4302
      %v5940 = vpop.f32.mrb[0].mxu0
      %v5941 = vadd.f32 0.0, %v5940
      %v5942 = vpop.f32.mrb[0].mxu0
      %v5943 = vpop.f32.mrb[0].mxu0
      %v5944 = vadd.f32 0.0, %v5943
      %v5945 = vpop.f32.mrb[0].mxu0
      %5946 = vmatprep.mubr.bf16.mxu0 0
      %5947 = vmatmul.mubr.bf16.gmra.mrb[0].mxu0 %v4303
      %v5948 = vpop.f32.mrb[0].mxu0
      %v5949 = vadd.f32 0.0, %v5948
      %v5950 = vpop.f32.mrb[0].mxu0
      %v5951 = vpop.f32.mrb[0].mxu0
      %v5952 = vadd.f32 0.0, %v5951
      %v5953 = vpop.f32.mrb[0].mxu0
      %5954 = vmatprep.mubr.bf16.mxu0 0
      %5955 = vmatmul.mubr.bf16.gmra.mrb[0].mxu0 %v4304
      %v5956 = vpop.f32.mrb[0].mxu0
      %v5957 = vadd.f32 0.0, %v5956
      %v5958 = vpop.f32.mrb[0].mxu0
      %v5959 = vpop.f32.mrb[0].mxu0
      %v5960 = vadd.f32 0.0, %v5959
      %v5961 = vpop.f32.mrb[0].mxu0
      %5962 = vmatprep.mubr.bf16.mxu0 0
      %5963 = vmatmul.mubr.bf16.gmra.mrb[0].mxu0 %v4305
      %v5964 = vpop.f32.mrb[0].mxu0
      %v5965 = vadd.f32 0.0, %v5964
      %v5966 = vpop.f32.mrb[0].mxu0
      %v5967 = vpop.f32.mrb[0].mxu0
      %v5968 = vadd.f32 0.0, %v5967
      %v5969 = vpop.f32.mrb[0].mxu0
      %5970 = vmatprep.mubr.bf16.mxu0 0
      %5971 = vmatmul.mubr.bf16.gmra.mrb[0].mxu0 %v4306
      %v5972 = vpop.f32.mrb[0].mxu0
      %v5973 = vadd.f32 0.0, %v5972
      %v5974 = vpop.f32.mrb[0].mxu0
      %v5975 = vpop.f32.mrb[0].mxu0
      %v5976 = vadd.f32 0.0, %v5975
      %v5977 = vpop.f32.mrb[0].mxu0
      %5978 = vmatprep.mubr.bf16.mxu0 0
      %5979 = vmatmul.mubr.bf16.gmra.mrb[0].mxu0 %v4307
      %v5980 = vpop.f32.mrb[0].mxu0
      %v5981 = vadd.f32 0.0, %v5980
      %v5982 = vpop.f32.mrb[0].mxu0
      %v5983 = vpop.f32.mrb[0].mxu0
      %v5984 = vadd.f32 0.0, %v5983
      %v5985 = vpop.f32.mrb[0].mxu0
      %5986 = vmatprep.mubr.bf16.mxu0 0
      %5987 = vmatmul.mubr.bf16.gmra.mrb[0].mxu0 %v4308
      %v5988 = vpop.f32.mrb[0].mxu0
      %v5989 = vadd.f32 0.0, %v5988
      %v5990 = vpop.f32.mrb[0].mxu0
      %v5991 = vpop.f32.mrb[0].mxu0
      %v5992 = vadd.f32 0.0, %v5991
      %v5993 = vpop.f32.mrb[0].mxu0
      %5994 = vmatprep.mubr.bf16.mxu0 0
      %5995 = vmatmul.mubr.bf16.gmra.mrb[0].mxu0 %v4309
      %v5996 = vpop.f32.mrb[0].mxu0
      %v5997 = vadd.f32 0.0, %v5996
      %v5998 = vpop.f32.mrb[0].mxu0
      %v5999 = vpop.f32.mrb[0].mxu0
      %v6000 = vadd.f32 0.0, %v5999
      %v6001 = vpop.f32.mrb[0].mxu0
      %6002 = vmatprep.mubr.bf16.mxu0 0
      %6003 = vmatmul.mubr.bf16.gmra.mrb[0].mxu0 %v4310
      %v6004 = vpop.f32.mrb[0].mxu0
      %v6005 = vadd.f32 0.0, %v6004
      %v6006 = vpop.f32.mrb[0].mxu0
      %v6007 = vpop.f32.mrb[0].mxu0
      %v6008 = vadd.f32 0.0, %v6007
      %v6009 = vpop.f32.mrb[0].mxu0
      %6010 = vmatprep.mubr.bf16.mxu0 0
      %6011 = vmatmul.mubr.bf16.gmra.mrb[0].mxu0 %v4311
      %v6012 = vpop.f32.mrb[0].mxu0
      %v6013 = vadd.f32 0.0, %v6012
      %v6014 = vpop.f32.mrb[0].mxu0
      %v6015 = vpop.f32.mrb[0].mxu0
      %v6016 = vadd.f32 0.0, %v6015
      %v6017 = vpop.f32.mrb[0].mxu0
      %6018 = vmatprep.mubr.bf16.mxu0 0
      %6019 = vmatmul.mubr.bf16.gmra.mrb[0].mxu0 %v4312
      %v6020 = vpop.f32.mrb[0].mxu0
      %v6021 = vadd.f32 0.0, %v6020
      %v6022 = vpop.f32.mrb[0].mxu0
      %v6023 = vpop.f32.mrb[0].mxu0
      %v6024 = vadd.f32 0.0, %v6023
      %v6025 = vpop.f32.mrb[0].mxu0
      %6026 = vmatprep.mubr.bf16.mxu0 0
      %6027 = vmatmul.mubr.bf16.gmra.mrb[0].mxu0 %v5012
      %v6028 = vpop.f32.mrb[0].mxu0
      %v6029 = vadd.f32 0.0, %v6028
      %v6030 = vpop.f32.mrb[0].mxu0
      %v6031 = vpop.f32.mrb[0].mxu0
      %v6032 = vadd.f32 0.0, %v6031
      %v6033 = vpop.f32.mrb[0].mxu0
      %6034 = vmatprep.mubr.bf16.mxu0 0
      %6035 = vmatmul.mubr.bf16.gmra.mrb[0].mxu0 %v5832
      %v6036 = vpop.f32.mrb[0].mxu0
      %v6037 = vadd.f32 0.0, %v6036
      %v6038 = vpop.f32.mrb[0].mxu0
      %v6039 = vpop.f32.mrb[0].mxu0
      %v6040 = vadd.f32 0.0, %v6039
      %v6041 = vpop.f32.mrb[0].mxu0
      %6042 = vdwg.mxu0
      %v6043 = vadd.f32 %v5779, %v5917
      %v6044 = vadd.f32 %v5780, %v5920
      %v6045 = vadd.f32 %v5781, %v5925
      %v6046 = vadd.f32 %v5782, %v5928
      %v6047 = vadd.f32 %v5783, %v5933
      %v6048 = vadd.f32 %v5784, %v5936
      %v6049 = vadd.f32 %v5785, %v5941
      %v6050 = vadd.f32 %v5786, %v5944
      %v6051 = vadd.f32 %v5787, %v5949
      %v6052 = vadd.f32 %v5788, %v5952
      %v6053 = vadd.f32 %v5789, %v5957
      %v6054 = vadd.f32 %v5790, %v5960
      %v6055 = vadd.f32 %v5791, %v5965
      %v6056 = vadd.f32 %v5792, %v5968
      %v6057 = vadd.f32 %v5793, %v5973
      %v6058 = vadd.f32 %v5794, %v5976
      %v6059 = vadd.f32 %v5795, %v5981
      %v6060 = vadd.f32 %v5796, %v5984
      %v6061 = vadd.f32 %v5797, %v5989
      %v6062 = vadd.f32 %v5798, %v5992
      %v6063 = vadd.f32 %v5799, %v5997
      %v6064 = vadd.f32 %v5800, %v6000
      %v6065 = vadd.f32 %v5801, %v6005
      %v6066 = vadd.f32 %v5802, %v6008
      %v6067 = vadd.f32 %v5803, %v6013
      %v6068 = vadd.f32 %v5804, %v6016
      %v6069 = vadd.f32 %v5805, %v6021
      %v6070 = vadd.f32 %v5806, %v6024
      %v6071 = vadd.f32 %v5807, %v6029
      %v6072 = vadd.f32 %v5808, %v6032
      %v6073 = vadd.f32 %v5809, %v6037
      %v6074 = vadd.f32 %v5810, %v6040
      %v6076 = vshrl.u32 %v3537, 16
      %v6078 = vrot.slane %v6076, 4
      %v6079 = vshll.u32 %v3537, 16
      %v6081 = vrot.slane %v6079, 5
      %v6082 = vor.u32 %v6078, %v6081
      %v6083 = vrot.slane %v6082, 4
      %v6085 = vshll.u32 %v3538, 16
      %v6087 = vrot.slane %v6085, 5
      %v6088 = vsel %vm3558, %v6083, %v6087
      %v6089 = vshrl.u32 %v3538, 16
      %v6091 = vrot.slane %v6089, 4
      %v6092 = vor.u32 %v6091, %v6087
      %v6093 = vrot.slane %v6092, 4
      %v6095 = vshll.u32 %v3539, 16
      %v6097 = vrot.slane %v6095, 5
      %v6098 = vsel %vm3558, %v6093, %v6097
      %s6099 = scalar_lea.vmem %s2, 448
      %v6100 = vld [vmem:[%s6099] sm:$0xf]
      %v6101 = vld [vmem:[%s6099 + $0x4] sm:$0xf]
      %v6102 = vld [vmem:[%s6099 + $0x8] sm:$0xf]
      %v6103 = vld [vmem:[%s6099 + $0xc] sm:$0xf]
      %v6104 = vld [vmem:[%s6099 + $0x10] sm:$0xf]
      %v6105 = vld [vmem:[%s6099 + $0x14] sm:$0xf]
      %v6106 = vld [vmem:[%s6099 + $0x18] sm:$0xf]
      %v6107 = vld [vmem:[%s6099 + $0x1c] sm:$0xf]
      %v6108 = vld [vmem:[%s6099 + $0x20] sm:$0xf]
      %v6109 = vld [vmem:[%s6099 + $0x24] sm:$0xf]
      %v6110 = vld [vmem:[%s6099 + $0x28] sm:$0xf]
      %v6111 = vld [vmem:[%s6099 + $0x2c] sm:$0xf]
      %v6112 = vld [vmem:[%s6099 + $0x30] sm:$0xf]
      %v6113 = vld [vmem:[%s6099 + $0x34] sm:$0xf]
      %v6114 = vld [vmem:[%s6099 + $0x38] sm:$0xf]
      %v6115 = vld [vmem:[%s6099 + $0x3c] sm:$0xf]
      %v6116 = vunpack.c.l.b16 %v6088
      %v6117 = vunpack.c.l.b16 %v6098
      %v6118 = vpack.c.b16 %v6117, %v6116
      %v6136 = vunpack.c.l.b16 %v6100
      %v6137 = vunpack.c.l.b16 %v6101
      %v6138 = vunpack.c.l.b16 %v6102
      %v6139 = vunpack.c.l.b16 %v6103
      %v6140 = vunpack.c.l.b16 %v6104
      %v6141 = vunpack.c.l.b16 %v6105
      %v6142 = vunpack.c.l.b16 %v6106
      %v6143 = vunpack.c.l.b16 %v6107
      %v6144 = vunpack.c.l.b16 %v6108
      %v6145 = vunpack.c.l.b16 %v6109
      %v6146 = vunpack.c.l.b16 %v6110
      %v6147 = vunpack.c.l.b16 %v6111
      %v6148 = vunpack.c.l.b16 %v6112
      %v6149 = vunpack.c.l.b16 %v6113
      %v6150 = vunpack.c.l.b16 %v6114
      %v6151 = vunpack.c.l.b16 %v6115
      %v6152 = vpack.c.b16 %v6137, %v6136
      %v6153 = vpack.c.b16 %v6139, %v6138
      %v6154 = vpack.c.b16 %v6141, %v6140
      %v6155 = vpack.c.b16 %v6143, %v6142
      %v6156 = vpack.c.b16 %v6145, %v6144
      %v6157 = vpack.c.b16 %v6147, %v6146
      %v6158 = vpack.c.b16 %v6149, %v6148
      %v6159 = vpack.c.b16 %v6151, %v6150
      %6168 = vmatprep.subr.bf16.mxu0 0
      %6169 = vmatpush1.bf16.msra.mxu0 %v6152
      %6170 = vmatprep.subr.bf16.mxu0 0
      %6171 = vmatpush1.bf16.msra.mxu0 %v6153
      %6172 = vmatprep.subr.bf16.mxu0 0
      %6173 = vmatpush1.bf16.msra.mxu0 %v6154
      %6174 = vmatprep.subr.bf16.mxu0 0
      %6175 = vmatpush1.bf16.msra.mxu0 %v6155
      %6176 = vmatprep.subr.bf16.mxu0 0
      %6177 = vmatpush1.bf16.msra.mxu0 %v6156
      %6178 = vmatprep.subr.bf16.mxu0 0
      %6179 = vmatpush1.bf16.msra.mxu0 %v6157
      %6180 = vmatprep.subr.bf16.mxu0 0
      %6181 = vmatpush1.bf16.msra.mxu0 %v6158
      %6182 = vmatprep.subr.bf16.mxu0 0
      %6183 = vmatpush1.bf16.msra.mxu0 %v6159
      %6184 = vmatprep.subr.bf16.mxu0 0
      %6185 = vmatpush1.bf16.msra.mxu0 0
      %6186 = vmatprep.subr.bf16.mxu0 0
      %6187 = vmatpush1.bf16.msra.mxu0 0
      %6188 = vmatprep.subr.bf16.mxu0 0
      %6189 = vmatpush1.bf16.msra.mxu0 0
      %6190 = vmatprep.subr.bf16.mxu0 0
      %6191 = vmatpush1.bf16.msra.mxu0 0
      %6192 = vmatprep.subr.bf16.mxu0 0
      %6193 = vmatpush1.bf16.msra.mxu0 0
      %6194 = vmatprep.subr.bf16.mxu0 0
      %6195 = vmatpush1.bf16.msra.mxu0 0
      %6196 = vmatprep.subr.bf16.mxu0 0
      %6197 = vmatpush1.bf16.msra.mxu0 0
      %6198 = vmatprep.subr.bf16.mxu0 0
      %6199 = vmatpush1.bf16.msra.mxu0 0
      %6200 = vmatprep.mubr.bf16.mxu0 0
      %6201 = vmatmul.mubr.bf16.gmra.mrb[0].mxu0 %v3994
      %v6202 = vpop.f32.mrb[0].mxu0
      %v6203 = vadd.f32 0.0, %v6202
      %v6204 = vpop.f32.mrb[0].mxu0
      %v6205 = vpop.f32.mrb[0].mxu0
      %v6206 = vadd.f32 0.0, %v6205
      %v6207 = vpop.f32.mrb[0].mxu0
      %6208 = vmatprep.mubr.bf16.mxu0 0
      %6209 = vmatmul.mubr.bf16.gmra.mrb[0].mxu0 %v3995
      %v6210 = vpop.f32.mrb[0].mxu0
      %v6211 = vadd.f32 0.0, %v6210
      %v6212 = vpop.f32.mrb[0].mxu0
      %v6213 = vpop.f32.mrb[0].mxu0
      %v6214 = vadd.f32 0.0, %v6213
      %v6215 = vpop.f32.mrb[0].mxu0
      %6216 = vmatprep.mubr.bf16.mxu0 0
      %6217 = vmatmul.mubr.bf16.gmra.mrb[0].mxu0 %v3996
      %v6218 = vpop.f32.mrb[0].mxu0
      %v6219 = vadd.f32 0.0, %v6218
      %v6220 = vpop.f32.mrb[0].mxu0
      %v6221 = vpop.f32.mrb[0].mxu0
      %v6222 = vadd.f32 0.0, %v6221
      %v6223 = vpop.f32.mrb[0].mxu0
      %6224 = vmatprep.mubr.bf16.mxu0 0
      %6225 = vmatmul.mubr.bf16.gmra.mrb[0].mxu0 %v3997
      %v6226 = vpop.f32.mrb[0].mxu0
      %v6227 = vadd.f32 0.0, %v6226
      %v6228 = vpop.f32.mrb[0].mxu0
      %v6229 = vpop.f32.mrb[0].mxu0
      %v6230 = vadd.f32 0.0, %v6229
      %v6231 = vpop.f32.mrb[0].mxu0
      %6232 = vmatprep.mubr.bf16.mxu0 0
      %6233 = vmatmul.mubr.bf16.gmra.mrb[0].mxu0 %v3998
      %v6234 = vpop.f32.mrb[0].mxu0
      %v6235 = vadd.f32 0.0, %v6234
      %v6236 = vpop.f32.mrb[0].mxu0
      %v6237 = vpop.f32.mrb[0].mxu0
      %v6238 = vadd.f32 0.0, %v6237
      %v6239 = vpop.f32.mrb[0].mxu0
      %6240 = vmatprep.mubr.bf16.mxu0 0
      %6241 = vmatmul.mubr.bf16.gmra.mrb[0].mxu0 %v3999
      %v6242 = vpop.f32.mrb[0].mxu0
      %v6243 = vadd.f32 0.0, %v6242
      %v6244 = vpop.f32.mrb[0].mxu0
      %v6245 = vpop.f32.mrb[0].mxu0
      %v6246 = vadd.f32 0.0, %v6245
      %v6247 = vpop.f32.mrb[0].mxu0
      %6248 = vmatprep.mubr.bf16.mxu0 0
      %6249 = vmatmul.mubr.bf16.gmra.mrb[0].mxu0 %v4000
      %v6250 = vpop.f32.mrb[0].mxu0
      %v6251 = vadd.f32 0.0, %v6250
      %v6252 = vpop.f32.mrb[0].mxu0
      %v6253 = vpop.f32.mrb[0].mxu0
      %v6254 = vadd.f32 0.0, %v6253
      %v6255 = vpop.f32.mrb[0].mxu0
      %6256 = vmatprep.mubr.bf16.mxu0 0
      %6257 = vmatmul.mubr.bf16.gmra.mrb[0].mxu0 %v4001
      %v6258 = vpop.f32.mrb[0].mxu0
      %v6259 = vadd.f32 0.0, %v6258
      %v6260 = vpop.f32.mrb[0].mxu0
      %v6261 = vpop.f32.mrb[0].mxu0
      %v6262 = vadd.f32 0.0, %v6261
      %v6263 = vpop.f32.mrb[0].mxu0
      %6264 = vmatprep.mubr.bf16.mxu0 0
      %6265 = vmatmul.mubr.bf16.gmra.mrb[0].mxu0 %v4002
      %v6266 = vpop.f32.mrb[0].mxu0
      %v6267 = vadd.f32 0.0, %v6266
      %v6268 = vpop.f32.mrb[0].mxu0
      %v6269 = vpop.f32.mrb[0].mxu0
      %v6270 = vadd.f32 0.0, %v6269
      %v6271 = vpop.f32.mrb[0].mxu0
      %6272 = vmatprep.mubr.bf16.mxu0 0
      %6273 = vmatmul.mubr.bf16.gmra.mrb[0].mxu0 %v4003
      %v6274 = vpop.f32.mrb[0].mxu0
      %v6275 = vadd.f32 0.0, %v6274
      %v6276 = vpop.f32.mrb[0].mxu0
      %v6277 = vpop.f32.mrb[0].mxu0
      %v6278 = vadd.f32 0.0, %v6277
      %v6279 = vpop.f32.mrb[0].mxu0
      %6280 = vmatprep.mubr.bf16.mxu0 0
      %6281 = vmatmul.mubr.bf16.gmra.mrb[0].mxu0 %v4004
      %v6282 = vpop.f32.mrb[0].mxu0
      %v6283 = vadd.f32 0.0, %v6282
      %v6284 = vpop.f32.mrb[0].mxu0
      %v6285 = vpop.f32.mrb[0].mxu0
      %v6286 = vadd.f32 0.0, %v6285
      %v6287 = vpop.f32.mrb[0].mxu0
      %6288 = vmatprep.mubr.bf16.mxu0 0
      %6289 = vmatmul.mubr.bf16.gmra.mrb[0].mxu0 %v4005
      %v6290 = vpop.f32.mrb[0].mxu0
      %v6291 = vadd.f32 0.0, %v6290
      %v6292 = vpop.f32.mrb[0].mxu0
      %v6293 = vpop.f32.mrb[0].mxu0
      %v6294 = vadd.f32 0.0, %v6293
      %v6295 = vpop.f32.mrb[0].mxu0
      %6296 = vmatprep.mubr.bf16.mxu0 0
      %6297 = vmatmul.mubr.bf16.gmra.mrb[0].mxu0 %v4006
      %v6298 = vpop.f32.mrb[0].mxu0
      %v6299 = vadd.f32 0.0, %v6298
      %v6300 = vpop.f32.mrb[0].mxu0
      %v6301 = vpop.f32.mrb[0].mxu0
      %v6302 = vadd.f32 0.0, %v6301
      %v6303 = vpop.f32.mrb[0].mxu0
      %6304 = vmatprep.mubr.bf16.mxu0 0
      %6305 = vmatmul.mubr.bf16.gmra.mrb[0].mxu0 %v4007
      %v6306 = vpop.f32.mrb[0].mxu0
      %v6307 = vadd.f32 0.0, %v6306
      %v6308 = vpop.f32.mrb[0].mxu0
      %v6309 = vpop.f32.mrb[0].mxu0
      %v6310 = vadd.f32 0.0, %v6309
      %v6311 = vpop.f32.mrb[0].mxu0
      %6312 = vmatprep.mubr.bf16.mxu0 0
      %6313 = vmatmul.mubr.bf16.gmra.mrb[0].mxu0 %v5298
      %v6314 = vpop.f32.mrb[0].mxu0
      %v6315 = vadd.f32 0.0, %v6314
      %v6316 = vpop.f32.mrb[0].mxu0
      %v6317 = vpop.f32.mrb[0].mxu0
      %v6318 = vadd.f32 0.0, %v6317
      %v6319 = vpop.f32.mrb[0].mxu0
      %6320 = vmatprep.mubr.bf16.mxu0 0
      %6321 = vmatmul.mubr.bf16.gmra.mrb[0].mxu0 %v6118
      %v6322 = vpop.f32.mrb[0].mxu0
      %v6323 = vadd.f32 0.0, %v6322
      %v6324 = vpop.f32.mrb[0].mxu0
      %v6325 = vpop.f32.mrb[0].mxu0
      %v6326 = vadd.f32 0.0, %v6325
      %v6327 = vpop.f32.mrb[0].mxu0
      %6328 = vdwg.mxu0
      %v6329 = vadd.f32 %v6043, %v6203
      %v6330 = vadd.f32 %v6044, %v6206
      %v6331 = vadd.f32 %v6045, %v6211
      %v6332 = vadd.f32 %v6046, %v6214
      %v6333 = vadd.f32 %v6047, %v6219
      %v6334 = vadd.f32 %v6048, %v6222
      %v6335 = vadd.f32 %v6049, %v6227
      %v6336 = vadd.f32 %v6050, %v6230
      %v6337 = vadd.f32 %v6051, %v6235
      %v6338 = vadd.f32 %v6052, %v6238
      %v6339 = vadd.f32 %v6053, %v6243
      %v6340 = vadd.f32 %v6054, %v6246
      %v6341 = vadd.f32 %v6055, %v6251
      %v6342 = vadd.f32 %v6056, %v6254
      %v6343 = vadd.f32 %v6057, %v6259
      %v6344 = vadd.f32 %v6058, %v6262
      %v6345 = vadd.f32 %v6059, %v6267
      %v6346 = vadd.f32 %v6060, %v6270
      %v6347 = vadd.f32 %v6061, %v6275
      %v6348 = vadd.f32 %v6062, %v6278
      %v6349 = vadd.f32 %v6063, %v6283
      %v6350 = vadd.f32 %v6064, %v6286
      %v6351 = vadd.f32 %v6065, %v6291
      %v6352 = vadd.f32 %v6066, %v6294
      %v6353 = vadd.f32 %v6067, %v6299
      %v6354 = vadd.f32 %v6068, %v6302
      %v6355 = vadd.f32 %v6069, %v6307
      %v6356 = vadd.f32 %v6070, %v6310
      %v6357 = vadd.f32 %v6071, %v6315
      %v6358 = vadd.f32 %v6072, %v6318
      %v6359 = vadd.f32 %v6073, %v6323
      %v6360 = vadd.f32 %v6074, %v6326
      %v6362 = vrot.slane %v3537, 5
      %v6363 = vrot.slane %v6362, 4
      %v6364 = vrot.slane %v3538, 5
      %v6365 = vsel %vm4556, %v6363, %v6364
      %v6366 = vrot.slane %v6364, 4
      %v6367 = vrot.slane %v3539, 5
      %v6368 = vsel %vm4556, %v6366, %v6367
      %s6369 = scalar_lea.vmem %s2, 512
      %v6370 = vld [vmem:[%s6369] sm:$0xf]
      %v6371 = vld [vmem:[%s6369 + $0x4] sm:$0xf]
      %v6372 = vld [vmem:[%s6369 + $0x8] sm:$0xf]
      %v6373 = vld [vmem:[%s6369 + $0xc] sm:$0xf]
      %v6374 = vld [vmem:[%s6369 + $0x10] sm:$0xf]
      %v6375 = vld [vmem:[%s6369 + $0x14] sm:$0xf]
      %v6376 = vld [vmem:[%s6369 + $0x18] sm:$0xf]
      %v6377 = vld [vmem:[%s6369 + $0x1c] sm:$0xf]
      %v6378 = vld [vmem:[%s6369 + $0x20] sm:$0xf]
      %v6379 = vld [vmem:[%s6369 + $0x24] sm:$0xf]
      %v6380 = vld [vmem:[%s6369 + $0x28] sm:$0xf]
      %v6381 = vld [vmem:[%s6369 + $0x2c] sm:$0xf]
      %v6382 = vld [vmem:[%s6369 + $0x30] sm:$0xf]
      %v6383 = vld [vmem:[%s6369 + $0x34] sm:$0xf]
      %v6384 = vld [vmem:[%s6369 + $0x38] sm:$0xf]
      %v6385 = vld [vmem:[%s6369 + $0x3c] sm:$0xf]
      %v6386 = vunpack.c.l.b16 %v6365
      %v6387 = vunpack.c.l.b16 %v6368
      %v6388 = vpack.c.b16 %v6387, %v6386
      %v6406 = vunpack.c.l.b16 %v6370
      %v6407 = vunpack.c.l.b16 %v6371
      %v6408 = vunpack.c.l.b16 %v6372
      %v6409 = vunpack.c.l.b16 %v6373
      %v6410 = vunpack.c.l.b16 %v6374
      %v6411 = vunpack.c.l.b16 %v6375
      %v6412 = vunpack.c.l.b16 %v6376
      %v6413 = vunpack.c.l.b16 %v6377
      %v6414 = vunpack.c.l.b16 %v6378
      %v6415 = vunpack.c.l.b16 %v6379
      %v6416 = vunpack.c.l.b16 %v6380
      %v6417 = vunpack.c.l.b16 %v6381
      %v6418 = vunpack.c.l.b16 %v6382
      %v6419 = vunpack.c.l.b16 %v6383
      %v6420 = vunpack.c.l.b16 %v6384
      %v6421 = vunpack.c.l.b16 %v6385
      %v6422 = vpack.c.b16 %v6407, %v6406
      %v6423 = vpack.c.b16 %v6409, %v6408
      %v6424 = vpack.c.b16 %v6411, %v6410
      %v6425 = vpack.c.b16 %v6413, %v6412
      %v6426 = vpack.c.b16 %v6415, %v6414
      %v6427 = vpack.c.b16 %v6417, %v6416
      %v6428 = vpack.c.b16 %v6419, %v6418
      %v6429 = vpack.c.b16 %v6421, %v6420
      %6438 = vmatprep.subr.bf16.mxu0 0
      %6439 = vmatpush1.bf16.msra.mxu0 %v6422
      %6440 = vmatprep.subr.bf16.mxu0 0
      %6441 = vmatpush1.bf16.msra.mxu0 %v6423
      %6442 = vmatprep.subr.bf16.mxu0 0
      %6443 = vmatpush1.bf16.msra.mxu0 %v6424
      %6444 = vmatprep.subr.bf16.mxu0 0
      %6445 = vmatpush1.bf16.msra.mxu0 %v6425
      %6446 = vmatprep.subr.bf16.mxu0 0
      %6447 = vmatpush1.bf16.msra.mxu0 %v6426
      %6448 = vmatprep.subr.bf16.mxu0 0
      %6449 = vmatpush1.bf16.msra.mxu0 %v6427
      %6450 = vmatprep.subr.bf16.mxu0 0
      %6451 = vmatpush1.bf16.msra.mxu0 %v6428
      %6452 = vmatprep.subr.bf16.mxu0 0
      %6453 = vmatpush1.bf16.msra.mxu0 %v6429
      %6454 = vmatprep.subr.bf16.mxu0 0
      %6455 = vmatpush1.bf16.msra.mxu0 0
      %6456 = vmatprep.subr.bf16.mxu0 0
      %6457 = vmatpush1.bf16.msra.mxu0 0
      %6458 = vmatprep.subr.bf16.mxu0 0
      %6459 = vmatpush1.bf16.msra.mxu0 0
      %6460 = vmatprep.subr.bf16.mxu0 0
      %6461 = vmatpush1.bf16.msra.mxu0 0
      %6462 = vmatprep.subr.bf16.mxu0 0
      %6463 = vmatpush1.bf16.msra.mxu0 0
      %6464 = vmatprep.subr.bf16.mxu0 0
      %6465 = vmatpush1.bf16.msra.mxu0 0
      %6466 = vmatprep.subr.bf16.mxu0 0
      %6467 = vmatpush1.bf16.msra.mxu0 0
      %6468 = vmatprep.subr.bf16.mxu0 0
      %6469 = vmatpush1.bf16.msra.mxu0 0
      %6470 = vmatprep.mubr.bf16.mxu0 0
      %6471 = vmatmul.mubr.bf16.gmra.mrb[0].mxu0 %v4720
      %v6472 = vpop.f32.mrb[0].mxu0
      %v6473 = vadd.f32 0.0, %v6472
      %v6474 = vpop.f32.mrb[0].mxu0
      %v6475 = vpop.f32.mrb[0].mxu0
      %v6476 = vadd.f32 0.0, %v6475
      %v6477 = vpop.f32.mrb[0].mxu0
      %6478 = vmatprep.mubr.bf16.mxu0 0
      %6479 = vmatmul.mubr.bf16.gmra.mrb[0].mxu0 %v4721
      %v6480 = vpop.f32.mrb[0].mxu0
      %v6481 = vadd.f32 0.0, %v6480
      %v6482 = vpop.f32.mrb[0].mxu0
      %v6483 = vpop.f32.mrb[0].mxu0
      %v6484 = vadd.f32 0.0, %v6483
      %v6485 = vpop.f32.mrb[0].mxu0
      %6486 = vmatprep.mubr.bf16.mxu0 0
      %6487 = vmatmul.mubr.bf16.gmra.mrb[0].mxu0 %v4722
      %v6488 = vpop.f32.mrb[0].mxu0
      %v6489 = vadd.f32 0.0, %v6488
      %v6490 = vpop.f32.mrb[0].mxu0
      %v6491 = vpop.f32.mrb[0].mxu0
      %v6492 = vadd.f32 0.0, %v6491
      %v6493 = vpop.f32.mrb[0].mxu0
      %6494 = vmatprep.mubr.bf16.mxu0 0
      %6495 = vmatmul.mubr.bf16.gmra.mrb[0].mxu0 %v4723
      %v6496 = vpop.f32.mrb[0].mxu0
      %v6497 = vadd.f32 0.0, %v6496
      %v6498 = vpop.f32.mrb[0].mxu0
      %v6499 = vpop.f32.mrb[0].mxu0
      %v6500 = vadd.f32 0.0, %v6499
      %v6501 = vpop.f32.mrb[0].mxu0
      %6502 = vmatprep.mubr.bf16.mxu0 0
      %6503 = vmatmul.mubr.bf16.gmra.mrb[0].mxu0 %v4724
      %v6504 = vpop.f32.mrb[0].mxu0
      %v6505 = vadd.f32 0.0, %v6504
      %v6506 = vpop.f32.mrb[0].mxu0
      %v6507 = vpop.f32.mrb[0].mxu0
      %v6508 = vadd.f32 0.0, %v6507
      %v6509 = vpop.f32.mrb[0].mxu0
      %6510 = vmatprep.mubr.bf16.mxu0 0
      %6511 = vmatmul.mubr.bf16.gmra.mrb[0].mxu0 %v4725
      %v6512 = vpop.f32.mrb[0].mxu0
      %v6513 = vadd.f32 0.0, %v6512
      %v6514 = vpop.f32.mrb[0].mxu0
      %v6515 = vpop.f32.mrb[0].mxu0
      %v6516 = vadd.f32 0.0, %v6515
      %v6517 = vpop.f32.mrb[0].mxu0
      %6518 = vmatprep.mubr.bf16.mxu0 0
      %6519 = vmatmul.mubr.bf16.gmra.mrb[0].mxu0 %v4726
      %v6520 = vpop.f32.mrb[0].mxu0
      %v6521 = vadd.f32 0.0, %v6520
      %v6522 = vpop.f32.mrb[0].mxu0
      %v6523 = vpop.f32.mrb[0].mxu0
      %v6524 = vadd.f32 0.0, %v6523
      %v6525 = vpop.f32.mrb[0].mxu0
      %6526 = vmatprep.mubr.bf16.mxu0 0
      %6527 = vmatmul.mubr.bf16.gmra.mrb[0].mxu0 %v4727
      %v6528 = vpop.f32.mrb[0].mxu0
      %v6529 = vadd.f32 0.0, %v6528
      %v6530 = vpop.f32.mrb[0].mxu0
      %v6531 = vpop.f32.mrb[0].mxu0
      %v6532 = vadd.f32 0.0, %v6531
      %v6533 = vpop.f32.mrb[0].mxu0
      %6534 = vmatprep.mubr.bf16.mxu0 0
      %6535 = vmatmul.mubr.bf16.gmra.mrb[0].mxu0 %v4728
      %v6536 = vpop.f32.mrb[0].mxu0
      %v6537 = vadd.f32 0.0, %v6536
      %v6538 = vpop.f32.mrb[0].mxu0
      %v6539 = vpop.f32.mrb[0].mxu0
      %v6540 = vadd.f32 0.0, %v6539
      %v6541 = vpop.f32.mrb[0].mxu0
      %6542 = vmatprep.mubr.bf16.mxu0 0
      %6543 = vmatmul.mubr.bf16.gmra.mrb[0].mxu0 %v4729
      %v6544 = vpop.f32.mrb[0].mxu0
      %v6545 = vadd.f32 0.0, %v6544
      %v6546 = vpop.f32.mrb[0].mxu0
      %v6547 = vpop.f32.mrb[0].mxu0
      %v6548 = vadd.f32 0.0, %v6547
      %v6549 = vpop.f32.mrb[0].mxu0
      %6550 = vmatprep.mubr.bf16.mxu0 0
      %6551 = vmatmul.mubr.bf16.gmra.mrb[0].mxu0 %v4730
      %v6552 = vpop.f32.mrb[0].mxu0
      %v6553 = vadd.f32 0.0, %v6552
      %v6554 = vpop.f32.mrb[0].mxu0
      %v6555 = vpop.f32.mrb[0].mxu0
      %v6556 = vadd.f32 0.0, %v6555
      %v6557 = vpop.f32.mrb[0].mxu0
      %6558 = vmatprep.mubr.bf16.mxu0 0
      %6559 = vmatmul.mubr.bf16.gmra.mrb[0].mxu0 %v4731
      %v6560 = vpop.f32.mrb[0].mxu0
      %v6561 = vadd.f32 0.0, %v6560
      %v6562 = vpop.f32.mrb[0].mxu0
      %v6563 = vpop.f32.mrb[0].mxu0
      %v6564 = vadd.f32 0.0, %v6563
      %v6565 = vpop.f32.mrb[0].mxu0
      %6566 = vmatprep.mubr.bf16.mxu0 0
      %6567 = vmatmul.mubr.bf16.gmra.mrb[0].mxu0 %v4732
      %v6568 = vpop.f32.mrb[0].mxu0
      %v6569 = vadd.f32 0.0, %v6568
      %v6570 = vpop.f32.mrb[0].mxu0
      %v6571 = vpop.f32.mrb[0].mxu0
      %v6572 = vadd.f32 0.0, %v6571
      %v6573 = vpop.f32.mrb[0].mxu0
      %6574 = vmatprep.mubr.bf16.mxu0 0
      %6575 = vmatmul.mubr.bf16.gmra.mrb[0].mxu0 %v4733
      %v6576 = vpop.f32.mrb[0].mxu0
      %v6577 = vadd.f32 0.0, %v6576
      %v6578 = vpop.f32.mrb[0].mxu0
      %v6579 = vpop.f32.mrb[0].mxu0
      %v6580 = vadd.f32 0.0, %v6579
      %v6581 = vpop.f32.mrb[0].mxu0
      %6582 = vmatprep.mubr.bf16.mxu0 0
      %6583 = vmatmul.mubr.bf16.gmra.mrb[0].mxu0 %v5568
      %v6584 = vpop.f32.mrb[0].mxu0
      %v6585 = vadd.f32 0.0, %v6584
      %v6586 = vpop.f32.mrb[0].mxu0
      %v6587 = vpop.f32.mrb[0].mxu0
      %v6588 = vadd.f32 0.0, %v6587
      %v6589 = vpop.f32.mrb[0].mxu0
      %6590 = vmatprep.mubr.bf16.mxu0 0
      %6591 = vmatmul.mubr.bf16.gmra.mrb[0].mxu0 %v6388
      %v6592 = vpop.f32.mrb[0].mxu0
      %v6593 = vadd.f32 0.0, %v6592
      %v6594 = vpop.f32.mrb[0].mxu0
      %v6595 = vpop.f32.mrb[0].mxu0
      %v6596 = vadd.f32 0.0, %v6595
      %v6597 = vpop.f32.mrb[0].mxu0
      %6598 = vdwg.mxu0
      %v6599 = vadd.f32 %v6329, %v6473
      %v6600 = vadd.f32 %v6330, %v6476
      %v6601 = vadd.f32 %v6331, %v6481
      %v6602 = vadd.f32 %v6332, %v6484
      %v6603 = vadd.f32 %v6333, %v6489
      %v6604 = vadd.f32 %v6334, %v6492
      %v6605 = vadd.f32 %v6335, %v6497
      %v6606 = vadd.f32 %v6336, %v6500
      %v6607 = vadd.f32 %v6337, %v6505
      %v6608 = vadd.f32 %v6338, %v6508
      %v6609 = vadd.f32 %v6339, %v6513
      %v6610 = vadd.f32 %v6340, %v6516
      %v6611 = vadd.f32 %v6341, %v6521
      %v6612 = vadd.f32 %v6342, %v6524
      %v6613 = vadd.f32 %v6343, %v6529
      %v6614 = vadd.f32 %v6344, %v6532
      %v6615 = vadd.f32 %v6345, %v6537
      %v6616 = vadd.f32 %v6346, %v6540
      %v6617 = vadd.f32 %v6347, %v6545
      %v6618 = vadd.f32 %v6348, %v6548
      %v6619 = vadd.f32 %v6349, %v6553
      %v6620 = vadd.f32 %v6350, %v6556
      %v6621 = vadd.f32 %v6351, %v6561
      %v6622 = vadd.f32 %v6352, %v6564
      %v6623 = vadd.f32 %v6353, %v6569
      %v6624 = vadd.f32 %v6354, %v6572
      %v6625 = vadd.f32 %v6355, %v6577
      %v6626 = vadd.f32 %v6356, %v6580
      %v6627 = vadd.f32 %v6357, %v6585
      %v6628 = vadd.f32 %v6358, %v6588
      %v6629 = vadd.f32 %v6359, %v6593
      %v6630 = vadd.f32 %v6360, %v6596
      %vm6679 = vcmask 1046528
      %v6680 = vrot.slane %v175, 1
      %v6681 = vrot.slane %v176, 1
      %v6682 = vsel %vm6679, %v6680, %v6681
      %v6683 = vrot.slane %v177, 1
      %v6684 = vsel %vm6679, %v6681, %v6683
      %v6685 = vrot.slane %v178, 1
      %v6686 = vrot.slane %v179, 1
      %v6687 = vsel %vm6679, %v6685, %v6686
      %v6688 = vrot.slane %v180, 1
      %v6689 = vsel %vm6679, %v6686, %v6688
      %v6690 = vrot.slane %v181, 1
      %v6691 = vrot.slane %v182, 1
      %v6692 = vsel %vm6679, %v6690, %v6691
      %v6693 = vrot.slane %v183, 1
      %v6694 = vsel %vm6679, %v6691, %v6693
      %v6695 = vrot.slane %v184, 1
      %v6696 = vrot.slane %v185, 1
      %v6697 = vsel %vm6679, %v6695, %v6696
      %v6698 = vrot.slane %v186, 1
      %v6699 = vsel %vm6679, %v6696, %v6698
      %v6700 = vrot.slane %v187, 1
      %v6701 = vrot.slane %v188, 1
      %v6702 = vsel %vm6679, %v6700, %v6701
      %v6703 = vrot.slane %v189, 1
      %v6704 = vsel %vm6679, %v6701, %v6703
      %v6705 = vrot.slane %v190, 1
      %v6706 = vrot.slane %v191, 1
      %v6707 = vsel %vm6679, %v6705, %v6706
      %v6708 = vrot.slane %v192, 1
      %v6709 = vsel %vm6679, %v6706, %v6708
      %v6710 = vrot.slane %v193, 1
      %v6711 = vrot.slane %v194, 1
      %v6712 = vsel %vm6679, %v6710, %v6711
      %v6713 = vrot.slane %v195, 1
      %v6714 = vsel %vm6679, %v6711, %v6713
      %v6715 = vrot.slane %v196, 1
      %v6716 = vrot.slane %v197, 1
      %v6717 = vsel %vm6679, %v6715, %v6716
      %v6718 = vrot.slane %v198, 1
      %v6719 = vsel %vm6679, %v6716, %v6718
      %v6720 = vrot.slane %v199, 1
      %v6721 = vrot.slane %v200, 1
      %v6722 = vsel %vm6679, %v6720, %v6721
      %v6723 = vrot.slane %v201, 1
      %v6724 = vsel %vm6679, %v6721, %v6723
      %v6725 = vrot.slane %v202, 1
      %v6726 = vrot.slane %v203, 1
      %v6727 = vsel %vm6679, %v6725, %v6726
      %v6728 = vrot.slane %v204, 1
      %v6729 = vsel %vm6679, %v6726, %v6728
      %v6730 = vrot.slane %v205, 1
      %v6731 = vrot.slane %v206, 1
      %v6732 = vsel %vm6679, %v6730, %v6731
      %v6733 = vrot.slane %v207, 1
      %v6734 = vsel %vm6679, %v6731, %v6733
      %v6735 = vrot.slane %v208, 1
      %v6736 = vrot.slane %v209, 1
      %v6737 = vsel %vm6679, %v6735, %v6736
      %v6738 = vrot.slane %v210, 1
      %v6739 = vsel %vm6679, %v6736, %v6738
      %v6740 = vrot.slane %v211, 1
      %v6741 = vrot.slane %v212, 1
      %v6742 = vsel %vm6679, %v6740, %v6741
      %v6743 = vrot.slane %v213, 1
      %v6744 = vsel %vm6679, %v6741, %v6743
      %v6745 = vrot.slane %v214, 1
      %v6746 = vrot.slane %v215, 1
      %v6747 = vsel %vm6679, %v6745, %v6746
      %v6748 = vrot.slane %v216, 1
      %v6749 = vsel %vm6679, %v6746, %v6748
      %v6750 = vrot.slane %v217, 1
      %v6751 = vrot.slane %v218, 1
      %v6752 = vsel %vm6679, %v6750, %v6751
      %v6753 = vrot.slane %v219, 1
      %v6754 = vsel %vm6679, %v6751, %v6753
      %v6755 = vrot.slane %v220, 1
      %v6756 = vrot.slane %v221, 1
      %v6757 = vsel %vm6679, %v6755, %v6756
      %v6758 = vrot.slane %v222, 1
      %v6759 = vsel %vm6679, %v6756, %v6758
      %v6792 = vadd.f32 %v6599, %v6682
      %v6793 = vadd.f32 %v6600, %v6684
      %v6794 = vadd.f32 %v6601, %v6687
      %v6795 = vadd.f32 %v6602, %v6689
      %v6796 = vadd.f32 %v6603, %v6692
      %v6797 = vadd.f32 %v6604, %v6694
      %v6798 = vadd.f32 %v6605, %v6697
      %v6799 = vadd.f32 %v6606, %v6699
      %v6800 = vadd.f32 %v6607, %v6702
      %v6801 = vadd.f32 %v6608, %v6704
      %v6802 = vadd.f32 %v6609, %v6707
      %v6803 = vadd.f32 %v6610, %v6709
      %v6804 = vadd.f32 %v6611, %v6712
      %v6805 = vadd.f32 %v6612, %v6714
      %v6806 = vadd.f32 %v6613, %v6717
      %v6807 = vadd.f32 %v6614, %v6719
      %v6808 = vadd.f32 %v6615, %v6722
      %v6809 = vadd.f32 %v6616, %v6724
      %v6810 = vadd.f32 %v6617, %v6727
      %v6811 = vadd.f32 %v6618, %v6729
      %v6812 = vadd.f32 %v6619, %v6732
      %v6813 = vadd.f32 %v6620, %v6734
      %v6814 = vadd.f32 %v6621, %v6737
      %v6815 = vadd.f32 %v6622, %v6739
      %v6816 = vadd.f32 %v6623, %v6742
      %v6817 = vadd.f32 %v6624, %v6744
      %v6818 = vadd.f32 %v6625, %v6747
      %v6819 = vadd.f32 %v6626, %v6749
      %v6820 = vadd.f32 %v6627, %v6752
      %v6821 = vadd.f32 %v6628, %v6754
      %v6822 = vadd.f32 %v6629, %v6757
      %v6823 = vadd.f32 %v6630, %v6759
      %v6824 = vmax.f32 %v6792, 0.0
      %v6825 = vmax.f32 %v6793, 0.0
      %v6826 = vmax.f32 %v6794, 0.0
      %v6827 = vmax.f32 %v6795, 0.0
      %v6828 = vmax.f32 %v6796, 0.0
      %v6829 = vmax.f32 %v6797, 0.0
      %v6830 = vmax.f32 %v6798, 0.0
      %v6831 = vmax.f32 %v6799, 0.0
      %v6832 = vmax.f32 %v6800, 0.0
      %v6833 = vmax.f32 %v6801, 0.0
      %v6834 = vmax.f32 %v6802, 0.0
      %v6835 = vmax.f32 %v6803, 0.0
      %v6836 = vmax.f32 %v6804, 0.0
      %v6837 = vmax.f32 %v6805, 0.0
      %v6838 = vmax.f32 %v6806, 0.0
      %v6839 = vmax.f32 %v6807, 0.0
      %v6840 = vmax.f32 %v6808, 0.0
      %v6841 = vmax.f32 %v6809, 0.0
      %v6842 = vmax.f32 %v6810, 0.0
      %v6843 = vmax.f32 %v6811, 0.0
      %v6844 = vmax.f32 %v6812, 0.0
      %v6845 = vmax.f32 %v6813, 0.0
      %v6846 = vmax.f32 %v6814, 0.0
      %v6847 = vmax.f32 %v6815, 0.0
      %v6848 = vmax.f32 %v6816, 0.0
      %v6849 = vmax.f32 %v6817, 0.0
      %v6850 = vmax.f32 %v6818, 0.0
      %v6851 = vmax.f32 %v6819, 0.0
      %v6852 = vmax.f32 %v6820, 0.0
      %v6853 = vmax.f32 %v6821, 0.0
      %v6854 = vmax.f32 %v6822, 0.0
      %v6855 = vmax.f32 %v6823, 0.0
      %6856 = vst [vmem:[%s170] sm:$0xff] %v6824
      %6857 = vst [vmem:[%s170 + $0x8] sm:$0xff] %v6825
      %6858 = vst [vmem:[%s170 + $0x10] sm:$0xff] %v6826
      %6859 = vst [vmem:[%s170 + $0x18] sm:$0xff] %v6827
      %6860 = vst [vmem:[%s170 + $0x20] sm:$0xff] %v6828
      %6861 = vst [vmem:[%s170 + $0x28] sm:$0xff] %v6829
      %6862 = vst [vmem:[%s170 + $0x30] sm:$0xff] %v6830
      %6863 = vst [vmem:[%s170 + $0x38] sm:$0xff] %v6831
      %6864 = vst [vmem:[%s170 + $0x40] sm:$0xff] %v6832
      %6865 = vst [vmem:[%s170 + $0x48] sm:$0xff] %v6833
      %6866 = vst [vmem:[%s170 + $0x50] sm:$0xff] %v6834
      %6867 = vst [vmem:[%s170 + $0x58] sm:$0xff] %v6835
      %6868 = vst [vmem:[%s170 + $0x60] sm:$0xff] %v6836
      %6869 = vst [vmem:[%s170 + $0x68] sm:$0xff] %v6837
      %6870 = vst [vmem:[%s170 + $0x70] sm:$0xff] %v6838
      %6871 = vst [vmem:[%s170 + $0x78] sm:$0xff] %v6839
      %6872 = vst [vmem:[%s170 + $0x80] sm:$0xff] %v6840
      %6873 = vst [vmem:[%s170 + $0x88] sm:$0xff] %v6841
      %6874 = vst [vmem:[%s170 + $0x90] sm:$0xff] %v6842
      %6875 = vst [vmem:[%s170 + $0x98] sm:$0xff] %v6843
      %6876 = vst [vmem:[%s170 + $0xa0] sm:$0xff] %v6844
      %6877 = vst [vmem:[%s170 + $0xa8] sm:$0xff] %v6845
      %6878 = vst [vmem:[%s170 + $0xb0] sm:$0xff] %v6846
      %6879 = vst [vmem:[%s170 + $0xb8] sm:$0xff] %v6847
      %6880 = vst [vmem:[%s170 + $0xc0] sm:$0xff] %v6848
      %6881 = vst [vmem:[%s170 + $0xc8] sm:$0xff] %v6849
      %6882 = vst [vmem:[%s170 + $0xd0] sm:$0xff] %v6850
      %6883 = vst [vmem:[%s170 + $0xd8] sm:$0xff] %v6851
      %6884 = vst [vmem:[%s170 + $0xe0] sm:$0xff] %v6852
      %6885 = vst [vmem:[%s170 + $0xe8] sm:$0xff] %v6853
      %6886 = vst [vmem:[%s170 + $0xf0] sm:$0xff] %v6854
      %6887 = vst [vmem:[%s170 + $0xf8] sm:$0xff] %v6855
      %p6888 = scmp.lt.s32.totalorder %s14, 1
      %s6889 = scalar_select %p6888, %s14, 1
      %s6890 = smul.addr %s6889, 32
      %s6891 = smul.addr %s6890, 8
      %s6892 = scalar_lea.vmem %s3, %s6891
      // Predicated region
      $region33: #{basic_block_forward.1} parent=31 // pred_check
        %p6893 = pneg %p100
      $region34: #{basic_block_forward.1} parent=31 // pred_check_branch
        %6895 = sbr.rel (%p6893) target = $region36
      $region35: #{basic_block_forward.1} parent=31 // pred_region
        _
      $region36: #{basic_block_forward.1} parent=31 // pred_fallthru
        _
    $region32: #{basic_block_forward.1} parent=5 // pred_fallthru
      _
    %p6896 = scmp.le.s32.totalorder 2, %s9
    // Predicated region
    $region37: #{basic_block_forward.1} parent=5 // pred_check
      %p6897 = pneg %p6896
    $region38: #{basic_block_forward.1} parent=5 // pred_check_branch
      %6899 = sbr.rel (%p6897) target = $region40
    $region39: #{basic_block_forward.1} parent=5 // pred_region
      %s6900 = ssub.s32 %s9, 2
      // Predicated region
      $region41: #{basic_block_forward.1} parent=39 // pred_check
        %p6901 = pneg %p106
      $region42: #{basic_block_forward.1} parent=39 // pred_check_branch
        %6903 = sbr.rel (%p6901) target = $region44
      $region43: #{basic_block_forward.1} parent=39 // pred_region
        %p6904 = scmp.lt.s32.totalorder %s15, 1
        %s6905 = scalar_select %p6904, %s15, 1
        %s6906 = smul.addr %s6905, 32
        %s6907 = smul.addr %s6906, 8
        %s6908 = scalar_lea.vmem %s3, %s6907
      $region44: #{basic_block_forward.1} parent=39 // pred_fallthru
        _
    $region40: #{basic_block_forward.1} parent=5 // pred_fallthru
      _
  $region6: #{basic_block_forward.1} parent=0 // loop_footer
    %s13 = sadd.s32 1, %s9
  $region7: #{basic_block_forward.1} parent=0 // loop_footer_branch
    %8 = sbr.rel target = $region3
  $region8: #{basic_block_forward.1} parent=0 // loop_exit
    _

</llo_original>
